<compile_context>
chip_gen: v6e
topology: v6e:2x2x1
jax: 0.10.0
libtpu: 0.0.40
codegen_flags: <defaults>
</compile_context>

<pallas_src>
import math
import jax
import jax.numpy as jnp
from jax.experimental import pallas as pl
from jax.experimental.pallas import tpu as pltpu

# Older jax releases exposed this as TPUCompilerParams.
_CompilerParams = getattr(pltpu, "CompilerParams", None) or getattr(
    pltpu, "TPUCompilerParams"
)

_NEG_SLOPE = 0.2
_IN_EPS = 1e-5


# ----------------------------- Pallas kernels ------------------------------ #

def _make_conv_kernel(taps, cin, l_out, n_valid, fuse_norm):
    """Build a per-sample 3x3-conv kernel.

    taps:     static list of (channel_offset, lane_offset) per tap (9 entries).
    cin:      channels contracted per tap.
    l_out:    output lanes (Ho * row_pitch, pad columns included).
    n_valid:  number of valid output positions (Ho*Wo) for IN statistics.
    fuse_norm=True  -> instance-norm + LeakyReLU(0.2) epilogue (gamma/beta refs)
    fuse_norm=False -> conv-bias + tanh epilogue (bias ref)
    """
    inv_n = 1.0 / float(n_valid)

    if fuse_norm:
        def kernel(x_ref, w_ref, m_ref, g_ref, b_ref, o_ref):
            acc = None
            for t, (c0, l0) in enumerate(taps):
                xt = x_ref[pl.ds(c0, cin), pl.ds(l0, l_out)]     # (Cin, L) bf16
                d = jnp.dot(w_ref[t], xt, preferred_element_type=jnp.float32)
                acc = d if acc is None else acc + d              # (Cout, L) f32
            m = m_ref[...]                                       # (1, L) valid-lane mask
            mean = jnp.sum(acc * m, axis=-1, keepdims=True) * inv_n
            cen = (acc - mean) * m
            var = jnp.sum(cen * cen, axis=-1, keepdims=True) * inv_n
            yn = (acc - mean) * jax.lax.rsqrt(var + _IN_EPS)
            yn = yn * g_ref[...] + b_ref[...]
            y = jnp.where(yn >= 0.0, yn, _NEG_SLOPE * yn)        # LeakyReLU(0.2)
            o_ref[...] = y.astype(o_ref.dtype)
        return kernel

    def kernel(x_ref, w_ref, b_ref, o_ref):
        acc = None
        for t, (c0, l0) in enumerate(taps):
            xt = x_ref[pl.ds(c0, cin), pl.ds(l0, l_out)]
            d = jnp.dot(w_ref[t], xt, preferred_element_type=jnp.float32)
            acc = d if acc is None else acc + d
        o_ref[...] = jnp.tanh(acc + b_ref[...]).astype(o_ref.dtype)
    return kernel


# ------------------------------- JAX glue ---------------------------------- #

def conv_layer(x, w, *, stride=1, gamma=None, beta=None, bias=None,
               out_dtype=jnp.bfloat16):
    """3x3 conv (pad=1) with a fused epilogue; x: (N, C, H, W) -> (N, Cout, Ho, Wo)."""
    N, C, H, W = x.shape
    Cout = w.shape[0]
    assert w.shape == (Cout, C, 3, 3)
    assert stride in (1, 2)

    xp = jnp.pad(x, ((0, 0), (0, 0), (1, 1), (1, 1)))            # (N, C, H+2, W+2)
    Hp, Wp = H + 2, W + 2

    if stride == 1:
        Ho, Wo, wrow = H, W, Wp
        planes = xp.reshape(N, C, Hp * Wp)                        # flat padded rows
        taps = [(0, di * Wp + dj) for di in range(3) for dj in range(3)]
        n_phase = 1
    else:
        assert H % 2 == 0 and W % 2 == 0
        Ho, Wo = H // 2, W // 2
        Hp2, Wp2 = Ho + 1, Wo + 1
        wrow = Wp2
        # Even/odd phase split -> every stride-2 tap is a unit-stride slice.
        planes = jnp.concatenate(
            [xp[:, :, ph::2, pw::2].reshape(N, C, Hp2 * Wp2)
             for ph in (0, 1) for pw in (0, 1)], axis=1)           # (N, 4C, Hp2*Wp2)
        taps = [(((di % 2) * 2 + (dj % 2)) * C,
                 (di // 2) * Wp2 + (dj // 2))
                for di in range(3) for dj in range(3)]
        n_phase = 4

    L = Ho * wrow                                # output lanes (pad cols included)
    need = max(l0 for _, l0 in taps) + L         # slack so every tap slice fits
    lp0 = planes.shape[-1]
    if need > lp0:
        planes = jnp.pad(planes, ((0, 0), (0, 0), (0, need - lp0)))
    planes = planes.astype(jnp.bfloat16)
    Lp = planes.shape[-1]
    Cp = n_phase * C

    # (Cout, Cin, 3, 3) -> (9, Cout, Cin), tap-major, bf16 for the MXU.
    w_taps = jnp.transpose(w, (2, 3, 0, 1)).reshape(9, Cout, C).astype(jnp.bfloat16)

    fuse_norm = gamma is not None
    kernel = _make_conv_kernel(tuple(taps), C, L, Ho * Wo, fuse_norm)

    if fuse_norm:
        # Valid-lane mask: pad columns are excluded from the IN statistics.
        col = jnp.arange(L, dtype=jnp.int32) % wrow
        mask = (col < Wo).astype(jnp.float32).reshape(1, L)
        g = gamma.reshape(Cout, 1).astype(jnp.float32)
        b = beta.reshape(Cout, 1).astype(jnp.float32)
        operands = (planes, w_taps, mask, g, b)
        in_specs = [
            pl.BlockSpec((None, Cp, Lp), lambda n: (n, 0, 0)),
            pl.BlockSpec((9, Cout, C), lambda n: (0, 0, 0)),
            pl.BlockSpec((1, L), lambda n: (0, 0)),
            pl.BlockSpec((Cout, 1), lambda n: (0, 0)),
            pl.BlockSpec((Cout, 1), lambda n: (0, 0)),
        ]
    else:
        b = bias.reshape(Cout, 1).astype(jnp.float32)
        operands = (planes, w_taps, b)
        in_specs = [
            pl.BlockSpec((None, Cp, Lp), lambda n: (n, 0, 0)),
            pl.BlockSpec((9, Cout, C), lambda n: (0, 0, 0)),
            pl.BlockSpec((Cout, 1), lambda n: (0, 0)),
        ]

    out = pl.pallas_call(
        kernel,
        out_shape=jax.ShapeDtypeStruct((N, Cout, L), out_dtype),
        grid=(N,),
        in_specs=in_specs,
        out_specs=pl.BlockSpec((None, Cout, L), lambda n: (n, 0, 0)),
        compiler_params=_CompilerParams(
            dimension_semantics=("parallel",),
            vmem_limit_bytes=64 * 1024 * 1024,
        ),
    )(*operands)

    # Drop the pad columns: (N, Cout, Ho*wrow) -> (N, Cout, Ho, Wo).
    return out.reshape(N, Cout, Ho, wrow)[:, :, :, :Wo]


def conv_in_lrelu(x, conv_p, norm_p, stride=1):
    """3x3 conv + instance norm + LeakyReLU(0.2); bias dropped (IN cancels it)."""
    return conv_layer(x, conv_p["w"], stride=stride,
                      gamma=norm_p["gamma"], beta=norm_p["beta"])


def conv_bias_tanh(x, conv_p):
    """3x3 conv (stride 1) + bias + tanh; f32 output (model head)."""
    return conv_layer(x, conv_p["w"], stride=1, bias=conv_p["b"],
                      out_dtype=jnp.float32)


def upsample2x(x):
    # upconv=False => nearest-neighbour resize followed by a conv.
    # TODO(synk): fold this gather into the conv's in-kernel tap indexing to
    # skip the 4x intermediate tensor.
    return jnp.repeat(jnp.repeat(x, 2, axis=2), 2, axis=3)


# ----------------------------- parameter init ------------------------------ #

def init_conv(key, out_c, in_c, k=3):
    fan_in = in_c * k * k
    w = jax.random.normal(key, (out_c, in_c, k, k), jnp.float32) / math.sqrt(fan_in)
    b = jnp.zeros((out_c,), jnp.float32)
    return {"w": w, "b": b}


def init_norm(c):
    return {"gamma": jnp.ones((c,), jnp.float32), "beta": jnp.zeros((c,), jnp.float32)}


def init_unet(key, in_c, out_c, ngf):
    ks = jax.random.split(key, 6)
    return {
        "enc1": init_conv(ks[0], ngf, in_c),        "enc1_n": init_norm(ngf),
        "enc2": init_conv(ks[1], 2 * ngf, ngf),     "enc2_n": init_norm(2 * ngf),
        "enc3": init_conv(ks[2], 4 * ngf, 2 * ngf), "enc3_n": init_norm(4 * ngf),
        "dec2": init_conv(ks[3], 2 * ngf, 4 * ngf), "dec2_n": init_norm(2 * ngf),
        "dec1": init_conv(ks[4], ngf, 4 * ngf),     "dec1_n": init_norm(ngf),
        "out":  init_conv(ks[5], out_c, 2 * ngf),
    }


def init_sunet(key, in_c, out_c, ngf):
    ks = jax.random.split(key, 4)
    return {
        "enc1": init_conv(ks[0], ngf, in_c),    "enc1_n": init_norm(ngf),
        "enc2": init_conv(ks[1], 2 * ngf, ngf), "enc2_n": init_norm(2 * ngf),
        "dec1": init_conv(ks[2], ngf, 2 * ngf), "dec1_n": init_norm(ngf),
        "out":  init_conv(ks[3], out_c, 2 * ngf),
    }


# ------------------------------- networks ---------------------------------- #

def unet_tail(e1, p):
    e2 = conv_in_lrelu(e1, p["enc2"], p["enc2_n"], stride=2)
    e3 = conv_in_lrelu(e2, p["enc3"], p["enc3_n"], stride=2)
    d2 = conv_in_lrelu(upsample2x(e3), p["dec2"], p["dec2_n"])
    d2 = jnp.concatenate([d2, e2], axis=1)
    d1 = conv_in_lrelu(upsample2x(d2), p["dec1"], p["dec1_n"])
    d1 = jnp.concatenate([d1, e1], axis=1)
    return conv_bias_tanh(d1, p["out"])


def sunet_tail(e1, p):
    e2 = conv_in_lrelu(e1, p["enc2"], p["enc2_n"], stride=2)
    d1 = conv_in_lrelu(upsample2x(e2), p["dec1"], p["dec1_n"])
    d1 = jnp.concatenate([d1, e1], axis=1)
    return conv_bias_tanh(d1, p["out"])


def generator_model_forward(params, color_img, depth_img, uv_img):
    x = jnp.concatenate((color_img, depth_img, uv_img), axis=1)   # cat on channels
    cp, dp = params["color_net"], params["depth_net"]

    # UNet.enc1 and SUNet.enc1 consume identical input patches: fuse them into
    # one stacked-weight GEMM call (per-channel IN makes the fusion exact).
    ngf_c = cp["enc1"]["w"].shape[0]
    w_stack = jnp.concatenate([cp["enc1"]["w"], dp["enc1"]["w"]], axis=0)
    g_stack = jnp.concatenate([cp["enc1_n"]["gamma"], dp["enc1_n"]["gamma"]], axis=0)
    b_stack = jnp.concatenate([cp["enc1_n"]["beta"], dp["enc1_n"]["beta"]], axis=0)
    e1_both = conv_layer(x, w_stack, stride=1, gamma=g_stack, beta=b_stack)
    ce1, de1 = e1_both[:, :ngf_c], e1_both[:, ngf_c:]

    color_front = unet_tail(ce1, cp)
    depth_front = sunet_tail(de1, dp)
    return color_front, depth_front


# --------------------------------- main ------------------------------------ #

if __name__ == "__main__":
    key = jax.random.PRNGKey(0)
    k_c, k_d, k_u, k_p1, k_p2 = jax.random.split(key, 5)

    B, H, W = 2, 16, 16
    ngf = 8
    color_img = jax.random.normal(k_c, (B, 3, H, W), jnp.float32)
    depth_img = jax.random.normal(k_d, (B, 1, H, W), jnp.float32)
    uv_img    = jax.random.normal(k_u, (B, 2, H, W), jnp.float32)
    in_channel = 3 + 1 + 2  # concatenated inputs

    params = {
        "color_net": init_unet(k_p1, in_channel, 3, ngf),   # UNet -> 3-ch color
        "depth_net": init_sunet(k_p2, in_channel, 1, ngf),  # SUNet -> 1-ch depth
    }

    fwd = jax.jit(generator_model_forward)
    color_front, depth_front = fwd(params, color_img, depth_img, uv_img)
    jax.block_until_ready((color_front, depth_front))

    assert color_front.shape == (B, 3, H, W), color_front.shape
    assert depth_front.shape == (B, 1, H, W), depth_front.shape
    assert bool(jnp.all(jnp.isfinite(color_front))) and bool(jnp.all(jnp.isfinite(depth_front)))
    assert bool(jnp.all(jnp.abs(color_front) <= 1.0)) and bool(jnp.all(jnp.abs(depth_front) <= 1.0))
    print("KERNEL_OK")
</pallas_src>

<mosaic_0001>
module attributes {stable_mosaic.version = 11 : i64} {
  func.func @kernel(%arg0: i32, %arg1: memref<1x6x326xbf16, #tpu.memory_space<vmem>>, %arg2: memref<9x16x6xbf16, #tpu.memory_space<vmem>>, %arg3: memref<1x288xf32, #tpu.memory_space<vmem>>, %arg4: memref<16x1xf32, #tpu.memory_space<vmem>>, %arg5: memref<16x1xf32, #tpu.memory_space<vmem>>, %arg6: memref<1x16x288xbf16, #tpu.memory_space<vmem>>) attributes {dimension_semantics = [#tpu.dimension_semantics<parallel>], iteration_bounds = array<i64: 2>, scalar_prefetch = 0 : i64, scratch_operands = 0 : i64, tpu.core_type = #tpu.core_type<tc>, window_params = [{transform_indices = @transform_0, window_bounds = array<i64: 1, 6, 326>}, {pipeline_mode = #tpu.pipeline_mode<synchronous>, transform_indices = @transform_1, window_bounds = array<i64: 9, 16, 6>}, {pipeline_mode = #tpu.pipeline_mode<synchronous>, transform_indices = @transform_2, window_bounds = array<i64: 1, 288>}, {pipeline_mode = #tpu.pipeline_mode<synchronous>, transform_indices = @transform_3, window_bounds = array<i64: 16, 1>}, {pipeline_mode = #tpu.pipeline_mode<synchronous>, transform_indices = @transform_4, window_bounds = array<i64: 16, 1>}, {transform_indices = @transform_5, window_bounds = array<i64: 1, 16, 288>}]} {
    %c0 = arith.constant 0 : index
    %c0_0 = arith.constant 0 : index
    %c0_1 = arith.constant 0 : index
    %0 = vector.load %arg1[%c0, %c0_0, %c0_1] : memref<1x6x326xbf16, #tpu.memory_space<vmem>>, vector<1x6x288xbf16>
    %1 = vector.shape_cast %0 : vector<1x6x288xbf16> to vector<6x288xbf16>
    %c0_2 = arith.constant 0 : index
    %c0_3 = arith.constant 0 : index
    %c0_4 = arith.constant 0 : index
    %2 = vector.load %arg2[%c0_2, %c0_3, %c0_4] : memref<9x16x6xbf16, #tpu.memory_space<vmem>>, vector<1x16x6xbf16>
    %3 = vector.shape_cast %2 : vector<1x16x6xbf16> to vector<16x6xbf16>
    %cst = arith.constant dense<0.000000e+00> : vector<16x288xf32>
    %4 = tpu.matmul %3, %1, %cst {dimension_numbers = #tpu.dot_dimension_numbers<[1], [0], [0], [1], [0, 0, 1, 1], [], []>} : vector<16x6xbf16>, vector<6x288xbf16>, vector<16x288xf32> -> vector<16x288xf32>
    %c0_5 = arith.constant 0 : index
    %c0_6 = arith.constant 0 : index
    %c1 = arith.constant 1 : index
    %5 = vector.load %arg1[%c0_5, %c0_6, %c1] : memref<1x6x326xbf16, #tpu.memory_space<vmem>>, vector<1x6x288xbf16>
    %6 = vector.shape_cast %5 : vector<1x6x288xbf16> to vector<6x288xbf16>
    %c1_7 = arith.constant 1 : index
    %c0_8 = arith.constant 0 : index
    %c0_9 = arith.constant 0 : index
    %7 = vector.load %arg2[%c1_7, %c0_8, %c0_9] : memref<9x16x6xbf16, #tpu.memory_space<vmem>>, vector<1x16x6xbf16>
    %8 = vector.shape_cast %7 : vector<1x16x6xbf16> to vector<16x6xbf16>
    %cst_10 = arith.constant dense<0.000000e+00> : vector<16x288xf32>
    %9 = tpu.matmul %8, %6, %cst_10 {dimension_numbers = #tpu.dot_dimension_numbers<[1], [0], [0], [1], [0, 0, 1, 1], [], []>} : vector<16x6xbf16>, vector<6x288xbf16>, vector<16x288xf32> -> vector<16x288xf32>
    %10 = arith.addf %4, %9 : vector<16x288xf32>
    %c0_11 = arith.constant 0 : index
    %c0_12 = arith.constant 0 : index
    %c2 = arith.constant 2 : index
    %11 = vector.load %arg1[%c0_11, %c0_12, %c2] : memref<1x6x326xbf16, #tpu.memory_space<vmem>>, vector<1x6x288xbf16>
    %12 = vector.shape_cast %11 : vector<1x6x288xbf16> to vector<6x288xbf16>
    %c2_13 = arith.constant 2 : index
    %c0_14 = arith.constant 0 : index
    %c0_15 = arith.constant 0 : index
    %13 = vector.load %arg2[%c2_13, %c0_14, %c0_15] : memref<9x16x6xbf16, #tpu.memory_space<vmem>>, vector<1x16x6xbf16>
    %14 = vector.shape_cast %13 : vector<1x16x6xbf16> to vector<16x6xbf16>
    %cst_16 = arith.constant dense<0.000000e+00> : vector<16x288xf32>
    %15 = tpu.matmul %14, %12, %cst_16 {dimension_numbers = #tpu.dot_dimension_numbers<[1], [0], [0], [1], [0, 0, 1, 1], [], []>} : vector<16x6xbf16>, vector<6x288xbf16>, vector<16x288xf32> -> vector<16x288xf32>
    %16 = arith.addf %10, %15 : vector<16x288xf32>
    %c0_17 = arith.constant 0 : index
    %c0_18 = arith.constant 0 : index
    %c18 = arith.constant 18 : index
    %17 = vector.load %arg1[%c0_17, %c0_18, %c18] : memref<1x6x326xbf16, #tpu.memory_space<vmem>>, vector<1x6x288xbf16>
    %18 = vector.shape_cast %17 : vector<1x6x288xbf16> to vector<6x288xbf16>
    %c3 = arith.constant 3 : index
    %c0_19 = arith.constant 0 : index
    %c0_20 = arith.constant 0 : index
    %19 = vector.load %arg2[%c3, %c0_19, %c0_20] : memref<9x16x6xbf16, #tpu.memory_space<vmem>>, vector<1x16x6xbf16>
    %20 = vector.shape_cast %19 : vector<1x16x6xbf16> to vector<16x6xbf16>
    %cst_21 = arith.constant dense<0.000000e+00> : vector<16x288xf32>
    %21 = tpu.matmul %20, %18, %cst_21 {dimension_numbers = #tpu.dot_dimension_numbers<[1], [0], [0], [1], [0, 0, 1, 1], [], []>} : vector<16x6xbf16>, vector<6x288xbf16>, vector<16x288xf32> -> vector<16x288xf32>
    %22 = arith.addf %16, %21 : vector<16x288xf32>
    %c0_22 = arith.constant 0 : index
    %c0_23 = arith.constant 0 : index
    %c19 = arith.constant 19 : index
    %23 = vector.load %arg1[%c0_22, %c0_23, %c19] : memref<1x6x326xbf16, #tpu.memory_space<vmem>>, vector<1x6x288xbf16>
    %24 = vector.shape_cast %23 : vector<1x6x288xbf16> to vector<6x288xbf16>
    %c4 = arith.constant 4 : index
    %c0_24 = arith.constant 0 : index
    %c0_25 = arith.constant 0 : index
    %25 = vector.load %arg2[%c4, %c0_24, %c0_25] : memref<9x16x6xbf16, #tpu.memory_space<vmem>>, vector<1x16x6xbf16>
    %26 = vector.shape_cast %25 : vector<1x16x6xbf16> to vector<16x6xbf16>
    %cst_26 = arith.constant dense<0.000000e+00> : vector<16x288xf32>
    %27 = tpu.matmul %26, %24, %cst_26 {dimension_numbers = #tpu.dot_dimension_numbers<[1], [0], [0], [1], [0, 0, 1, 1], [], []>} : vector<16x6xbf16>, vector<6x288xbf16>, vector<16x288xf32> -> vector<16x288xf32>
    %28 = arith.addf %22, %27 : vector<16x288xf32>
    %c0_27 = arith.constant 0 : index
    %c0_28 = arith.constant 0 : index
    %c20 = arith.constant 20 : index
    %29 = vector.load %arg1[%c0_27, %c0_28, %c20] : memref<1x6x326xbf16, #tpu.memory_space<vmem>>, vector<1x6x288xbf16>
    %30 = vector.shape_cast %29 : vector<1x6x288xbf16> to vector<6x288xbf16>
    %c5 = arith.constant 5 : index
    %c0_29 = arith.constant 0 : index
    %c0_30 = arith.constant 0 : index
    %31 = vector.load %arg2[%c5, %c0_29, %c0_30] : memref<9x16x6xbf16, #tpu.memory_space<vmem>>, vector<1x16x6xbf16>
    %32 = vector.shape_cast %31 : vector<1x16x6xbf16> to vector<16x6xbf16>
    %cst_31 = arith.constant dense<0.000000e+00> : vector<16x288xf32>
    %33 = tpu.matmul %32, %30, %cst_31 {dimension_numbers = #tpu.dot_dimension_numbers<[1], [0], [0], [1], [0, 0, 1, 1], [], []>} : vector<16x6xbf16>, vector<6x288xbf16>, vector<16x288xf32> -> vector<16x288xf32>
    %34 = arith.addf %28, %33 : vector<16x288xf32>
    %c0_32 = arith.constant 0 : index
    %c0_33 = arith.constant 0 : index
    %c36 = arith.constant 36 : index
    %35 = vector.load %arg1[%c0_32, %c0_33, %c36] : memref<1x6x326xbf16, #tpu.memory_space<vmem>>, vector<1x6x288xbf16>
    %36 = vector.shape_cast %35 : vector<1x6x288xbf16> to vector<6x288xbf16>
    %c6 = arith.constant 6 : index
    %c0_34 = arith.constant 0 : index
    %c0_35 = arith.constant 0 : index
    %37 = vector.load %arg2[%c6, %c0_34, %c0_35] : memref<9x16x6xbf16, #tpu.memory_space<vmem>>, vector<1x16x6xbf16>
    %38 = vector.shape_cast %37 : vector<1x16x6xbf16> to vector<16x6xbf16>
    %cst_36 = arith.constant dense<0.000000e+00> : vector<16x288xf32>
    %39 = tpu.matmul %38, %36, %cst_36 {dimension_numbers = #tpu.dot_dimension_numbers<[1], [0], [0], [1], [0, 0, 1, 1], [], []>} : vector<16x6xbf16>, vector<6x288xbf16>, vector<16x288xf32> -> vector<16x288xf32>
    %40 = arith.addf %34, %39 : vector<16x288xf32>
    %c0_37 = arith.constant 0 : index
    %c0_38 = arith.constant 0 : index
    %c37 = arith.constant 37 : index
    %41 = vector.load %arg1[%c0_37, %c0_38, %c37] : memref<1x6x326xbf16, #tpu.memory_space<vmem>>, vector<1x6x288xbf16>
    %42 = vector.shape_cast %41 : vector<1x6x288xbf16> to vector<6x288xbf16>
    %c7 = arith.constant 7 : index
    %c0_39 = arith.constant 0 : index
    %c0_40 = arith.constant 0 : index
    %43 = vector.load %arg2[%c7, %c0_39, %c0_40] : memref<9x16x6xbf16, #tpu.memory_space<vmem>>, vector<1x16x6xbf16>
    %44 = vector.shape_cast %43 : vector<1x16x6xbf16> to vector<16x6xbf16>
    %cst_41 = arith.constant dense<0.000000e+00> : vector<16x288xf32>
    %45 = tpu.matmul %44, %42, %cst_41 {dimension_numbers = #tpu.dot_dimension_numbers<[1], [0], [0], [1], [0, 0, 1, 1], [], []>} : vector<16x6xbf16>, vector<6x288xbf16>, vector<16x288xf32> -> vector<16x288xf32>
    %46 = arith.addf %40, %45 : vector<16x288xf32>
    %c0_42 = arith.constant 0 : index
    %c0_43 = arith.constant 0 : index
    %c38 = arith.constant 38 : index
    %47 = vector.load %arg1[%c0_42, %c0_43, %c38] : memref<1x6x326xbf16, #tpu.memory_space<vmem>>, vector<1x6x288xbf16>
    %48 = vector.shape_cast %47 : vector<1x6x288xbf16> to vector<6x288xbf16>
    %c8 = arith.constant 8 : index
    %c0_44 = arith.constant 0 : index
    %c0_45 = arith.constant 0 : index
    %49 = vector.load %arg2[%c8, %c0_44, %c0_45] : memref<9x16x6xbf16, #tpu.memory_space<vmem>>, vector<1x16x6xbf16>
    %50 = vector.shape_cast %49 : vector<1x16x6xbf16> to vector<16x6xbf16>
    %cst_46 = arith.constant dense<0.000000e+00> : vector<16x288xf32>
    %51 = tpu.matmul %50, %48, %cst_46 {dimension_numbers = #tpu.dot_dimension_numbers<[1], [0], [0], [1], [0, 0, 1, 1], [], []>} : vector<16x6xbf16>, vector<6x288xbf16>, vector<16x288xf32> -> vector<16x288xf32>
    %52 = arith.addf %46, %51 : vector<16x288xf32>
    %c0_47 = arith.constant 0 : index
    %c0_48 = arith.constant 0 : index
    %53 = vector.load %arg3[%c0_47, %c0_48] : memref<1x288xf32, #tpu.memory_space<vmem>>, vector<1x288xf32>
    %54 = vector.broadcast %53 : vector<1x288xf32> to vector<16x288xf32>
    %55 = arith.mulf %52, %54 : vector<16x288xf32>
    %cst_49 = arith.constant dense<0.000000e+00> : vector<16xf32>
    %56 = vector.multi_reduction <add>, %55, %cst_49 [1] : vector<16x288xf32> to vector<16xf32>
    %57 = vector.shape_cast %56 : vector<16xf32> to vector<16x1xf32>
    %cst_50 = arith.constant 3.906250e-03 : f32
    %58 = vector.broadcast %cst_50 : f32 to vector<16x1xf32>
    %59 = arith.mulf %57, %58 : vector<16x1xf32>
    %60 = vector.broadcast %59 : vector<16x1xf32> to vector<16x288xf32>
    %61 = arith.subf %52, %60 : vector<16x288xf32>
    %62 = vector.broadcast %53 : vector<1x288xf32> to vector<16x288xf32>
    %63 = arith.mulf %61, %62 : vector<16x288xf32>
    %64 = arith.mulf %63, %63 : vector<16x288xf32>
    %cst_51 = arith.constant dense<0.000000e+00> : vector<16xf32>
    %65 = vector.multi_reduction <add>, %64, %cst_51 [1] : vector<16x288xf32> to vector<16xf32>
    %66 = vector.shape_cast %65 : vector<16xf32> to vector<16x1xf32>
    %cst_52 = arith.constant 3.906250e-03 : f32
    %67 = vector.broadcast %cst_52 : f32 to vector<16x1xf32>
    %68 = arith.mulf %66, %67 : vector<16x1xf32>
    %69 = vector.broadcast %59 : vector<16x1xf32> to vector<16x288xf32>
    %70 = arith.subf %52, %69 : vector<16x288xf32>
    %cst_53 = arith.constant 9.99999974E-6 : f32
    %71 = vector.broadcast %cst_53 : f32 to vector<16x1xf32>
    %72 = arith.addf %68, %71 : vector<16x1xf32>
    %73 = math.rsqrt %72 : vector<16x1xf32>
    %74 = vector.broadcast %73 : vector<16x1xf32> to vector<16x288xf32>
    %75 = arith.mulf %70, %74 : vector<16x288xf32>
    %c0_54 = arith.constant 0 : index
    %c0_55 = arith.constant 0 : index
    %76 = vector.load %arg4[%c0_54, %c0_55] : memref<16x1xf32, #tpu.memory_space<vmem>>, vector<16x1xf32>
    %77 = vector.broadcast %76 : vector<16x1xf32> to vector<16x288xf32>
    %78 = arith.mulf %75, %77 : vector<16x288xf32>
    %c0_56 = arith.constant 0 : index
    %c0_57 = arith.constant 0 : index
    %79 = vector.load %arg5[%c0_56, %c0_57] : memref<16x1xf32, #tpu.memory_space<vmem>>, vector<16x1xf32>
    %80 = vector.broadcast %79 : vector<16x1xf32> to vector<16x288xf32>
    %81 = arith.addf %78, %80 : vector<16x288xf32>
    %cst_58 = arith.constant 0.000000e+00 : f32
    %82 = vector.broadcast %cst_58 : f32 to vector<16x288xf32>
    %83 = arith.cmpf oge, %81, %82 : vector<16x288xf32>
    %cst_59 = arith.constant 2.000000e-01 : f32
    %84 = vector.broadcast %cst_59 : f32 to vector<16x288xf32>
    %85 = arith.mulf %84, %81 : vector<16x288xf32>
    %86 = arith.select %83, %81, %85 : vector<16x288xi1>, vector<16x288xf32>
    %87 = arith.truncf %86 : vector<16x288xf32> to vector<16x288xbf16>
    %c0_60 = arith.constant 0 : index
    %c0_61 = arith.constant 0 : index
    %c0_62 = arith.constant 0 : index
    %88 = vector.load %arg6[%c0_60, %c0_61, %c0_62] : memref<1x16x288xbf16, #tpu.memory_space<vmem>>, vector<1x16x288xbf16>
    %89 = vector.shape_cast %88 : vector<1x16x288xbf16> to vector<16x288xbf16>
    %90 = vector.shape_cast %87 : vector<16x288xbf16> to vector<1x16x288xbf16>
    tpu.vector_store %arg6[%c0_60, %c0_61, %c0_62], %90 {strides = array<i32>} : memref<1x16x288xbf16, #tpu.memory_space<vmem>>, vector<1x16x288xbf16>,
    return
  }
  func.func @transform_0(%arg0: i32) -> (i32, i32, i32) {
    %c0_i32 = arith.constant 0 : i32
    %c0_i32_0 = arith.constant 0 : i32
    %c0_i32_1 = arith.constant 0 : i32
    return %arg0, %c0_i32, %c0_i32_0 : i32, i32, i32
  }
  func.func @transform_1(%arg0: i32) -> (i32, i32, i32) {
    %c0_i32 = arith.constant 0 : i32
    %c0_i32_0 = arith.constant 0 : i32
    %c0_i32_1 = arith.constant 0 : i32
    %c0_i32_2 = arith.constant 0 : i32
    return %c0_i32, %c0_i32_0, %c0_i32_1 : i32, i32, i32
  }
  func.func @transform_2(%arg0: i32) -> (i32, i32) {
    %c0_i32 = arith.constant 0 : i32
    %c0_i32_0 = arith.constant 0 : i32
    %c0_i32_1 = arith.constant 0 : i32
    return %c0_i32, %c0_i32_0 : i32, i32
  }
  func.func @transform_3(%arg0: i32) -> (i32, i32) {
    %c0_i32 = arith.constant 0 : i32
    %c0_i32_0 = arith.constant 0 : i32
    %c0_i32_1 = arith.constant 0 : i32
    return %c0_i32, %c0_i32_0 : i32, i32
  }
  func.func @transform_4(%arg0: i32) -> (i32, i32) {
    %c0_i32 = arith.constant 0 : i32
    %c0_i32_0 = arith.constant 0 : i32
    %c0_i32_1 = arith.constant 0 : i32
    return %c0_i32, %c0_i32_0 : i32, i32
  }
  func.func @transform_5(%arg0: i32) -> (i32, i32, i32) {
    %c0_i32 = arith.constant 0 : i32
    %c0_i32_0 = arith.constant 0 : i32
    %c0_i32_1 = arith.constant 0 : i32
    return %arg0, %c0_i32, %c0_i32_0 : i32, i32, i32
  }
}

module attributes {stable_mosaic.version = 11 : i64} {
  func.func @kernel(%arg0: i32, %arg1: memref<1x32x82xbf16, #tpu.memory_space<vmem>>, %arg2: memref<9x16x8xbf16, #tpu.memory_space<vmem>>, %arg3: memref<1x72xf32, #tpu.memory_space<vmem>>, %arg4: memref<16x1xf32, #tpu.memory_space<vmem>>, %arg5: memref<16x1xf32, #tpu.memory_space<vmem>>, %arg6: memref<1x16x72xbf16, #tpu.memory_space<vmem>>) attributes {dimension_semantics = [#tpu.dimension_semantics<parallel>], iteration_bounds = array<i64: 2>, scalar_prefetch = 0 : i64, scratch_operands = 0 : i64, tpu.core_type = #tpu.core_type<tc>, window_params = [{transform_indices = @transform_0, window_bounds = array<i64: 1, 32, 82>}, {pipeline_mode = #tpu.pipeline_mode<synchronous>, transform_indices = @transform_1, window_bounds = array<i64: 9, 16, 8>}, {pipeline_mode = #tpu.pipeline_mode<synchronous>, transform_indices = @transform_2, window_bounds = array<i64: 1, 72>}, {pipeline_mode = #tpu.pipeline_mode<synchronous>, transform_indices = @transform_3, window_bounds = array<i64: 16, 1>}, {pipeline_mode = #tpu.pipeline_mode<synchronous>, transform_indices = @transform_4, window_bounds = array<i64: 16, 1>}, {transform_indices = @transform_5, window_bounds = array<i64: 1, 16, 72>}]} {
    %c0 = arith.constant 0 : index
    %c0_0 = arith.constant 0 : index
    %c0_1 = arith.constant 0 : index
    %0 = vector.load %arg1[%c0, %c0_0, %c0_1] : memref<1x32x82xbf16, #tpu.memory_space<vmem>>, vector<1x8x72xbf16>
    %1 = vector.shape_cast %0 : vector<1x8x72xbf16> to vector<8x72xbf16>
    %c0_2 = arith.constant 0 : index
    %c0_3 = arith.constant 0 : index
    %c0_4 = arith.constant 0 : index
    %2 = vector.load %arg2[%c0_2, %c0_3, %c0_4] : memref<9x16x8xbf16, #tpu.memory_space<vmem>>, vector<1x16x8xbf16>
    %3 = vector.shape_cast %2 : vector<1x16x8xbf16> to vector<16x8xbf16>
    %cst = arith.constant dense<0.000000e+00> : vector<16x72xf32>
    %4 = tpu.matmul %3, %1, %cst {dimension_numbers = #tpu.dot_dimension_numbers<[1], [0], [0], [1], [0, 0, 1, 1], [], []>} : vector<16x8xbf16>, vector<8x72xbf16>, vector<16x72xf32> -> vector<16x72xf32>
    %c0_5 = arith.constant 0 : index
    %c8 = arith.constant 8 : index
    %c0_6 = arith.constant 0 : index
    %5 = vector.load %arg1[%c0_5, %c8, %c0_6] : memref<1x32x82xbf16, #tpu.memory_space<vmem>>, vector<1x8x72xbf16>
    %6 = vector.shape_cast %5 : vector<1x8x72xbf16> to vector<8x72xbf16>
    %c1 = arith.constant 1 : index
    %c0_7 = arith.constant 0 : index
    %c0_8 = arith.constant 0 : index
    %7 = vector.load %arg2[%c1, %c0_7, %c0_8] : memref<9x16x8xbf16, #tpu.memory_space<vmem>>, vector<1x16x8xbf16>
    %8 = vector.shape_cast %7 : vector<1x16x8xbf16> to vector<16x8xbf16>
    %cst_9 = arith.constant dense<0.000000e+00> : vector<16x72xf32>
    %9 = tpu.matmul %8, %6, %cst_9 {dimension_numbers = #tpu.dot_dimension_numbers<[1], [0], [0], [1], [0, 0, 1, 1], [], []>} : vector<16x8xbf16>, vector<8x72xbf16>, vector<16x72xf32> -> vector<16x72xf32>
    %10 = arith.addf %4, %9 : vector<16x72xf32>
    %c0_10 = arith.constant 0 : index
    %c0_11 = arith.constant 0 : index
    %c1_12 = arith.constant 1 : index
    %11 = vector.load %arg1[%c0_10, %c0_11, %c1_12] : memref<1x32x82xbf16, #tpu.memory_space<vmem>>, vector<1x8x72xbf16>
    %12 = vector.shape_cast %11 : vector<1x8x72xbf16> to vector<8x72xbf16>
    %c2 = arith.constant 2 : index
    %c0_13 = arith.constant 0 : index
    %c0_14 = arith.constant 0 : index
    %13 = vector.load %arg2[%c2, %c0_13, %c0_14] : memref<9x16x8xbf16, #tpu.memory_space<vmem>>, vector<1x16x8xbf16>
    %14 = vector.shape_cast %13 : vector<1x16x8xbf16> to vector<16x8xbf16>
    %cst_15 = arith.constant dense<0.000000e+00> : vector<16x72xf32>
    %15 = tpu.matmul %14, %12, %cst_15 {dimension_numbers = #tpu.dot_dimension_numbers<[1], [0], [0], [1], [0, 0, 1, 1], [], []>} : vector<16x8xbf16>, vector<8x72xbf16>, vector<16x72xf32> -> vector<16x72xf32>
    %16 = arith.addf %10, %15 : vector<16x72xf32>
    %c0_16 = arith.constant 0 : index
    %c16 = arith.constant 16 : index
    %c0_17 = arith.constant 0 : index
    %17 = vector.load %arg1[%c0_16, %c16, %c0_17] : memref<1x32x82xbf16, #tpu.memory_space<vmem>>, vector<1x8x72xbf16>
    %18 = vector.shape_cast %17 : vector<1x8x72xbf16> to vector<8x72xbf16>
    %c3 = arith.constant 3 : index
    %c0_18 = arith.constant 0 : index
    %c0_19 = arith.constant 0 : index
    %19 = vector.load %arg2[%c3, %c0_18, %c0_19] : memref<9x16x8xbf16, #tpu.memory_space<vmem>>, vector<1x16x8xbf16>
    %20 = vector.shape_cast %19 : vector<1x16x8xbf16> to vector<16x8xbf16>
    %cst_20 = arith.constant dense<0.000000e+00> : vector<16x72xf32>
    %21 = tpu.matmul %20, %18, %cst_20 {dimension_numbers = #tpu.dot_dimension_numbers<[1], [0], [0], [1], [0, 0, 1, 1], [], []>} : vector<16x8xbf16>, vector<8x72xbf16>, vector<16x72xf32> -> vector<16x72xf32>
    %22 = arith.addf %16, %21 : vector<16x72xf32>
    %c0_21 = arith.constant 0 : index
    %c24 = arith.constant 24 : index
    %c0_22 = arith.constant 0 : index
    %23 = vector.load %arg1[%c0_21, %c24, %c0_22] : memref<1x32x82xbf16, #tpu.memory_space<vmem>>, vector<1x8x72xbf16>
    %24 = vector.shape_cast %23 : vector<1x8x72xbf16> to vector<8x72xbf16>
    %c4 = arith.constant 4 : index
    %c0_23 = arith.constant 0 : index
    %c0_24 = arith.constant 0 : index
    %25 = vector.load %arg2[%c4, %c0_23, %c0_24] : memref<9x16x8xbf16, #tpu.memory_space<vmem>>, vector<1x16x8xbf16>
    %26 = vector.shape_cast %25 : vector<1x16x8xbf16> to vector<16x8xbf16>
    %cst_25 = arith.constant dense<0.000000e+00> : vector<16x72xf32>
    %27 = tpu.matmul %26, %24, %cst_25 {dimension_numbers = #tpu.dot_dimension_numbers<[1], [0], [0], [1], [0, 0, 1, 1], [], []>} : vector<16x8xbf16>, vector<8x72xbf16>, vector<16x72xf32> -> vector<16x72xf32>
    %28 = arith.addf %22, %27 : vector<16x72xf32>
    %c0_26 = arith.constant 0 : index
    %c16_27 = arith.constant 16 : index
    %c1_28 = arith.constant 1 : index
    %29 = vector.load %arg1[%c0_26, %c16_27, %c1_28] : memref<1x32x82xbf16, #tpu.memory_space<vmem>>, vector<1x8x72xbf16>
    %30 = vector.shape_cast %29 : vector<1x8x72xbf16> to vector<8x72xbf16>
    %c5 = arith.constant 5 : index
    %c0_29 = arith.constant 0 : index
    %c0_30 = arith.constant 0 : index
    %31 = vector.load %arg2[%c5, %c0_29, %c0_30] : memref<9x16x8xbf16, #tpu.memory_space<vmem>>, vector<1x16x8xbf16>
    %32 = vector.shape_cast %31 : vector<1x16x8xbf16> to vector<16x8xbf16>
    %cst_31 = arith.constant dense<0.000000e+00> : vector<16x72xf32>
    %33 = tpu.matmul %32, %30, %cst_31 {dimension_numbers = #tpu.dot_dimension_numbers<[1], [0], [0], [1], [0, 0, 1, 1], [], []>} : vector<16x8xbf16>, vector<8x72xbf16>, vector<16x72xf32> -> vector<16x72xf32>
    %34 = arith.addf %28, %33 : vector<16x72xf32>
    %c0_32 = arith.constant 0 : index
    %c0_33 = arith.constant 0 : index
    %c9 = arith.constant 9 : index
    %35 = vector.load %arg1[%c0_32, %c0_33, %c9] : memref<1x32x82xbf16, #tpu.memory_space<vmem>>, vector<1x8x72xbf16>
    %36 = vector.shape_cast %35 : vector<1x8x72xbf16> to vector<8x72xbf16>
    %c6 = arith.constant 6 : index
    %c0_34 = arith.constant 0 : index
    %c0_35 = arith.constant 0 : index
    %37 = vector.load %arg2[%c6, %c0_34, %c0_35] : memref<9x16x8xbf16, #tpu.memory_space<vmem>>, vector<1x16x8xbf16>
    %38 = vector.shape_cast %37 : vector<1x16x8xbf16> to vector<16x8xbf16>
    %cst_36 = arith.constant dense<0.000000e+00> : vector<16x72xf32>
    %39 = tpu.matmul %38, %36, %cst_36 {dimension_numbers = #tpu.dot_dimension_numbers<[1], [0], [0], [1], [0, 0, 1, 1], [], []>} : vector<16x8xbf16>, vector<8x72xbf16>, vector<16x72xf32> -> vector<16x72xf32>
    %40 = arith.addf %34, %39 : vector<16x72xf32>
    %c0_37 = arith.constant 0 : index
    %c8_38 = arith.constant 8 : index
    %c9_39 = arith.constant 9 : index
    %41 = vector.load %arg1[%c0_37, %c8_38, %c9_39] : memref<1x32x82xbf16, #tpu.memory_space<vmem>>, vector<1x8x72xbf16>
    %42 = vector.shape_cast %41 : vector<1x8x72xbf16> to vector<8x72xbf16>
    %c7 = arith.constant 7 : index
    %c0_40 = arith.constant 0 : index
    %c0_41 = arith.constant 0 : index
    %43 = vector.load %arg2[%c7, %c0_40, %c0_41] : memref<9x16x8xbf16, #tpu.memory_space<vmem>>, vector<1x16x8xbf16>
    %44 = vector.shape_cast %43 : vector<1x16x8xbf16> to vector<16x8xbf16>
    %cst_42 = arith.constant dense<0.000000e+00> : vector<16x72xf32>
    %45 = tpu.matmul %44, %42, %cst_42 {dimension_numbers = #tpu.dot_dimension_numbers<[1], [0], [0], [1], [0, 0, 1, 1], [], []>} : vector<16x8xbf16>, vector<8x72xbf16>, vector<16x72xf32> -> vector<16x72xf32>
    %46 = arith.addf %40, %45 : vector<16x72xf32>
    %c0_43 = arith.constant 0 : index
    %c0_44 = arith.constant 0 : index
    %c10 = arith.constant 10 : index
    %47 = vector.load %arg1[%c0_43, %c0_44, %c10] : memref<1x32x82xbf16, #tpu.memory_space<vmem>>, vector<1x8x72xbf16>
    %48 = vector.shape_cast %47 : vector<1x8x72xbf16> to vector<8x72xbf16>
    %c8_45 = arith.constant 8 : index
    %c0_46 = arith.constant 0 : index
    %c0_47 = arith.constant 0 : index
    %49 = vector.load %arg2[%c8_45, %c0_46, %c0_47] : memref<9x16x8xbf16, #tpu.memory_space<vmem>>, vector<1x16x8xbf16>
    %50 = vector.shape_cast %49 : vector<1x16x8xbf16> to vector<16x8xbf16>
    %cst_48 = arith.constant dense<0.000000e+00> : vector<16x72xf32>
    %51 = tpu.matmul %50, %48, %cst_48 {dimension_numbers = #tpu.dot_dimension_numbers<[1], [0], [0], [1], [0, 0, 1, 1], [], []>} : vector<16x8xbf16>, vector<8x72xbf16>, vector<16x72xf32> -> vector<16x72xf32>
    %52 = arith.addf %46, %51 : vector<16x72xf32>
    %c0_49 = arith.constant 0 : index
    %c0_50 = arith.constant 0 : index
    %53 = vector.load %arg3[%c0_49, %c0_50] : memref<1x72xf32, #tpu.memory_space<vmem>>, vector<1x72xf32>
    %54 = vector.broadcast %53 : vector<1x72xf32> to vector<16x72xf32>
    %55 = arith.mulf %52, %54 : vector<16x72xf32>
    %cst_51 = arith.constant dense<0.000000e+00> : vector<16xf32>
    %56 = vector.multi_reduction <add>, %55, %cst_51 [1] : vector<16x72xf32> to vector<16xf32>
    %57 = vector.shape_cast %56 : vector<16xf32> to vector<16x1xf32>
    %cst_52 = arith.constant 1.562500e-02 : f32
    %58 = vector.broadcast %cst_52 : f32 to vector<16x1xf32>
    %59 = arith.mulf %57, %58 : vector<16x1xf32>
    %60 = vector.broadcast %59 : vector<16x1xf32> to vector<16x72xf32>
    %61 = arith.subf %52, %60 : vector<16x72xf32>
    %62 = vector.broadcast %53 : vector<1x72xf32> to vector<16x72xf32>
    %63 = arith.mulf %61, %62 : vector<16x72xf32>
    %64 = arith.mulf %63, %63 : vector<16x72xf32>
    %cst_53 = arith.constant dense<0.000000e+00> : vector<16xf32>
    %65 = vector.multi_reduction <add>, %64, %cst_53 [1] : vector<16x72xf32> to vector<16xf32>
    %66 = vector.shape_cast %65 : vector<16xf32> to vector<16x1xf32>
    %cst_54 = arith.constant 1.562500e-02 : f32
    %67 = vector.broadcast %cst_54 : f32 to vector<16x1xf32>
    %68 = arith.mulf %66, %67 : vector<16x1xf32>
    %69 = vector.broadcast %59 : vector<16x1xf32> to vector<16x72xf32>
    %70 = arith.subf %52, %69 : vector<16x72xf32>
    %cst_55 = arith.constant 9.99999974E-6 : f32
    %71 = vector.broadcast %cst_55 : f32 to vector<16x1xf32>
    %72 = arith.addf %68, %71 : vector<16x1xf32>
    %73 = math.rsqrt %72 : vector<16x1xf32>
    %74 = vector.broadcast %73 : vector<16x1xf32> to vector<16x72xf32>
    %75 = arith.mulf %70, %74 : vector<16x72xf32>
    %c0_56 = arith.constant 0 : index
    %c0_57 = arith.constant 0 : index
    %76 = vector.load %arg4[%c0_56, %c0_57] : memref<16x1xf32, #tpu.memory_space<vmem>>, vector<16x1xf32>
    %77 = vector.broadcast %76 : vector<16x1xf32> to vector<16x72xf32>
    %78 = arith.mulf %75, %77 : vector<16x72xf32>
    %c0_58 = arith.constant 0 : index
    %c0_59 = arith.constant 0 : index
    %79 = vector.load %arg5[%c0_58, %c0_59] : memref<16x1xf32, #tpu.memory_space<vmem>>, vector<16x1xf32>
    %80 = vector.broadcast %79 : vector<16x1xf32> to vector<16x72xf32>
    %81 = arith.addf %78, %80 : vector<16x72xf32>
    %cst_60 = arith.constant 0.000000e+00 : f32
    %82 = vector.broadcast %cst_60 : f32 to vector<16x72xf32>
    %83 = arith.cmpf oge, %81, %82 : vector<16x72xf32>
    %cst_61 = arith.constant 2.000000e-01 : f32
    %84 = vector.broadcast %cst_61 : f32 to vector<16x72xf32>
    %85 = arith.mulf %84, %81 : vector<16x72xf32>
    %86 = arith.select %83, %81, %85 : vector<16x72xi1>, vector<16x72xf32>
    %87 = arith.truncf %86 : vector<16x72xf32> to vector<16x72xbf16>
    %c0_62 = arith.constant 0 : index
    %c0_63 = arith.constant 0 : index
    %c0_64 = arith.constant 0 : index
    %88 = vector.load %arg6[%c0_62, %c0_63, %c0_64] : memref<1x16x72xbf16, #tpu.memory_space<vmem>>, vector<1x16x72xbf16>
    %89 = vector.shape_cast %88 : vector<1x16x72xbf16> to vector<16x72xbf16>
    %90 = vector.shape_cast %87 : vector<16x72xbf16> to vector<1x16x72xbf16>
    tpu.vector_store %arg6[%c0_62, %c0_63, %c0_64], %90 {strides = array<i32>} : memref<1x16x72xbf16, #tpu.memory_space<vmem>>, vector<1x16x72xbf16>,
    return
  }
  func.func @transform_0(%arg0: i32) -> (i32, i32, i32) {
    %c0_i32 = arith.constant 0 : i32
    %c0_i32_0 = arith.constant 0 : i32
    %c0_i32_1 = arith.constant 0 : i32
    return %arg0, %c0_i32, %c0_i32_0 : i32, i32, i32
  }
  func.func @transform_1(%arg0: i32) -> (i32, i32, i32) {
    %c0_i32 = arith.constant 0 : i32
    %c0_i32_0 = arith.constant 0 : i32
    %c0_i32_1 = arith.constant 0 : i32
    %c0_i32_2 = arith.constant 0 : i32
    return %c0_i32, %c0_i32_0, %c0_i32_1 : i32, i32, i32
  }
  func.func @transform_2(%arg0: i32) -> (i32, i32) {
    %c0_i32 = arith.constant 0 : i32
    %c0_i32_0 = arith.constant 0 : i32
    %c0_i32_1 = arith.constant 0 : i32
    return %c0_i32, %c0_i32_0 : i32, i32
  }
  func.func @transform_3(%arg0: i32) -> (i32, i32) {
    %c0_i32 = arith.constant 0 : i32
    %c0_i32_0 = arith.constant 0 : i32
    %c0_i32_1 = arith.constant 0 : i32
    return %c0_i32, %c0_i32_0 : i32, i32
  }
  func.func @transform_4(%arg0: i32) -> (i32, i32) {
    %c0_i32 = arith.constant 0 : i32
    %c0_i32_0 = arith.constant 0 : i32
    %c0_i32_1 = arith.constant 0 : i32
    return %c0_i32, %c0_i32_0 : i32, i32
  }
  func.func @transform_5(%arg0: i32) -> (i32, i32, i32) {
    %c0_i32 = arith.constant 0 : i32
    %c0_i32_0 = arith.constant 0 : i32
    %c0_i32_1 = arith.constant 0 : i32
    return %arg0, %c0_i32, %c0_i32_0 : i32, i32, i32
  }
}

module attributes {stable_mosaic.version = 11 : i64} {
  func.func @kernel(%arg0: i32, %arg1: memref<1x64x26xbf16, #tpu.memory_space<vmem>>, %arg2: memref<9x32x16xbf16, #tpu.memory_space<vmem>>, %arg3: memref<1x20xf32, #tpu.memory_space<vmem>>, %arg4: memref<32x1xf32, #tpu.memory_space<vmem>>, %arg5: memref<32x1xf32, #tpu.memory_space<vmem>>, %arg6: memref<1x32x20xbf16, #tpu.memory_space<vmem>>) attributes {dimension_semantics = [#tpu.dimension_semantics<parallel>], iteration_bounds = array<i64: 2>, scalar_prefetch = 0 : i64, scratch_operands = 0 : i64, tpu.core_type = #tpu.core_type<tc>, window_params = [{transform_indices = @transform_0, window_bounds = array<i64: 1, 64, 26>}, {pipeline_mode = #tpu.pipeline_mode<synchronous>, transform_indices = @transform_1, window_bounds = array<i64: 9, 32, 16>}, {pipeline_mode = #tpu.pipeline_mode<synchronous>, transform_indices = @transform_2, window_bounds = array<i64: 1, 20>}, {pipeline_mode = #tpu.pipeline_mode<synchronous>, transform_indices = @transform_3, window_bounds = array<i64: 32, 1>}, {pipeline_mode = #tpu.pipeline_mode<synchronous>, transform_indices = @transform_4, window_bounds = array<i64: 32, 1>}, {transform_indices = @transform_5, window_bounds = array<i64: 1, 32, 20>}]} {
    %c0 = arith.constant 0 : index
    %c0_0 = arith.constant 0 : index
    %c0_1 = arith.constant 0 : index
    %0 = vector.load %arg1[%c0, %c0_0, %c0_1] : memref<1x64x26xbf16, #tpu.memory_space<vmem>>, vector<1x16x20xbf16>
    %1 = vector.shape_cast %0 : vector<1x16x20xbf16> to vector<16x20xbf16>
    %c0_2 = arith.constant 0 : index
    %c0_3 = arith.constant 0 : index
    %c0_4 = arith.constant 0 : index
    %2 = vector.load %arg2[%c0_2, %c0_3, %c0_4] : memref<9x32x16xbf16, #tpu.memory_space<vmem>>, vector<1x32x16xbf16>
    %3 = vector.shape_cast %2 : vector<1x32x16xbf16> to vector<32x16xbf16>
    %cst = arith.constant dense<0.000000e+00> : vector<32x20xf32>
    %4 = tpu.matmul %3, %1, %cst {dimension_numbers = #tpu.dot_dimension_numbers<[1], [0], [0], [1], [0, 0, 1, 1], [], []>} : vector<32x16xbf16>, vector<16x20xbf16>, vector<32x20xf32> -> vector<32x20xf32>
    %c0_5 = arith.constant 0 : index
    %c16 = arith.constant 16 : index
    %c0_6 = arith.constant 0 : index
    %5 = vector.load %arg1[%c0_5, %c16, %c0_6] : memref<1x64x26xbf16, #tpu.memory_space<vmem>>, vector<1x16x20xbf16>
    %6 = vector.shape_cast %5 : vector<1x16x20xbf16> to vector<16x20xbf16>
    %c1 = arith.constant 1 : index
    %c0_7 = arith.constant 0 : index
    %c0_8 = arith.constant 0 : index
    %7 = vector.load %arg2[%c1, %c0_7, %c0_8] : memref<9x32x16xbf16, #tpu.memory_space<vmem>>, vector<1x32x16xbf16>
    %8 = vector.shape_cast %7 : vector<1x32x16xbf16> to vector<32x16xbf16>
    %cst_9 = arith.constant dense<0.000000e+00> : vector<32x20xf32>
    %9 = tpu.matmul %8, %6, %cst_9 {dimension_numbers = #tpu.dot_dimension_numbers<[1], [0], [0], [1], [0, 0, 1, 1], [], []>} : vector<32x16xbf16>, vector<16x20xbf16>, vector<32x20xf32> -> vector<32x20xf32>
    %10 = arith.addf %4, %9 : vector<32x20xf32>
    %c0_10 = arith.constant 0 : index
    %c0_11 = arith.constant 0 : index
    %c1_12 = arith.constant 1 : index
    %11 = vector.load %arg1[%c0_10, %c0_11, %c1_12] : memref<1x64x26xbf16, #tpu.memory_space<vmem>>, vector<1x16x20xbf16>
    %12 = vector.shape_cast %11 : vector<1x16x20xbf16> to vector<16x20xbf16>
    %c2 = arith.constant 2 : index
    %c0_13 = arith.constant 0 : index
    %c0_14 = arith.constant 0 : index
    %13 = vector.load %arg2[%c2, %c0_13, %c0_14] : memref<9x32x16xbf16, #tpu.memory_space<vmem>>, vector<1x32x16xbf16>
    %14 = vector.shape_cast %13 : vector<1x32x16xbf16> to vector<32x16xbf16>
    %cst_15 = arith.constant dense<0.000000e+00> : vector<32x20xf32>
    %15 = tpu.matmul %14, %12, %cst_15 {dimension_numbers = #tpu.dot_dimension_numbers<[1], [0], [0], [1], [0, 0, 1, 1], [], []>} : vector<32x16xbf16>, vector<16x20xbf16>, vector<32x20xf32> -> vector<32x20xf32>
    %16 = arith.addf %10, %15 : vector<32x20xf32>
    %c0_16 = arith.constant 0 : index
    %c32 = arith.constant 32 : index
    %c0_17 = arith.constant 0 : index
    %17 = vector.load %arg1[%c0_16, %c32, %c0_17] : memref<1x64x26xbf16, #tpu.memory_space<vmem>>, vector<1x16x20xbf16>
    %18 = vector.shape_cast %17 : vector<1x16x20xbf16> to vector<16x20xbf16>
    %c3 = arith.constant 3 : index
    %c0_18 = arith.constant 0 : index
    %c0_19 = arith.constant 0 : index
    %19 = vector.load %arg2[%c3, %c0_18, %c0_19] : memref<9x32x16xbf16, #tpu.memory_space<vmem>>, vector<1x32x16xbf16>
    %20 = vector.shape_cast %19 : vector<1x32x16xbf16> to vector<32x16xbf16>
    %cst_20 = arith.constant dense<0.000000e+00> : vector<32x20xf32>
    %21 = tpu.matmul %20, %18, %cst_20 {dimension_numbers = #tpu.dot_dimension_numbers<[1], [0], [0], [1], [0, 0, 1, 1], [], []>} : vector<32x16xbf16>, vector<16x20xbf16>, vector<32x20xf32> -> vector<32x20xf32>
    %22 = arith.addf %16, %21 : vector<32x20xf32>
    %c0_21 = arith.constant 0 : index
    %c48 = arith.constant 48 : index
    %c0_22 = arith.constant 0 : index
    %23 = vector.load %arg1[%c0_21, %c48, %c0_22] : memref<1x64x26xbf16, #tpu.memory_space<vmem>>, vector<1x16x20xbf16>
    %24 = vector.shape_cast %23 : vector<1x16x20xbf16> to vector<16x20xbf16>
    %c4 = arith.constant 4 : index
    %c0_23 = arith.constant 0 : index
    %c0_24 = arith.constant 0 : index
    %25 = vector.load %arg2[%c4, %c0_23, %c0_24] : memref<9x32x16xbf16, #tpu.memory_space<vmem>>, vector<1x32x16xbf16>
    %26 = vector.shape_cast %25 : vector<1x32x16xbf16> to vector<32x16xbf16>
    %cst_25 = arith.constant dense<0.000000e+00> : vector<32x20xf32>
    %27 = tpu.matmul %26, %24, %cst_25 {dimension_numbers = #tpu.dot_dimension_numbers<[1], [0], [0], [1], [0, 0, 1, 1], [], []>} : vector<32x16xbf16>, vector<16x20xbf16>, vector<32x20xf32> -> vector<32x20xf32>
    %28 = arith.addf %22, %27 : vector<32x20xf32>
    %c0_26 = arith.constant 0 : index
    %c32_27 = arith.constant 32 : index
    %c1_28 = arith.constant 1 : index
    %29 = vector.load %arg1[%c0_26, %c32_27, %c1_28] : memref<1x64x26xbf16, #tpu.memory_space<vmem>>, vector<1x16x20xbf16>
    %30 = vector.shape_cast %29 : vector<1x16x20xbf16> to vector<16x20xbf16>
    %c5 = arith.constant 5 : index
    %c0_29 = arith.constant 0 : index
    %c0_30 = arith.constant 0 : index
    %31 = vector.load %arg2[%c5, %c0_29, %c0_30] : memref<9x32x16xbf16, #tpu.memory_space<vmem>>, vector<1x32x16xbf16>
    %32 = vector.shape_cast %31 : vector<1x32x16xbf16> to vector<32x16xbf16>
    %cst_31 = arith.constant dense<0.000000e+00> : vector<32x20xf32>
    %33 = tpu.matmul %32, %30, %cst_31 {dimension_numbers = #tpu.dot_dimension_numbers<[1], [0], [0], [1], [0, 0, 1, 1], [], []>} : vector<32x16xbf16>, vector<16x20xbf16>, vector<32x20xf32> -> vector<32x20xf32>
    %34 = arith.addf %28, %33 : vector<32x20xf32>
    %c0_32 = arith.constant 0 : index
    %c0_33 = arith.constant 0 : index
    %c5_34 = arith.constant 5 : index
    %35 = vector.load %arg1[%c0_32, %c0_33, %c5_34] : memref<1x64x26xbf16, #tpu.memory_space<vmem>>, vector<1x16x20xbf16>
    %36 = vector.shape_cast %35 : vector<1x16x20xbf16> to vector<16x20xbf16>
    %c6 = arith.constant 6 : index
    %c0_35 = arith.constant 0 : index
    %c0_36 = arith.constant 0 : index
    %37 = vector.load %arg2[%c6, %c0_35, %c0_36] : memref<9x32x16xbf16, #tpu.memory_space<vmem>>, vector<1x32x16xbf16>
    %38 = vector.shape_cast %37 : vector<1x32x16xbf16> to vector<32x16xbf16>
    %cst_37 = arith.constant dense<0.000000e+00> : vector<32x20xf32>
    %39 = tpu.matmul %38, %36, %cst_37 {dimension_numbers = #tpu.dot_dimension_numbers<[1], [0], [0], [1], [0, 0, 1, 1], [], []>} : vector<32x16xbf16>, vector<16x20xbf16>, vector<32x20xf32> -> vector<32x20xf32>
    %40 = arith.addf %34, %39 : vector<32x20xf32>
    %c0_38 = arith.constant 0 : index
    %c16_39 = arith.constant 16 : index
    %c5_40 = arith.constant 5 : index
    %41 = vector.load %arg1[%c0_38, %c16_39, %c5_40] : memref<1x64x26xbf16, #tpu.memory_space<vmem>>, vector<1x16x20xbf16>
    %42 = vector.shape_cast %41 : vector<1x16x20xbf16> to vector<16x20xbf16>
    %c7 = arith.constant 7 : index
    %c0_41 = arith.constant 0 : index
    %c0_42 = arith.constant 0 : index
    %43 = vector.load %arg2[%c7, %c0_41, %c0_42] : memref<9x32x16xbf16, #tpu.memory_space<vmem>>, vector<1x32x16xbf16>
    %44 = vector.shape_cast %43 : vector<1x32x16xbf16> to vector<32x16xbf16>
    %cst_43 = arith.constant dense<0.000000e+00> : vector<32x20xf32>
    %45 = tpu.matmul %44, %42, %cst_43 {dimension_numbers = #tpu.dot_dimension_numbers<[1], [0], [0], [1], [0, 0, 1, 1], [], []>} : vector<32x16xbf16>, vector<16x20xbf16>, vector<32x20xf32> -> vector<32x20xf32>
    %46 = arith.addf %40, %45 : vector<32x20xf32>
    %c0_44 = arith.constant 0 : index
    %c0_45 = arith.constant 0 : index
    %c6_46 = arith.constant 6 : index
    %47 = vector.load %arg1[%c0_44, %c0_45, %c6_46] : memref<1x64x26xbf16, #tpu.memory_space<vmem>>, vector<1x16x20xbf16>
    %48 = vector.shape_cast %47 : vector<1x16x20xbf16> to vector<16x20xbf16>
    %c8 = arith.constant 8 : index
    %c0_47 = arith.constant 0 : index
    %c0_48 = arith.constant 0 : index
    %49 = vector.load %arg2[%c8, %c0_47, %c0_48] : memref<9x32x16xbf16, #tpu.memory_space<vmem>>, vector<1x32x16xbf16>
    %50 = vector.shape_cast %49 : vector<1x32x16xbf16> to vector<32x16xbf16>
    %cst_49 = arith.constant dense<0.000000e+00> : vector<32x20xf32>
    %51 = tpu.matmul %50, %48, %cst_49 {dimension_numbers = #tpu.dot_dimension_numbers<[1], [0], [0], [1], [0, 0, 1, 1], [], []>} : vector<32x16xbf16>, vector<16x20xbf16>, vector<32x20xf32> -> vector<32x20xf32>
    %52 = arith.addf %46, %51 : vector<32x20xf32>
    %c0_50 = arith.constant 0 : index
    %c0_51 = arith.constant 0 : index
    %53 = vector.load %arg3[%c0_50, %c0_51] : memref<1x20xf32, #tpu.memory_space<vmem>>, vector<1x20xf32>
    %54 = vector.broadcast %53 : vector<1x20xf32> to vector<32x20xf32>
    %55 = arith.mulf %52, %54 : vector<32x20xf32>
    %cst_52 = arith.constant dense<0.000000e+00> : vector<32xf32>
    %56 = vector.multi_reduction <add>, %55, %cst_52 [1] : vector<32x20xf32> to vector<32xf32>
    %57 = vector.shape_cast %56 : vector<32xf32> to vector<32x1xf32>
    %cst_53 = arith.constant 6.250000e-02 : f32
    %58 = vector.broadcast %cst_53 : f32 to vector<32x1xf32>
    %59 = arith.mulf %57, %58 : vector<32x1xf32>
    %60 = vector.broadcast %59 : vector<32x1xf32> to vector<32x20xf32>
    %61 = arith.subf %52, %60 : vector<32x20xf32>
    %62 = vector.broadcast %53 : vector<1x20xf32> to vector<32x20xf32>
    %63 = arith.mulf %61, %62 : vector<32x20xf32>
    %64 = arith.mulf %63, %63 : vector<32x20xf32>
    %cst_54 = arith.constant dense<0.000000e+00> : vector<32xf32>
    %65 = vector.multi_reduction <add>, %64, %cst_54 [1] : vector<32x20xf32> to vector<32xf32>
    %66 = vector.shape_cast %65 : vector<32xf32> to vector<32x1xf32>
    %cst_55 = arith.constant 6.250000e-02 : f32
    %67 = vector.broadcast %cst_55 : f32 to vector<32x1xf32>
    %68 = arith.mulf %66, %67 : vector<32x1xf32>
    %69 = vector.broadcast %59 : vector<32x1xf32> to vector<32x20xf32>
    %70 = arith.subf %52, %69 : vector<32x20xf32>
    %cst_56 = arith.constant 9.99999974E-6 : f32
    %71 = vector.broadcast %cst_56 : f32 to vector<32x1xf32>
    %72 = arith.addf %68, %71 : vector<32x1xf32>
    %73 = math.rsqrt %72 : vector<32x1xf32>
    %74 = vector.broadcast %73 : vector<32x1xf32> to vector<32x20xf32>
    %75 = arith.mulf %70, %74 : vector<32x20xf32>
    %c0_57 = arith.constant 0 : index
    %c0_58 = arith.constant 0 : index
    %76 = vector.load %arg4[%c0_57, %c0_58] : memref<32x1xf32, #tpu.memory_space<vmem>>, vector<32x1xf32>
    %77 = vector.broadcast %76 : vector<32x1xf32> to vector<32x20xf32>
    %78 = arith.mulf %75, %77 : vector<32x20xf32>
    %c0_59 = arith.constant 0 : index
    %c0_60 = arith.constant 0 : index
    %79 = vector.load %arg5[%c0_59, %c0_60] : memref<32x1xf32, #tpu.memory_space<vmem>>, vector<32x1xf32>
    %80 = vector.broadcast %79 : vector<32x1xf32> to vector<32x20xf32>
    %81 = arith.addf %78, %80 : vector<32x20xf32>
    %cst_61 = arith.constant 0.000000e+00 : f32
    %82 = vector.broadcast %cst_61 : f32 to vector<32x20xf32>
    %83 = arith.cmpf oge, %81, %82 : vector<32x20xf32>
    %cst_62 = arith.constant 2.000000e-01 : f32
    %84 = vector.broadcast %cst_62 : f32 to vector<32x20xf32>
    %85 = arith.mulf %84, %81 : vector<32x20xf32>
    %86 = arith.select %83, %81, %85 : vector<32x20xi1>, vector<32x20xf32>
    %87 = arith.truncf %86 : vector<32x20xf32> to vector<32x20xbf16>
    %c0_63 = arith.constant 0 : index
    %c0_64 = arith.constant 0 : index
    %c0_65 = arith.constant 0 : index
    %88 = vector.load %arg6[%c0_63, %c0_64, %c0_65] : memref<1x32x20xbf16, #tpu.memory_space<vmem>>, vector<1x32x20xbf16>
    %89 = vector.shape_cast %88 : vector<1x32x20xbf16> to vector<32x20xbf16>
    %90 = vector.shape_cast %87 : vector<32x20xbf16> to vector<1x32x20xbf16>
    tpu.vector_store %arg6[%c0_63, %c0_64, %c0_65], %90 {strides = array<i32>} : memref<1x32x20xbf16, #tpu.memory_space<vmem>>, vector<1x32x20xbf16>,
    return
  }
  func.func @transform_0(%arg0: i32) -> (i32, i32, i32) {
    %c0_i32 = arith.constant 0 : i32
    %c0_i32_0 = arith.constant 0 : i32
    %c0_i32_1 = arith.constant 0 : i32
    return %arg0, %c0_i32, %c0_i32_0 : i32, i32, i32
  }
  func.func @transform_1(%arg0: i32) -> (i32, i32, i32) {
    %c0_i32 = arith.constant 0 : i32
    %c0_i32_0 = arith.constant 0 : i32
    %c0_i32_1 = arith.constant 0 : i32
    %c0_i32_2 = arith.constant 0 : i32
    return %c0_i32, %c0_i32_0, %c0_i32_1 : i32, i32, i32
  }
  func.func @transform_2(%arg0: i32) -> (i32, i32) {
    %c0_i32 = arith.constant 0 : i32
    %c0_i32_0 = arith.constant 0 : i32
    %c0_i32_1 = arith.constant 0 : i32
    return %c0_i32, %c0_i32_0 : i32, i32
  }
  func.func @transform_3(%arg0: i32) -> (i32, i32) {
    %c0_i32 = arith.constant 0 : i32
    %c0_i32_0 = arith.constant 0 : i32
    %c0_i32_1 = arith.constant 0 : i32
    return %c0_i32, %c0_i32_0 : i32, i32
  }
  func.func @transform_4(%arg0: i32) -> (i32, i32) {
    %c0_i32 = arith.constant 0 : i32
    %c0_i32_0 = arith.constant 0 : i32
    %c0_i32_1 = arith.constant 0 : i32
    return %c0_i32, %c0_i32_0 : i32, i32
  }
  func.func @transform_5(%arg0: i32) -> (i32, i32, i32) {
    %c0_i32 = arith.constant 0 : i32
    %c0_i32_0 = arith.constant 0 : i32
    %c0_i32_1 = arith.constant 0 : i32
    return %arg0, %c0_i32, %c0_i32_0 : i32, i32, i32
  }
}

module attributes {stable_mosaic.version = 11 : i64} {
  func.func @kernel(%arg0: i32, %arg1: memref<1x32x102xbf16, #tpu.memory_space<vmem>>, %arg2: memref<9x16x32xbf16, #tpu.memory_space<vmem>>, %arg3: memref<1x80xf32, #tpu.memory_space<vmem>>, %arg4: memref<16x1xf32, #tpu.memory_space<vmem>>, %arg5: memref<16x1xf32, #tpu.memory_space<vmem>>, %arg6: memref<1x16x80xbf16, #tpu.memory_space<vmem>>) attributes {dimension_semantics = [#tpu.dimension_semantics<parallel>], iteration_bounds = array<i64: 2>, scalar_prefetch = 0 : i64, scratch_operands = 0 : i64, tpu.core_type = #tpu.core_type<tc>, window_params = [{transform_indices = @transform_0, window_bounds = array<i64: 1, 32, 102>}, {pipeline_mode = #tpu.pipeline_mode<synchronous>, transform_indices = @transform_1, window_bounds = array<i64: 9, 16, 32>}, {pipeline_mode = #tpu.pipeline_mode<synchronous>, transform_indices = @transform_2, window_bounds = array<i64: 1, 80>}, {pipeline_mode = #tpu.pipeline_mode<synchronous>, transform_indices = @transform_3, window_bounds = array<i64: 16, 1>}, {pipeline_mode = #tpu.pipeline_mode<synchronous>, transform_indices = @transform_4, window_bounds = array<i64: 16, 1>}, {transform_indices = @transform_5, window_bounds = array<i64: 1, 16, 80>}]} {
    %c0 = arith.constant 0 : index
    %c0_0 = arith.constant 0 : index
    %c0_1 = arith.constant 0 : index
    %0 = vector.load %arg1[%c0, %c0_0, %c0_1] : memref<1x32x102xbf16, #tpu.memory_space<vmem>>, vector<1x32x80xbf16>
    %1 = vector.shape_cast %0 : vector<1x32x80xbf16> to vector<32x80xbf16>
    %c0_2 = arith.constant 0 : index
    %c0_3 = arith.constant 0 : index
    %c0_4 = arith.constant 0 : index
    %2 = vector.load %arg2[%c0_2, %c0_3, %c0_4] : memref<9x16x32xbf16, #tpu.memory_space<vmem>>, vector<1x16x32xbf16>
    %3 = vector.shape_cast %2 : vector<1x16x32xbf16> to vector<16x32xbf16>
    %cst = arith.constant dense<0.000000e+00> : vector<16x80xf32>
    %4 = tpu.matmul %3, %1, %cst {dimension_numbers = #tpu.dot_dimension_numbers<[1], [0], [0], [1], [0, 0, 1, 1], [], []>} : vector<16x32xbf16>, vector<32x80xbf16>, vector<16x80xf32> -> vector<16x80xf32>
    %c0_5 = arith.constant 0 : index
    %c0_6 = arith.constant 0 : index
    %c1 = arith.constant 1 : index
    %5 = vector.load %arg1[%c0_5, %c0_6, %c1] : memref<1x32x102xbf16, #tpu.memory_space<vmem>>, vector<1x32x80xbf16>
    %6 = vector.shape_cast %5 : vector<1x32x80xbf16> to vector<32x80xbf16>
    %c1_7 = arith.constant 1 : index
    %c0_8 = arith.constant 0 : index
    %c0_9 = arith.constant 0 : index
    %7 = vector.load %arg2[%c1_7, %c0_8, %c0_9] : memref<9x16x32xbf16, #tpu.memory_space<vmem>>, vector<1x16x32xbf16>
    %8 = vector.shape_cast %7 : vector<1x16x32xbf16> to vector<16x32xbf16>
    %cst_10 = arith.constant dense<0.000000e+00> : vector<16x80xf32>
    %9 = tpu.matmul %8, %6, %cst_10 {dimension_numbers = #tpu.dot_dimension_numbers<[1], [0], [0], [1], [0, 0, 1, 1], [], []>} : vector<16x32xbf16>, vector<32x80xbf16>, vector<16x80xf32> -> vector<16x80xf32>
    %10 = arith.addf %4, %9 : vector<16x80xf32>
    %c0_11 = arith.constant 0 : index
    %c0_12 = arith.constant 0 : index
    %c2 = arith.constant 2 : index
    %11 = vector.load %arg1[%c0_11, %c0_12, %c2] : memref<1x32x102xbf16, #tpu.memory_space<vmem>>, vector<1x32x80xbf16>
    %12 = vector.shape_cast %11 : vector<1x32x80xbf16> to vector<32x80xbf16>
    %c2_13 = arith.constant 2 : index
    %c0_14 = arith.constant 0 : index
    %c0_15 = arith.constant 0 : index
    %13 = vector.load %arg2[%c2_13, %c0_14, %c0_15] : memref<9x16x32xbf16, #tpu.memory_space<vmem>>, vector<1x16x32xbf16>
    %14 = vector.shape_cast %13 : vector<1x16x32xbf16> to vector<16x32xbf16>
    %cst_16 = arith.constant dense<0.000000e+00> : vector<16x80xf32>
    %15 = tpu.matmul %14, %12, %cst_16 {dimension_numbers = #tpu.dot_dimension_numbers<[1], [0], [0], [1], [0, 0, 1, 1], [], []>} : vector<16x32xbf16>, vector<32x80xbf16>, vector<16x80xf32> -> vector<16x80xf32>
    %16 = arith.addf %10, %15 : vector<16x80xf32>
    %c0_17 = arith.constant 0 : index
    %c0_18 = arith.constant 0 : index
    %c10 = arith.constant 10 : index
    %17 = vector.load %arg1[%c0_17, %c0_18, %c10] : memref<1x32x102xbf16, #tpu.memory_space<vmem>>, vector<1x32x80xbf16>
    %18 = vector.shape_cast %17 : vector<1x32x80xbf16> to vector<32x80xbf16>
    %c3 = arith.constant 3 : index
    %c0_19 = arith.constant 0 : index
    %c0_20 = arith.constant 0 : index
    %19 = vector.load %arg2[%c3, %c0_19, %c0_20] : memref<9x16x32xbf16, #tpu.memory_space<vmem>>, vector<1x16x32xbf16>
    %20 = vector.shape_cast %19 : vector<1x16x32xbf16> to vector<16x32xbf16>
    %cst_21 = arith.constant dense<0.000000e+00> : vector<16x80xf32>
    %21 = tpu.matmul %20, %18, %cst_21 {dimension_numbers = #tpu.dot_dimension_numbers<[1], [0], [0], [1], [0, 0, 1, 1], [], []>} : vector<16x32xbf16>, vector<32x80xbf16>, vector<16x80xf32> -> vector<16x80xf32>
    %22 = arith.addf %16, %21 : vector<16x80xf32>
    %c0_22 = arith.constant 0 : index
    %c0_23 = arith.constant 0 : index
    %c11 = arith.constant 11 : index
    %23 = vector.load %arg1[%c0_22, %c0_23, %c11] : memref<1x32x102xbf16, #tpu.memory_space<vmem>>, vector<1x32x80xbf16>
    %24 = vector.shape_cast %23 : vector<1x32x80xbf16> to vector<32x80xbf16>
    %c4 = arith.constant 4 : index
    %c0_24 = arith.constant 0 : index
    %c0_25 = arith.constant 0 : index
    %25 = vector.load %arg2[%c4, %c0_24, %c0_25] : memref<9x16x32xbf16, #tpu.memory_space<vmem>>, vector<1x16x32xbf16>
    %26 = vector.shape_cast %25 : vector<1x16x32xbf16> to vector<16x32xbf16>
    %cst_26 = arith.constant dense<0.000000e+00> : vector<16x80xf32>
    %27 = tpu.matmul %26, %24, %cst_26 {dimension_numbers = #tpu.dot_dimension_numbers<[1], [0], [0], [1], [0, 0, 1, 1], [], []>} : vector<16x32xbf16>, vector<32x80xbf16>, vector<16x80xf32> -> vector<16x80xf32>
    %28 = arith.addf %22, %27 : vector<16x80xf32>
    %c0_27 = arith.constant 0 : index
    %c0_28 = arith.constant 0 : index
    %c12 = arith.constant 12 : index
    %29 = vector.load %arg1[%c0_27, %c0_28, %c12] : memref<1x32x102xbf16, #tpu.memory_space<vmem>>, vector<1x32x80xbf16>
    %30 = vector.shape_cast %29 : vector<1x32x80xbf16> to vector<32x80xbf16>
    %c5 = arith.constant 5 : index
    %c0_29 = arith.constant 0 : index
    %c0_30 = arith.constant 0 : index
    %31 = vector.load %arg2[%c5, %c0_29, %c0_30] : memref<9x16x32xbf16, #tpu.memory_space<vmem>>, vector<1x16x32xbf16>
    %32 = vector.shape_cast %31 : vector<1x16x32xbf16> to vector<16x32xbf16>
    %cst_31 = arith.constant dense<0.000000e+00> : vector<16x80xf32>
    %33 = tpu.matmul %32, %30, %cst_31 {dimension_numbers = #tpu.dot_dimension_numbers<[1], [0], [0], [1], [0, 0, 1, 1], [], []>} : vector<16x32xbf16>, vector<32x80xbf16>, vector<16x80xf32> -> vector<16x80xf32>
    %34 = arith.addf %28, %33 : vector<16x80xf32>
    %c0_32 = arith.constant 0 : index
    %c0_33 = arith.constant 0 : index
    %c20 = arith.constant 20 : index
    %35 = vector.load %arg1[%c0_32, %c0_33, %c20] : memref<1x32x102xbf16, #tpu.memory_space<vmem>>, vector<1x32x80xbf16>
    %36 = vector.shape_cast %35 : vector<1x32x80xbf16> to vector<32x80xbf16>
    %c6 = arith.constant 6 : index
    %c0_34 = arith.constant 0 : index
    %c0_35 = arith.constant 0 : index
    %37 = vector.load %arg2[%c6, %c0_34, %c0_35] : memref<9x16x32xbf16, #tpu.memory_space<vmem>>, vector<1x16x32xbf16>
    %38 = vector.shape_cast %37 : vector<1x16x32xbf16> to vector<16x32xbf16>
    %cst_36 = arith.constant dense<0.000000e+00> : vector<16x80xf32>
    %39 = tpu.matmul %38, %36, %cst_36 {dimension_numbers = #tpu.dot_dimension_numbers<[1], [0], [0], [1], [0, 0, 1, 1], [], []>} : vector<16x32xbf16>, vector<32x80xbf16>, vector<16x80xf32> -> vector<16x80xf32>
    %40 = arith.addf %34, %39 : vector<16x80xf32>
    %c0_37 = arith.constant 0 : index
    %c0_38 = arith.constant 0 : index
    %c21 = arith.constant 21 : index
    %41 = vector.load %arg1[%c0_37, %c0_38, %c21] : memref<1x32x102xbf16, #tpu.memory_space<vmem>>, vector<1x32x80xbf16>
    %42 = vector.shape_cast %41 : vector<1x32x80xbf16> to vector<32x80xbf16>
    %c7 = arith.constant 7 : index
    %c0_39 = arith.constant 0 : index
    %c0_40 = arith.constant 0 : index
    %43 = vector.load %arg2[%c7, %c0_39, %c0_40] : memref<9x16x32xbf16, #tpu.memory_space<vmem>>, vector<1x16x32xbf16>
    %44 = vector.shape_cast %43 : vector<1x16x32xbf16> to vector<16x32xbf16>
    %cst_41 = arith.constant dense<0.000000e+00> : vector<16x80xf32>
    %45 = tpu.matmul %44, %42, %cst_41 {dimension_numbers = #tpu.dot_dimension_numbers<[1], [0], [0], [1], [0, 0, 1, 1], [], []>} : vector<16x32xbf16>, vector<32x80xbf16>, vector<16x80xf32> -> vector<16x80xf32>
    %46 = arith.addf %40, %45 : vector<16x80xf32>
    %c0_42 = arith.constant 0 : index
    %c0_43 = arith.constant 0 : index
    %c22 = arith.constant 22 : index
    %47 = vector.load %arg1[%c0_42, %c0_43, %c22] : memref<1x32x102xbf16, #tpu.memory_space<vmem>>, vector<1x32x80xbf16>
    %48 = vector.shape_cast %47 : vector<1x32x80xbf16> to vector<32x80xbf16>
    %c8 = arith.constant 8 : index
    %c0_44 = arith.constant 0 : index
    %c0_45 = arith.constant 0 : index
    %49 = vector.load %arg2[%c8, %c0_44, %c0_45] : memref<9x16x32xbf16, #tpu.memory_space<vmem>>, vector<1x16x32xbf16>
    %50 = vector.shape_cast %49 : vector<1x16x32xbf16> to vector<16x32xbf16>
    %cst_46 = arith.constant dense<0.000000e+00> : vector<16x80xf32>
    %51 = tpu.matmul %50, %48, %cst_46 {dimension_numbers = #tpu.dot_dimension_numbers<[1], [0], [0], [1], [0, 0, 1, 1], [], []>} : vector<16x32xbf16>, vector<32x80xbf16>, vector<16x80xf32> -> vector<16x80xf32>
    %52 = arith.addf %46, %51 : vector<16x80xf32>
    %c0_47 = arith.constant 0 : index
    %c0_48 = arith.constant 0 : index
    %53 = vector.load %arg3[%c0_47, %c0_48] : memref<1x80xf32, #tpu.memory_space<vmem>>, vector<1x80xf32>
    %54 = vector.broadcast %53 : vector<1x80xf32> to vector<16x80xf32>
    %55 = arith.mulf %52, %54 : vector<16x80xf32>
    %cst_49 = arith.constant dense<0.000000e+00> : vector<16xf32>
    %56 = vector.multi_reduction <add>, %55, %cst_49 [1] : vector<16x80xf32> to vector<16xf32>
    %57 = vector.shape_cast %56 : vector<16xf32> to vector<16x1xf32>
    %cst_50 = arith.constant 1.562500e-02 : f32
    %58 = vector.broadcast %cst_50 : f32 to vector<16x1xf32>
    %59 = arith.mulf %57, %58 : vector<16x1xf32>
    %60 = vector.broadcast %59 : vector<16x1xf32> to vector<16x80xf32>
    %61 = arith.subf %52, %60 : vector<16x80xf32>
    %62 = vector.broadcast %53 : vector<1x80xf32> to vector<16x80xf32>
    %63 = arith.mulf %61, %62 : vector<16x80xf32>
    %64 = arith.mulf %63, %63 : vector<16x80xf32>
    %cst_51 = arith.constant dense<0.000000e+00> : vector<16xf32>
    %65 = vector.multi_reduction <add>, %64, %cst_51 [1] : vector<16x80xf32> to vector<16xf32>
    %66 = vector.shape_cast %65 : vector<16xf32> to vector<16x1xf32>
    %cst_52 = arith.constant 1.562500e-02 : f32
    %67 = vector.broadcast %cst_52 : f32 to vector<16x1xf32>
    %68 = arith.mulf %66, %67 : vector<16x1xf32>
    %69 = vector.broadcast %59 : vector<16x1xf32> to vector<16x80xf32>
    %70 = arith.subf %52, %69 : vector<16x80xf32>
    %cst_53 = arith.constant 9.99999974E-6 : f32
    %71 = vector.broadcast %cst_53 : f32 to vector<16x1xf32>
    %72 = arith.addf %68, %71 : vector<16x1xf32>
    %73 = math.rsqrt %72 : vector<16x1xf32>
    %74 = vector.broadcast %73 : vector<16x1xf32> to vector<16x80xf32>
    %75 = arith.mulf %70, %74 : vector<16x80xf32>
    %c0_54 = arith.constant 0 : index
    %c0_55 = arith.constant 0 : index
    %76 = vector.load %arg4[%c0_54, %c0_55] : memref<16x1xf32, #tpu.memory_space<vmem>>, vector<16x1xf32>
    %77 = vector.broadcast %76 : vector<16x1xf32> to vector<16x80xf32>
    %78 = arith.mulf %75, %77 : vector<16x80xf32>
    %c0_56 = arith.constant 0 : index
    %c0_57 = arith.constant 0 : index
    %79 = vector.load %arg5[%c0_56, %c0_57] : memref<16x1xf32, #tpu.memory_space<vmem>>, vector<16x1xf32>
    %80 = vector.broadcast %79 : vector<16x1xf32> to vector<16x80xf32>
    %81 = arith.addf %78, %80 : vector<16x80xf32>
    %cst_58 = arith.constant 0.000000e+00 : f32
    %82 = vector.broadcast %cst_58 : f32 to vector<16x80xf32>
    %83 = arith.cmpf oge, %81, %82 : vector<16x80xf32>
    %cst_59 = arith.constant 2.000000e-01 : f32
    %84 = vector.broadcast %cst_59 : f32 to vector<16x80xf32>
    %85 = arith.mulf %84, %81 : vector<16x80xf32>
    %86 = arith.select %83, %81, %85 : vector<16x80xi1>, vector<16x80xf32>
    %87 = arith.truncf %86 : vector<16x80xf32> to vector<16x80xbf16>
    %c0_60 = arith.constant 0 : index
    %c0_61 = arith.constant 0 : index
    %c0_62 = arith.constant 0 : index
    %88 = vector.load %arg6[%c0_60, %c0_61, %c0_62] : memref<1x16x80xbf16, #tpu.memory_space<vmem>>, vector<1x16x80xbf16>
    %89 = vector.shape_cast %88 : vector<1x16x80xbf16> to vector<16x80xbf16>
    %90 = vector.shape_cast %87 : vector<16x80xbf16> to vector<1x16x80xbf16>
    tpu.vector_store %arg6[%c0_60, %c0_61, %c0_62], %90 {strides = array<i32>} : memref<1x16x80xbf16, #tpu.memory_space<vmem>>, vector<1x16x80xbf16>,
    return
  }
  func.func @transform_0(%arg0: i32) -> (i32, i32, i32) {
    %c0_i32 = arith.constant 0 : i32
    %c0_i32_0 = arith.constant 0 : i32
    %c0_i32_1 = arith.constant 0 : i32
    return %arg0, %c0_i32, %c0_i32_0 : i32, i32, i32
  }
  func.func @transform_1(%arg0: i32) -> (i32, i32, i32) {
    %c0_i32 = arith.constant 0 : i32
    %c0_i32_0 = arith.constant 0 : i32
    %c0_i32_1 = arith.constant 0 : i32
    %c0_i32_2 = arith.constant 0 : i32
    return %c0_i32, %c0_i32_0, %c0_i32_1 : i32, i32, i32
  }
  func.func @transform_2(%arg0: i32) -> (i32, i32) {
    %c0_i32 = arith.constant 0 : i32
    %c0_i32_0 = arith.constant 0 : i32
    %c0_i32_1 = arith.constant 0 : i32
    return %c0_i32, %c0_i32_0 : i32, i32
  }
  func.func @transform_3(%arg0: i32) -> (i32, i32) {
    %c0_i32 = arith.constant 0 : i32
    %c0_i32_0 = arith.constant 0 : i32
    %c0_i32_1 = arith.constant 0 : i32
    return %c0_i32, %c0_i32_0 : i32, i32
  }
  func.func @transform_4(%arg0: i32) -> (i32, i32) {
    %c0_i32 = arith.constant 0 : i32
    %c0_i32_0 = arith.constant 0 : i32
    %c0_i32_1 = arith.constant 0 : i32
    return %c0_i32, %c0_i32_0 : i32, i32
  }
  func.func @transform_5(%arg0: i32) -> (i32, i32, i32) {
    %c0_i32 = arith.constant 0 : i32
    %c0_i32_0 = arith.constant 0 : i32
    %c0_i32_1 = arith.constant 0 : i32
    return %arg0, %c0_i32, %c0_i32_0 : i32, i32, i32
  }
}

module attributes {stable_mosaic.version = 11 : i64} {
  func.func @kernel(%arg0: i32, %arg1: memref<1x32x326xbf16, #tpu.memory_space<vmem>>, %arg2: memref<9x8x32xbf16, #tpu.memory_space<vmem>>, %arg3: memref<1x288xf32, #tpu.memory_space<vmem>>, %arg4: memref<8x1xf32, #tpu.memory_space<vmem>>, %arg5: memref<8x1xf32, #tpu.memory_space<vmem>>, %arg6: memref<1x8x288xbf16, #tpu.memory_space<vmem>>) attributes {dimension_semantics = [#tpu.dimension_semantics<parallel>], iteration_bounds = array<i64: 2>, scalar_prefetch = 0 : i64, scratch_operands = 0 : i64, tpu.core_type = #tpu.core_type<tc>, window_params = [{transform_indices = @transform_0, window_bounds = array<i64: 1, 32, 326>}, {pipeline_mode = #tpu.pipeline_mode<synchronous>, transform_indices = @transform_1, window_bounds = array<i64: 9, 8, 32>}, {pipeline_mode = #tpu.pipeline_mode<synchronous>, transform_indices = @transform_2, window_bounds = array<i64: 1, 288>}, {pipeline_mode = #tpu.pipeline_mode<synchronous>, transform_indices = @transform_3, window_bounds = array<i64: 8, 1>}, {pipeline_mode = #tpu.pipeline_mode<synchronous>, transform_indices = @transform_4, window_bounds = array<i64: 8, 1>}, {transform_indices = @transform_5, window_bounds = array<i64: 1, 8, 288>}]} {
    %c0 = arith.constant 0 : index
    %c0_0 = arith.constant 0 : index
    %c0_1 = arith.constant 0 : index
    %0 = vector.load %arg1[%c0, %c0_0, %c0_1] : memref<1x32x326xbf16, #tpu.memory_space<vmem>>, vector<1x32x288xbf16>
    %1 = vector.shape_cast %0 : vector<1x32x288xbf16> to vector<32x288xbf16>
    %c0_2 = arith.constant 0 : index
    %c0_3 = arith.constant 0 : index
    %c0_4 = arith.constant 0 : index
    %2 = vector.load %arg2[%c0_2, %c0_3, %c0_4] : memref<9x8x32xbf16, #tpu.memory_space<vmem>>, vector<1x8x32xbf16>
    %3 = vector.shape_cast %2 : vector<1x8x32xbf16> to vector<8x32xbf16>
    %cst = arith.constant dense<0.000000e+00> : vector<8x288xf32>
    %4 = tpu.matmul %3, %1, %cst {dimension_numbers = #tpu.dot_dimension_numbers<[1], [0], [0], [1], [0, 0, 1, 1], [], []>} : vector<8x32xbf16>, vector<32x288xbf16>, vector<8x288xf32> -> vector<8x288xf32>
    %c0_5 = arith.constant 0 : index
    %c0_6 = arith.constant 0 : index
    %c1 = arith.constant 1 : index
    %5 = vector.load %arg1[%c0_5, %c0_6, %c1] : memref<1x32x326xbf16, #tpu.memory_space<vmem>>, vector<1x32x288xbf16>
    %6 = vector.shape_cast %5 : vector<1x32x288xbf16> to vector<32x288xbf16>
    %c1_7 = arith.constant 1 : index
    %c0_8 = arith.constant 0 : index
    %c0_9 = arith.constant 0 : index
    %7 = vector.load %arg2[%c1_7, %c0_8, %c0_9] : memref<9x8x32xbf16, #tpu.memory_space<vmem>>, vector<1x8x32xbf16>
    %8 = vector.shape_cast %7 : vector<1x8x32xbf16> to vector<8x32xbf16>
    %cst_10 = arith.constant dense<0.000000e+00> : vector<8x288xf32>
    %9 = tpu.matmul %8, %6, %cst_10 {dimension_numbers = #tpu.dot_dimension_numbers<[1], [0], [0], [1], [0, 0, 1, 1], [], []>} : vector<8x32xbf16>, vector<32x288xbf16>, vector<8x288xf32> -> vector<8x288xf32>
    %10 = arith.addf %4, %9 : vector<8x288xf32>
    %c0_11 = arith.constant 0 : index
    %c0_12 = arith.constant 0 : index
    %c2 = arith.constant 2 : index
    %11 = vector.load %arg1[%c0_11, %c0_12, %c2] : memref<1x32x326xbf16, #tpu.memory_space<vmem>>, vector<1x32x288xbf16>
    %12 = vector.shape_cast %11 : vector<1x32x288xbf16> to vector<32x288xbf16>
    %c2_13 = arith.constant 2 : index
    %c0_14 = arith.constant 0 : index
    %c0_15 = arith.constant 0 : index
    %13 = vector.load %arg2[%c2_13, %c0_14, %c0_15] : memref<9x8x32xbf16, #tpu.memory_space<vmem>>, vector<1x8x32xbf16>
    %14 = vector.shape_cast %13 : vector<1x8x32xbf16> to vector<8x32xbf16>
    %cst_16 = arith.constant dense<0.000000e+00> : vector<8x288xf32>
    %15 = tpu.matmul %14, %12, %cst_16 {dimension_numbers = #tpu.dot_dimension_numbers<[1], [0], [0], [1], [0, 0, 1, 1], [], []>} : vector<8x32xbf16>, vector<32x288xbf16>, vector<8x288xf32> -> vector<8x288xf32>
    %16 = arith.addf %10, %15 : vector<8x288xf32>
    %c0_17 = arith.constant 0 : index
    %c0_18 = arith.constant 0 : index
    %c18 = arith.constant 18 : index
    %17 = vector.load %arg1[%c0_17, %c0_18, %c18] : memref<1x32x326xbf16, #tpu.memory_space<vmem>>, vector<1x32x288xbf16>
    %18 = vector.shape_cast %17 : vector<1x32x288xbf16> to vector<32x288xbf16>
    %c3 = arith.constant 3 : index
    %c0_19 = arith.constant 0 : index
    %c0_20 = arith.constant 0 : index
    %19 = vector.load %arg2[%c3, %c0_19, %c0_20] : memref<9x8x32xbf16, #tpu.memory_space<vmem>>, vector<1x8x32xbf16>
    %20 = vector.shape_cast %19 : vector<1x8x32xbf16> to vector<8x32xbf16>
    %cst_21 = arith.constant dense<0.000000e+00> : vector<8x288xf32>
    %21 = tpu.matmul %20, %18, %cst_21 {dimension_numbers = #tpu.dot_dimension_numbers<[1], [0], [0], [1], [0, 0, 1, 1], [], []>} : vector<8x32xbf16>, vector<32x288xbf16>, vector<8x288xf32> -> vector<8x288xf32>
    %22 = arith.addf %16, %21 : vector<8x288xf32>
    %c0_22 = arith.constant 0 : index
    %c0_23 = arith.constant 0 : index
    %c19 = arith.constant 19 : index
    %23 = vector.load %arg1[%c0_22, %c0_23, %c19] : memref<1x32x326xbf16, #tpu.memory_space<vmem>>, vector<1x32x288xbf16>
    %24 = vector.shape_cast %23 : vector<1x32x288xbf16> to vector<32x288xbf16>
    %c4 = arith.constant 4 : index
    %c0_24 = arith.constant 0 : index
    %c0_25 = arith.constant 0 : index
    %25 = vector.load %arg2[%c4, %c0_24, %c0_25] : memref<9x8x32xbf16, #tpu.memory_space<vmem>>, vector<1x8x32xbf16>
    %26 = vector.shape_cast %25 : vector<1x8x32xbf16> to vector<8x32xbf16>
    %cst_26 = arith.constant dense<0.000000e+00> : vector<8x288xf32>
    %27 = tpu.matmul %26, %24, %cst_26 {dimension_numbers = #tpu.dot_dimension_numbers<[1], [0], [0], [1], [0, 0, 1, 1], [], []>} : vector<8x32xbf16>, vector<32x288xbf16>, vector<8x288xf32> -> vector<8x288xf32>
    %28 = arith.addf %22, %27 : vector<8x288xf32>
    %c0_27 = arith.constant 0 : index
    %c0_28 = arith.constant 0 : index
    %c20 = arith.constant 20 : index
    %29 = vector.load %arg1[%c0_27, %c0_28, %c20] : memref<1x32x326xbf16, #tpu.memory_space<vmem>>, vector<1x32x288xbf16>
    %30 = vector.shape_cast %29 : vector<1x32x288xbf16> to vector<32x288xbf16>
    %c5 = arith.constant 5 : index
    %c0_29 = arith.constant 0 : index
    %c0_30 = arith.constant 0 : index
    %31 = vector.load %arg2[%c5, %c0_29, %c0_30] : memref<9x8x32xbf16, #tpu.memory_space<vmem>>, vector<1x8x32xbf16>
    %32 = vector.shape_cast %31 : vector<1x8x32xbf16> to vector<8x32xbf16>
    %cst_31 = arith.constant dense<0.000000e+00> : vector<8x288xf32>
    %33 = tpu.matmul %32, %30, %cst_31 {dimension_numbers = #tpu.dot_dimension_numbers<[1], [0], [0], [1], [0, 0, 1, 1], [], []>} : vector<8x32xbf16>, vector<32x288xbf16>, vector<8x288xf32> -> vector<8x288xf32>
    %34 = arith.addf %28, %33 : vector<8x288xf32>
    %c0_32 = arith.constant 0 : index
    %c0_33 = arith.constant 0 : index
    %c36 = arith.constant 36 : index
    %35 = vector.load %arg1[%c0_32, %c0_33, %c36] : memref<1x32x326xbf16, #tpu.memory_space<vmem>>, vector<1x32x288xbf16>
    %36 = vector.shape_cast %35 : vector<1x32x288xbf16> to vector<32x288xbf16>
    %c6 = arith.constant 6 : index
    %c0_34 = arith.constant 0 : index
    %c0_35 = arith.constant 0 : index
    %37 = vector.load %arg2[%c6, %c0_34, %c0_35] : memref<9x8x32xbf16, #tpu.memory_space<vmem>>, vector<1x8x32xbf16>
    %38 = vector.shape_cast %37 : vector<1x8x32xbf16> to vector<8x32xbf16>
    %cst_36 = arith.constant dense<0.000000e+00> : vector<8x288xf32>
    %39 = tpu.matmul %38, %36, %cst_36 {dimension_numbers = #tpu.dot_dimension_numbers<[1], [0], [0], [1], [0, 0, 1, 1], [], []>} : vector<8x32xbf16>, vector<32x288xbf16>, vector<8x288xf32> -> vector<8x288xf32>
    %40 = arith.addf %34, %39 : vector<8x288xf32>
    %c0_37 = arith.constant 0 : index
    %c0_38 = arith.constant 0 : index
    %c37 = arith.constant 37 : index
    %41 = vector.load %arg1[%c0_37, %c0_38, %c37] : memref<1x32x326xbf16, #tpu.memory_space<vmem>>, vector<1x32x288xbf16>
    %42 = vector.shape_cast %41 : vector<1x32x288xbf16> to vector<32x288xbf16>
    %c7 = arith.constant 7 : index
    %c0_39 = arith.constant 0 : index
    %c0_40 = arith.constant 0 : index
    %43 = vector.load %arg2[%c7, %c0_39, %c0_40] : memref<9x8x32xbf16, #tpu.memory_space<vmem>>, vector<1x8x32xbf16>
    %44 = vector.shape_cast %43 : vector<1x8x32xbf16> to vector<8x32xbf16>
    %cst_41 = arith.constant dense<0.000000e+00> : vector<8x288xf32>
    %45 = tpu.matmul %44, %42, %cst_41 {dimension_numbers = #tpu.dot_dimension_numbers<[1], [0], [0], [1], [0, 0, 1, 1], [], []>} : vector<8x32xbf16>, vector<32x288xbf16>, vector<8x288xf32> -> vector<8x288xf32>
    %46 = arith.addf %40, %45 : vector<8x288xf32>
    %c0_42 = arith.constant 0 : index
    %c0_43 = arith.constant 0 : index
    %c38 = arith.constant 38 : index
    %47 = vector.load %arg1[%c0_42, %c0_43, %c38] : memref<1x32x326xbf16, #tpu.memory_space<vmem>>, vector<1x32x288xbf16>
    %48 = vector.shape_cast %47 : vector<1x32x288xbf16> to vector<32x288xbf16>
    %c8 = arith.constant 8 : index
    %c0_44 = arith.constant 0 : index
    %c0_45 = arith.constant 0 : index
    %49 = vector.load %arg2[%c8, %c0_44, %c0_45] : memref<9x8x32xbf16, #tpu.memory_space<vmem>>, vector<1x8x32xbf16>
    %50 = vector.shape_cast %49 : vector<1x8x32xbf16> to vector<8x32xbf16>
    %cst_46 = arith.constant dense<0.000000e+00> : vector<8x288xf32>
    %51 = tpu.matmul %50, %48, %cst_46 {dimension_numbers = #tpu.dot_dimension_numbers<[1], [0], [0], [1], [0, 0, 1, 1], [], []>} : vector<8x32xbf16>, vector<32x288xbf16>, vector<8x288xf32> -> vector<8x288xf32>
    %52 = arith.addf %46, %51 : vector<8x288xf32>
    %c0_47 = arith.constant 0 : index
    %c0_48 = arith.constant 0 : index
    %53 = vector.load %arg3[%c0_47, %c0_48] : memref<1x288xf32, #tpu.memory_space<vmem>>, vector<1x288xf32>
    %54 = vector.broadcast %53 : vector<1x288xf32> to vector<8x288xf32>
    %55 = arith.mulf %52, %54 : vector<8x288xf32>
    %cst_49 = arith.constant dense<0.000000e+00> : vector<8xf32>
    %56 = vector.multi_reduction <add>, %55, %cst_49 [1] : vector<8x288xf32> to vector<8xf32>
    %57 = vector.shape_cast %56 : vector<8xf32> to vector<8x1xf32>
    %cst_50 = arith.constant 3.906250e-03 : f32
    %58 = vector.broadcast %cst_50 : f32 to vector<8x1xf32>
    %59 = arith.mulf %57, %58 : vector<8x1xf32>
    %60 = vector.broadcast %59 : vector<8x1xf32> to vector<8x288xf32>
    %61 = arith.subf %52, %60 : vector<8x288xf32>
    %62 = vector.broadcast %53 : vector<1x288xf32> to vector<8x288xf32>
    %63 = arith.mulf %61, %62 : vector<8x288xf32>
    %64 = arith.mulf %63, %63 : vector<8x288xf32>
    %cst_51 = arith.constant dense<0.000000e+00> : vector<8xf32>
    %65 = vector.multi_reduction <add>, %64, %cst_51 [1] : vector<8x288xf32> to vector<8xf32>
    %66 = vector.shape_cast %65 : vector<8xf32> to vector<8x1xf32>
    %cst_52 = arith.constant 3.906250e-03 : f32
    %67 = vector.broadcast %cst_52 : f32 to vector<8x1xf32>
    %68 = arith.mulf %66, %67 : vector<8x1xf32>
    %69 = vector.broadcast %59 : vector<8x1xf32> to vector<8x288xf32>
    %70 = arith.subf %52, %69 : vector<8x288xf32>
    %cst_53 = arith.constant 9.99999974E-6 : f32
    %71 = vector.broadcast %cst_53 : f32 to vector<8x1xf32>
    %72 = arith.addf %68, %71 : vector<8x1xf32>
    %73 = math.rsqrt %72 : vector<8x1xf32>
    %74 = vector.broadcast %73 : vector<8x1xf32> to vector<8x288xf32>
    %75 = arith.mulf %70, %74 : vector<8x288xf32>
    %c0_54 = arith.constant 0 : index
    %c0_55 = arith.constant 0 : index
    %76 = vector.load %arg4[%c0_54, %c0_55] : memref<8x1xf32, #tpu.memory_space<vmem>>, vector<8x1xf32>
    %77 = vector.broadcast %76 : vector<8x1xf32> to vector<8x288xf32>
    %78 = arith.mulf %75, %77 : vector<8x288xf32>
    %c0_56 = arith.constant 0 : index
    %c0_57 = arith.constant 0 : index
    %79 = vector.load %arg5[%c0_56, %c0_57] : memref<8x1xf32, #tpu.memory_space<vmem>>, vector<8x1xf32>
    %80 = vector.broadcast %79 : vector<8x1xf32> to vector<8x288xf32>
    %81 = arith.addf %78, %80 : vector<8x288xf32>
    %cst_58 = arith.constant 0.000000e+00 : f32
    %82 = vector.broadcast %cst_58 : f32 to vector<8x288xf32>
    %83 = arith.cmpf oge, %81, %82 : vector<8x288xf32>
    %cst_59 = arith.constant 2.000000e-01 : f32
    %84 = vector.broadcast %cst_59 : f32 to vector<8x288xf32>
    %85 = arith.mulf %84, %81 : vector<8x288xf32>
    %86 = arith.select %83, %81, %85 : vector<8x288xi1>, vector<8x288xf32>
    %87 = arith.truncf %86 : vector<8x288xf32> to vector<8x288xbf16>
    %c0_60 = arith.constant 0 : index
    %c0_61 = arith.constant 0 : index
    %c0_62 = arith.constant 0 : index
    %88 = vector.load %arg6[%c0_60, %c0_61, %c0_62] : memref<1x8x288xbf16, #tpu.memory_space<vmem>>, vector<1x8x288xbf16>
    %89 = vector.shape_cast %88 : vector<1x8x288xbf16> to vector<8x288xbf16>
    %90 = vector.shape_cast %87 : vector<8x288xbf16> to vector<1x8x288xbf16>
    tpu.vector_store %arg6[%c0_60, %c0_61, %c0_62], %90 {strides = array<i32>} : memref<1x8x288xbf16, #tpu.memory_space<vmem>>, vector<1x8x288xbf16>,
    return
  }
  func.func @transform_0(%arg0: i32) -> (i32, i32, i32) {
    %c0_i32 = arith.constant 0 : i32
    %c0_i32_0 = arith.constant 0 : i32
    %c0_i32_1 = arith.constant 0 : i32
    return %arg0, %c0_i32, %c0_i32_0 : i32, i32, i32
  }
  func.func @transform_1(%arg0: i32) -> (i32, i32, i32) {
    %c0_i32 = arith.constant 0 : i32
    %c0_i32_0 = arith.constant 0 : i32
    %c0_i32_1 = arith.constant 0 : i32
    %c0_i32_2 = arith.constant 0 : i32
    return %c0_i32, %c0_i32_0, %c0_i32_1 : i32, i32, i32
  }
  func.func @transform_2(%arg0: i32) -> (i32, i32) {
    %c0_i32 = arith.constant 0 : i32
    %c0_i32_0 = arith.constant 0 : i32
    %c0_i32_1 = arith.constant 0 : i32
    return %c0_i32, %c0_i32_0 : i32, i32
  }
  func.func @transform_3(%arg0: i32) -> (i32, i32) {
    %c0_i32 = arith.constant 0 : i32
    %c0_i32_0 = arith.constant 0 : i32
    %c0_i32_1 = arith.constant 0 : i32
    return %c0_i32, %c0_i32_0 : i32, i32
  }
  func.func @transform_4(%arg0: i32) -> (i32, i32) {
    %c0_i32 = arith.constant 0 : i32
    %c0_i32_0 = arith.constant 0 : i32
    %c0_i32_1 = arith.constant 0 : i32
    return %c0_i32, %c0_i32_0 : i32, i32
  }
  func.func @transform_5(%arg0: i32) -> (i32, i32, i32) {
    %c0_i32 = arith.constant 0 : i32
    %c0_i32_0 = arith.constant 0 : i32
    %c0_i32_1 = arith.constant 0 : i32
    return %arg0, %c0_i32, %c0_i32_0 : i32, i32, i32
  }
}

module attributes {stable_mosaic.version = 11 : i64} {
  func.func @kernel(%arg0: i32, %arg1: memref<1x16x326xbf16, #tpu.memory_space<vmem>>, %arg2: memref<9x8x16xbf16, #tpu.memory_space<vmem>>, %arg3: memref<1x288xf32, #tpu.memory_space<vmem>>, %arg4: memref<8x1xf32, #tpu.memory_space<vmem>>, %arg5: memref<8x1xf32, #tpu.memory_space<vmem>>, %arg6: memref<1x8x288xbf16, #tpu.memory_space<vmem>>) attributes {dimension_semantics = [#tpu.dimension_semantics<parallel>], iteration_bounds = array<i64: 2>, scalar_prefetch = 0 : i64, scratch_operands = 0 : i64, tpu.core_type = #tpu.core_type<tc>, window_params = [{transform_indices = @transform_0, window_bounds = array<i64: 1, 16, 326>}, {pipeline_mode = #tpu.pipeline_mode<synchronous>, transform_indices = @transform_1, window_bounds = array<i64: 9, 8, 16>}, {pipeline_mode = #tpu.pipeline_mode<synchronous>, transform_indices = @transform_2, window_bounds = array<i64: 1, 288>}, {pipeline_mode = #tpu.pipeline_mode<synchronous>, transform_indices = @transform_3, window_bounds = array<i64: 8, 1>}, {pipeline_mode = #tpu.pipeline_mode<synchronous>, transform_indices = @transform_4, window_bounds = array<i64: 8, 1>}, {transform_indices = @transform_5, window_bounds = array<i64: 1, 8, 288>}]} {
    %c0 = arith.constant 0 : index
    %c0_0 = arith.constant 0 : index
    %c0_1 = arith.constant 0 : index
    %0 = vector.load %arg1[%c0, %c0_0, %c0_1] : memref<1x16x326xbf16, #tpu.memory_space<vmem>>, vector<1x16x288xbf16>
    %1 = vector.shape_cast %0 : vector<1x16x288xbf16> to vector<16x288xbf16>
    %c0_2 = arith.constant 0 : index
    %c0_3 = arith.constant 0 : index
    %c0_4 = arith.constant 0 : index
    %2 = vector.load %arg2[%c0_2, %c0_3, %c0_4] : memref<9x8x16xbf16, #tpu.memory_space<vmem>>, vector<1x8x16xbf16>
    %3 = vector.shape_cast %2 : vector<1x8x16xbf16> to vector<8x16xbf16>
    %cst = arith.constant dense<0.000000e+00> : vector<8x288xf32>
    %4 = tpu.matmul %3, %1, %cst {dimension_numbers = #tpu.dot_dimension_numbers<[1], [0], [0], [1], [0, 0, 1, 1], [], []>} : vector<8x16xbf16>, vector<16x288xbf16>, vector<8x288xf32> -> vector<8x288xf32>
    %c0_5 = arith.constant 0 : index
    %c0_6 = arith.constant 0 : index
    %c1 = arith.constant 1 : index
    %5 = vector.load %arg1[%c0_5, %c0_6, %c1] : memref<1x16x326xbf16, #tpu.memory_space<vmem>>, vector<1x16x288xbf16>
    %6 = vector.shape_cast %5 : vector<1x16x288xbf16> to vector<16x288xbf16>
    %c1_7 = arith.constant 1 : index
    %c0_8 = arith.constant 0 : index
    %c0_9 = arith.constant 0 : index
    %7 = vector.load %arg2[%c1_7, %c0_8, %c0_9] : memref<9x8x16xbf16, #tpu.memory_space<vmem>>, vector<1x8x16xbf16>
    %8 = vector.shape_cast %7 : vector<1x8x16xbf16> to vector<8x16xbf16>
    %cst_10 = arith.constant dense<0.000000e+00> : vector<8x288xf32>
    %9 = tpu.matmul %8, %6, %cst_10 {dimension_numbers = #tpu.dot_dimension_numbers<[1], [0], [0], [1], [0, 0, 1, 1], [], []>} : vector<8x16xbf16>, vector<16x288xbf16>, vector<8x288xf32> -> vector<8x288xf32>
    %10 = arith.addf %4, %9 : vector<8x288xf32>
    %c0_11 = arith.constant 0 : index
    %c0_12 = arith.constant 0 : index
    %c2 = arith.constant 2 : index
    %11 = vector.load %arg1[%c0_11, %c0_12, %c2] : memref<1x16x326xbf16, #tpu.memory_space<vmem>>, vector<1x16x288xbf16>
    %12 = vector.shape_cast %11 : vector<1x16x288xbf16> to vector<16x288xbf16>
    %c2_13 = arith.constant 2 : index
    %c0_14 = arith.constant 0 : index
    %c0_15 = arith.constant 0 : index
    %13 = vector.load %arg2[%c2_13, %c0_14, %c0_15] : memref<9x8x16xbf16, #tpu.memory_space<vmem>>, vector<1x8x16xbf16>
    %14 = vector.shape_cast %13 : vector<1x8x16xbf16> to vector<8x16xbf16>
    %cst_16 = arith.constant dense<0.000000e+00> : vector<8x288xf32>
    %15 = tpu.matmul %14, %12, %cst_16 {dimension_numbers = #tpu.dot_dimension_numbers<[1], [0], [0], [1], [0, 0, 1, 1], [], []>} : vector<8x16xbf16>, vector<16x288xbf16>, vector<8x288xf32> -> vector<8x288xf32>
    %16 = arith.addf %10, %15 : vector<8x288xf32>
    %c0_17 = arith.constant 0 : index
    %c0_18 = arith.constant 0 : index
    %c18 = arith.constant 18 : index
    %17 = vector.load %arg1[%c0_17, %c0_18, %c18] : memref<1x16x326xbf16, #tpu.memory_space<vmem>>, vector<1x16x288xbf16>
    %18 = vector.shape_cast %17 : vector<1x16x288xbf16> to vector<16x288xbf16>
    %c3 = arith.constant 3 : index
    %c0_19 = arith.constant 0 : index
    %c0_20 = arith.constant 0 : index
    %19 = vector.load %arg2[%c3, %c0_19, %c0_20] : memref<9x8x16xbf16, #tpu.memory_space<vmem>>, vector<1x8x16xbf16>
    %20 = vector.shape_cast %19 : vector<1x8x16xbf16> to vector<8x16xbf16>
    %cst_21 = arith.constant dense<0.000000e+00> : vector<8x288xf32>
    %21 = tpu.matmul %20, %18, %cst_21 {dimension_numbers = #tpu.dot_dimension_numbers<[1], [0], [0], [1], [0, 0, 1, 1], [], []>} : vector<8x16xbf16>, vector<16x288xbf16>, vector<8x288xf32> -> vector<8x288xf32>
    %22 = arith.addf %16, %21 : vector<8x288xf32>
    %c0_22 = arith.constant 0 : index
    %c0_23 = arith.constant 0 : index
    %c19 = arith.constant 19 : index
    %23 = vector.load %arg1[%c0_22, %c0_23, %c19] : memref<1x16x326xbf16, #tpu.memory_space<vmem>>, vector<1x16x288xbf16>
    %24 = vector.shape_cast %23 : vector<1x16x288xbf16> to vector<16x288xbf16>
    %c4 = arith.constant 4 : index
    %c0_24 = arith.constant 0 : index
    %c0_25 = arith.constant 0 : index
    %25 = vector.load %arg2[%c4, %c0_24, %c0_25] : memref<9x8x16xbf16, #tpu.memory_space<vmem>>, vector<1x8x16xbf16>
    %26 = vector.shape_cast %25 : vector<1x8x16xbf16> to vector<8x16xbf16>
    %cst_26 = arith.constant dense<0.000000e+00> : vector<8x288xf32>
    %27 = tpu.matmul %26, %24, %cst_26 {dimension_numbers = #tpu.dot_dimension_numbers<[1], [0], [0], [1], [0, 0, 1, 1], [], []>} : vector<8x16xbf16>, vector<16x288xbf16>, vector<8x288xf32> -> vector<8x288xf32>
    %28 = arith.addf %22, %27 : vector<8x288xf32>
    %c0_27 = arith.constant 0 : index
    %c0_28 = arith.constant 0 : index
    %c20 = arith.constant 20 : index
    %29 = vector.load %arg1[%c0_27, %c0_28, %c20] : memref<1x16x326xbf16, #tpu.memory_space<vmem>>, vector<1x16x288xbf16>
    %30 = vector.shape_cast %29 : vector<1x16x288xbf16> to vector<16x288xbf16>
    %c5 = arith.constant 5 : index
    %c0_29 = arith.constant 0 : index
    %c0_30 = arith.constant 0 : index
    %31 = vector.load %arg2[%c5, %c0_29, %c0_30] : memref<9x8x16xbf16, #tpu.memory_space<vmem>>, vector<1x8x16xbf16>
    %32 = vector.shape_cast %31 : vector<1x8x16xbf16> to vector<8x16xbf16>
    %cst_31 = arith.constant dense<0.000000e+00> : vector<8x288xf32>
    %33 = tpu.matmul %32, %30, %cst_31 {dimension_numbers = #tpu.dot_dimension_numbers<[1], [0], [0], [1], [0, 0, 1, 1], [], []>} : vector<8x16xbf16>, vector<16x288xbf16>, vector<8x288xf32> -> vector<8x288xf32>
    %34 = arith.addf %28, %33 : vector<8x288xf32>
    %c0_32 = arith.constant 0 : index
    %c0_33 = arith.constant 0 : index
    %c36 = arith.constant 36 : index
    %35 = vector.load %arg1[%c0_32, %c0_33, %c36] : memref<1x16x326xbf16, #tpu.memory_space<vmem>>, vector<1x16x288xbf16>
    %36 = vector.shape_cast %35 : vector<1x16x288xbf16> to vector<16x288xbf16>
    %c6 = arith.constant 6 : index
    %c0_34 = arith.constant 0 : index
    %c0_35 = arith.constant 0 : index
    %37 = vector.load %arg2[%c6, %c0_34, %c0_35] : memref<9x8x16xbf16, #tpu.memory_space<vmem>>, vector<1x8x16xbf16>
    %38 = vector.shape_cast %37 : vector<1x8x16xbf16> to vector<8x16xbf16>
    %cst_36 = arith.constant dense<0.000000e+00> : vector<8x288xf32>
    %39 = tpu.matmul %38, %36, %cst_36 {dimension_numbers = #tpu.dot_dimension_numbers<[1], [0], [0], [1], [0, 0, 1, 1], [], []>} : vector<8x16xbf16>, vector<16x288xbf16>, vector<8x288xf32> -> vector<8x288xf32>
    %40 = arith.addf %34, %39 : vector<8x288xf32>
    %c0_37 = arith.constant 0 : index
    %c0_38 = arith.constant 0 : index
    %c37 = arith.constant 37 : index
    %41 = vector.load %arg1[%c0_37, %c0_38, %c37] : memref<1x16x326xbf16, #tpu.memory_space<vmem>>, vector<1x16x288xbf16>
    %42 = vector.shape_cast %41 : vector<1x16x288xbf16> to vector<16x288xbf16>
    %c7 = arith.constant 7 : index
    %c0_39 = arith.constant 0 : index
    %c0_40 = arith.constant 0 : index
    %43 = vector.load %arg2[%c7, %c0_39, %c0_40] : memref<9x8x16xbf16, #tpu.memory_space<vmem>>, vector<1x8x16xbf16>
    %44 = vector.shape_cast %43 : vector<1x8x16xbf16> to vector<8x16xbf16>
    %cst_41 = arith.constant dense<0.000000e+00> : vector<8x288xf32>
    %45 = tpu.matmul %44, %42, %cst_41 {dimension_numbers = #tpu.dot_dimension_numbers<[1], [0], [0], [1], [0, 0, 1, 1], [], []>} : vector<8x16xbf16>, vector<16x288xbf16>, vector<8x288xf32> -> vector<8x288xf32>
    %46 = arith.addf %40, %45 : vector<8x288xf32>
    %c0_42 = arith.constant 0 : index
    %c0_43 = arith.constant 0 : index
    %c38 = arith.constant 38 : index
    %47 = vector.load %arg1[%c0_42, %c0_43, %c38] : memref<1x16x326xbf16, #tpu.memory_space<vmem>>, vector<1x16x288xbf16>
    %48 = vector.shape_cast %47 : vector<1x16x288xbf16> to vector<16x288xbf16>
    %c8 = arith.constant 8 : index
    %c0_44 = arith.constant 0 : index
    %c0_45 = arith.constant 0 : index
    %49 = vector.load %arg2[%c8, %c0_44, %c0_45] : memref<9x8x16xbf16, #tpu.memory_space<vmem>>, vector<1x8x16xbf16>
    %50 = vector.shape_cast %49 : vector<1x8x16xbf16> to vector<8x16xbf16>
    %cst_46 = arith.constant dense<0.000000e+00> : vector<8x288xf32>
    %51 = tpu.matmul %50, %48, %cst_46 {dimension_numbers = #tpu.dot_dimension_numbers<[1], [0], [0], [1], [0, 0, 1, 1], [], []>} : vector<8x16xbf16>, vector<16x288xbf16>, vector<8x288xf32> -> vector<8x288xf32>
    %52 = arith.addf %46, %51 : vector<8x288xf32>
    %c0_47 = arith.constant 0 : index
    %c0_48 = arith.constant 0 : index
    %53 = vector.load %arg3[%c0_47, %c0_48] : memref<1x288xf32, #tpu.memory_space<vmem>>, vector<1x288xf32>
    %54 = vector.broadcast %53 : vector<1x288xf32> to vector<8x288xf32>
    %55 = arith.mulf %52, %54 : vector<8x288xf32>
    %cst_49 = arith.constant dense<0.000000e+00> : vector<8xf32>
    %56 = vector.multi_reduction <add>, %55, %cst_49 [1] : vector<8x288xf32> to vector<8xf32>
    %57 = vector.shape_cast %56 : vector<8xf32> to vector<8x1xf32>
    %cst_50 = arith.constant 3.906250e-03 : f32
    %58 = vector.broadcast %cst_50 : f32 to vector<8x1xf32>
    %59 = arith.mulf %57, %58 : vector<8x1xf32>
    %60 = vector.broadcast %59 : vector<8x1xf32> to vector<8x288xf32>
    %61 = arith.subf %52, %60 : vector<8x288xf32>
    %62 = vector.broadcast %53 : vector<1x288xf32> to vector<8x288xf32>
    %63 = arith.mulf %61, %62 : vector<8x288xf32>
    %64 = arith.mulf %63, %63 : vector<8x288xf32>
    %cst_51 = arith.constant dense<0.000000e+00> : vector<8xf32>
    %65 = vector.multi_reduction <add>, %64, %cst_51 [1] : vector<8x288xf32> to vector<8xf32>
    %66 = vector.shape_cast %65 : vector<8xf32> to vector<8x1xf32>
    %cst_52 = arith.constant 3.906250e-03 : f32
    %67 = vector.broadcast %cst_52 : f32 to vector<8x1xf32>
    %68 = arith.mulf %66, %67 : vector<8x1xf32>
    %69 = vector.broadcast %59 : vector<8x1xf32> to vector<8x288xf32>
    %70 = arith.subf %52, %69 : vector<8x288xf32>
    %cst_53 = arith.constant 9.99999974E-6 : f32
    %71 = vector.broadcast %cst_53 : f32 to vector<8x1xf32>
    %72 = arith.addf %68, %71 : vector<8x1xf32>
    %73 = math.rsqrt %72 : vector<8x1xf32>
    %74 = vector.broadcast %73 : vector<8x1xf32> to vector<8x288xf32>
    %75 = arith.mulf %70, %74 : vector<8x288xf32>
    %c0_54 = arith.constant 0 : index
    %c0_55 = arith.constant 0 : index
    %76 = vector.load %arg4[%c0_54, %c0_55] : memref<8x1xf32, #tpu.memory_space<vmem>>, vector<8x1xf32>
    %77 = vector.broadcast %76 : vector<8x1xf32> to vector<8x288xf32>
    %78 = arith.mulf %75, %77 : vector<8x288xf32>
    %c0_56 = arith.constant 0 : index
    %c0_57 = arith.constant 0 : index
    %79 = vector.load %arg5[%c0_56, %c0_57] : memref<8x1xf32, #tpu.memory_space<vmem>>, vector<8x1xf32>
    %80 = vector.broadcast %79 : vector<8x1xf32> to vector<8x288xf32>
    %81 = arith.addf %78, %80 : vector<8x288xf32>
    %cst_58 = arith.constant 0.000000e+00 : f32
    %82 = vector.broadcast %cst_58 : f32 to vector<8x288xf32>
    %83 = arith.cmpf oge, %81, %82 : vector<8x288xf32>
    %cst_59 = arith.constant 2.000000e-01 : f32
    %84 = vector.broadcast %cst_59 : f32 to vector<8x288xf32>
    %85 = arith.mulf %84, %81 : vector<8x288xf32>
    %86 = arith.select %83, %81, %85 : vector<8x288xi1>, vector<8x288xf32>
    %87 = arith.truncf %86 : vector<8x288xf32> to vector<8x288xbf16>
    %c0_60 = arith.constant 0 : index
    %c0_61 = arith.constant 0 : index
    %c0_62 = arith.constant 0 : index
    %88 = vector.load %arg6[%c0_60, %c0_61, %c0_62] : memref<1x8x288xbf16, #tpu.memory_space<vmem>>, vector<1x8x288xbf16>
    %89 = vector.shape_cast %88 : vector<1x8x288xbf16> to vector<8x288xbf16>
    %90 = vector.shape_cast %87 : vector<8x288xbf16> to vector<1x8x288xbf16>
    tpu.vector_store %arg6[%c0_60, %c0_61, %c0_62], %90 {strides = array<i32>} : memref<1x8x288xbf16, #tpu.memory_space<vmem>>, vector<1x8x288xbf16>,
    return
  }
  func.func @transform_0(%arg0: i32) -> (i32, i32, i32) {
    %c0_i32 = arith.constant 0 : i32
    %c0_i32_0 = arith.constant 0 : i32
    %c0_i32_1 = arith.constant 0 : i32
    return %arg0, %c0_i32, %c0_i32_0 : i32, i32, i32
  }
  func.func @transform_1(%arg0: i32) -> (i32, i32, i32) {
    %c0_i32 = arith.constant 0 : i32
    %c0_i32_0 = arith.constant 0 : i32
    %c0_i32_1 = arith.constant 0 : i32
    %c0_i32_2 = arith.constant 0 : i32
    return %c0_i32, %c0_i32_0, %c0_i32_1 : i32, i32, i32
  }
  func.func @transform_2(%arg0: i32) -> (i32, i32) {
    %c0_i32 = arith.constant 0 : i32
    %c0_i32_0 = arith.constant 0 : i32
    %c0_i32_1 = arith.constant 0 : i32
    return %c0_i32, %c0_i32_0 : i32, i32
  }
  func.func @transform_3(%arg0: i32) -> (i32, i32) {
    %c0_i32 = arith.constant 0 : i32
    %c0_i32_0 = arith.constant 0 : i32
    %c0_i32_1 = arith.constant 0 : i32
    return %c0_i32, %c0_i32_0 : i32, i32
  }
  func.func @transform_4(%arg0: i32) -> (i32, i32) {
    %c0_i32 = arith.constant 0 : i32
    %c0_i32_0 = arith.constant 0 : i32
    %c0_i32_1 = arith.constant 0 : i32
    return %c0_i32, %c0_i32_0 : i32, i32
  }
  func.func @transform_5(%arg0: i32) -> (i32, i32, i32) {
    %c0_i32 = arith.constant 0 : i32
    %c0_i32_0 = arith.constant 0 : i32
    %c0_i32_1 = arith.constant 0 : i32
    return %arg0, %c0_i32, %c0_i32_0 : i32, i32, i32
  }
}

module attributes {stable_mosaic.version = 11 : i64} {
  func.func @kernel(%arg0: i32, %arg1: memref<1x16x326xbf16, #tpu.memory_space<vmem>>, %arg2: memref<9x3x16xbf16, #tpu.memory_space<vmem>>, %arg3: memref<3x1xf32, #tpu.memory_space<vmem>>, %arg4: memref<1x3x288xf32, #tpu.memory_space<vmem>>) attributes {dimension_semantics = [#tpu.dimension_semantics<parallel>], iteration_bounds = array<i64: 2>, scalar_prefetch = 0 : i64, scratch_operands = 0 : i64, tpu.core_type = #tpu.core_type<tc>, window_params = [{transform_indices = @transform_0, window_bounds = array<i64: 1, 16, 326>}, {pipeline_mode = #tpu.pipeline_mode<synchronous>, transform_indices = @transform_1, window_bounds = array<i64: 9, 3, 16>}, {pipeline_mode = #tpu.pipeline_mode<synchronous>, transform_indices = @transform_2, window_bounds = array<i64: 3, 1>}, {transform_indices = @transform_3, window_bounds = array<i64: 1, 3, 288>}]} {
    %c0 = arith.constant 0 : index
    %c0_0 = arith.constant 0 : index
    %c0_1 = arith.constant 0 : index
    %0 = vector.load %arg1[%c0, %c0_0, %c0_1] : memref<1x16x326xbf16, #tpu.memory_space<vmem>>, vector<1x16x288xbf16>
    %1 = vector.shape_cast %0 : vector<1x16x288xbf16> to vector<16x288xbf16>
    %c0_2 = arith.constant 0 : index
    %c0_3 = arith.constant 0 : index
    %c0_4 = arith.constant 0 : index
    %2 = vector.load %arg2[%c0_2, %c0_3, %c0_4] : memref<9x3x16xbf16, #tpu.memory_space<vmem>>, vector<1x3x16xbf16>
    %3 = vector.shape_cast %2 : vector<1x3x16xbf16> to vector<3x16xbf16>
    %cst = arith.constant dense<0.000000e+00> : vector<3x288xf32>
    %4 = tpu.matmul %3, %1, %cst {dimension_numbers = #tpu.dot_dimension_numbers<[1], [0], [0], [1], [0, 0, 1, 1], [], []>} : vector<3x16xbf16>, vector<16x288xbf16>, vector<3x288xf32> -> vector<3x288xf32>
    %c0_5 = arith.constant 0 : index
    %c0_6 = arith.constant 0 : index
    %c1 = arith.constant 1 : index
    %5 = vector.load %arg1[%c0_5, %c0_6, %c1] : memref<1x16x326xbf16, #tpu.memory_space<vmem>>, vector<1x16x288xbf16>
    %6 = vector.shape_cast %5 : vector<1x16x288xbf16> to vector<16x288xbf16>
    %c1_7 = arith.constant 1 : index
    %c0_8 = arith.constant 0 : index
    %c0_9 = arith.constant 0 : index
    %7 = vector.load %arg2[%c1_7, %c0_8, %c0_9] : memref<9x3x16xbf16, #tpu.memory_space<vmem>>, vector<1x3x16xbf16>
    %8 = vector.shape_cast %7 : vector<1x3x16xbf16> to vector<3x16xbf16>
    %cst_10 = arith.constant dense<0.000000e+00> : vector<3x288xf32>
    %9 = tpu.matmul %8, %6, %cst_10 {dimension_numbers = #tpu.dot_dimension_numbers<[1], [0], [0], [1], [0, 0, 1, 1], [], []>} : vector<3x16xbf16>, vector<16x288xbf16>, vector<3x288xf32> -> vector<3x288xf32>
    %10 = arith.addf %4, %9 : vector<3x288xf32>
    %c0_11 = arith.constant 0 : index
    %c0_12 = arith.constant 0 : index
    %c2 = arith.constant 2 : index
    %11 = vector.load %arg1[%c0_11, %c0_12, %c2] : memref<1x16x326xbf16, #tpu.memory_space<vmem>>, vector<1x16x288xbf16>
    %12 = vector.shape_cast %11 : vector<1x16x288xbf16> to vector<16x288xbf16>
    %c2_13 = arith.constant 2 : index
    %c0_14 = arith.constant 0 : index
    %c0_15 = arith.constant 0 : index
    %13 = vector.load %arg2[%c2_13, %c0_14, %c0_15] : memref<9x3x16xbf16, #tpu.memory_space<vmem>>, vector<1x3x16xbf16>
    %14 = vector.shape_cast %13 : vector<1x3x16xbf16> to vector<3x16xbf16>
    %cst_16 = arith.constant dense<0.000000e+00> : vector<3x288xf32>
    %15 = tpu.matmul %14, %12, %cst_16 {dimension_numbers = #tpu.dot_dimension_numbers<[1], [0], [0], [1], [0, 0, 1, 1], [], []>} : vector<3x16xbf16>, vector<16x288xbf16>, vector<3x288xf32> -> vector<3x288xf32>
    %16 = arith.addf %10, %15 : vector<3x288xf32>
    %c0_17 = arith.constant 0 : index
    %c0_18 = arith.constant 0 : index
    %c18 = arith.constant 18 : index
    %17 = vector.load %arg1[%c0_17, %c0_18, %c18] : memref<1x16x326xbf16, #tpu.memory_space<vmem>>, vector<1x16x288xbf16>
    %18 = vector.shape_cast %17 : vector<1x16x288xbf16> to vector<16x288xbf16>
    %c3 = arith.constant 3 : index
    %c0_19 = arith.constant 0 : index
    %c0_20 = arith.constant 0 : index
    %19 = vector.load %arg2[%c3, %c0_19, %c0_20] : memref<9x3x16xbf16, #tpu.memory_space<vmem>>, vector<1x3x16xbf16>
    %20 = vector.shape_cast %19 : vector<1x3x16xbf16> to vector<3x16xbf16>
    %cst_21 = arith.constant dense<0.000000e+00> : vector<3x288xf32>
    %21 = tpu.matmul %20, %18, %cst_21 {dimension_numbers = #tpu.dot_dimension_numbers<[1], [0], [0], [1], [0, 0, 1, 1], [], []>} : vector<3x16xbf16>, vector<16x288xbf16>, vector<3x288xf32> -> vector<3x288xf32>
    %22 = arith.addf %16, %21 : vector<3x288xf32>
    %c0_22 = arith.constant 0 : index
    %c0_23 = arith.constant 0 : index
    %c19 = arith.constant 19 : index
    %23 = vector.load %arg1[%c0_22, %c0_23, %c19] : memref<1x16x326xbf16, #tpu.memory_space<vmem>>, vector<1x16x288xbf16>
    %24 = vector.shape_cast %23 : vector<1x16x288xbf16> to vector<16x288xbf16>
    %c4 = arith.constant 4 : index
    %c0_24 = arith.constant 0 : index
    %c0_25 = arith.constant 0 : index
    %25 = vector.load %arg2[%c4, %c0_24, %c0_25] : memref<9x3x16xbf16, #tpu.memory_space<vmem>>, vector<1x3x16xbf16>
    %26 = vector.shape_cast %25 : vector<1x3x16xbf16> to vector<3x16xbf16>
    %cst_26 = arith.constant dense<0.000000e+00> : vector<3x288xf32>
    %27 = tpu.matmul %26, %24, %cst_26 {dimension_numbers = #tpu.dot_dimension_numbers<[1], [0], [0], [1], [0, 0, 1, 1], [], []>} : vector<3x16xbf16>, vector<16x288xbf16>, vector<3x288xf32> -> vector<3x288xf32>
    %28 = arith.addf %22, %27 : vector<3x288xf32>
    %c0_27 = arith.constant 0 : index
    %c0_28 = arith.constant 0 : index
    %c20 = arith.constant 20 : index
    %29 = vector.load %arg1[%c0_27, %c0_28, %c20] : memref<1x16x326xbf16, #tpu.memory_space<vmem>>, vector<1x16x288xbf16>
    %30 = vector.shape_cast %29 : vector<1x16x288xbf16> to vector<16x288xbf16>
    %c5 = arith.constant 5 : index
    %c0_29 = arith.constant 0 : index
    %c0_30 = arith.constant 0 : index
    %31 = vector.load %arg2[%c5, %c0_29, %c0_30] : memref<9x3x16xbf16, #tpu.memory_space<vmem>>, vector<1x3x16xbf16>
    %32 = vector.shape_cast %31 : vector<1x3x16xbf16> to vector<3x16xbf16>
    %cst_31 = arith.constant dense<0.000000e+00> : vector<3x288xf32>
    %33 = tpu.matmul %32, %30, %cst_31 {dimension_numbers = #tpu.dot_dimension_numbers<[1], [0], [0], [1], [0, 0, 1, 1], [], []>} : vector<3x16xbf16>, vector<16x288xbf16>, vector<3x288xf32> -> vector<3x288xf32>
    %34 = arith.addf %28, %33 : vector<3x288xf32>
    %c0_32 = arith.constant 0 : index
    %c0_33 = arith.constant 0 : index
    %c36 = arith.constant 36 : index
    %35 = vector.load %arg1[%c0_32, %c0_33, %c36] : memref<1x16x326xbf16, #tpu.memory_space<vmem>>, vector<1x16x288xbf16>
    %36 = vector.shape_cast %35 : vector<1x16x288xbf16> to vector<16x288xbf16>
    %c6 = arith.constant 6 : index
    %c0_34 = arith.constant 0 : index
    %c0_35 = arith.constant 0 : index
    %37 = vector.load %arg2[%c6, %c0_34, %c0_35] : memref<9x3x16xbf16, #tpu.memory_space<vmem>>, vector<1x3x16xbf16>
    %38 = vector.shape_cast %37 : vector<1x3x16xbf16> to vector<3x16xbf16>
    %cst_36 = arith.constant dense<0.000000e+00> : vector<3x288xf32>
    %39 = tpu.matmul %38, %36, %cst_36 {dimension_numbers = #tpu.dot_dimension_numbers<[1], [0], [0], [1], [0, 0, 1, 1], [], []>} : vector<3x16xbf16>, vector<16x288xbf16>, vector<3x288xf32> -> vector<3x288xf32>
    %40 = arith.addf %34, %39 : vector<3x288xf32>
    %c0_37 = arith.constant 0 : index
    %c0_38 = arith.constant 0 : index
    %c37 = arith.constant 37 : index
    %41 = vector.load %arg1[%c0_37, %c0_38, %c37] : memref<1x16x326xbf16, #tpu.memory_space<vmem>>, vector<1x16x288xbf16>
    %42 = vector.shape_cast %41 : vector<1x16x288xbf16> to vector<16x288xbf16>
    %c7 = arith.constant 7 : index
    %c0_39 = arith.constant 0 : index
    %c0_40 = arith.constant 0 : index
    %43 = vector.load %arg2[%c7, %c0_39, %c0_40] : memref<9x3x16xbf16, #tpu.memory_space<vmem>>, vector<1x3x16xbf16>
    %44 = vector.shape_cast %43 : vector<1x3x16xbf16> to vector<3x16xbf16>
    %cst_41 = arith.constant dense<0.000000e+00> : vector<3x288xf32>
    %45 = tpu.matmul %44, %42, %cst_41 {dimension_numbers = #tpu.dot_dimension_numbers<[1], [0], [0], [1], [0, 0, 1, 1], [], []>} : vector<3x16xbf16>, vector<16x288xbf16>, vector<3x288xf32> -> vector<3x288xf32>
    %46 = arith.addf %40, %45 : vector<3x288xf32>
    %c0_42 = arith.constant 0 : index
    %c0_43 = arith.constant 0 : index
    %c38 = arith.constant 38 : index
    %47 = vector.load %arg1[%c0_42, %c0_43, %c38] : memref<1x16x326xbf16, #tpu.memory_space<vmem>>, vector<1x16x288xbf16>
    %48 = vector.shape_cast %47 : vector<1x16x288xbf16> to vector<16x288xbf16>
    %c8 = arith.constant 8 : index
    %c0_44 = arith.constant 0 : index
    %c0_45 = arith.constant 0 : index
    %49 = vector.load %arg2[%c8, %c0_44, %c0_45] : memref<9x3x16xbf16, #tpu.memory_space<vmem>>, vector<1x3x16xbf16>
    %50 = vector.shape_cast %49 : vector<1x3x16xbf16> to vector<3x16xbf16>
    %cst_46 = arith.constant dense<0.000000e+00> : vector<3x288xf32>
    %51 = tpu.matmul %50, %48, %cst_46 {dimension_numbers = #tpu.dot_dimension_numbers<[1], [0], [0], [1], [0, 0, 1, 1], [], []>} : vector<3x16xbf16>, vector<16x288xbf16>, vector<3x288xf32> -> vector<3x288xf32>
    %52 = arith.addf %46, %51 : vector<3x288xf32>
    %c0_47 = arith.constant 0 : index
    %c0_48 = arith.constant 0 : index
    %53 = vector.load %arg3[%c0_47, %c0_48] : memref<3x1xf32, #tpu.memory_space<vmem>>, vector<3x1xf32>
    %54 = vector.broadcast %53 : vector<3x1xf32> to vector<3x288xf32>
    %55 = arith.addf %52, %54 : vector<3x288xf32>
    %56 = math.tanh %55 : vector<3x288xf32>
    %c0_49 = arith.constant 0 : index
    %c0_50 = arith.constant 0 : index
    %c0_51 = arith.constant 0 : index
    %57 = vector.load %arg4[%c0_49, %c0_50, %c0_51] : memref<1x3x288xf32, #tpu.memory_space<vmem>>, vector<1x3x288xf32>
    %58 = vector.shape_cast %57 : vector<1x3x288xf32> to vector<3x288xf32>
    %59 = vector.shape_cast %56 : vector<3x288xf32> to vector<1x3x288xf32>
    tpu.vector_store %arg4[%c0_49, %c0_50, %c0_51], %59 {strides = array<i32>} : memref<1x3x288xf32, #tpu.memory_space<vmem>>, vector<1x3x288xf32>,
    return
  }
  func.func @transform_0(%arg0: i32) -> (i32, i32, i32) {
    %c0_i32 = arith.constant 0 : i32
    %c0_i32_0 = arith.constant 0 : i32
    %c0_i32_1 = arith.constant 0 : i32
    return %arg0, %c0_i32, %c0_i32_0 : i32, i32, i32
  }
  func.func @transform_1(%arg0: i32) -> (i32, i32, i32) {
    %c0_i32 = arith.constant 0 : i32
    %c0_i32_0 = arith.constant 0 : i32
    %c0_i32_1 = arith.constant 0 : i32
    %c0_i32_2 = arith.constant 0 : i32
    return %c0_i32, %c0_i32_0, %c0_i32_1 : i32, i32, i32
  }
  func.func @transform_2(%arg0: i32) -> (i32, i32) {
    %c0_i32 = arith.constant 0 : i32
    %c0_i32_0 = arith.constant 0 : i32
    %c0_i32_1 = arith.constant 0 : i32
    return %c0_i32, %c0_i32_0 : i32, i32
  }
  func.func @transform_3(%arg0: i32) -> (i32, i32, i32) {
    %c0_i32 = arith.constant 0 : i32
    %c0_i32_0 = arith.constant 0 : i32
    %c0_i32_1 = arith.constant 0 : i32
    return %arg0, %c0_i32, %c0_i32_0 : i32, i32, i32
  }
}

module attributes {stable_mosaic.version = 11 : i64} {
  func.func @kernel(%arg0: i32, %arg1: memref<1x16x326xbf16, #tpu.memory_space<vmem>>, %arg2: memref<9x1x16xbf16, #tpu.memory_space<vmem>>, %arg3: memref<1x1xf32, #tpu.memory_space<vmem>>, %arg4: memref<1x1x288xf32, #tpu.memory_space<vmem>>) attributes {dimension_semantics = [#tpu.dimension_semantics<parallel>], iteration_bounds = array<i64: 2>, scalar_prefetch = 0 : i64, scratch_operands = 0 : i64, tpu.core_type = #tpu.core_type<tc>, window_params = [{transform_indices = @transform_0, window_bounds = array<i64: 1, 16, 326>}, {pipeline_mode = #tpu.pipeline_mode<synchronous>, transform_indices = @transform_1, window_bounds = array<i64: 9, 1, 16>}, {pipeline_mode = #tpu.pipeline_mode<synchronous>, transform_indices = @transform_2, window_bounds = array<i64: 1, 1>}, {transform_indices = @transform_3, window_bounds = array<i64: 1, 1, 288>}]} {
    %c0 = arith.constant 0 : index
    %c0_0 = arith.constant 0 : index
    %c0_1 = arith.constant 0 : index
    %0 = vector.load %arg1[%c0, %c0_0, %c0_1] : memref<1x16x326xbf16, #tpu.memory_space<vmem>>, vector<1x16x288xbf16>
    %1 = vector.shape_cast %0 : vector<1x16x288xbf16> to vector<16x288xbf16>
    %c0_2 = arith.constant 0 : index
    %c0_3 = arith.constant 0 : index
    %c0_4 = arith.constant 0 : index
    %2 = vector.load %arg2[%c0_2, %c0_3, %c0_4] : memref<9x1x16xbf16, #tpu.memory_space<vmem>>, vector<1x1x16xbf16>
    %3 = vector.shape_cast %2 : vector<1x1x16xbf16> to vector<1x16xbf16>
    %cst = arith.constant dense<0.000000e+00> : vector<1x288xf32>
    %4 = tpu.matmul %3, %1, %cst {dimension_numbers = #tpu.dot_dimension_numbers<[1], [0], [0], [1], [0, 0, 1, 1], [], []>} : vector<1x16xbf16>, vector<16x288xbf16>, vector<1x288xf32> -> vector<1x288xf32>
    %c0_5 = arith.constant 0 : index
    %c0_6 = arith.constant 0 : index
    %c1 = arith.constant 1 : index
    %5 = vector.load %arg1[%c0_5, %c0_6, %c1] : memref<1x16x326xbf16, #tpu.memory_space<vmem>>, vector<1x16x288xbf16>
    %6 = vector.shape_cast %5 : vector<1x16x288xbf16> to vector<16x288xbf16>
    %c1_7 = arith.constant 1 : index
    %c0_8 = arith.constant 0 : index
    %c0_9 = arith.constant 0 : index
    %7 = vector.load %arg2[%c1_7, %c0_8, %c0_9] : memref<9x1x16xbf16, #tpu.memory_space<vmem>>, vector<1x1x16xbf16>
    %8 = vector.shape_cast %7 : vector<1x1x16xbf16> to vector<1x16xbf16>
    %cst_10 = arith.constant dense<0.000000e+00> : vector<1x288xf32>
    %9 = tpu.matmul %8, %6, %cst_10 {dimension_numbers = #tpu.dot_dimension_numbers<[1], [0], [0], [1], [0, 0, 1, 1], [], []>} : vector<1x16xbf16>, vector<16x288xbf16>, vector<1x288xf32> -> vector<1x288xf32>
    %10 = arith.addf %4, %9 : vector<1x288xf32>
    %c0_11 = arith.constant 0 : index
    %c0_12 = arith.constant 0 : index
    %c2 = arith.constant 2 : index
    %11 = vector.load %arg1[%c0_11, %c0_12, %c2] : memref<1x16x326xbf16, #tpu.memory_space<vmem>>, vector<1x16x288xbf16>
    %12 = vector.shape_cast %11 : vector<1x16x288xbf16> to vector<16x288xbf16>
    %c2_13 = arith.constant 2 : index
    %c0_14 = arith.constant 0 : index
    %c0_15 = arith.constant 0 : index
    %13 = vector.load %arg2[%c2_13, %c0_14, %c0_15] : memref<9x1x16xbf16, #tpu.memory_space<vmem>>, vector<1x1x16xbf16>
    %14 = vector.shape_cast %13 : vector<1x1x16xbf16> to vector<1x16xbf16>
    %cst_16 = arith.constant dense<0.000000e+00> : vector<1x288xf32>
    %15 = tpu.matmul %14, %12, %cst_16 {dimension_numbers = #tpu.dot_dimension_numbers<[1], [0], [0], [1], [0, 0, 1, 1], [], []>} : vector<1x16xbf16>, vector<16x288xbf16>, vector<1x288xf32> -> vector<1x288xf32>
    %16 = arith.addf %10, %15 : vector<1x288xf32>
    %c0_17 = arith.constant 0 : index
    %c0_18 = arith.constant 0 : index
    %c18 = arith.constant 18 : index
    %17 = vector.load %arg1[%c0_17, %c0_18, %c18] : memref<1x16x326xbf16, #tpu.memory_space<vmem>>, vector<1x16x288xbf16>
    %18 = vector.shape_cast %17 : vector<1x16x288xbf16> to vector<16x288xbf16>
    %c3 = arith.constant 3 : index
    %c0_19 = arith.constant 0 : index
    %c0_20 = arith.constant 0 : index
    %19 = vector.load %arg2[%c3, %c0_19, %c0_20] : memref<9x1x16xbf16, #tpu.memory_space<vmem>>, vector<1x1x16xbf16>
    %20 = vector.shape_cast %19 : vector<1x1x16xbf16> to vector<1x16xbf16>
    %cst_21 = arith.constant dense<0.000000e+00> : vector<1x288xf32>
    %21 = tpu.matmul %20, %18, %cst_21 {dimension_numbers = #tpu.dot_dimension_numbers<[1], [0], [0], [1], [0, 0, 1, 1], [], []>} : vector<1x16xbf16>, vector<16x288xbf16>, vector<1x288xf32> -> vector<1x288xf32>
    %22 = arith.addf %16, %21 : vector<1x288xf32>
    %c0_22 = arith.constant 0 : index
    %c0_23 = arith.constant 0 : index
    %c19 = arith.constant 19 : index
    %23 = vector.load %arg1[%c0_22, %c0_23, %c19] : memref<1x16x326xbf16, #tpu.memory_space<vmem>>, vector<1x16x288xbf16>
    %24 = vector.shape_cast %23 : vector<1x16x288xbf16> to vector<16x288xbf16>
    %c4 = arith.constant 4 : index
    %c0_24 = arith.constant 0 : index
    %c0_25 = arith.constant 0 : index
    %25 = vector.load %arg2[%c4, %c0_24, %c0_25] : memref<9x1x16xbf16, #tpu.memory_space<vmem>>, vector<1x1x16xbf16>
    %26 = vector.shape_cast %25 : vector<1x1x16xbf16> to vector<1x16xbf16>
    %cst_26 = arith.constant dense<0.000000e+00> : vector<1x288xf32>
    %27 = tpu.matmul %26, %24, %cst_26 {dimension_numbers = #tpu.dot_dimension_numbers<[1], [0], [0], [1], [0, 0, 1, 1], [], []>} : vector<1x16xbf16>, vector<16x288xbf16>, vector<1x288xf32> -> vector<1x288xf32>
    %28 = arith.addf %22, %27 : vector<1x288xf32>
    %c0_27 = arith.constant 0 : index
    %c0_28 = arith.constant 0 : index
    %c20 = arith.constant 20 : index
    %29 = vector.load %arg1[%c0_27, %c0_28, %c20] : memref<1x16x326xbf16, #tpu.memory_space<vmem>>, vector<1x16x288xbf16>
    %30 = vector.shape_cast %29 : vector<1x16x288xbf16> to vector<16x288xbf16>
    %c5 = arith.constant 5 : index
    %c0_29 = arith.constant 0 : index
    %c0_30 = arith.constant 0 : index
    %31 = vector.load %arg2[%c5, %c0_29, %c0_30] : memref<9x1x16xbf16, #tpu.memory_space<vmem>>, vector<1x1x16xbf16>
    %32 = vector.shape_cast %31 : vector<1x1x16xbf16> to vector<1x16xbf16>
    %cst_31 = arith.constant dense<0.000000e+00> : vector<1x288xf32>
    %33 = tpu.matmul %32, %30, %cst_31 {dimension_numbers = #tpu.dot_dimension_numbers<[1], [0], [0], [1], [0, 0, 1, 1], [], []>} : vector<1x16xbf16>, vector<16x288xbf16>, vector<1x288xf32> -> vector<1x288xf32>
    %34 = arith.addf %28, %33 : vector<1x288xf32>
    %c0_32 = arith.constant 0 : index
    %c0_33 = arith.constant 0 : index
    %c36 = arith.constant 36 : index
    %35 = vector.load %arg1[%c0_32, %c0_33, %c36] : memref<1x16x326xbf16, #tpu.memory_space<vmem>>, vector<1x16x288xbf16>
    %36 = vector.shape_cast %35 : vector<1x16x288xbf16> to vector<16x288xbf16>
    %c6 = arith.constant 6 : index
    %c0_34 = arith.constant 0 : index
    %c0_35 = arith.constant 0 : index
    %37 = vector.load %arg2[%c6, %c0_34, %c0_35] : memref<9x1x16xbf16, #tpu.memory_space<vmem>>, vector<1x1x16xbf16>
    %38 = vector.shape_cast %37 : vector<1x1x16xbf16> to vector<1x16xbf16>
    %cst_36 = arith.constant dense<0.000000e+00> : vector<1x288xf32>
    %39 = tpu.matmul %38, %36, %cst_36 {dimension_numbers = #tpu.dot_dimension_numbers<[1], [0], [0], [1], [0, 0, 1, 1], [], []>} : vector<1x16xbf16>, vector<16x288xbf16>, vector<1x288xf32> -> vector<1x288xf32>
    %40 = arith.addf %34, %39 : vector<1x288xf32>
    %c0_37 = arith.constant 0 : index
    %c0_38 = arith.constant 0 : index
    %c37 = arith.constant 37 : index
    %41 = vector.load %arg1[%c0_37, %c0_38, %c37] : memref<1x16x326xbf16, #tpu.memory_space<vmem>>, vector<1x16x288xbf16>
    %42 = vector.shape_cast %41 : vector<1x16x288xbf16> to vector<16x288xbf16>
    %c7 = arith.constant 7 : index
    %c0_39 = arith.constant 0 : index
    %c0_40 = arith.constant 0 : index
    %43 = vector.load %arg2[%c7, %c0_39, %c0_40] : memref<9x1x16xbf16, #tpu.memory_space<vmem>>, vector<1x1x16xbf16>
    %44 = vector.shape_cast %43 : vector<1x1x16xbf16> to vector<1x16xbf16>
    %cst_41 = arith.constant dense<0.000000e+00> : vector<1x288xf32>
    %45 = tpu.matmul %44, %42, %cst_41 {dimension_numbers = #tpu.dot_dimension_numbers<[1], [0], [0], [1], [0, 0, 1, 1], [], []>} : vector<1x16xbf16>, vector<16x288xbf16>, vector<1x288xf32> -> vector<1x288xf32>
    %46 = arith.addf %40, %45 : vector<1x288xf32>
    %c0_42 = arith.constant 0 : index
    %c0_43 = arith.constant 0 : index
    %c38 = arith.constant 38 : index
    %47 = vector.load %arg1[%c0_42, %c0_43, %c38] : memref<1x16x326xbf16, #tpu.memory_space<vmem>>, vector<1x16x288xbf16>
    %48 = vector.shape_cast %47 : vector<1x16x288xbf16> to vector<16x288xbf16>
    %c8 = arith.constant 8 : index
    %c0_44 = arith.constant 0 : index
    %c0_45 = arith.constant 0 : index
    %49 = vector.load %arg2[%c8, %c0_44, %c0_45] : memref<9x1x16xbf16, #tpu.memory_space<vmem>>, vector<1x1x16xbf16>
    %50 = vector.shape_cast %49 : vector<1x1x16xbf16> to vector<1x16xbf16>
    %cst_46 = arith.constant dense<0.000000e+00> : vector<1x288xf32>
    %51 = tpu.matmul %50, %48, %cst_46 {dimension_numbers = #tpu.dot_dimension_numbers<[1], [0], [0], [1], [0, 0, 1, 1], [], []>} : vector<1x16xbf16>, vector<16x288xbf16>, vector<1x288xf32> -> vector<1x288xf32>
    %52 = arith.addf %46, %51 : vector<1x288xf32>
    %c0_47 = arith.constant 0 : index
    %c0_48 = arith.constant 0 : index
    %53 = vector.load %arg3[%c0_47, %c0_48] : memref<1x1xf32, #tpu.memory_space<vmem>>, vector<1x1xf32>
    %54 = vector.broadcast %53 : vector<1x1xf32> to vector<1x288xf32>
    %55 = arith.addf %52, %54 : vector<1x288xf32>
    %56 = math.tanh %55 : vector<1x288xf32>
    %c0_49 = arith.constant 0 : index
    %c0_50 = arith.constant 0 : index
    %c0_51 = arith.constant 0 : index
    %57 = vector.load %arg4[%c0_49, %c0_50, %c0_51] : memref<1x1x288xf32, #tpu.memory_space<vmem>>, vector<1x1x288xf32>
    %58 = vector.shape_cast %57 : vector<1x1x288xf32> to vector<1x288xf32>
    %59 = vector.shape_cast %56 : vector<1x288xf32> to vector<1x1x288xf32>
    tpu.vector_store %arg4[%c0_49, %c0_50, %c0_51], %59 {strides = array<i32>} : memref<1x1x288xf32, #tpu.memory_space<vmem>>, vector<1x1x288xf32>,
    return
  }
  func.func @transform_0(%arg0: i32) -> (i32, i32, i32) {
    %c0_i32 = arith.constant 0 : i32
    %c0_i32_0 = arith.constant 0 : i32
    %c0_i32_1 = arith.constant 0 : i32
    return %arg0, %c0_i32, %c0_i32_0 : i32, i32, i32
  }
  func.func @transform_1(%arg0: i32) -> (i32, i32, i32) {
    %c0_i32 = arith.constant 0 : i32
    %c0_i32_0 = arith.constant 0 : i32
    %c0_i32_1 = arith.constant 0 : i32
    %c0_i32_2 = arith.constant 0 : i32
    return %c0_i32, %c0_i32_0, %c0_i32_1 : i32, i32, i32
  }
  func.func @transform_2(%arg0: i32) -> (i32, i32) {
    %c0_i32 = arith.constant 0 : i32
    %c0_i32_0 = arith.constant 0 : i32
    %c0_i32_1 = arith.constant 0 : i32
    return %c0_i32, %c0_i32_0 : i32, i32
  }
  func.func @transform_3(%arg0: i32) -> (i32, i32, i32) {
    %c0_i32 = arith.constant 0 : i32
    %c0_i32_0 = arith.constant 0 : i32
    %c0_i32_1 = arith.constant 0 : i32
    return %arg0, %c0_i32, %c0_i32_0 : i32, i32, i32
  }
}

</mosaic_0001>

<llo_original>
// kernel: generator_model_forward.9
$region0: #{generator_model_forward.9}
  #allocation0 [shape = 'u32[]', space=smem, size = 0x4, offset = 0x4, fixed_abs, tag = 'smem constant byte address 0x4 - core index']
  #allocation1 [shape = 'u32[144,128]{1,0:T(1,128)}', space=vmem, size = 0x12000, scoped, tag = 'internal scratch']
  %s0 = inlined_call_operand.vmem [shape: bf16[2,6,326], index: 0, kind: input, shape index: {}]
  %s1 = inlined_call_operand.vmem [shape: bf16[9,16,6], index: 1, kind: input, shape index: {}]
  %s2 = inlined_call_operand.vmem [shape: f32[1,288], index: 2, kind: input, shape index: {}]
  %s3 = inlined_call_operand.vmem [shape: f32[16,1], index: 3, kind: input, shape index: {}]
  %s4 = inlined_call_operand.vmem [shape: f32[16,1], index: 4, kind: input, shape index: {}]
  %s5 = inlined_call_operand.vmem [shape: bf16[2,16,288], index: 5, kind: output, shape index: {}]
  %s6 = sld [smem:[#allocation0]]
  $region53: #{generator_model_forward.9} parent=0
    _
  %s8 = ssub.s32 1, %s6
  %s9 = scalar_select 0, %s8, %s6
  loop: start=0, step=1, limit=4
  $region2: #{generator_model_forward.9} parent=0 // loop_pre_header
    _
  $region3: #{generator_model_forward.9} parent=0 // loop_header
    %s11 = sphi 0, %s15
    %p12 = scmp.ge.s32.totalorder %s11, 4
    %s21 = sphi 0, %s23
    %s24 = sphi 0, %s21
    %s25 = sphi 0, %s24
    %s41 = sphi 0, %s25
    %s45 = sphi 0, %s45
    %s47 = sphi 0, %s45
    %s48 = sphi 0, %s47
    %s62 = sphi 0, %s48
    %s66 = sphi 0, %s66
    %s68 = sphi 0, %s66
    %s69 = sphi 0, %s68
    %s83 = sphi 0, %s69
    %s87 = sphi 0, %s87
    %s89 = sphi 0, %s87
    %s90 = sphi 0, %s89
    %s104 = sphi 0, %s90
    %s108 = sphi 0, %s108
    %s110 = sphi 0, %s108
    %s111 = sphi 0, %s110
    %s125 = sphi 0, %s111
    %s131 = sphi 0, %s133
    %s134 = sphi 0, %s131
    %s135 = sphi 0, %s134
    %s151 = sphi 0, %s135
  $region4: #{generator_model_forward.9} parent=0 // loop_header_branch
    %14 = sbr.rel (%p12) target = $region8
  $region5: #{generator_model_forward.9} parent=0 // loop_body
    %s16 = ssub.s32 %s11, 1
    %s17 = ssub.s32 %s11, 2
    %s18 = sadd.s32 %s11, 1
    %s19 = ssub.s32 %s11, %s18
    %p20 = scmp.eq.s32.totalorder %s19, 0
    %s22 = sadd.s32 %s21, 1
    %s23 = scalar_select %p20, %s21, %s22
    %p26 = pneg %p20
    %p27 = scmp.eq.s32.totalorder %s11, 1
    %p28 = por %p26, %p27
    %p29 = scmp.ne.s32.totalorder %s21, %s24
    %p30 = scmp.eq.s32.totalorder %s11, 0
    %p31 = por %p29, %p30
    %p32 = scmp.ne.s32.totalorder %s21, %s24
    %p33 = scmp.eq.s32.totalorder %s16, 1
    %p34 = por %p32, %p33
    %p35 = scmp.ne.s32.totalorder %s24, %s25
    %p36 = scmp.eq.s32.totalorder %s16, 0
    %p37 = por %p35, %p36
    %p38 = scmp.ne.s32.totalorder %s24, %s25
    %p39 = scmp.eq.s32.totalorder %s17, 1
    %p40 = por %p38, %p39
    %p42 = scmp.ne.s32.totalorder %s25, %s41
    %p43 = scmp.eq.s32.totalorder %s17, 0
    %p44 = por %p42, %p43
    %s46 = sadd.s32 %s45, 1
    %p49 = scmp.eq.s32.totalorder %s11, 1
    %p50 = scmp.ne.s32.totalorder %s45, %s47
    %p51 = scmp.eq.s32.totalorder %s11, 0
    %p52 = por %p50, %p51
    %p53 = scmp.ne.s32.totalorder %s45, %s47
    %p54 = scmp.eq.s32.totalorder %s16, 1
    %p55 = por %p53, %p54
    %p56 = scmp.ne.s32.totalorder %s47, %s48
    %p57 = scmp.eq.s32.totalorder %s16, 0
    %p58 = por %p56, %p57
    %p59 = scmp.ne.s32.totalorder %s47, %s48
    %p60 = scmp.eq.s32.totalorder %s17, 1
    %p61 = por %p59, %p60
    %p63 = scmp.ne.s32.totalorder %s48, %s62
    %p64 = scmp.eq.s32.totalorder %s17, 0
    %p65 = por %p63, %p64
    %s67 = sadd.s32 %s66, 1
    %p70 = scmp.eq.s32.totalorder %s11, 1
    %p71 = scmp.ne.s32.totalorder %s66, %s68
    %p72 = scmp.eq.s32.totalorder %s11, 0
    %p73 = por %p71, %p72
    %p74 = scmp.ne.s32.totalorder %s66, %s68
    %p75 = scmp.eq.s32.totalorder %s16, 1
    %p76 = por %p74, %p75
    %p77 = scmp.ne.s32.totalorder %s68, %s69
    %p78 = scmp.eq.s32.totalorder %s16, 0
    %p79 = por %p77, %p78
    %p80 = scmp.ne.s32.totalorder %s68, %s69
    %p81 = scmp.eq.s32.totalorder %s17, 1
    %p82 = por %p80, %p81
    %p84 = scmp.ne.s32.totalorder %s69, %s83
    %p85 = scmp.eq.s32.totalorder %s17, 0
    %p86 = por %p84, %p85
    %s88 = sadd.s32 %s87, 1
    %p91 = scmp.eq.s32.totalorder %s11, 1
    %p92 = scmp.ne.s32.totalorder %s87, %s89
    %p93 = scmp.eq.s32.totalorder %s11, 0
    %p94 = por %p92, %p93
    %p95 = scmp.ne.s32.totalorder %s87, %s89
    %p96 = scmp.eq.s32.totalorder %s16, 1
    %p97 = por %p95, %p96
    %p98 = scmp.ne.s32.totalorder %s89, %s90
    %p99 = scmp.eq.s32.totalorder %s16, 0
    %p100 = por %p98, %p99
    %p101 = scmp.ne.s32.totalorder %s89, %s90
    %p102 = scmp.eq.s32.totalorder %s17, 1
    %p103 = por %p101, %p102
    %p105 = scmp.ne.s32.totalorder %s90, %s104
    %p106 = scmp.eq.s32.totalorder %s17, 0
    %p107 = por %p105, %p106
    %s109 = sadd.s32 %s108, 1
    %p112 = scmp.eq.s32.totalorder %s11, 1
    %p113 = scmp.ne.s32.totalorder %s108, %s110
    %p114 = scmp.eq.s32.totalorder %s11, 0
    %p115 = por %p113, %p114
    %p116 = scmp.ne.s32.totalorder %s108, %s110
    %p117 = scmp.eq.s32.totalorder %s16, 1
    %p118 = por %p116, %p117
    %p119 = scmp.ne.s32.totalorder %s110, %s111
    %p120 = scmp.eq.s32.totalorder %s16, 0
    %p121 = por %p119, %p120
    %p122 = scmp.ne.s32.totalorder %s110, %s111
    %p123 = scmp.eq.s32.totalorder %s17, 1
    %p124 = por %p122, %p123
    %p126 = scmp.ne.s32.totalorder %s111, %s125
    %p127 = scmp.eq.s32.totalorder %s17, 0
    %p128 = por %p126, %p127
    %s129 = ssub.s32 %s11, %s18
    %p130 = scmp.eq.s32.totalorder %s129, 0
    %s132 = sadd.s32 %s131, 1
    %s133 = scalar_select %p130, %s131, %s132
    %p136 = pneg %p130
    %p137 = scmp.eq.s32.totalorder %s11, 1
    %p138 = por %p136, %p137
    %p139 = scmp.ne.s32.totalorder %s131, %s134
    %p140 = scmp.eq.s32.totalorder %s11, 0
    %p141 = por %p139, %p140
    %p142 = scmp.ne.s32.totalorder %s131, %s134
    %p143 = scmp.eq.s32.totalorder %s16, 1
    %p144 = por %p142, %p143
    %p145 = scmp.ne.s32.totalorder %s134, %s135
    %p146 = scmp.eq.s32.totalorder %s16, 0
    %p147 = por %p145, %p146
    %p148 = scmp.ne.s32.totalorder %s134, %s135
    %p149 = scmp.eq.s32.totalorder %s17, 1
    %p150 = por %p148, %p149
    %p152 = scmp.ne.s32.totalorder %s135, %s151
    %p153 = scmp.eq.s32.totalorder %s17, 0
    %p154 = por %p152, %p153
    %p155 = scmp.le.s32.totalorder 1, %s11
    %p156 = scmp.lt.s32.totalorder %s11, 3
    %p157 = pnand %p155, %p156
    %p158 = pneg %p157
    // Predicated region
    $region9: #{generator_model_forward.9} parent=5 // pred_check
      _
    $region10: #{generator_model_forward.9} parent=5 // pred_check_branch
      %160 = sbr.rel (%p157) target = $region12
    $region11: #{generator_model_forward.9} parent=5 // pred_region
      %s161 = ssub.s32 %s11, 1
      // Predicated region
      $region13: #{generator_model_forward.9} parent=11 // pred_check
        %p162 = pneg %p58
      $region14: #{generator_model_forward.9} parent=11 // pred_check_branch
        %164 = sbr.rel (%p162) target = $region16
      $region15: #{generator_model_forward.9} parent=11 // pred_region
        _
      $region16: #{generator_model_forward.9} parent=11 // pred_fallthru
        _
      // Predicated region
      $region17: #{generator_model_forward.9} parent=11 // pred_check
        %p165 = pneg %p79
      $region18: #{generator_model_forward.9} parent=11 // pred_check_branch
        %167 = sbr.rel (%p165) target = $region20
      $region19: #{generator_model_forward.9} parent=11 // pred_region
        _
      $region20: #{generator_model_forward.9} parent=11 // pred_fallthru
        _
      // Predicated region
      $region21: #{generator_model_forward.9} parent=11 // pred_check
        %p168 = pneg %p100
      $region22: #{generator_model_forward.9} parent=11 // pred_check_branch
        %170 = sbr.rel (%p168) target = $region24
      $region23: #{generator_model_forward.9} parent=11 // pred_region
        _
      $region24: #{generator_model_forward.9} parent=11 // pred_fallthru
        _
      // Predicated region
      $region25: #{generator_model_forward.9} parent=11 // pred_check
        %p171 = pneg %p121
      $region26: #{generator_model_forward.9} parent=11 // pred_check_branch
        %173 = sbr.rel (%p171) target = $region28
      $region27: #{generator_model_forward.9} parent=11 // pred_region
        _
      $region28: #{generator_model_forward.9} parent=11 // pred_fallthru
        _
    $region12: #{generator_model_forward.9} parent=5 // pred_fallthru
      _
    %p174 = scmp.lt.s32.totalorder %s11, 2
    // Predicated region
    $region29: #{generator_model_forward.9} parent=5 // pred_check
      %p175 = pneg %p174
    $region30: #{generator_model_forward.9} parent=5 // pred_check_branch
      %177 = sbr.rel (%p175) target = $region32
    $region31: #{generator_model_forward.9} parent=5 // pred_region
      // Predicated region
      $region33: #{generator_model_forward.9} parent=31 // pred_check
        %p178 = pneg %p31
      $region34: #{generator_model_forward.9} parent=31 // pred_check_branch
        %180 = sbr.rel (%p178) target = $region36
      $region35: #{generator_model_forward.9} parent=31 // pred_region
        %p181 = scmp.lt.s32.totalorder %s11, 1
        %s182 = scalar_select %p181, %s11, 1
        %s183 = smul.addr %s182, 3
        %s184 = smul.addr %s183, 4
        %s185 = scalar_lea.vmem %s0, %s184
      $region36: #{generator_model_forward.9} parent=31 // pred_fallthru
        _
    $region32: #{generator_model_forward.9} parent=5 // pred_fallthru
      _
    %p186 = scmp.le.s32.totalorder 1, %s11
    %p187 = scmp.lt.s32.totalorder %s11, 3
    %p188 = pnand %p186, %p187
    %p189 = pneg %p188
    // Predicated region
    $region37: #{generator_model_forward.9} parent=5 // pred_check
      _
    $region38: #{generator_model_forward.9} parent=5 // pred_check_branch
      %191 = sbr.rel (%p188) target = $region40
    $region39: #{generator_model_forward.9} parent=5 // pred_region
      %s192 = ssub.s32 %s11, 1
      %p193 = scmp.lt.s32.totalorder %s16, 1
      %s194 = scalar_select %p193, %s16, 1
      %s195 = smul.addr %s194, 3
      %s196 = smul.addr %s195, 4
      %s197 = scalar_lea.vmem %s0, %s196
      %p198 = pneg %p37
      %p199 = pneg %p34
      %p200 = pneg %p58
      %p201 = pneg %p55
      %p202 = pneg %p79
      %p203 = pneg %p76
      %p204 = pneg %p100
      %p205 = pneg %p97
      %p206 = pneg %p121
      %p207 = pneg %p118
      %p208 = pneg %p147
      %p209 = pneg %p144
      %p210 = scmp.lt.s32.totalorder %s16, 1
      %s211 = scalar_select %p210, %s16, 1
      %s212 = smul.addr %s211, 6
      %s213 = smul.addr %s212, 4
      %s214 = scalar_lea.vmem %s5, %s213
      %p215 = scmp.lt.s32.totalorder %s16, 1
      %s216 = scalar_select %p215, %s16, 1
      %s217 = smul.addr %s216, 3
      %s218 = smul.addr %s217, 4
      %s219 = scalar_lea.vmem %s0, %s218
      %p220 = scmp.lt.s32.totalorder %s16, 1
      %s221 = scalar_select %p220, %s16, 1
      %s222 = smul.addr %s221, 6
      %s223 = smul.addr %s222, 4
      %s224 = scalar_lea.vmem %s5, %s223
      %v226 = vld [vmem:[%s219] sm:$0x77]
      %v227 = vld [vmem:[%s219 + $0x8] sm:$0x7]
      %v228 = vld [vmem:[%s1] sm:$0xf]
      %v229 = vld [vmem:[%s1 + $0x4] sm:$0xf]
      %s230 = scalar_lea.vmem %s1, 8
      %v231 = vld [vmem:[%s230] sm:$0xf]
      %v232 = vld [vmem:[%s230 + $0x4] sm:$0xf]
      %v235 = vunpack.c.l.b16 %v231
      %v236 = vunpack.c.l.b16 %v232
      %v237 = vpack.c.b16 %v236, %v235
      %v240 = vunpack.c.l.b16 %v226
      %v241 = vunpack.c.h.b16 %v226
      %v242 = vunpack.c.l.b16 %v227
      %v243 = vpack.c.b16 %v240, %v240
      %v244 = vpack.c.b16 %v241, %v241
      %v245 = vpack.c.b16 %v242, %v242
      %246 = vrot.lane.b32.xlu0 %v243, 127
      %v247 = vpop.permute.xlu0 %246
      %248 = vrot.lane.b32.xlu0 %v244, 127
      %v249 = vpop.permute.xlu0 %248
      %250 = vrot.lane.b32.xlu0 %v245, 127
      %v251 = vpop.permute.xlu0 %250
      %vm252 = vcmask 1039360
      %v253 = vsel %vm252, %v247, %v249
      %v254 = vsel %vm252, %v249, %v251
      %vm255 = vcmask 48128
      %v257 = vsel %vm255, %v237, 0
      %vm259 = vcmask 1042432
      %v261 = vsel %vm259, %v253, 0
      %v264 = vsel %vm259, %v254, 0
      %v267 = vsel %vm259, %v251, 0
      %269 = vmatprep.subr.bf16.mxu0 0
      %270 = vmatpush1.bf16.msra.mxu0 0
      %271 = vmatprep.subr.bf16.mxu0 0
      %272 = vmatpush1.bf16.msra.mxu0 0
      %273 = vmatprep.subr.bf16.mxu0 0
      %274 = vmatpush1.bf16.msra.mxu0 0
      %275 = vmatprep.subr.bf16.mxu0 0
      %276 = vmatpush1.bf16.msra.mxu0 0
      %277 = vmatprep.subr.bf16.mxu0 0
      %278 = vmatpush1.bf16.msra.mxu0 0
      %279 = vmatprep.subr.bf16.mxu0 0
      %280 = vmatpush1.bf16.msra.mxu0 0
      %281 = vmatprep.subr.bf16.mxu0 0
      %282 = vmatpush1.bf16.msra.mxu0 0
      %283 = vmatprep.subr.bf16.mxu0 %v264
      %284 = vmatpush1.bf16.msra.mxu0 %v261
      %285 = vmatprep.subr.bf16.mxu0 0
      %286 = vmatpush2.bf16.msra.mxu0 0
      %287 = vmatprep.subr.bf16.mxu0 0
      %288 = vmatpush2.bf16.msra.mxu0 0
      %289 = vmatprep.subr.bf16.mxu0 0
      %290 = vmatpush2.bf16.msra.mxu0 0
      %291 = vmatprep.subr.bf16.mxu0 0
      %292 = vmatpush2.bf16.msra.mxu0 0
      %293 = vmatprep.subr.bf16.mxu0 0
      %294 = vmatpush2.bf16.msra.mxu0 0
      %295 = vmatprep.subr.bf16.mxu0 0
      %296 = vmatpush2.bf16.msra.mxu0 0
      %297 = vmatprep.subr.bf16.mxu0 0
      %298 = vmatpush2.bf16.msra.mxu0 0
      %299 = vmatprep.subr.bf16.mxu0 0
      %300 = vmatpush2.bf16.msra.mxu0 0
      %301 = vmatprep.mubr.bf16.mxu0 0
      %302 = vmatmul.mubr.bf16.gmra.mxu0 %v257
      %v303 = vpop.f32.mrf.mxu0
      %v304 = vadd.f32 0.0, %v303
      %v305 = vpop.f32.mrf.mxu0
      %v306 = vadd.f32 0.0, %v305
      %v307 = vpop.f32.mrf.mxu0
      %v308 = vadd.f32 0.0, %v307
      %v309 = vpop.f32.mrf.mxu0
      %v310 = vadd.f32 0.0, %v309
      %311 = vdwg.mxu0
      %312 = vmatprep.subr.bf16.mxu0 0
      %313 = vmatpush1.bf16.msra.mxu0 0
      %314 = vmatprep.subr.bf16.mxu0 0
      %315 = vmatpush1.bf16.msra.mxu0 0
      %316 = vmatprep.subr.bf16.mxu0 0
      %317 = vmatpush1.bf16.msra.mxu0 0
      %318 = vmatprep.subr.bf16.mxu0 0
      %319 = vmatpush1.bf16.msra.mxu0 0
      %320 = vmatprep.subr.bf16.mxu0 0
      %321 = vmatpush1.bf16.msra.mxu0 0
      %322 = vmatprep.subr.bf16.mxu0 0
      %323 = vmatpush1.bf16.msra.mxu0 0
      %324 = vmatprep.subr.bf16.mxu0 0
      %325 = vmatpush1.bf16.msra.mxu0 0
      %326 = vmatprep.subr.bf16.mxu0 0
      %327 = vmatpush1.bf16.msra.mxu0 %v267
      %328 = vmatprep.subr.bf16.mxu0 0
      %329 = vmatpush2.bf16.msra.mxu0 0
      %330 = vmatprep.subr.bf16.mxu0 0
      %331 = vmatpush2.bf16.msra.mxu0 0
      %332 = vmatprep.subr.bf16.mxu0 0
      %333 = vmatpush2.bf16.msra.mxu0 0
      %334 = vmatprep.subr.bf16.mxu0 0
      %335 = vmatpush2.bf16.msra.mxu0 0
      %336 = vmatprep.subr.bf16.mxu0 0
      %337 = vmatpush2.bf16.msra.mxu0 0
      %338 = vmatprep.subr.bf16.mxu0 0
      %339 = vmatpush2.bf16.msra.mxu0 0
      %340 = vmatprep.subr.bf16.mxu0 0
      %341 = vmatpush2.bf16.msra.mxu0 0
      %342 = vmatprep.subr.bf16.mxu0 0
      %343 = vmatpush2.bf16.msra.mxu0 0
      %344 = vmatprep.mubr.bf16.mxu0 0
      %345 = vmatmul.mubr.bf16.gmra.mxu0 %v257
      %v346 = vpop.f32.mrf.mxu0
      %v347 = vadd.f32 0.0, %v346
      %v348 = vpop.f32.mrf.mxu0
      %v349 = vpop.f32.mrf.mxu0
      %v350 = vadd.f32 0.0, %v349
      %v351 = vpop.f32.mrf.mxu0
      %352 = vdwg.mxu0
      %v355 = vunpack.c.l.b16 %v228
      %v356 = vunpack.c.l.b16 %v229
      %v357 = vpack.c.b16 %v356, %v355
      %v359 = vsel %vm255, %v357, 0
      %v362 = vsel %vm259, %v243, 0
      %v365 = vsel %vm259, %v244, 0
      %v368 = vsel %vm259, %v245, 0
      %370 = vmatprep.subr.bf16.mxu0 0
      %371 = vmatpush1.bf16.msra.mxu0 0
      %372 = vmatprep.subr.bf16.mxu0 0
      %373 = vmatpush1.bf16.msra.mxu0 0
      %374 = vmatprep.subr.bf16.mxu0 0
      %375 = vmatpush1.bf16.msra.mxu0 0
      %376 = vmatprep.subr.bf16.mxu0 0
      %377 = vmatpush1.bf16.msra.mxu0 0
      %378 = vmatprep.subr.bf16.mxu0 0
      %379 = vmatpush1.bf16.msra.mxu0 0
      %380 = vmatprep.subr.bf16.mxu0 0
      %381 = vmatpush1.bf16.msra.mxu0 0
      %382 = vmatprep.subr.bf16.mxu0 0
      %383 = vmatpush1.bf16.msra.mxu0 0
      %384 = vmatprep.subr.bf16.mxu0 %v365
      %385 = vmatpush1.bf16.msra.mxu0 %v362
      %386 = vmatprep.subr.bf16.mxu0 0
      %387 = vmatpush2.bf16.msra.mxu0 0
      %388 = vmatprep.subr.bf16.mxu0 0
      %389 = vmatpush2.bf16.msra.mxu0 0
      %390 = vmatprep.subr.bf16.mxu0 0
      %391 = vmatpush2.bf16.msra.mxu0 0
      %392 = vmatprep.subr.bf16.mxu0 0
      %393 = vmatpush2.bf16.msra.mxu0 0
      %394 = vmatprep.subr.bf16.mxu0 0
      %395 = vmatpush2.bf16.msra.mxu0 0
      %396 = vmatprep.subr.bf16.mxu0 0
      %397 = vmatpush2.bf16.msra.mxu0 0
      %398 = vmatprep.subr.bf16.mxu0 0
      %399 = vmatpush2.bf16.msra.mxu0 0
      %400 = vmatprep.subr.bf16.mxu0 0
      %401 = vmatpush2.bf16.msra.mxu0 0
      %402 = vmatprep.mubr.bf16.mxu0 0
      %403 = vmatmul.mubr.bf16.gmra.mxu0 %v359
      %v404 = vpop.f32.mrf.mxu0
      %v405 = vadd.f32 %v304, %v404
      %v406 = vpop.f32.mrf.mxu0
      %v407 = vadd.f32 %v306, %v406
      %v408 = vpop.f32.mrf.mxu0
      %v409 = vadd.f32 %v308, %v408
      %v410 = vpop.f32.mrf.mxu0
      %v411 = vadd.f32 %v310, %v410
      %412 = vdwg.mxu0
      %413 = vmatprep.subr.bf16.mxu0 0
      %414 = vmatpush1.bf16.msra.mxu0 0
      %415 = vmatprep.subr.bf16.mxu0 0
      %416 = vmatpush1.bf16.msra.mxu0 0
      %417 = vmatprep.subr.bf16.mxu0 0
      %418 = vmatpush1.bf16.msra.mxu0 0
      %419 = vmatprep.subr.bf16.mxu0 0
      %420 = vmatpush1.bf16.msra.mxu0 0
      %421 = vmatprep.subr.bf16.mxu0 0
      %422 = vmatpush1.bf16.msra.mxu0 0
      %423 = vmatprep.subr.bf16.mxu0 0
      %424 = vmatpush1.bf16.msra.mxu0 0
      %425 = vmatprep.subr.bf16.mxu0 0
      %426 = vmatpush1.bf16.msra.mxu0 0
      %427 = vmatprep.subr.bf16.mxu0 0
      %428 = vmatpush1.bf16.msra.mxu0 %v368
      %429 = vmatprep.subr.bf16.mxu0 0
      %430 = vmatpush2.bf16.msra.mxu0 0
      %431 = vmatprep.subr.bf16.mxu0 0
      %432 = vmatpush2.bf16.msra.mxu0 0
      %433 = vmatprep.subr.bf16.mxu0 0
      %434 = vmatpush2.bf16.msra.mxu0 0
      %435 = vmatprep.subr.bf16.mxu0 0
      %436 = vmatpush2.bf16.msra.mxu0 0
      %437 = vmatprep.subr.bf16.mxu0 0
      %438 = vmatpush2.bf16.msra.mxu0 0
      %439 = vmatprep.subr.bf16.mxu0 0
      %440 = vmatpush2.bf16.msra.mxu0 0
      %441 = vmatprep.subr.bf16.mxu0 0
      %442 = vmatpush2.bf16.msra.mxu0 0
      %443 = vmatprep.subr.bf16.mxu0 0
      %444 = vmatpush2.bf16.msra.mxu0 0
      %445 = vmatprep.mubr.bf16.mxu0 0
      %446 = vmatmul.mubr.bf16.gmra.mxu0 %v359
      %v447 = vpop.f32.mrf.mxu0
      %v448 = vadd.f32 %v347, %v447
      %v449 = vpop.f32.mrf.mxu0
      %v450 = vpop.f32.mrf.mxu0
      %v451 = vadd.f32 %v350, %v450
      %v452 = vpop.f32.mrf.mxu0
      %453 = vdwg.mxu0
      %s454 = scalar_lea.vmem %s1, 16
      %v455 = vld [vmem:[%s454] sm:$0xf]
      %v456 = vld [vmem:[%s454 + $0x4] sm:$0xf]
      %v459 = vunpack.c.l.b16 %v455
      %v460 = vunpack.c.l.b16 %v456
      %v461 = vpack.c.b16 %v460, %v459
      %462 = vrot.lane.b32.xlu0 %v243, 126
      %v463 = vpop.permute.xlu0 %462
      %464 = vrot.lane.b32.xlu0 %v244, 126
      %v465 = vpop.permute.xlu0 %464
      %466 = vrot.lane.b32.xlu0 %v245, 126
      %v467 = vpop.permute.xlu0 %466
      %vm468 = vcmask 1031168
      %v469 = vsel %vm468, %v463, %v465
      %v470 = vsel %vm468, %v465, %v467
      %v472 = vsel %vm255, %v461, 0
      %v475 = vsel %vm259, %v469, 0
      %v478 = vsel %vm259, %v470, 0
      %v481 = vsel %vm259, %v467, 0
      %483 = vmatprep.subr.bf16.mxu0 0
      %484 = vmatpush1.bf16.msra.mxu0 0
      %485 = vmatprep.subr.bf16.mxu0 0
      %486 = vmatpush1.bf16.msra.mxu0 0
      %487 = vmatprep.subr.bf16.mxu0 0
      %488 = vmatpush1.bf16.msra.mxu0 0
      %489 = vmatprep.subr.bf16.mxu0 0
      %490 = vmatpush1.bf16.msra.mxu0 0
      %491 = vmatprep.subr.bf16.mxu0 0
      %492 = vmatpush1.bf16.msra.mxu0 0
      %493 = vmatprep.subr.bf16.mxu0 0
      %494 = vmatpush1.bf16.msra.mxu0 0
      %495 = vmatprep.subr.bf16.mxu0 0
      %496 = vmatpush1.bf16.msra.mxu0 0
      %497 = vmatprep.subr.bf16.mxu0 %v478
      %498 = vmatpush1.bf16.msra.mxu0 %v475
      %499 = vmatprep.subr.bf16.mxu0 0
      %500 = vmatpush2.bf16.msra.mxu0 0
      %501 = vmatprep.subr.bf16.mxu0 0
      %502 = vmatpush2.bf16.msra.mxu0 0
      %503 = vmatprep.subr.bf16.mxu0 0
      %504 = vmatpush2.bf16.msra.mxu0 0
      %505 = vmatprep.subr.bf16.mxu0 0
      %506 = vmatpush2.bf16.msra.mxu0 0
      %507 = vmatprep.subr.bf16.mxu0 0
      %508 = vmatpush2.bf16.msra.mxu0 0
      %509 = vmatprep.subr.bf16.mxu0 0
      %510 = vmatpush2.bf16.msra.mxu0 0
      %511 = vmatprep.subr.bf16.mxu0 0
      %512 = vmatpush2.bf16.msra.mxu0 0
      %513 = vmatprep.subr.bf16.mxu0 0
      %514 = vmatpush2.bf16.msra.mxu0 0
      %515 = vmatprep.mubr.bf16.mxu0 0
      %516 = vmatmul.mubr.bf16.gmra.mxu0 %v472
      %v517 = vpop.f32.mrf.mxu0
      %v518 = vadd.f32 0.0, %v517
      %v519 = vpop.f32.mrf.mxu0
      %v520 = vadd.f32 0.0, %v519
      %v521 = vpop.f32.mrf.mxu0
      %v522 = vadd.f32 0.0, %v521
      %v523 = vpop.f32.mrf.mxu0
      %v524 = vadd.f32 0.0, %v523
      %525 = vdwg.mxu0
      %526 = vmatprep.subr.bf16.mxu0 0
      %527 = vmatpush1.bf16.msra.mxu0 0
      %528 = vmatprep.subr.bf16.mxu0 0
      %529 = vmatpush1.bf16.msra.mxu0 0
      %530 = vmatprep.subr.bf16.mxu0 0
      %531 = vmatpush1.bf16.msra.mxu0 0
      %532 = vmatprep.subr.bf16.mxu0 0
      %533 = vmatpush1.bf16.msra.mxu0 0
      %534 = vmatprep.subr.bf16.mxu0 0
      %535 = vmatpush1.bf16.msra.mxu0 0
      %536 = vmatprep.subr.bf16.mxu0 0
      %537 = vmatpush1.bf16.msra.mxu0 0
      %538 = vmatprep.subr.bf16.mxu0 0
      %539 = vmatpush1.bf16.msra.mxu0 0
      %540 = vmatprep.subr.bf16.mxu0 0
      %541 = vmatpush1.bf16.msra.mxu0 %v481
      %542 = vmatprep.subr.bf16.mxu0 0
      %543 = vmatpush2.bf16.msra.mxu0 0
      %544 = vmatprep.subr.bf16.mxu0 0
      %545 = vmatpush2.bf16.msra.mxu0 0
      %546 = vmatprep.subr.bf16.mxu0 0
      %547 = vmatpush2.bf16.msra.mxu0 0
      %548 = vmatprep.subr.bf16.mxu0 0
      %549 = vmatpush2.bf16.msra.mxu0 0
      %550 = vmatprep.subr.bf16.mxu0 0
      %551 = vmatpush2.bf16.msra.mxu0 0
      %552 = vmatprep.subr.bf16.mxu0 0
      %553 = vmatpush2.bf16.msra.mxu0 0
      %554 = vmatprep.subr.bf16.mxu0 0
      %555 = vmatpush2.bf16.msra.mxu0 0
      %556 = vmatprep.subr.bf16.mxu0 0
      %557 = vmatpush2.bf16.msra.mxu0 0
      %558 = vmatprep.mubr.bf16.mxu0 0
      %559 = vmatmul.mubr.bf16.gmra.mxu0 %v472
      %v560 = vpop.f32.mrf.mxu0
      %v561 = vadd.f32 0.0, %v560
      %v562 = vpop.f32.mrf.mxu0
      %v563 = vpop.f32.mrf.mxu0
      %v564 = vadd.f32 0.0, %v563
      %v565 = vpop.f32.mrf.mxu0
      %566 = vdwg.mxu0
      %v567 = vadd.f32 %v405, %v518
      %v568 = vadd.f32 %v407, %v520
      %v569 = vadd.f32 %v448, %v561
      %v570 = vadd.f32 %v409, %v522
      %v571 = vadd.f32 %v411, %v524
      %v572 = vadd.f32 %v451, %v564
      %s573 = scalar_lea.vmem %s1, 24
      %v574 = vld [vmem:[%s573] sm:$0xf]
      %v575 = vld [vmem:[%s573 + $0x4] sm:$0xf]
      %v578 = vunpack.c.l.b16 %v574
      %v579 = vunpack.c.l.b16 %v575
      %v580 = vpack.c.b16 %v579, %v578
      %581 = vrot.lane.b32.xlu0 %v243, 110
      %v582 = vpop.permute.xlu0 %581
      %583 = vrot.lane.b32.xlu0 %v244, 110
      %v584 = vpop.permute.xlu0 %583
      %585 = vrot.lane.b32.xlu0 %v245, 110
      %v586 = vpop.permute.xlu0 %585
      %vm587 = vcmask 900096
      %v588 = vsel %vm587, %v582, %v584
      %v589 = vsel %vm587, %v584, %v586
      %v591 = vsel %vm255, %v580, 0
      %v594 = vsel %vm259, %v588, 0
      %v597 = vsel %vm259, %v589, 0
      %v600 = vsel %vm259, %v586, 0
      %602 = vmatprep.subr.bf16.mxu0 0
      %603 = vmatpush1.bf16.msra.mxu0 0
      %604 = vmatprep.subr.bf16.mxu0 0
      %605 = vmatpush1.bf16.msra.mxu0 0
      %606 = vmatprep.subr.bf16.mxu0 0
      %607 = vmatpush1.bf16.msra.mxu0 0
      %608 = vmatprep.subr.bf16.mxu0 0
      %609 = vmatpush1.bf16.msra.mxu0 0
      %610 = vmatprep.subr.bf16.mxu0 0
      %611 = vmatpush1.bf16.msra.mxu0 0
      %612 = vmatprep.subr.bf16.mxu0 0
      %613 = vmatpush1.bf16.msra.mxu0 0
      %614 = vmatprep.subr.bf16.mxu0 0
      %615 = vmatpush1.bf16.msra.mxu0 0
      %616 = vmatprep.subr.bf16.mxu0 %v597
      %617 = vmatpush1.bf16.msra.mxu0 %v594
      %618 = vmatprep.subr.bf16.mxu0 0
      %619 = vmatpush2.bf16.msra.mxu0 0
      %620 = vmatprep.subr.bf16.mxu0 0
      %621 = vmatpush2.bf16.msra.mxu0 0
      %622 = vmatprep.subr.bf16.mxu0 0
      %623 = vmatpush2.bf16.msra.mxu0 0
      %624 = vmatprep.subr.bf16.mxu0 0
      %625 = vmatpush2.bf16.msra.mxu0 0
      %626 = vmatprep.subr.bf16.mxu0 0
      %627 = vmatpush2.bf16.msra.mxu0 0
      %628 = vmatprep.subr.bf16.mxu0 0
      %629 = vmatpush2.bf16.msra.mxu0 0
      %630 = vmatprep.subr.bf16.mxu0 0
      %631 = vmatpush2.bf16.msra.mxu0 0
      %632 = vmatprep.subr.bf16.mxu0 0
      %633 = vmatpush2.bf16.msra.mxu0 0
      %634 = vmatprep.mubr.bf16.mxu0 0
      %635 = vmatmul.mubr.bf16.gmra.mxu0 %v591
      %v636 = vpop.f32.mrf.mxu0
      %v637 = vadd.f32 0.0, %v636
      %v638 = vpop.f32.mrf.mxu0
      %v639 = vadd.f32 0.0, %v638
      %v640 = vpop.f32.mrf.mxu0
      %v641 = vadd.f32 0.0, %v640
      %v642 = vpop.f32.mrf.mxu0
      %v643 = vadd.f32 0.0, %v642
      %644 = vdwg.mxu0
      %645 = vmatprep.subr.bf16.mxu0 0
      %646 = vmatpush1.bf16.msra.mxu0 0
      %647 = vmatprep.subr.bf16.mxu0 0
      %648 = vmatpush1.bf16.msra.mxu0 0
      %649 = vmatprep.subr.bf16.mxu0 0
      %650 = vmatpush1.bf16.msra.mxu0 0
      %651 = vmatprep.subr.bf16.mxu0 0
      %652 = vmatpush1.bf16.msra.mxu0 0
      %653 = vmatprep.subr.bf16.mxu0 0
      %654 = vmatpush1.bf16.msra.mxu0 0
      %655 = vmatprep.subr.bf16.mxu0 0
      %656 = vmatpush1.bf16.msra.mxu0 0
      %657 = vmatprep.subr.bf16.mxu0 0
      %658 = vmatpush1.bf16.msra.mxu0 0
      %659 = vmatprep.subr.bf16.mxu0 0
      %660 = vmatpush1.bf16.msra.mxu0 %v600
      %661 = vmatprep.subr.bf16.mxu0 0
      %662 = vmatpush2.bf16.msra.mxu0 0
      %663 = vmatprep.subr.bf16.mxu0 0
      %664 = vmatpush2.bf16.msra.mxu0 0
      %665 = vmatprep.subr.bf16.mxu0 0
      %666 = vmatpush2.bf16.msra.mxu0 0
      %667 = vmatprep.subr.bf16.mxu0 0
      %668 = vmatpush2.bf16.msra.mxu0 0
      %669 = vmatprep.subr.bf16.mxu0 0
      %670 = vmatpush2.bf16.msra.mxu0 0
      %671 = vmatprep.subr.bf16.mxu0 0
      %672 = vmatpush2.bf16.msra.mxu0 0
      %673 = vmatprep.subr.bf16.mxu0 0
      %674 = vmatpush2.bf16.msra.mxu0 0
      %675 = vmatprep.subr.bf16.mxu0 0
      %676 = vmatpush2.bf16.msra.mxu0 0
      %677 = vmatprep.mubr.bf16.mxu0 0
      %678 = vmatmul.mubr.bf16.gmra.mxu0 %v591
      %v679 = vpop.f32.mrf.mxu0
      %v680 = vadd.f32 0.0, %v679
      %v681 = vpop.f32.mrf.mxu0
      %v682 = vpop.f32.mrf.mxu0
      %v683 = vadd.f32 0.0, %v682
      %v684 = vpop.f32.mrf.mxu0
      %685 = vdwg.mxu0
      %v686 = vadd.f32 %v567, %v637
      %v687 = vadd.f32 %v568, %v639
      %v688 = vadd.f32 %v569, %v680
      %v689 = vadd.f32 %v570, %v641
      %v690 = vadd.f32 %v571, %v643
      %v691 = vadd.f32 %v572, %v683
      %s692 = scalar_lea.vmem %s1, 32
      %v693 = vld [vmem:[%s692] sm:$0xf]
      %v694 = vld [vmem:[%s692 + $0x4] sm:$0xf]
      %v697 = vunpack.c.l.b16 %v693
      %v698 = vunpack.c.l.b16 %v694
      %v699 = vpack.c.b16 %v698, %v697
      %700 = vrot.lane.b32.xlu0 %v243, 109
      %v701 = vpop.permute.xlu0 %700
      %702 = vrot.lane.b32.xlu0 %v244, 109
      %v703 = vpop.permute.xlu0 %702
      %704 = vrot.lane.b32.xlu0 %v245, 109
      %v705 = vpop.permute.xlu0 %704
      %vm706 = vcmask 891904
      %v707 = vsel %vm706, %v701, %v703
      %v708 = vsel %vm706, %v703, %v705
      %v710 = vsel %vm255, %v699, 0
      %v713 = vsel %vm259, %v707, 0
      %v716 = vsel %vm259, %v708, 0
      %v719 = vsel %vm259, %v705, 0
      %721 = vmatprep.subr.bf16.mxu0 0
      %722 = vmatpush1.bf16.msra.mxu0 0
      %723 = vmatprep.subr.bf16.mxu0 0
      %724 = vmatpush1.bf16.msra.mxu0 0
      %725 = vmatprep.subr.bf16.mxu0 0
      %726 = vmatpush1.bf16.msra.mxu0 0
      %727 = vmatprep.subr.bf16.mxu0 0
      %728 = vmatpush1.bf16.msra.mxu0 0
      %729 = vmatprep.subr.bf16.mxu0 0
      %730 = vmatpush1.bf16.msra.mxu0 0
      %731 = vmatprep.subr.bf16.mxu0 0
      %732 = vmatpush1.bf16.msra.mxu0 0
      %733 = vmatprep.subr.bf16.mxu0 0
      %734 = vmatpush1.bf16.msra.mxu0 0
      %735 = vmatprep.subr.bf16.mxu0 %v716
      %736 = vmatpush1.bf16.msra.mxu0 %v713
      %737 = vmatprep.subr.bf16.mxu0 0
      %738 = vmatpush2.bf16.msra.mxu0 0
      %739 = vmatprep.subr.bf16.mxu0 0
      %740 = vmatpush2.bf16.msra.mxu0 0
      %741 = vmatprep.subr.bf16.mxu0 0
      %742 = vmatpush2.bf16.msra.mxu0 0
      %743 = vmatprep.subr.bf16.mxu0 0
      %744 = vmatpush2.bf16.msra.mxu0 0
      %745 = vmatprep.subr.bf16.mxu0 0
      %746 = vmatpush2.bf16.msra.mxu0 0
      %747 = vmatprep.subr.bf16.mxu0 0
      %748 = vmatpush2.bf16.msra.mxu0 0
      %749 = vmatprep.subr.bf16.mxu0 0
      %750 = vmatpush2.bf16.msra.mxu0 0
      %751 = vmatprep.subr.bf16.mxu0 0
      %752 = vmatpush2.bf16.msra.mxu0 0
      %753 = vmatprep.mubr.bf16.mxu0 0
      %754 = vmatmul.mubr.bf16.gmra.mxu0 %v710
      %v755 = vpop.f32.mrf.mxu0
      %v756 = vadd.f32 0.0, %v755
      %v757 = vpop.f32.mrf.mxu0
      %v758 = vadd.f32 0.0, %v757
      %v759 = vpop.f32.mrf.mxu0
      %v760 = vadd.f32 0.0, %v759
      %v761 = vpop.f32.mrf.mxu0
      %v762 = vadd.f32 0.0, %v761
      %763 = vdwg.mxu0
      %764 = vmatprep.subr.bf16.mxu0 0
      %765 = vmatpush1.bf16.msra.mxu0 0
      %766 = vmatprep.subr.bf16.mxu0 0
      %767 = vmatpush1.bf16.msra.mxu0 0
      %768 = vmatprep.subr.bf16.mxu0 0
      %769 = vmatpush1.bf16.msra.mxu0 0
      %770 = vmatprep.subr.bf16.mxu0 0
      %771 = vmatpush1.bf16.msra.mxu0 0
      %772 = vmatprep.subr.bf16.mxu0 0
      %773 = vmatpush1.bf16.msra.mxu0 0
      %774 = vmatprep.subr.bf16.mxu0 0
      %775 = vmatpush1.bf16.msra.mxu0 0
      %776 = vmatprep.subr.bf16.mxu0 0
      %777 = vmatpush1.bf16.msra.mxu0 0
      %778 = vmatprep.subr.bf16.mxu0 0
      %779 = vmatpush1.bf16.msra.mxu0 %v719
      %780 = vmatprep.subr.bf16.mxu0 0
      %781 = vmatpush2.bf16.msra.mxu0 0
      %782 = vmatprep.subr.bf16.mxu0 0
      %783 = vmatpush2.bf16.msra.mxu0 0
      %784 = vmatprep.subr.bf16.mxu0 0
      %785 = vmatpush2.bf16.msra.mxu0 0
      %786 = vmatprep.subr.bf16.mxu0 0
      %787 = vmatpush2.bf16.msra.mxu0 0
      %788 = vmatprep.subr.bf16.mxu0 0
      %789 = vmatpush2.bf16.msra.mxu0 0
      %790 = vmatprep.subr.bf16.mxu0 0
      %791 = vmatpush2.bf16.msra.mxu0 0
      %792 = vmatprep.subr.bf16.mxu0 0
      %793 = vmatpush2.bf16.msra.mxu0 0
      %794 = vmatprep.subr.bf16.mxu0 0
      %795 = vmatpush2.bf16.msra.mxu0 0
      %796 = vmatprep.mubr.bf16.mxu0 0
      %797 = vmatmul.mubr.bf16.gmra.mxu0 %v710
      %v798 = vpop.f32.mrf.mxu0
      %v799 = vadd.f32 0.0, %v798
      %v800 = vpop.f32.mrf.mxu0
      %v801 = vpop.f32.mrf.mxu0
      %v802 = vadd.f32 0.0, %v801
      %v803 = vpop.f32.mrf.mxu0
      %804 = vdwg.mxu0
      %v805 = vadd.f32 %v686, %v756
      %v806 = vadd.f32 %v687, %v758
      %v807 = vadd.f32 %v688, %v799
      %v808 = vadd.f32 %v689, %v760
      %v809 = vadd.f32 %v690, %v762
      %v810 = vadd.f32 %v691, %v802
      %s811 = scalar_lea.vmem %s1, 40
      %v812 = vld [vmem:[%s811] sm:$0xf]
      %v813 = vld [vmem:[%s811 + $0x4] sm:$0xf]
      %v816 = vunpack.c.l.b16 %v812
      %v817 = vunpack.c.l.b16 %v813
      %v818 = vpack.c.b16 %v817, %v816
      %819 = vrot.lane.b32.xlu0 %v243, 108
      %v820 = vpop.permute.xlu0 %819
      %821 = vrot.lane.b32.xlu0 %v244, 108
      %v822 = vpop.permute.xlu0 %821
      %823 = vrot.lane.b32.xlu0 %v245, 108
      %v824 = vpop.permute.xlu0 %823
      %vm825 = vcmask 883712
      %v826 = vsel %vm825, %v820, %v822
      %v827 = vsel %vm825, %v822, %v824
      %v829 = vsel %vm255, %v818, 0
      %v832 = vsel %vm259, %v826, 0
      %v835 = vsel %vm259, %v827, 0
      %v838 = vsel %vm259, %v824, 0
      %840 = vmatprep.subr.bf16.mxu0 0
      %841 = vmatpush1.bf16.msra.mxu0 0
      %842 = vmatprep.subr.bf16.mxu0 0
      %843 = vmatpush1.bf16.msra.mxu0 0
      %844 = vmatprep.subr.bf16.mxu0 0
      %845 = vmatpush1.bf16.msra.mxu0 0
      %846 = vmatprep.subr.bf16.mxu0 0
      %847 = vmatpush1.bf16.msra.mxu0 0
      %848 = vmatprep.subr.bf16.mxu0 0
      %849 = vmatpush1.bf16.msra.mxu0 0
      %850 = vmatprep.subr.bf16.mxu0 0
      %851 = vmatpush1.bf16.msra.mxu0 0
      %852 = vmatprep.subr.bf16.mxu0 0
      %853 = vmatpush1.bf16.msra.mxu0 0
      %854 = vmatprep.subr.bf16.mxu0 %v835
      %855 = vmatpush1.bf16.msra.mxu0 %v832
      %856 = vmatprep.subr.bf16.mxu0 0
      %857 = vmatpush2.bf16.msra.mxu0 0
      %858 = vmatprep.subr.bf16.mxu0 0
      %859 = vmatpush2.bf16.msra.mxu0 0
      %860 = vmatprep.subr.bf16.mxu0 0
      %861 = vmatpush2.bf16.msra.mxu0 0
      %862 = vmatprep.subr.bf16.mxu0 0
      %863 = vmatpush2.bf16.msra.mxu0 0
      %864 = vmatprep.subr.bf16.mxu0 0
      %865 = vmatpush2.bf16.msra.mxu0 0
      %866 = vmatprep.subr.bf16.mxu0 0
      %867 = vmatpush2.bf16.msra.mxu0 0
      %868 = vmatprep.subr.bf16.mxu0 0
      %869 = vmatpush2.bf16.msra.mxu0 0
      %870 = vmatprep.subr.bf16.mxu0 0
      %871 = vmatpush2.bf16.msra.mxu0 0
      %872 = vmatprep.mubr.bf16.mxu0 0
      %873 = vmatmul.mubr.bf16.gmra.mxu0 %v829
      %v874 = vpop.f32.mrf.mxu0
      %v875 = vadd.f32 0.0, %v874
      %v876 = vpop.f32.mrf.mxu0
      %v877 = vadd.f32 0.0, %v876
      %v878 = vpop.f32.mrf.mxu0
      %v879 = vadd.f32 0.0, %v878
      %v880 = vpop.f32.mrf.mxu0
      %v881 = vadd.f32 0.0, %v880
      %882 = vdwg.mxu0
      %883 = vmatprep.subr.bf16.mxu0 0
      %884 = vmatpush1.bf16.msra.mxu0 0
      %885 = vmatprep.subr.bf16.mxu0 0
      %886 = vmatpush1.bf16.msra.mxu0 0
      %887 = vmatprep.subr.bf16.mxu0 0
      %888 = vmatpush1.bf16.msra.mxu0 0
      %889 = vmatprep.subr.bf16.mxu0 0
      %890 = vmatpush1.bf16.msra.mxu0 0
      %891 = vmatprep.subr.bf16.mxu0 0
      %892 = vmatpush1.bf16.msra.mxu0 0
      %893 = vmatprep.subr.bf16.mxu0 0
      %894 = vmatpush1.bf16.msra.mxu0 0
      %895 = vmatprep.subr.bf16.mxu0 0
      %896 = vmatpush1.bf16.msra.mxu0 0
      %897 = vmatprep.subr.bf16.mxu0 0
      %898 = vmatpush1.bf16.msra.mxu0 %v838
      %899 = vmatprep.subr.bf16.mxu0 0
      %900 = vmatpush2.bf16.msra.mxu0 0
      %901 = vmatprep.subr.bf16.mxu0 0
      %902 = vmatpush2.bf16.msra.mxu0 0
      %903 = vmatprep.subr.bf16.mxu0 0
      %904 = vmatpush2.bf16.msra.mxu0 0
      %905 = vmatprep.subr.bf16.mxu0 0
      %906 = vmatpush2.bf16.msra.mxu0 0
      %907 = vmatprep.subr.bf16.mxu0 0
      %908 = vmatpush2.bf16.msra.mxu0 0
      %909 = vmatprep.subr.bf16.mxu0 0
      %910 = vmatpush2.bf16.msra.mxu0 0
      %911 = vmatprep.subr.bf16.mxu0 0
      %912 = vmatpush2.bf16.msra.mxu0 0
      %913 = vmatprep.subr.bf16.mxu0 0
      %914 = vmatpush2.bf16.msra.mxu0 0
      %915 = vmatprep.mubr.bf16.mxu0 0
      %916 = vmatmul.mubr.bf16.gmra.mxu0 %v829
      %v917 = vpop.f32.mrf.mxu0
      %v918 = vadd.f32 0.0, %v917
      %v919 = vpop.f32.mrf.mxu0
      %v920 = vpop.f32.mrf.mxu0
      %v921 = vadd.f32 0.0, %v920
      %v922 = vpop.f32.mrf.mxu0
      %923 = vdwg.mxu0
      %v924 = vadd.f32 %v805, %v875
      %v925 = vadd.f32 %v806, %v877
      %v926 = vadd.f32 %v807, %v918
      %v927 = vadd.f32 %v808, %v879
      %v928 = vadd.f32 %v809, %v881
      %v929 = vadd.f32 %v810, %v921
      %s930 = scalar_lea.vmem %s1, 48
      %v931 = vld [vmem:[%s930] sm:$0xf]
      %v932 = vld [vmem:[%s930 + $0x4] sm:$0xf]
      %v935 = vunpack.c.l.b16 %v931
      %v936 = vunpack.c.l.b16 %v932
      %v937 = vpack.c.b16 %v936, %v935
      %938 = vrot.lane.b32.xlu0 %v243, 92
      %v939 = vpop.permute.xlu0 %938
      %940 = vrot.lane.b32.xlu0 %v244, 92
      %v941 = vpop.permute.xlu0 %940
      %942 = vrot.lane.b32.xlu0 %v245, 92
      %v943 = vpop.permute.xlu0 %942
      %vm944 = vcmask 752640
      %v945 = vsel %vm944, %v939, %v941
      %v946 = vsel %vm944, %v941, %v943
      %v948 = vsel %vm255, %v937, 0
      %v951 = vsel %vm259, %v945, 0
      %v954 = vsel %vm259, %v946, 0
      %v957 = vsel %vm259, %v943, 0
      %959 = vmatprep.subr.bf16.mxu0 0
      %960 = vmatpush1.bf16.msra.mxu0 0
      %961 = vmatprep.subr.bf16.mxu0 0
      %962 = vmatpush1.bf16.msra.mxu0 0
      %963 = vmatprep.subr.bf16.mxu0 0
      %964 = vmatpush1.bf16.msra.mxu0 0
      %965 = vmatprep.subr.bf16.mxu0 0
      %966 = vmatpush1.bf16.msra.mxu0 0
      %967 = vmatprep.subr.bf16.mxu0 0
      %968 = vmatpush1.bf16.msra.mxu0 0
      %969 = vmatprep.subr.bf16.mxu0 0
      %970 = vmatpush1.bf16.msra.mxu0 0
      %971 = vmatprep.subr.bf16.mxu0 0
      %972 = vmatpush1.bf16.msra.mxu0 0
      %973 = vmatprep.subr.bf16.mxu0 %v954
      %974 = vmatpush1.bf16.msra.mxu0 %v951
      %975 = vmatprep.subr.bf16.mxu0 0
      %976 = vmatpush2.bf16.msra.mxu0 0
      %977 = vmatprep.subr.bf16.mxu0 0
      %978 = vmatpush2.bf16.msra.mxu0 0
      %979 = vmatprep.subr.bf16.mxu0 0
      %980 = vmatpush2.bf16.msra.mxu0 0
      %981 = vmatprep.subr.bf16.mxu0 0
      %982 = vmatpush2.bf16.msra.mxu0 0
      %983 = vmatprep.subr.bf16.mxu0 0
      %984 = vmatpush2.bf16.msra.mxu0 0
      %985 = vmatprep.subr.bf16.mxu0 0
      %986 = vmatpush2.bf16.msra.mxu0 0
      %987 = vmatprep.subr.bf16.mxu0 0
      %988 = vmatpush2.bf16.msra.mxu0 0
      %989 = vmatprep.subr.bf16.mxu0 0
      %990 = vmatpush2.bf16.msra.mxu0 0
      %991 = vmatprep.mubr.bf16.mxu0 0
      %992 = vmatmul.mubr.bf16.gmra.mxu0 %v948
      %v993 = vpop.f32.mrf.mxu0
      %v994 = vadd.f32 0.0, %v993
      %v995 = vpop.f32.mrf.mxu0
      %v996 = vadd.f32 0.0, %v995
      %v997 = vpop.f32.mrf.mxu0
      %v998 = vadd.f32 0.0, %v997
      %v999 = vpop.f32.mrf.mxu0
      %v1000 = vadd.f32 0.0, %v999
      %1001 = vdwg.mxu0
      %1002 = vmatprep.subr.bf16.mxu0 0
      %1003 = vmatpush1.bf16.msra.mxu0 0
      %1004 = vmatprep.subr.bf16.mxu0 0
      %1005 = vmatpush1.bf16.msra.mxu0 0
      %1006 = vmatprep.subr.bf16.mxu0 0
      %1007 = vmatpush1.bf16.msra.mxu0 0
      %1008 = vmatprep.subr.bf16.mxu0 0
      %1009 = vmatpush1.bf16.msra.mxu0 0
      %1010 = vmatprep.subr.bf16.mxu0 0
      %1011 = vmatpush1.bf16.msra.mxu0 0
      %1012 = vmatprep.subr.bf16.mxu0 0
      %1013 = vmatpush1.bf16.msra.mxu0 0
      %1014 = vmatprep.subr.bf16.mxu0 0
      %1015 = vmatpush1.bf16.msra.mxu0 0
      %1016 = vmatprep.subr.bf16.mxu0 0
      %1017 = vmatpush1.bf16.msra.mxu0 %v957
      %1018 = vmatprep.subr.bf16.mxu0 0
      %1019 = vmatpush2.bf16.msra.mxu0 0
      %1020 = vmatprep.subr.bf16.mxu0 0
      %1021 = vmatpush2.bf16.msra.mxu0 0
      %1022 = vmatprep.subr.bf16.mxu0 0
      %1023 = vmatpush2.bf16.msra.mxu0 0
      %1024 = vmatprep.subr.bf16.mxu0 0
      %1025 = vmatpush2.bf16.msra.mxu0 0
      %1026 = vmatprep.subr.bf16.mxu0 0
      %1027 = vmatpush2.bf16.msra.mxu0 0
      %1028 = vmatprep.subr.bf16.mxu0 0
      %1029 = vmatpush2.bf16.msra.mxu0 0
      %1030 = vmatprep.subr.bf16.mxu0 0
      %1031 = vmatpush2.bf16.msra.mxu0 0
      %1032 = vmatprep.subr.bf16.mxu0 0
      %1033 = vmatpush2.bf16.msra.mxu0 0
      %1034 = vmatprep.mubr.bf16.mxu0 0
      %1035 = vmatmul.mubr.bf16.gmra.mxu0 %v948
      %v1036 = vpop.f32.mrf.mxu0
      %v1037 = vadd.f32 0.0, %v1036
      %v1038 = vpop.f32.mrf.mxu0
      %v1039 = vpop.f32.mrf.mxu0
      %v1040 = vadd.f32 0.0, %v1039
      %v1041 = vpop.f32.mrf.mxu0
      %1042 = vdwg.mxu0
      %v1043 = vadd.f32 %v924, %v994
      %v1044 = vadd.f32 %v925, %v996
      %v1045 = vadd.f32 %v926, %v1037
      %v1046 = vadd.f32 %v927, %v998
      %v1047 = vadd.f32 %v928, %v1000
      %v1048 = vadd.f32 %v929, %v1040
      %s1049 = scalar_lea.vmem %s1, 56
      %v1050 = vld [vmem:[%s1049] sm:$0xf]
      %v1051 = vld [vmem:[%s1049 + $0x4] sm:$0xf]
      %v1054 = vunpack.c.l.b16 %v1050
      %v1055 = vunpack.c.l.b16 %v1051
      %v1056 = vpack.c.b16 %v1055, %v1054
      %1057 = vrot.lane.b32.xlu0 %v243, 91
      %v1058 = vpop.permute.xlu0 %1057
      %1059 = vrot.lane.b32.xlu0 %v244, 91
      %v1060 = vpop.permute.xlu0 %1059
      %1061 = vrot.lane.b32.xlu0 %v245, 91
      %v1062 = vpop.permute.xlu0 %1061
      %vm1063 = vcmask 744448
      %v1064 = vsel %vm1063, %v1058, %v1060
      %v1065 = vsel %vm1063, %v1060, %v1062
      %v1067 = vsel %vm255, %v1056, 0
      %v1070 = vsel %vm259, %v1064, 0
      %v1073 = vsel %vm259, %v1065, 0
      %v1076 = vsel %vm259, %v1062, 0
      %1078 = vmatprep.subr.bf16.mxu0 0
      %1079 = vmatpush1.bf16.msra.mxu0 0
      %1080 = vmatprep.subr.bf16.mxu0 0
      %1081 = vmatpush1.bf16.msra.mxu0 0
      %1082 = vmatprep.subr.bf16.mxu0 0
      %1083 = vmatpush1.bf16.msra.mxu0 0
      %1084 = vmatprep.subr.bf16.mxu0 0
      %1085 = vmatpush1.bf16.msra.mxu0 0
      %1086 = vmatprep.subr.bf16.mxu0 0
      %1087 = vmatpush1.bf16.msra.mxu0 0
      %1088 = vmatprep.subr.bf16.mxu0 0
      %1089 = vmatpush1.bf16.msra.mxu0 0
      %1090 = vmatprep.subr.bf16.mxu0 0
      %1091 = vmatpush1.bf16.msra.mxu0 0
      %1092 = vmatprep.subr.bf16.mxu0 %v1073
      %1093 = vmatpush1.bf16.msra.mxu0 %v1070
      %1094 = vmatprep.subr.bf16.mxu0 0
      %1095 = vmatpush2.bf16.msra.mxu0 0
      %1096 = vmatprep.subr.bf16.mxu0 0
      %1097 = vmatpush2.bf16.msra.mxu0 0
      %1098 = vmatprep.subr.bf16.mxu0 0
      %1099 = vmatpush2.bf16.msra.mxu0 0
      %1100 = vmatprep.subr.bf16.mxu0 0
      %1101 = vmatpush2.bf16.msra.mxu0 0
      %1102 = vmatprep.subr.bf16.mxu0 0
      %1103 = vmatpush2.bf16.msra.mxu0 0
      %1104 = vmatprep.subr.bf16.mxu0 0
      %1105 = vmatpush2.bf16.msra.mxu0 0
      %1106 = vmatprep.subr.bf16.mxu0 0
      %1107 = vmatpush2.bf16.msra.mxu0 0
      %1108 = vmatprep.subr.bf16.mxu0 0
      %1109 = vmatpush2.bf16.msra.mxu0 0
      %1110 = vmatprep.mubr.bf16.mxu0 0
      %1111 = vmatmul.mubr.bf16.gmra.mxu0 %v1067
      %v1112 = vpop.f32.mrf.mxu0
      %v1113 = vadd.f32 0.0, %v1112
      %v1114 = vpop.f32.mrf.mxu0
      %v1115 = vadd.f32 0.0, %v1114
      %v1116 = vpop.f32.mrf.mxu0
      %v1117 = vadd.f32 0.0, %v1116
      %v1118 = vpop.f32.mrf.mxu0
      %v1119 = vadd.f32 0.0, %v1118
      %1120 = vdwg.mxu0
      %1121 = vmatprep.subr.bf16.mxu0 0
      %1122 = vmatpush1.bf16.msra.mxu0 0
      %1123 = vmatprep.subr.bf16.mxu0 0
      %1124 = vmatpush1.bf16.msra.mxu0 0
      %1125 = vmatprep.subr.bf16.mxu0 0
      %1126 = vmatpush1.bf16.msra.mxu0 0
      %1127 = vmatprep.subr.bf16.mxu0 0
      %1128 = vmatpush1.bf16.msra.mxu0 0
      %1129 = vmatprep.subr.bf16.mxu0 0
      %1130 = vmatpush1.bf16.msra.mxu0 0
      %1131 = vmatprep.subr.bf16.mxu0 0
      %1132 = vmatpush1.bf16.msra.mxu0 0
      %1133 = vmatprep.subr.bf16.mxu0 0
      %1134 = vmatpush1.bf16.msra.mxu0 0
      %1135 = vmatprep.subr.bf16.mxu0 0
      %1136 = vmatpush1.bf16.msra.mxu0 %v1076
      %1137 = vmatprep.subr.bf16.mxu0 0
      %1138 = vmatpush2.bf16.msra.mxu0 0
      %1139 = vmatprep.subr.bf16.mxu0 0
      %1140 = vmatpush2.bf16.msra.mxu0 0
      %1141 = vmatprep.subr.bf16.mxu0 0
      %1142 = vmatpush2.bf16.msra.mxu0 0
      %1143 = vmatprep.subr.bf16.mxu0 0
      %1144 = vmatpush2.bf16.msra.mxu0 0
      %1145 = vmatprep.subr.bf16.mxu0 0
      %1146 = vmatpush2.bf16.msra.mxu0 0
      %1147 = vmatprep.subr.bf16.mxu0 0
      %1148 = vmatpush2.bf16.msra.mxu0 0
      %1149 = vmatprep.subr.bf16.mxu0 0
      %1150 = vmatpush2.bf16.msra.mxu0 0
      %1151 = vmatprep.subr.bf16.mxu0 0
      %1152 = vmatpush2.bf16.msra.mxu0 0
      %1153 = vmatprep.mubr.bf16.mxu0 0
      %1154 = vmatmul.mubr.bf16.gmra.mxu0 %v1067
      %v1155 = vpop.f32.mrf.mxu0
      %v1156 = vadd.f32 0.0, %v1155
      %v1157 = vpop.f32.mrf.mxu0
      %v1158 = vpop.f32.mrf.mxu0
      %v1159 = vadd.f32 0.0, %v1158
      %v1160 = vpop.f32.mrf.mxu0
      %1161 = vdwg.mxu0
      %v1162 = vadd.f32 %v1043, %v1113
      %v1163 = vadd.f32 %v1044, %v1115
      %v1164 = vadd.f32 %v1045, %v1156
      %v1165 = vadd.f32 %v1046, %v1117
      %v1166 = vadd.f32 %v1047, %v1119
      %v1167 = vadd.f32 %v1048, %v1159
      %s1168 = scalar_lea.vmem %s1, 64
      %v1169 = vld [vmem:[%s1168] sm:$0xf]
      %v1170 = vld [vmem:[%s1168 + $0x4] sm:$0xf]
      %v1173 = vunpack.c.l.b16 %v1169
      %v1174 = vunpack.c.l.b16 %v1170
      %v1175 = vpack.c.b16 %v1174, %v1173
      %1176 = vrot.lane.b32.xlu0 %v243, 90
      %v1177 = vpop.permute.xlu0 %1176
      %1178 = vrot.lane.b32.xlu0 %v244, 90
      %v1179 = vpop.permute.xlu0 %1178
      %1180 = vrot.lane.b32.xlu0 %v245, 90
      %v1181 = vpop.permute.xlu0 %1180
      %vm1182 = vcmask 736256
      %v1183 = vsel %vm1182, %v1177, %v1179
      %v1184 = vsel %vm1182, %v1179, %v1181
      %v1186 = vsel %vm255, %v1175, 0
      %v1189 = vsel %vm259, %v1183, 0
      %v1192 = vsel %vm259, %v1184, 0
      %v1195 = vsel %vm259, %v1181, 0
      %1197 = vmatprep.subr.bf16.mxu0 0
      %1198 = vmatpush1.bf16.msra.mxu0 0
      %1199 = vmatprep.subr.bf16.mxu0 0
      %1200 = vmatpush1.bf16.msra.mxu0 0
      %1201 = vmatprep.subr.bf16.mxu0 0
      %1202 = vmatpush1.bf16.msra.mxu0 0
      %1203 = vmatprep.subr.bf16.mxu0 0
      %1204 = vmatpush1.bf16.msra.mxu0 0
      %1205 = vmatprep.subr.bf16.mxu0 0
      %1206 = vmatpush1.bf16.msra.mxu0 0
      %1207 = vmatprep.subr.bf16.mxu0 0
      %1208 = vmatpush1.bf16.msra.mxu0 0
      %1209 = vmatprep.subr.bf16.mxu0 0
      %1210 = vmatpush1.bf16.msra.mxu0 0
      %1211 = vmatprep.subr.bf16.mxu0 %v1192
      %1212 = vmatpush1.bf16.msra.mxu0 %v1189
      %1213 = vmatprep.subr.bf16.mxu0 0
      %1214 = vmatpush2.bf16.msra.mxu0 0
      %1215 = vmatprep.subr.bf16.mxu0 0
      %1216 = vmatpush2.bf16.msra.mxu0 0
      %1217 = vmatprep.subr.bf16.mxu0 0
      %1218 = vmatpush2.bf16.msra.mxu0 0
      %1219 = vmatprep.subr.bf16.mxu0 0
      %1220 = vmatpush2.bf16.msra.mxu0 0
      %1221 = vmatprep.subr.bf16.mxu0 0
      %1222 = vmatpush2.bf16.msra.mxu0 0
      %1223 = vmatprep.subr.bf16.mxu0 0
      %1224 = vmatpush2.bf16.msra.mxu0 0
      %1225 = vmatprep.subr.bf16.mxu0 0
      %1226 = vmatpush2.bf16.msra.mxu0 0
      %1227 = vmatprep.subr.bf16.mxu0 0
      %1228 = vmatpush2.bf16.msra.mxu0 0
      %1229 = vmatprep.mubr.bf16.mxu0 0
      %1230 = vmatmul.mubr.bf16.gmra.mxu0 %v1186
      %v1231 = vpop.f32.mrf.mxu0
      %v1232 = vadd.f32 0.0, %v1231
      %v1233 = vpop.f32.mrf.mxu0
      %v1234 = vadd.f32 0.0, %v1233
      %v1235 = vpop.f32.mrf.mxu0
      %v1236 = vadd.f32 0.0, %v1235
      %v1237 = vpop.f32.mrf.mxu0
      %v1238 = vadd.f32 0.0, %v1237
      %1239 = vdwg.mxu0
      %1240 = vmatprep.subr.bf16.mxu0 0
      %1241 = vmatpush1.bf16.msra.mxu0 0
      %1242 = vmatprep.subr.bf16.mxu0 0
      %1243 = vmatpush1.bf16.msra.mxu0 0
      %1244 = vmatprep.subr.bf16.mxu0 0
      %1245 = vmatpush1.bf16.msra.mxu0 0
      %1246 = vmatprep.subr.bf16.mxu0 0
      %1247 = vmatpush1.bf16.msra.mxu0 0
      %1248 = vmatprep.subr.bf16.mxu0 0
      %1249 = vmatpush1.bf16.msra.mxu0 0
      %1250 = vmatprep.subr.bf16.mxu0 0
      %1251 = vmatpush1.bf16.msra.mxu0 0
      %1252 = vmatprep.subr.bf16.mxu0 0
      %1253 = vmatpush1.bf16.msra.mxu0 0
      %1254 = vmatprep.subr.bf16.mxu0 0
      %1255 = vmatpush1.bf16.msra.mxu0 %v1195
      %1256 = vmatprep.subr.bf16.mxu0 0
      %1257 = vmatpush2.bf16.msra.mxu0 0
      %1258 = vmatprep.subr.bf16.mxu0 0
      %1259 = vmatpush2.bf16.msra.mxu0 0
      %1260 = vmatprep.subr.bf16.mxu0 0
      %1261 = vmatpush2.bf16.msra.mxu0 0
      %1262 = vmatprep.subr.bf16.mxu0 0
      %1263 = vmatpush2.bf16.msra.mxu0 0
      %1264 = vmatprep.subr.bf16.mxu0 0
      %1265 = vmatpush2.bf16.msra.mxu0 0
      %1266 = vmatprep.subr.bf16.mxu0 0
      %1267 = vmatpush2.bf16.msra.mxu0 0
      %1268 = vmatprep.subr.bf16.mxu0 0
      %1269 = vmatpush2.bf16.msra.mxu0 0
      %1270 = vmatprep.subr.bf16.mxu0 0
      %1271 = vmatpush2.bf16.msra.mxu0 0
      %1272 = vmatprep.mubr.bf16.mxu0 0
      %1273 = vmatmul.mubr.bf16.gmra.mxu0 %v1186
      %v1274 = vpop.f32.mrf.mxu0
      %v1275 = vadd.f32 0.0, %v1274
      %v1276 = vpop.f32.mrf.mxu0
      %v1277 = vpop.f32.mrf.mxu0
      %v1278 = vadd.f32 0.0, %v1277
      %v1279 = vpop.f32.mrf.mxu0
      %1280 = vdwg.mxu0
      %v1281 = vadd.f32 %v1162, %v1232
      %v1282 = vadd.f32 %v1163, %v1234
      %v1283 = vadd.f32 %v1164, %v1275
      %v1284 = vadd.f32 %v1165, %v1236
      %v1285 = vadd.f32 %v1166, %v1238
      %v1286 = vadd.f32 %v1167, %v1278
      %v1287 = vld [vmem:[%s2] sm:$0x7]
      %v1289 = vlaneseq
      %v1290 = vshrl.u32 %v1289, 7
      %v1291 = vsub.s32 0, %v1290
      %v1292 = vrot.slane %v1287, %v1291
      %v1293 = vlaneseq
      %v1294 = vshrl.u32 %v1293, 7
      %v1295 = vsub.s32 1, %v1294
      %v1296 = vrot.slane %v1287, %v1295
      %v1297 = vlaneseq
      %v1298 = vshrl.u32 %v1297, 7
      %v1299 = vsub.s32 2, %v1298
      %v1300 = vrot.slane %v1287, %v1299
      %v1304 = vmul.f32 %v1281, %v1292
      %v1305 = vmul.f32 %v1282, %v1296
      %v1306 = vmul.f32 %v1283, %v1300
      %v1307 = vmul.f32 %v1284, %v1292
      %v1308 = vmul.f32 %v1285, %v1296
      %v1309 = vmul.f32 %v1286, %v1300
      %v1310 = vadd.f32 %v1304, %v1305
      %vm1311 = vcmask 261120
      %v1312 = vsel %vm1311, %v1306, 0.0
      %v1313 = vadd.f32 %v1310, %v1312
      %1314 = vadd.xlane.f32.xlu0 %v1313
      %v1315 = vpop.xlane.xlu0 %1314
      %v1316 = vadd.f32 %v1307, %v1308
      %v1317 = vsel %vm1311, %v1309, 0.0
      %v1318 = vadd.f32 %v1316, %v1317
      %1319 = vadd.xlane.f32.xlu0 %v1318
      %v1320 = vpop.xlane.xlu0 %1319
      %v1321 = vmul.f32 %v1315, 0.00390625
      %v1322 = vmul.f32 %v1320, 0.00390625
      %v1323 = vsub.f32 %v1281, %v1321
      %v1324 = vsub.f32 %v1282, %v1321
      %v1325 = vsub.f32 %v1283, %v1321
      %v1326 = vsub.f32 %v1284, %v1322
      %v1327 = vsub.f32 %v1285, %v1322
      %v1328 = vsub.f32 %v1286, %v1322
      %v1329 = vmul.f32 %v1323, %v1292
      %v1330 = vmul.f32 %v1324, %v1296
      %v1331 = vmul.f32 %v1325, %v1300
      %v1332 = vmul.f32 %v1326, %v1292
      %v1333 = vmul.f32 %v1327, %v1296
      %v1334 = vmul.f32 %v1328, %v1300
      %v1335 = vmul.f32 %v1329, %v1329
      %v1336 = vmul.f32 %v1330, %v1330
      %v1337 = vmul.f32 %v1331, %v1331
      %v1338 = vmul.f32 %v1332, %v1332
      %v1339 = vmul.f32 %v1333, %v1333
      %v1340 = vmul.f32 %v1334, %v1334
      %v1341 = vadd.f32 %v1335, %v1336
      %v1342 = vsel %vm1311, %v1337, 0.0
      %v1343 = vadd.f32 %v1341, %v1342
      %1344 = vadd.xlane.f32.xlu0 %v1343
      %v1345 = vpop.xlane.xlu0 %1344
      %v1346 = vadd.f32 %v1338, %v1339
      %v1347 = vsel %vm1311, %v1340, 0.0
      %v1348 = vadd.f32 %v1346, %v1347
      %1349 = vadd.xlane.f32.xlu0 %v1348
      %v1350 = vpop.xlane.xlu0 %1349
      %v1351 = vmul.f32 %v1345, 0.00390625
      %v1352 = vmul.f32 %v1350, 0.00390625
      %v1353 = vadd.f32 %v1351, 1e-05
      %v1354 = vadd.f32 %v1352, 1e-05
      %v1355 = vrsqrt.pop %v1353
      %v1356 = vrsqrt.pop %v1354
      %v1357 = vmul.f32 %v1323, %v1355
      %v1358 = vmul.f32 %v1324, %v1355
      %v1359 = vmul.f32 %v1325, %v1355
      %v1360 = vmul.f32 %v1326, %v1356
      %v1361 = vmul.f32 %v1327, %v1356
      %v1362 = vmul.f32 %v1328, %v1356
      %v1363 = vld [vmem:[%s3] sm:$0xff]
      %v1364 = vld [vmem:[%s3 + $0x8] sm:$0xff]
      %1366 = vset.pattern.permute.xlu0 0
      %1367 = vperm.xlu0 %1366, %v1363
      %v1368 = vpop.permute.xlu0 %1367
      %1371 = vset.pattern.permute.xlu0 0
      %1372 = vperm.xlu0 %1371, %v1364
      %v1373 = vpop.permute.xlu0 %1372
      %v1375 = vmul.f32 %v1357, %v1368
      %v1376 = vmul.f32 %v1358, %v1368
      %v1377 = vmul.f32 %v1359, %v1368
      %v1378 = vmul.f32 %v1360, %v1373
      %v1379 = vmul.f32 %v1361, %v1373
      %v1380 = vmul.f32 %v1362, %v1373
      %v1381 = vld [vmem:[%s4] sm:$0xff]
      %v1382 = vld [vmem:[%s4 + $0x8] sm:$0xff]
      %1384 = vset.pattern.permute.xlu0 0
      %1385 = vperm.xlu0 %1384, %v1381
      %v1386 = vpop.permute.xlu0 %1385
      %1389 = vset.pattern.permute.xlu0 0
      %1390 = vperm.xlu0 %1389, %v1382
      %v1391 = vpop.permute.xlu0 %1390
      %v1393 = vadd.f32 %v1375, %v1386
      %v1394 = vadd.f32 %v1376, %v1386
      %v1395 = vadd.f32 %v1377, %v1386
      %v1396 = vadd.f32 %v1378, %v1391
      %v1397 = vadd.f32 %v1379, %v1391
      %v1398 = vadd.f32 %v1380, %v1391
      %vm1399 = vcmp.ge.f32.partialorder %v1393, 0.0
      %vm1400 = vcmp.ge.f32.partialorder %v1394, 0.0
      %vm1401 = vcmp.ge.f32.partialorder %v1395, 0.0
      %vm1402 = vcmp.ge.f32.partialorder %v1396, 0.0
      %vm1403 = vcmp.ge.f32.partialorder %v1397, 0.0
      %vm1404 = vcmp.ge.f32.partialorder %v1398, 0.0
      %v1405 = vmul.f32 %v1393, 0.2
      %v1406 = vmul.f32 %v1394, 0.2
      %v1407 = vmul.f32 %v1395, 0.2
      %v1408 = vmul.f32 %v1396, 0.2
      %v1409 = vmul.f32 %v1397, 0.2
      %v1410 = vmul.f32 %v1398, 0.2
      %v1411 = vsel %vm1399, %v1393, %v1405
      %v1412 = vsel %vm1400, %v1394, %v1406
      %v1413 = vsel %vm1401, %v1395, %v1407
      %v1414 = vsel %vm1402, %v1396, %v1408
      %v1415 = vsel %vm1403, %v1397, %v1409
      %v1416 = vsel %vm1404, %v1398, %v1410
      %v1417 = vpack.c.bf16 %v1414, %v1411
      %v1418 = vpack.c.bf16 %v1415, %v1412
      %v1419 = vpack.c.bf16 %v1416, %v1413
      %v1423 = vunpack.c.l.b16 %v1417
      %v1424 = vunpack.c.l.b16 %v1418
      %v1425 = vunpack.c.l.b16 %v1419
      %v1426 = vunpack.c.h.b16 %v1417
      %v1427 = vunpack.c.h.b16 %v1418
      %v1428 = vunpack.c.h.b16 %v1419
      %v1429 = vpack.c.b16 %v1424, %v1423
      %v1430 = vpack.c.b16 %v1425, %v1425
      %v1431 = vpack.c.b16 %v1427, %v1426
      %v1432 = vpack.c.b16 %v1428, %v1428
      %1437 = vst [vmem:[%s224] sm:$0xff] %v1429
      %vm1438 = vcmask 257024
      %1439 = vst.msk [vmem:[%s224 + $0x8] sm:$0xf] %vm1438, %v1430
      %1440 = vst [vmem:[%s224 + $0xc] sm:$0xff] %v1431
      %1441 = vst.msk [vmem:[%s224 + $0x14] sm:$0xf] %vm1438, %v1432
      %p1442 = scmp.lt.s32.totalorder %s16, 1
      %s1443 = scalar_select %p1442, %s16, 1
      %s1444 = smul.addr %s1443, 6
      %s1445 = smul.addr %s1444, 4
      %s1446 = scalar_lea.vmem %s5, %s1445
      // Predicated region
      $region41: #{generator_model_forward.9} parent=39 // pred_check
        %p1447 = pneg %p144
      $region42: #{generator_model_forward.9} parent=39 // pred_check_branch
        %1449 = sbr.rel (%p1447) target = $region44
      $region43: #{generator_model_forward.9} parent=39 // pred_region
        _
      $region44: #{generator_model_forward.9} parent=39 // pred_fallthru
        _
    $region40: #{generator_model_forward.9} parent=5 // pred_fallthru
      _
    %p1450 = scmp.le.s32.totalorder 2, %s11
    // Predicated region
    $region45: #{generator_model_forward.9} parent=5 // pred_check
      %p1451 = pneg %p1450
    $region46: #{generator_model_forward.9} parent=5 // pred_check_branch
      %1453 = sbr.rel (%p1451) target = $region48
    $region47: #{generator_model_forward.9} parent=5 // pred_region
      %s1454 = ssub.s32 %s11, 2
      // Predicated region
      $region49: #{generator_model_forward.9} parent=47 // pred_check
        %p1455 = pneg %p150
      $region50: #{generator_model_forward.9} parent=47 // pred_check_branch
        %1457 = sbr.rel (%p1455) target = $region52
      $region51: #{generator_model_forward.9} parent=47 // pred_region
        %p1458 = scmp.lt.s32.totalorder %s17, 1
        %s1459 = scalar_select %p1458, %s17, 1
        %s1460 = smul.addr %s1459, 6
        %s1461 = smul.addr %s1460, 4
        %s1462 = scalar_lea.vmem %s5, %s1461
      $region52: #{generator_model_forward.9} parent=47 // pred_fallthru
        _
    $region48: #{generator_model_forward.9} parent=5 // pred_fallthru
      _
  $region6: #{generator_model_forward.9} parent=0 // loop_footer
    %s15 = sadd.s32 1, %s11
  $region7: #{generator_model_forward.9} parent=0 // loop_footer_branch
    %10 = sbr.rel target = $region3
  $region8: #{generator_model_forward.9} parent=0 // loop_exit
    _

// kernel: generator_model_forward.10
$region0: #{generator_model_forward.10}
  #allocation0 [shape = 'u32[]', space=smem, size = 0x4, offset = 0x4, fixed_abs, tag = 'smem constant byte address 0x4 - core index']
  #allocation1 [shape = 'u32[144,128]{1,0:T(1,128)}', space=vmem, size = 0x12000, scoped, tag = 'internal scratch']
  %s0 = inlined_call_operand.vmem [shape: bf16[2,32,82], index: 0, kind: input, shape index: {}]
  %s1 = inlined_call_operand.vmem [shape: bf16[9,16,8], index: 1, kind: input, shape index: {}]
  %s2 = inlined_call_operand.vmem [shape: f32[1,72], index: 2, kind: input, shape index: {}]
  %s3 = inlined_call_operand.vmem [shape: f32[16,1], index: 3, kind: input, shape index: {}]
  %s4 = inlined_call_operand.vmem [shape: f32[16,1], index: 4, kind: input, shape index: {}]
  %s5 = inlined_call_operand.vmem [shape: bf16[2,16,72], index: 5, kind: output, shape index: {}]
  %s6 = sld [smem:[#allocation0]]
  $region53: #{generator_model_forward.10} parent=0
    _
  %s8 = ssub.s32 1, %s6
  %s9 = scalar_select 0, %s8, %s6
  loop: start=0, step=1, limit=4
  $region2: #{generator_model_forward.10} parent=0 // loop_pre_header
    _
  $region3: #{generator_model_forward.10} parent=0 // loop_header
    %s11 = sphi 0, %s15
    %p12 = scmp.ge.s32.totalorder %s11, 4
    %s21 = sphi 0, %s23
    %s24 = sphi 0, %s21
    %s25 = sphi 0, %s24
    %s41 = sphi 0, %s25
    %s45 = sphi 0, %s45
    %s47 = sphi 0, %s45
    %s48 = sphi 0, %s47
    %s62 = sphi 0, %s48
    %s66 = sphi 0, %s66
    %s68 = sphi 0, %s66
    %s69 = sphi 0, %s68
    %s83 = sphi 0, %s69
    %s87 = sphi 0, %s87
    %s89 = sphi 0, %s87
    %s90 = sphi 0, %s89
    %s104 = sphi 0, %s90
    %s108 = sphi 0, %s108
    %s110 = sphi 0, %s108
    %s111 = sphi 0, %s110
    %s125 = sphi 0, %s111
    %s131 = sphi 0, %s133
    %s134 = sphi 0, %s131
    %s135 = sphi 0, %s134
    %s151 = sphi 0, %s135
  $region4: #{generator_model_forward.10} parent=0 // loop_header_branch
    %14 = sbr.rel (%p12) target = $region8
  $region5: #{generator_model_forward.10} parent=0 // loop_body
    %s16 = ssub.s32 %s11, 1
    %s17 = ssub.s32 %s11, 2
    %s18 = sadd.s32 %s11, 1
    %s19 = ssub.s32 %s11, %s18
    %p20 = scmp.eq.s32.totalorder %s19, 0
    %s22 = sadd.s32 %s21, 1
    %s23 = scalar_select %p20, %s21, %s22
    %p26 = pneg %p20
    %p27 = scmp.eq.s32.totalorder %s11, 1
    %p28 = por %p26, %p27
    %p29 = scmp.ne.s32.totalorder %s21, %s24
    %p30 = scmp.eq.s32.totalorder %s11, 0
    %p31 = por %p29, %p30
    %p32 = scmp.ne.s32.totalorder %s21, %s24
    %p33 = scmp.eq.s32.totalorder %s16, 1
    %p34 = por %p32, %p33
    %p35 = scmp.ne.s32.totalorder %s24, %s25
    %p36 = scmp.eq.s32.totalorder %s16, 0
    %p37 = por %p35, %p36
    %p38 = scmp.ne.s32.totalorder %s24, %s25
    %p39 = scmp.eq.s32.totalorder %s17, 1
    %p40 = por %p38, %p39
    %p42 = scmp.ne.s32.totalorder %s25, %s41
    %p43 = scmp.eq.s32.totalorder %s17, 0
    %p44 = por %p42, %p43
    %s46 = sadd.s32 %s45, 1
    %p49 = scmp.eq.s32.totalorder %s11, 1
    %p50 = scmp.ne.s32.totalorder %s45, %s47
    %p51 = scmp.eq.s32.totalorder %s11, 0
    %p52 = por %p50, %p51
    %p53 = scmp.ne.s32.totalorder %s45, %s47
    %p54 = scmp.eq.s32.totalorder %s16, 1
    %p55 = por %p53, %p54
    %p56 = scmp.ne.s32.totalorder %s47, %s48
    %p57 = scmp.eq.s32.totalorder %s16, 0
    %p58 = por %p56, %p57
    %p59 = scmp.ne.s32.totalorder %s47, %s48
    %p60 = scmp.eq.s32.totalorder %s17, 1
    %p61 = por %p59, %p60
    %p63 = scmp.ne.s32.totalorder %s48, %s62
    %p64 = scmp.eq.s32.totalorder %s17, 0
    %p65 = por %p63, %p64
    %s67 = sadd.s32 %s66, 1
    %p70 = scmp.eq.s32.totalorder %s11, 1
    %p71 = scmp.ne.s32.totalorder %s66, %s68
    %p72 = scmp.eq.s32.totalorder %s11, 0
    %p73 = por %p71, %p72
    %p74 = scmp.ne.s32.totalorder %s66, %s68
    %p75 = scmp.eq.s32.totalorder %s16, 1
    %p76 = por %p74, %p75
    %p77 = scmp.ne.s32.totalorder %s68, %s69
    %p78 = scmp.eq.s32.totalorder %s16, 0
    %p79 = por %p77, %p78
    %p80 = scmp.ne.s32.totalorder %s68, %s69
    %p81 = scmp.eq.s32.totalorder %s17, 1
    %p82 = por %p80, %p81
    %p84 = scmp.ne.s32.totalorder %s69, %s83
    %p85 = scmp.eq.s32.totalorder %s17, 0
    %p86 = por %p84, %p85
    %s88 = sadd.s32 %s87, 1
    %p91 = scmp.eq.s32.totalorder %s11, 1
    %p92 = scmp.ne.s32.totalorder %s87, %s89
    %p93 = scmp.eq.s32.totalorder %s11, 0
    %p94 = por %p92, %p93
    %p95 = scmp.ne.s32.totalorder %s87, %s89
    %p96 = scmp.eq.s32.totalorder %s16, 1
    %p97 = por %p95, %p96
    %p98 = scmp.ne.s32.totalorder %s89, %s90
    %p99 = scmp.eq.s32.totalorder %s16, 0
    %p100 = por %p98, %p99
    %p101 = scmp.ne.s32.totalorder %s89, %s90
    %p102 = scmp.eq.s32.totalorder %s17, 1
    %p103 = por %p101, %p102
    %p105 = scmp.ne.s32.totalorder %s90, %s104
    %p106 = scmp.eq.s32.totalorder %s17, 0
    %p107 = por %p105, %p106
    %s109 = sadd.s32 %s108, 1
    %p112 = scmp.eq.s32.totalorder %s11, 1
    %p113 = scmp.ne.s32.totalorder %s108, %s110
    %p114 = scmp.eq.s32.totalorder %s11, 0
    %p115 = por %p113, %p114
    %p116 = scmp.ne.s32.totalorder %s108, %s110
    %p117 = scmp.eq.s32.totalorder %s16, 1
    %p118 = por %p116, %p117
    %p119 = scmp.ne.s32.totalorder %s110, %s111
    %p120 = scmp.eq.s32.totalorder %s16, 0
    %p121 = por %p119, %p120
    %p122 = scmp.ne.s32.totalorder %s110, %s111
    %p123 = scmp.eq.s32.totalorder %s17, 1
    %p124 = por %p122, %p123
    %p126 = scmp.ne.s32.totalorder %s111, %s125
    %p127 = scmp.eq.s32.totalorder %s17, 0
    %p128 = por %p126, %p127
    %s129 = ssub.s32 %s11, %s18
    %p130 = scmp.eq.s32.totalorder %s129, 0
    %s132 = sadd.s32 %s131, 1
    %s133 = scalar_select %p130, %s131, %s132
    %p136 = pneg %p130
    %p137 = scmp.eq.s32.totalorder %s11, 1
    %p138 = por %p136, %p137
    %p139 = scmp.ne.s32.totalorder %s131, %s134
    %p140 = scmp.eq.s32.totalorder %s11, 0
    %p141 = por %p139, %p140
    %p142 = scmp.ne.s32.totalorder %s131, %s134
    %p143 = scmp.eq.s32.totalorder %s16, 1
    %p144 = por %p142, %p143
    %p145 = scmp.ne.s32.totalorder %s134, %s135
    %p146 = scmp.eq.s32.totalorder %s16, 0
    %p147 = por %p145, %p146
    %p148 = scmp.ne.s32.totalorder %s134, %s135
    %p149 = scmp.eq.s32.totalorder %s17, 1
    %p150 = por %p148, %p149
    %p152 = scmp.ne.s32.totalorder %s135, %s151
    %p153 = scmp.eq.s32.totalorder %s17, 0
    %p154 = por %p152, %p153
    %p155 = scmp.le.s32.totalorder 1, %s11
    %p156 = scmp.lt.s32.totalorder %s11, 3
    %p157 = pnand %p155, %p156
    %p158 = pneg %p157
    // Predicated region
    $region9: #{generator_model_forward.10} parent=5 // pred_check
      _
    $region10: #{generator_model_forward.10} parent=5 // pred_check_branch
      %160 = sbr.rel (%p157) target = $region12
    $region11: #{generator_model_forward.10} parent=5 // pred_region
      %s161 = ssub.s32 %s11, 1
      // Predicated region
      $region13: #{generator_model_forward.10} parent=11 // pred_check
        %p162 = pneg %p58
      $region14: #{generator_model_forward.10} parent=11 // pred_check_branch
        %164 = sbr.rel (%p162) target = $region16
      $region15: #{generator_model_forward.10} parent=11 // pred_region
        _
      $region16: #{generator_model_forward.10} parent=11 // pred_fallthru
        _
      // Predicated region
      $region17: #{generator_model_forward.10} parent=11 // pred_check
        %p165 = pneg %p79
      $region18: #{generator_model_forward.10} parent=11 // pred_check_branch
        %167 = sbr.rel (%p165) target = $region20
      $region19: #{generator_model_forward.10} parent=11 // pred_region
        _
      $region20: #{generator_model_forward.10} parent=11 // pred_fallthru
        _
      // Predicated region
      $region21: #{generator_model_forward.10} parent=11 // pred_check
        %p168 = pneg %p100
      $region22: #{generator_model_forward.10} parent=11 // pred_check_branch
        %170 = sbr.rel (%p168) target = $region24
      $region23: #{generator_model_forward.10} parent=11 // pred_region
        _
      $region24: #{generator_model_forward.10} parent=11 // pred_fallthru
        _
      // Predicated region
      $region25: #{generator_model_forward.10} parent=11 // pred_check
        %p171 = pneg %p121
      $region26: #{generator_model_forward.10} parent=11 // pred_check_branch
        %173 = sbr.rel (%p171) target = $region28
      $region27: #{generator_model_forward.10} parent=11 // pred_region
        _
      $region28: #{generator_model_forward.10} parent=11 // pred_fallthru
        _
    $region12: #{generator_model_forward.10} parent=5 // pred_fallthru
      _
    %p174 = scmp.lt.s32.totalorder %s11, 2
    // Predicated region
    $region29: #{generator_model_forward.10} parent=5 // pred_check
      %p175 = pneg %p174
    $region30: #{generator_model_forward.10} parent=5 // pred_check_branch
      %177 = sbr.rel (%p175) target = $region32
    $region31: #{generator_model_forward.10} parent=5 // pred_region
      // Predicated region
      $region33: #{generator_model_forward.10} parent=31 // pred_check
        %p178 = pneg %p31
      $region34: #{generator_model_forward.10} parent=31 // pred_check_branch
        %180 = sbr.rel (%p178) target = $region36
      $region35: #{generator_model_forward.10} parent=31 // pred_region
        %p181 = scmp.lt.s32.totalorder %s11, 1
        %s182 = scalar_select %p181, %s11, 1
        %s183 = smul.addr %s182, 4
        %s184 = smul.addr %s183, 4
        %s185 = scalar_lea.vmem %s0, %s184
      $region36: #{generator_model_forward.10} parent=31 // pred_fallthru
        _
    $region32: #{generator_model_forward.10} parent=5 // pred_fallthru
      _
    %p186 = scmp.le.s32.totalorder 1, %s11
    %p187 = scmp.lt.s32.totalorder %s11, 3
    %p188 = pnand %p186, %p187
    %p189 = pneg %p188
    // Predicated region
    $region37: #{generator_model_forward.10} parent=5 // pred_check
      _
    $region38: #{generator_model_forward.10} parent=5 // pred_check_branch
      %191 = sbr.rel (%p188) target = $region40
    $region39: #{generator_model_forward.10} parent=5 // pred_region
      %s192 = ssub.s32 %s11, 1
      %p193 = scmp.lt.s32.totalorder %s16, 1
      %s194 = scalar_select %p193, %s16, 1
      %s195 = smul.addr %s194, 4
      %s196 = smul.addr %s195, 4
      %s197 = scalar_lea.vmem %s0, %s196
      %p198 = pneg %p37
      %p199 = pneg %p34
      %p200 = pneg %p58
      %p201 = pneg %p55
      %p202 = pneg %p79
      %p203 = pneg %p76
      %p204 = pneg %p100
      %p205 = pneg %p97
      %p206 = pneg %p121
      %p207 = pneg %p118
      %p208 = pneg %p147
      %p209 = pneg %p144
      %p210 = scmp.lt.s32.totalorder %s16, 1
      %s211 = scalar_select %p210, %s16, 1
      %s212 = smul.addr %s211, 2
      %s213 = smul.addr %s212, 4
      %s214 = scalar_lea.vmem %s5, %s213
      %p215 = scmp.lt.s32.totalorder %s16, 1
      %s216 = scalar_select %p215, %s16, 1
      %s217 = smul.addr %s216, 4
      %s218 = smul.addr %s217, 4
      %s219 = scalar_lea.vmem %s0, %s218
      %p220 = scmp.lt.s32.totalorder %s16, 1
      %s221 = scalar_select %p220, %s16, 1
      %s222 = smul.addr %s221, 2
      %s223 = smul.addr %s222, 4
      %s224 = scalar_lea.vmem %s5, %s223
      %v226 = vld [vmem:[%s219] sm:$0xf]
      %v227 = vld [vmem:[%s1] sm:$0xf]
      %v228 = vld [vmem:[%s1 + $0x4] sm:$0xf]
      %v229 = vld [vmem:[%s219 + $0x4] sm:$0xf]
      %s230 = scalar_lea.vmem %s1, 8
      %v231 = vld [vmem:[%s230] sm:$0xf]
      %v232 = vld [vmem:[%s230 + $0x4] sm:$0xf]
      %v235 = vunpack.c.l.b16 %v231
      %v236 = vunpack.c.l.b16 %v232
      %v237 = vpack.c.b16 %v236, %v235
      %vm238 = vcmask 64512
      %v240 = vsel %vm238, %v237, 0
      %vm242 = vcmask 1043456
      %v244 = vsel %vm242, %v229, 0
      %246 = vmatprep.subr.bf16.mxu0 0
      %247 = vmatpush1.bf16.msra.mxu0 0
      %248 = vmatprep.subr.bf16.mxu0 0
      %249 = vmatpush1.bf16.msra.mxu0 0
      %250 = vmatprep.subr.bf16.mxu0 0
      %251 = vmatpush1.bf16.msra.mxu0 0
      %252 = vmatprep.subr.bf16.mxu0 0
      %253 = vmatpush1.bf16.msra.mxu0 0
      %254 = vmatprep.subr.bf16.mxu0 0
      %255 = vmatpush1.bf16.msra.mxu0 0
      %256 = vmatprep.subr.bf16.mxu0 0
      %257 = vmatpush1.bf16.msra.mxu0 0
      %258 = vmatprep.subr.bf16.mxu0 0
      %259 = vmatpush1.bf16.msra.mxu0 0
      %260 = vmatprep.subr.bf16.mxu0 0
      %261 = vmatpush1.bf16.msra.mxu0 %v244
      %262 = vmatprep.subr.bf16.mxu0 0
      %263 = vmatpush2.bf16.msra.mxu0 0
      %264 = vmatprep.subr.bf16.mxu0 0
      %265 = vmatpush2.bf16.msra.mxu0 0
      %266 = vmatprep.subr.bf16.mxu0 0
      %267 = vmatpush2.bf16.msra.mxu0 0
      %268 = vmatprep.subr.bf16.mxu0 0
      %269 = vmatpush2.bf16.msra.mxu0 0
      %270 = vmatprep.subr.bf16.mxu0 0
      %271 = vmatpush2.bf16.msra.mxu0 0
      %272 = vmatprep.subr.bf16.mxu0 0
      %273 = vmatpush2.bf16.msra.mxu0 0
      %274 = vmatprep.subr.bf16.mxu0 0
      %275 = vmatpush2.bf16.msra.mxu0 0
      %276 = vmatprep.subr.bf16.mxu0 0
      %277 = vmatpush2.bf16.msra.mxu0 0
      %278 = vmatprep.mubr.bf16.mxu0 0
      %279 = vmatmul.mubr.bf16.gmra.mxu0 %v240
      %v280 = vpop.f32.mrf.mxu0
      %v281 = vadd.f32 0.0, %v280
      %v282 = vpop.f32.mrf.mxu0
      %v283 = vpop.f32.mrf.mxu0
      %v284 = vadd.f32 0.0, %v283
      %v285 = vpop.f32.mrf.mxu0
      %286 = vdwg.mxu0
      %v289 = vunpack.c.l.b16 %v227
      %v290 = vunpack.c.l.b16 %v228
      %v291 = vpack.c.b16 %v290, %v289
      %v293 = vsel %vm238, %v291, 0
      %v296 = vsel %vm242, %v226, 0
      %298 = vmatprep.subr.bf16.mxu0 0
      %299 = vmatpush1.bf16.msra.mxu0 0
      %300 = vmatprep.subr.bf16.mxu0 0
      %301 = vmatpush1.bf16.msra.mxu0 0
      %302 = vmatprep.subr.bf16.mxu0 0
      %303 = vmatpush1.bf16.msra.mxu0 0
      %304 = vmatprep.subr.bf16.mxu0 0
      %305 = vmatpush1.bf16.msra.mxu0 0
      %306 = vmatprep.subr.bf16.mxu0 0
      %307 = vmatpush1.bf16.msra.mxu0 0
      %308 = vmatprep.subr.bf16.mxu0 0
      %309 = vmatpush1.bf16.msra.mxu0 0
      %310 = vmatprep.subr.bf16.mxu0 0
      %311 = vmatpush1.bf16.msra.mxu0 0
      %312 = vmatprep.subr.bf16.mxu0 0
      %313 = vmatpush1.bf16.msra.mxu0 %v296
      %314 = vmatprep.subr.bf16.mxu0 0
      %315 = vmatpush2.bf16.msra.mxu0 0
      %316 = vmatprep.subr.bf16.mxu0 0
      %317 = vmatpush2.bf16.msra.mxu0 0
      %318 = vmatprep.subr.bf16.mxu0 0
      %319 = vmatpush2.bf16.msra.mxu0 0
      %320 = vmatprep.subr.bf16.mxu0 0
      %321 = vmatpush2.bf16.msra.mxu0 0
      %322 = vmatprep.subr.bf16.mxu0 0
      %323 = vmatpush2.bf16.msra.mxu0 0
      %324 = vmatprep.subr.bf16.mxu0 0
      %325 = vmatpush2.bf16.msra.mxu0 0
      %326 = vmatprep.subr.bf16.mxu0 0
      %327 = vmatpush2.bf16.msra.mxu0 0
      %328 = vmatprep.subr.bf16.mxu0 0
      %329 = vmatpush2.bf16.msra.mxu0 0
      %330 = vmatprep.mubr.bf16.mxu0 0
      %331 = vmatmul.mubr.bf16.gmra.mxu0 %v293
      %v332 = vpop.f32.mrf.mxu0
      %v333 = vadd.f32 %v281, %v332
      %v334 = vpop.f32.mrf.mxu0
      %v335 = vpop.f32.mrf.mxu0
      %v336 = vadd.f32 %v284, %v335
      %v337 = vpop.f32.mrf.mxu0
      %338 = vdwg.mxu0
      %s339 = scalar_lea.vmem %s1, 16
      %v340 = vld [vmem:[%s339] sm:$0xf]
      %v341 = vld [vmem:[%s339 + $0x4] sm:$0xf]
      %v344 = vunpack.c.l.b16 %v340
      %v345 = vunpack.c.l.b16 %v341
      %v346 = vpack.c.b16 %v345, %v344
      %v348 = vunpack.c.l.b16 %v226
      %v349 = vpack.c.b16 %v348, %v348
      %350 = vrot.lane.b32.xlu0 %v349, 127
      %v351 = vpop.permute.xlu0 %350
      %v353 = vsel %vm238, %v346, 0
      %v356 = vsel %vm242, %v351, 0
      %358 = vmatprep.subr.bf16.mxu0 0
      %359 = vmatpush1.bf16.msra.mxu0 0
      %360 = vmatprep.subr.bf16.mxu0 0
      %361 = vmatpush1.bf16.msra.mxu0 0
      %362 = vmatprep.subr.bf16.mxu0 0
      %363 = vmatpush1.bf16.msra.mxu0 0
      %364 = vmatprep.subr.bf16.mxu0 0
      %365 = vmatpush1.bf16.msra.mxu0 0
      %366 = vmatprep.subr.bf16.mxu0 0
      %367 = vmatpush1.bf16.msra.mxu0 0
      %368 = vmatprep.subr.bf16.mxu0 0
      %369 = vmatpush1.bf16.msra.mxu0 0
      %370 = vmatprep.subr.bf16.mxu0 0
      %371 = vmatpush1.bf16.msra.mxu0 0
      %372 = vmatprep.subr.bf16.mxu0 0
      %373 = vmatpush1.bf16.msra.mxu0 %v356
      %374 = vmatprep.subr.bf16.mxu0 0
      %375 = vmatpush2.bf16.msra.mxu0 0
      %376 = vmatprep.subr.bf16.mxu0 0
      %377 = vmatpush2.bf16.msra.mxu0 0
      %378 = vmatprep.subr.bf16.mxu0 0
      %379 = vmatpush2.bf16.msra.mxu0 0
      %380 = vmatprep.subr.bf16.mxu0 0
      %381 = vmatpush2.bf16.msra.mxu0 0
      %382 = vmatprep.subr.bf16.mxu0 0
      %383 = vmatpush2.bf16.msra.mxu0 0
      %384 = vmatprep.subr.bf16.mxu0 0
      %385 = vmatpush2.bf16.msra.mxu0 0
      %386 = vmatprep.subr.bf16.mxu0 0
      %387 = vmatpush2.bf16.msra.mxu0 0
      %388 = vmatprep.subr.bf16.mxu0 0
      %389 = vmatpush2.bf16.msra.mxu0 0
      %390 = vmatprep.mubr.bf16.mxu0 0
      %391 = vmatmul.mubr.bf16.gmra.mxu0 %v353
      %v392 = vpop.f32.mrf.mxu0
      %v393 = vadd.f32 0.0, %v392
      %v394 = vpop.f32.mrf.mxu0
      %v395 = vpop.f32.mrf.mxu0
      %v396 = vadd.f32 0.0, %v395
      %v397 = vpop.f32.mrf.mxu0
      %398 = vdwg.mxu0
      %v399 = vadd.f32 %v333, %v393
      %v400 = vadd.f32 %v336, %v396
      %v401 = vld [vmem:[%s219 + $0x8] sm:$0xf]
      %s402 = scalar_lea.vmem %s1, 24
      %v403 = vld [vmem:[%s402] sm:$0xf]
      %v404 = vld [vmem:[%s402 + $0x4] sm:$0xf]
      %v407 = vunpack.c.l.b16 %v403
      %v408 = vunpack.c.l.b16 %v404
      %v409 = vpack.c.b16 %v408, %v407
      %v411 = vsel %vm238, %v409, 0
      %v414 = vsel %vm242, %v401, 0
      %416 = vmatprep.subr.bf16.mxu0 0
      %417 = vmatpush1.bf16.msra.mxu0 0
      %418 = vmatprep.subr.bf16.mxu0 0
      %419 = vmatpush1.bf16.msra.mxu0 0
      %420 = vmatprep.subr.bf16.mxu0 0
      %421 = vmatpush1.bf16.msra.mxu0 0
      %422 = vmatprep.subr.bf16.mxu0 0
      %423 = vmatpush1.bf16.msra.mxu0 0
      %424 = vmatprep.subr.bf16.mxu0 0
      %425 = vmatpush1.bf16.msra.mxu0 0
      %426 = vmatprep.subr.bf16.mxu0 0
      %427 = vmatpush1.bf16.msra.mxu0 0
      %428 = vmatprep.subr.bf16.mxu0 0
      %429 = vmatpush1.bf16.msra.mxu0 0
      %430 = vmatprep.subr.bf16.mxu0 0
      %431 = vmatpush1.bf16.msra.mxu0 %v414
      %432 = vmatprep.subr.bf16.mxu0 0
      %433 = vmatpush2.bf16.msra.mxu0 0
      %434 = vmatprep.subr.bf16.mxu0 0
      %435 = vmatpush2.bf16.msra.mxu0 0
      %436 = vmatprep.subr.bf16.mxu0 0
      %437 = vmatpush2.bf16.msra.mxu0 0
      %438 = vmatprep.subr.bf16.mxu0 0
      %439 = vmatpush2.bf16.msra.mxu0 0
      %440 = vmatprep.subr.bf16.mxu0 0
      %441 = vmatpush2.bf16.msra.mxu0 0
      %442 = vmatprep.subr.bf16.mxu0 0
      %443 = vmatpush2.bf16.msra.mxu0 0
      %444 = vmatprep.subr.bf16.mxu0 0
      %445 = vmatpush2.bf16.msra.mxu0 0
      %446 = vmatprep.subr.bf16.mxu0 0
      %447 = vmatpush2.bf16.msra.mxu0 0
      %448 = vmatprep.mubr.bf16.mxu0 0
      %449 = vmatmul.mubr.bf16.gmra.mxu0 %v411
      %v450 = vpop.f32.mrf.mxu0
      %v451 = vadd.f32 0.0, %v450
      %v452 = vpop.f32.mrf.mxu0
      %v453 = vpop.f32.mrf.mxu0
      %v454 = vadd.f32 0.0, %v453
      %v455 = vpop.f32.mrf.mxu0
      %456 = vdwg.mxu0
      %v457 = vadd.f32 %v399, %v451
      %v458 = vadd.f32 %v400, %v454
      %v459 = vld [vmem:[%s219 + $0xc] sm:$0xf]
      %s460 = scalar_lea.vmem %s1, 32
      %v461 = vld [vmem:[%s460] sm:$0xf]
      %v462 = vld [vmem:[%s460 + $0x4] sm:$0xf]
      %v465 = vunpack.c.l.b16 %v461
      %v466 = vunpack.c.l.b16 %v462
      %v467 = vpack.c.b16 %v466, %v465
      %v469 = vsel %vm238, %v467, 0
      %v472 = vsel %vm242, %v459, 0
      %474 = vmatprep.subr.bf16.mxu0 0
      %475 = vmatpush1.bf16.msra.mxu0 0
      %476 = vmatprep.subr.bf16.mxu0 0
      %477 = vmatpush1.bf16.msra.mxu0 0
      %478 = vmatprep.subr.bf16.mxu0 0
      %479 = vmatpush1.bf16.msra.mxu0 0
      %480 = vmatprep.subr.bf16.mxu0 0
      %481 = vmatpush1.bf16.msra.mxu0 0
      %482 = vmatprep.subr.bf16.mxu0 0
      %483 = vmatpush1.bf16.msra.mxu0 0
      %484 = vmatprep.subr.bf16.mxu0 0
      %485 = vmatpush1.bf16.msra.mxu0 0
      %486 = vmatprep.subr.bf16.mxu0 0
      %487 = vmatpush1.bf16.msra.mxu0 0
      %488 = vmatprep.subr.bf16.mxu0 0
      %489 = vmatpush1.bf16.msra.mxu0 %v472
      %490 = vmatprep.subr.bf16.mxu0 0
      %491 = vmatpush2.bf16.msra.mxu0 0
      %492 = vmatprep.subr.bf16.mxu0 0
      %493 = vmatpush2.bf16.msra.mxu0 0
      %494 = vmatprep.subr.bf16.mxu0 0
      %495 = vmatpush2.bf16.msra.mxu0 0
      %496 = vmatprep.subr.bf16.mxu0 0
      %497 = vmatpush2.bf16.msra.mxu0 0
      %498 = vmatprep.subr.bf16.mxu0 0
      %499 = vmatpush2.bf16.msra.mxu0 0
      %500 = vmatprep.subr.bf16.mxu0 0
      %501 = vmatpush2.bf16.msra.mxu0 0
      %502 = vmatprep.subr.bf16.mxu0 0
      %503 = vmatpush2.bf16.msra.mxu0 0
      %504 = vmatprep.subr.bf16.mxu0 0
      %505 = vmatpush2.bf16.msra.mxu0 0
      %506 = vmatprep.mubr.bf16.mxu0 0
      %507 = vmatmul.mubr.bf16.gmra.mxu0 %v469
      %v508 = vpop.f32.mrf.mxu0
      %v509 = vadd.f32 0.0, %v508
      %v510 = vpop.f32.mrf.mxu0
      %v511 = vpop.f32.mrf.mxu0
      %v512 = vadd.f32 0.0, %v511
      %v513 = vpop.f32.mrf.mxu0
      %514 = vdwg.mxu0
      %v515 = vadd.f32 %v457, %v509
      %v516 = vadd.f32 %v458, %v512
      %s517 = scalar_lea.vmem %s1, 40
      %v518 = vld [vmem:[%s517] sm:$0xf]
      %v519 = vld [vmem:[%s517 + $0x4] sm:$0xf]
      %v522 = vunpack.c.l.b16 %v518
      %v523 = vunpack.c.l.b16 %v519
      %v524 = vpack.c.b16 %v523, %v522
      %v526 = vunpack.c.l.b16 %v401
      %v527 = vpack.c.b16 %v526, %v526
      %528 = vrot.lane.b32.xlu0 %v527, 127
      %v529 = vpop.permute.xlu0 %528
      %v531 = vsel %vm238, %v524, 0
      %v534 = vsel %vm242, %v529, 0
      %536 = vmatprep.subr.bf16.mxu0 0
      %537 = vmatpush1.bf16.msra.mxu0 0
      %538 = vmatprep.subr.bf16.mxu0 0
      %539 = vmatpush1.bf16.msra.mxu0 0
      %540 = vmatprep.subr.bf16.mxu0 0
      %541 = vmatpush1.bf16.msra.mxu0 0
      %542 = vmatprep.subr.bf16.mxu0 0
      %543 = vmatpush1.bf16.msra.mxu0 0
      %544 = vmatprep.subr.bf16.mxu0 0
      %545 = vmatpush1.bf16.msra.mxu0 0
      %546 = vmatprep.subr.bf16.mxu0 0
      %547 = vmatpush1.bf16.msra.mxu0 0
      %548 = vmatprep.subr.bf16.mxu0 0
      %549 = vmatpush1.bf16.msra.mxu0 0
      %550 = vmatprep.subr.bf16.mxu0 0
      %551 = vmatpush1.bf16.msra.mxu0 %v534
      %552 = vmatprep.subr.bf16.mxu0 0
      %553 = vmatpush2.bf16.msra.mxu0 0
      %554 = vmatprep.subr.bf16.mxu0 0
      %555 = vmatpush2.bf16.msra.mxu0 0
      %556 = vmatprep.subr.bf16.mxu0 0
      %557 = vmatpush2.bf16.msra.mxu0 0
      %558 = vmatprep.subr.bf16.mxu0 0
      %559 = vmatpush2.bf16.msra.mxu0 0
      %560 = vmatprep.subr.bf16.mxu0 0
      %561 = vmatpush2.bf16.msra.mxu0 0
      %562 = vmatprep.subr.bf16.mxu0 0
      %563 = vmatpush2.bf16.msra.mxu0 0
      %564 = vmatprep.subr.bf16.mxu0 0
      %565 = vmatpush2.bf16.msra.mxu0 0
      %566 = vmatprep.subr.bf16.mxu0 0
      %567 = vmatpush2.bf16.msra.mxu0 0
      %568 = vmatprep.mubr.bf16.mxu0 0
      %569 = vmatmul.mubr.bf16.gmra.mxu0 %v531
      %v570 = vpop.f32.mrf.mxu0
      %v571 = vadd.f32 0.0, %v570
      %v572 = vpop.f32.mrf.mxu0
      %v573 = vpop.f32.mrf.mxu0
      %v574 = vadd.f32 0.0, %v573
      %v575 = vpop.f32.mrf.mxu0
      %576 = vdwg.mxu0
      %v577 = vadd.f32 %v515, %v571
      %v578 = vadd.f32 %v516, %v574
      %s579 = scalar_lea.vmem %s1, 48
      %v580 = vld [vmem:[%s579] sm:$0xf]
      %v581 = vld [vmem:[%s579 + $0x4] sm:$0xf]
      %v584 = vunpack.c.l.b16 %v580
      %v585 = vunpack.c.l.b16 %v581
      %v586 = vpack.c.b16 %v585, %v584
      %587 = vrot.lane.b32.xlu0 %v349, 119
      %v588 = vpop.permute.xlu0 %587
      %v590 = vsel %vm238, %v586, 0
      %v593 = vsel %vm242, %v588, 0
      %595 = vmatprep.subr.bf16.mxu0 0
      %596 = vmatpush1.bf16.msra.mxu0 0
      %597 = vmatprep.subr.bf16.mxu0 0
      %598 = vmatpush1.bf16.msra.mxu0 0
      %599 = vmatprep.subr.bf16.mxu0 0
      %600 = vmatpush1.bf16.msra.mxu0 0
      %601 = vmatprep.subr.bf16.mxu0 0
      %602 = vmatpush1.bf16.msra.mxu0 0
      %603 = vmatprep.subr.bf16.mxu0 0
      %604 = vmatpush1.bf16.msra.mxu0 0
      %605 = vmatprep.subr.bf16.mxu0 0
      %606 = vmatpush1.bf16.msra.mxu0 0
      %607 = vmatprep.subr.bf16.mxu0 0
      %608 = vmatpush1.bf16.msra.mxu0 0
      %609 = vmatprep.subr.bf16.mxu0 0
      %610 = vmatpush1.bf16.msra.mxu0 %v593
      %611 = vmatprep.subr.bf16.mxu0 0
      %612 = vmatpush2.bf16.msra.mxu0 0
      %613 = vmatprep.subr.bf16.mxu0 0
      %614 = vmatpush2.bf16.msra.mxu0 0
      %615 = vmatprep.subr.bf16.mxu0 0
      %616 = vmatpush2.bf16.msra.mxu0 0
      %617 = vmatprep.subr.bf16.mxu0 0
      %618 = vmatpush2.bf16.msra.mxu0 0
      %619 = vmatprep.subr.bf16.mxu0 0
      %620 = vmatpush2.bf16.msra.mxu0 0
      %621 = vmatprep.subr.bf16.mxu0 0
      %622 = vmatpush2.bf16.msra.mxu0 0
      %623 = vmatprep.subr.bf16.mxu0 0
      %624 = vmatpush2.bf16.msra.mxu0 0
      %625 = vmatprep.subr.bf16.mxu0 0
      %626 = vmatpush2.bf16.msra.mxu0 0
      %627 = vmatprep.mubr.bf16.mxu0 0
      %628 = vmatmul.mubr.bf16.gmra.mxu0 %v590
      %v629 = vpop.f32.mrf.mxu0
      %v630 = vadd.f32 0.0, %v629
      %v631 = vpop.f32.mrf.mxu0
      %v632 = vpop.f32.mrf.mxu0
      %v633 = vadd.f32 0.0, %v632
      %v634 = vpop.f32.mrf.mxu0
      %635 = vdwg.mxu0
      %v636 = vadd.f32 %v577, %v630
      %v637 = vadd.f32 %v578, %v633
      %s638 = scalar_lea.vmem %s1, 56
      %v639 = vld [vmem:[%s638] sm:$0xf]
      %v640 = vld [vmem:[%s638 + $0x4] sm:$0xf]
      %v643 = vunpack.c.l.b16 %v639
      %v644 = vunpack.c.l.b16 %v640
      %v645 = vpack.c.b16 %v644, %v643
      %v647 = vunpack.c.l.b16 %v229
      %v648 = vpack.c.b16 %v647, %v647
      %649 = vrot.lane.b32.xlu0 %v648, 119
      %v650 = vpop.permute.xlu0 %649
      %v652 = vsel %vm238, %v645, 0
      %v655 = vsel %vm242, %v650, 0
      %657 = vmatprep.subr.bf16.mxu0 0
      %658 = vmatpush1.bf16.msra.mxu0 0
      %659 = vmatprep.subr.bf16.mxu0 0
      %660 = vmatpush1.bf16.msra.mxu0 0
      %661 = vmatprep.subr.bf16.mxu0 0
      %662 = vmatpush1.bf16.msra.mxu0 0
      %663 = vmatprep.subr.bf16.mxu0 0
      %664 = vmatpush1.bf16.msra.mxu0 0
      %665 = vmatprep.subr.bf16.mxu0 0
      %666 = vmatpush1.bf16.msra.mxu0 0
      %667 = vmatprep.subr.bf16.mxu0 0
      %668 = vmatpush1.bf16.msra.mxu0 0
      %669 = vmatprep.subr.bf16.mxu0 0
      %670 = vmatpush1.bf16.msra.mxu0 0
      %671 = vmatprep.subr.bf16.mxu0 0
      %672 = vmatpush1.bf16.msra.mxu0 %v655
      %673 = vmatprep.subr.bf16.mxu0 0
      %674 = vmatpush2.bf16.msra.mxu0 0
      %675 = vmatprep.subr.bf16.mxu0 0
      %676 = vmatpush2.bf16.msra.mxu0 0
      %677 = vmatprep.subr.bf16.mxu0 0
      %678 = vmatpush2.bf16.msra.mxu0 0
      %679 = vmatprep.subr.bf16.mxu0 0
      %680 = vmatpush2.bf16.msra.mxu0 0
      %681 = vmatprep.subr.bf16.mxu0 0
      %682 = vmatpush2.bf16.msra.mxu0 0
      %683 = vmatprep.subr.bf16.mxu0 0
      %684 = vmatpush2.bf16.msra.mxu0 0
      %685 = vmatprep.subr.bf16.mxu0 0
      %686 = vmatpush2.bf16.msra.mxu0 0
      %687 = vmatprep.subr.bf16.mxu0 0
      %688 = vmatpush2.bf16.msra.mxu0 0
      %689 = vmatprep.mubr.bf16.mxu0 0
      %690 = vmatmul.mubr.bf16.gmra.mxu0 %v652
      %v691 = vpop.f32.mrf.mxu0
      %v692 = vadd.f32 0.0, %v691
      %v693 = vpop.f32.mrf.mxu0
      %v694 = vpop.f32.mrf.mxu0
      %v695 = vadd.f32 0.0, %v694
      %v696 = vpop.f32.mrf.mxu0
      %697 = vdwg.mxu0
      %v698 = vadd.f32 %v636, %v692
      %v699 = vadd.f32 %v637, %v695
      %s700 = scalar_lea.vmem %s1, 64
      %v701 = vld [vmem:[%s700] sm:$0xf]
      %v702 = vld [vmem:[%s700 + $0x4] sm:$0xf]
      %v705 = vunpack.c.l.b16 %v701
      %v706 = vunpack.c.l.b16 %v702
      %v707 = vpack.c.b16 %v706, %v705
      %708 = vrot.lane.b32.xlu0 %v349, 118
      %v709 = vpop.permute.xlu0 %708
      %v711 = vsel %vm238, %v707, 0
      %v714 = vsel %vm242, %v709, 0
      %716 = vmatprep.subr.bf16.mxu0 0
      %717 = vmatpush1.bf16.msra.mxu0 0
      %718 = vmatprep.subr.bf16.mxu0 0
      %719 = vmatpush1.bf16.msra.mxu0 0
      %720 = vmatprep.subr.bf16.mxu0 0
      %721 = vmatpush1.bf16.msra.mxu0 0
      %722 = vmatprep.subr.bf16.mxu0 0
      %723 = vmatpush1.bf16.msra.mxu0 0
      %724 = vmatprep.subr.bf16.mxu0 0
      %725 = vmatpush1.bf16.msra.mxu0 0
      %726 = vmatprep.subr.bf16.mxu0 0
      %727 = vmatpush1.bf16.msra.mxu0 0
      %728 = vmatprep.subr.bf16.mxu0 0
      %729 = vmatpush1.bf16.msra.mxu0 0
      %730 = vmatprep.subr.bf16.mxu0 0
      %731 = vmatpush1.bf16.msra.mxu0 %v714
      %732 = vmatprep.subr.bf16.mxu0 0
      %733 = vmatpush2.bf16.msra.mxu0 0
      %734 = vmatprep.subr.bf16.mxu0 0
      %735 = vmatpush2.bf16.msra.mxu0 0
      %736 = vmatprep.subr.bf16.mxu0 0
      %737 = vmatpush2.bf16.msra.mxu0 0
      %738 = vmatprep.subr.bf16.mxu0 0
      %739 = vmatpush2.bf16.msra.mxu0 0
      %740 = vmatprep.subr.bf16.mxu0 0
      %741 = vmatpush2.bf16.msra.mxu0 0
      %742 = vmatprep.subr.bf16.mxu0 0
      %743 = vmatpush2.bf16.msra.mxu0 0
      %744 = vmatprep.subr.bf16.mxu0 0
      %745 = vmatpush2.bf16.msra.mxu0 0
      %746 = vmatprep.subr.bf16.mxu0 0
      %747 = vmatpush2.bf16.msra.mxu0 0
      %748 = vmatprep.mubr.bf16.mxu0 0
      %749 = vmatmul.mubr.bf16.gmra.mxu0 %v711
      %v750 = vpop.f32.mrf.mxu0
      %v751 = vadd.f32 0.0, %v750
      %v752 = vpop.f32.mrf.mxu0
      %v753 = vpop.f32.mrf.mxu0
      %v754 = vadd.f32 0.0, %v753
      %v755 = vpop.f32.mrf.mxu0
      %756 = vdwg.mxu0
      %v757 = vadd.f32 %v698, %v751
      %v758 = vadd.f32 %v699, %v754
      %v759 = vld [vmem:[%s2] sm:$0x1]
      %v761 = vlaneseq
      %v762 = vshrl.u32 %v761, 7
      %v763 = vsub.s32 0, %v762
      %v764 = vrot.slane %v759, %v763
      %v766 = vmul.f32 %v757, %v764
      %v767 = vmul.f32 %v758, %v764
      %vm768 = vcmask 588800
      %v769 = vsel %vm768, %v766, 0.0
      %770 = vadd.xlane.f32.xlu0 %v769
      %v771 = vpop.xlane.xlu0 %770
      %v772 = vsel %vm768, %v767, 0.0
      %773 = vadd.xlane.f32.xlu0 %v772
      %v774 = vpop.xlane.xlu0 %773
      %v775 = vmul.f32 %v771, 0.015625
      %v776 = vmul.f32 %v774, 0.015625
      %v777 = vsub.f32 %v757, %v775
      %v778 = vsub.f32 %v758, %v776
      %v779 = vmul.f32 %v777, %v764
      %v780 = vmul.f32 %v778, %v764
      %v781 = vmul.f32 %v779, %v779
      %v782 = vmul.f32 %v780, %v780
      %v783 = vsel %vm768, %v781, 0.0
      %784 = vadd.xlane.f32.xlu0 %v783
      %v785 = vpop.xlane.xlu0 %784
      %v786 = vsel %vm768, %v782, 0.0
      %787 = vadd.xlane.f32.xlu0 %v786
      %v788 = vpop.xlane.xlu0 %787
      %v789 = vmul.f32 %v785, 0.015625
      %v790 = vmul.f32 %v788, 0.015625
      %v791 = vadd.f32 %v789, 1e-05
      %v792 = vadd.f32 %v790, 1e-05
      %v793 = vrsqrt.pop %v791
      %v794 = vrsqrt.pop %v792
      %v795 = vmul.f32 %v777, %v793
      %v796 = vmul.f32 %v778, %v794
      %v797 = vld [vmem:[%s3] sm:$0xff]
      %v798 = vld [vmem:[%s3 + $0x8] sm:$0xff]
      %800 = vset.pattern.permute.xlu0 0
      %801 = vperm.xlu0 %800, %v797
      %v802 = vpop.permute.xlu0 %801
      %805 = vset.pattern.permute.xlu0 0
      %806 = vperm.xlu0 %805, %v798
      %v807 = vpop.permute.xlu0 %806
      %v809 = vmul.f32 %v795, %v802
      %v810 = vmul.f32 %v796, %v807
      %v811 = vld [vmem:[%s4] sm:$0xff]
      %v812 = vld [vmem:[%s4 + $0x8] sm:$0xff]
      %814 = vset.pattern.permute.xlu0 0
      %815 = vperm.xlu0 %814, %v811
      %v816 = vpop.permute.xlu0 %815
      %819 = vset.pattern.permute.xlu0 0
      %820 = vperm.xlu0 %819, %v812
      %v821 = vpop.permute.xlu0 %820
      %v823 = vadd.f32 %v809, %v816
      %v824 = vadd.f32 %v810, %v821
      %vm825 = vcmp.ge.f32.partialorder %v823, 0.0
      %vm826 = vcmp.ge.f32.partialorder %v824, 0.0
      %v827 = vmul.f32 %v823, 0.2
      %v828 = vmul.f32 %v824, 0.2
      %v829 = vsel %vm825, %v823, %v827
      %v830 = vsel %vm826, %v824, %v828
      %v831 = vpack.c.bf16 %v830, %v829
      %v833 = vunpack.c.l.b16 %v831
      %v834 = vunpack.c.h.b16 %v831
      %v835 = vpack.c.b16 %v833, %v833
      %v836 = vpack.c.b16 %v834, %v834
      %vm839 = vcmask 584704
      %840 = vst.msk [vmem:[%s224] sm:$0xf] %vm839, %v835
      %841 = vst.msk [vmem:[%s224 + $0x4] sm:$0xf] %vm839, %v836
      %p842 = scmp.lt.s32.totalorder %s16, 1
      %s843 = scalar_select %p842, %s16, 1
      %s844 = smul.addr %s843, 2
      %s845 = smul.addr %s844, 4
      %s846 = scalar_lea.vmem %s5, %s845
      // Predicated region
      $region41: #{generator_model_forward.10} parent=39 // pred_check
        %p847 = pneg %p144
      $region42: #{generator_model_forward.10} parent=39 // pred_check_branch
        %849 = sbr.rel (%p847) target = $region44
      $region43: #{generator_model_forward.10} parent=39 // pred_region
        _
      $region44: #{generator_model_forward.10} parent=39 // pred_fallthru
        _
    $region40: #{generator_model_forward.10} parent=5 // pred_fallthru
      _
    %p850 = scmp.le.s32.totalorder 2, %s11
    // Predicated region
    $region45: #{generator_model_forward.10} parent=5 // pred_check
      %p851 = pneg %p850
    $region46: #{generator_model_forward.10} parent=5 // pred_check_branch
      %853 = sbr.rel (%p851) target = $region48
    $region47: #{generator_model_forward.10} parent=5 // pred_region
      %s854 = ssub.s32 %s11, 2
      // Predicated region
      $region49: #{generator_model_forward.10} parent=47 // pred_check
        %p855 = pneg %p150
      $region50: #{generator_model_forward.10} parent=47 // pred_check_branch
        %857 = sbr.rel (%p855) target = $region52
      $region51: #{generator_model_forward.10} parent=47 // pred_region
        %p858 = scmp.lt.s32.totalorder %s17, 1
        %s859 = scalar_select %p858, %s17, 1
        %s860 = smul.addr %s859, 2
        %s861 = smul.addr %s860, 4
        %s862 = scalar_lea.vmem %s5, %s861
      $region52: #{generator_model_forward.10} parent=47 // pred_fallthru
        _
    $region48: #{generator_model_forward.10} parent=5 // pred_fallthru
      _
  $region6: #{generator_model_forward.10} parent=0 // loop_footer
    %s15 = sadd.s32 1, %s11
  $region7: #{generator_model_forward.10} parent=0 // loop_footer_branch
    %10 = sbr.rel target = $region3
  $region8: #{generator_model_forward.10} parent=0 // loop_exit
    _

// kernel: generator_model_forward.11
$region0: #{generator_model_forward.11}
  #allocation0 [shape = 'u32[]', space=smem, size = 0x4, offset = 0x4, fixed_abs, tag = 'smem constant byte address 0x4 - core index']
  #allocation1 [shape = 'u32[144,128]{1,0:T(1,128)}', space=vmem, size = 0x12000, scoped, tag = 'internal scratch']
  %s0 = inlined_call_operand.vmem [shape: bf16[2,64,26], index: 0, kind: input, shape index: {}]
  %s1 = inlined_call_operand.vmem [shape: bf16[9,32,16], index: 1, kind: input, shape index: {}]
  %s2 = inlined_call_operand.vmem [shape: f32[1,20], index: 2, kind: input, shape index: {}]
  %s3 = inlined_call_operand.vmem [shape: f32[32,1], index: 3, kind: input, shape index: {}]
  %s4 = inlined_call_operand.vmem [shape: f32[32,1], index: 4, kind: input, shape index: {}]
  %s5 = inlined_call_operand.vmem [shape: bf16[2,32,20], index: 5, kind: output, shape index: {}]
  %s6 = sld [smem:[#allocation0]]
  $region53: #{generator_model_forward.11} parent=0
    _
  %s8 = ssub.s32 1, %s6
  %s9 = scalar_select 0, %s8, %s6
  loop: start=0, step=1, limit=4
  $region2: #{generator_model_forward.11} parent=0 // loop_pre_header
    _
  $region3: #{generator_model_forward.11} parent=0 // loop_header
    %s11 = sphi 0, %s15
    %p12 = scmp.ge.s32.totalorder %s11, 4
    %s21 = sphi 0, %s23
    %s24 = sphi 0, %s21
    %s25 = sphi 0, %s24
    %s41 = sphi 0, %s25
    %s45 = sphi 0, %s45
    %s47 = sphi 0, %s45
    %s48 = sphi 0, %s47
    %s62 = sphi 0, %s48
    %s66 = sphi 0, %s66
    %s68 = sphi 0, %s66
    %s69 = sphi 0, %s68
    %s83 = sphi 0, %s69
    %s87 = sphi 0, %s87
    %s89 = sphi 0, %s87
    %s90 = sphi 0, %s89
    %s104 = sphi 0, %s90
    %s108 = sphi 0, %s108
    %s110 = sphi 0, %s108
    %s111 = sphi 0, %s110
    %s125 = sphi 0, %s111
    %s131 = sphi 0, %s133
    %s134 = sphi 0, %s131
    %s135 = sphi 0, %s134
    %s151 = sphi 0, %s135
  $region4: #{generator_model_forward.11} parent=0 // loop_header_branch
    %14 = sbr.rel (%p12) target = $region8
  $region5: #{generator_model_forward.11} parent=0 // loop_body
    %s16 = ssub.s32 %s11, 1
    %s17 = ssub.s32 %s11, 2
    %s18 = sadd.s32 %s11, 1
    %s19 = ssub.s32 %s11, %s18
    %p20 = scmp.eq.s32.totalorder %s19, 0
    %s22 = sadd.s32 %s21, 1
    %s23 = scalar_select %p20, %s21, %s22
    %p26 = pneg %p20
    %p27 = scmp.eq.s32.totalorder %s11, 1
    %p28 = por %p26, %p27
    %p29 = scmp.ne.s32.totalorder %s21, %s24
    %p30 = scmp.eq.s32.totalorder %s11, 0
    %p31 = por %p29, %p30
    %p32 = scmp.ne.s32.totalorder %s21, %s24
    %p33 = scmp.eq.s32.totalorder %s16, 1
    %p34 = por %p32, %p33
    %p35 = scmp.ne.s32.totalorder %s24, %s25
    %p36 = scmp.eq.s32.totalorder %s16, 0
    %p37 = por %p35, %p36
    %p38 = scmp.ne.s32.totalorder %s24, %s25
    %p39 = scmp.eq.s32.totalorder %s17, 1
    %p40 = por %p38, %p39
    %p42 = scmp.ne.s32.totalorder %s25, %s41
    %p43 = scmp.eq.s32.totalorder %s17, 0
    %p44 = por %p42, %p43
    %s46 = sadd.s32 %s45, 1
    %p49 = scmp.eq.s32.totalorder %s11, 1
    %p50 = scmp.ne.s32.totalorder %s45, %s47
    %p51 = scmp.eq.s32.totalorder %s11, 0
    %p52 = por %p50, %p51
    %p53 = scmp.ne.s32.totalorder %s45, %s47
    %p54 = scmp.eq.s32.totalorder %s16, 1
    %p55 = por %p53, %p54
    %p56 = scmp.ne.s32.totalorder %s47, %s48
    %p57 = scmp.eq.s32.totalorder %s16, 0
    %p58 = por %p56, %p57
    %p59 = scmp.ne.s32.totalorder %s47, %s48
    %p60 = scmp.eq.s32.totalorder %s17, 1
    %p61 = por %p59, %p60
    %p63 = scmp.ne.s32.totalorder %s48, %s62
    %p64 = scmp.eq.s32.totalorder %s17, 0
    %p65 = por %p63, %p64
    %s67 = sadd.s32 %s66, 1
    %p70 = scmp.eq.s32.totalorder %s11, 1
    %p71 = scmp.ne.s32.totalorder %s66, %s68
    %p72 = scmp.eq.s32.totalorder %s11, 0
    %p73 = por %p71, %p72
    %p74 = scmp.ne.s32.totalorder %s66, %s68
    %p75 = scmp.eq.s32.totalorder %s16, 1
    %p76 = por %p74, %p75
    %p77 = scmp.ne.s32.totalorder %s68, %s69
    %p78 = scmp.eq.s32.totalorder %s16, 0
    %p79 = por %p77, %p78
    %p80 = scmp.ne.s32.totalorder %s68, %s69
    %p81 = scmp.eq.s32.totalorder %s17, 1
    %p82 = por %p80, %p81
    %p84 = scmp.ne.s32.totalorder %s69, %s83
    %p85 = scmp.eq.s32.totalorder %s17, 0
    %p86 = por %p84, %p85
    %s88 = sadd.s32 %s87, 1
    %p91 = scmp.eq.s32.totalorder %s11, 1
    %p92 = scmp.ne.s32.totalorder %s87, %s89
    %p93 = scmp.eq.s32.totalorder %s11, 0
    %p94 = por %p92, %p93
    %p95 = scmp.ne.s32.totalorder %s87, %s89
    %p96 = scmp.eq.s32.totalorder %s16, 1
    %p97 = por %p95, %p96
    %p98 = scmp.ne.s32.totalorder %s89, %s90
    %p99 = scmp.eq.s32.totalorder %s16, 0
    %p100 = por %p98, %p99
    %p101 = scmp.ne.s32.totalorder %s89, %s90
    %p102 = scmp.eq.s32.totalorder %s17, 1
    %p103 = por %p101, %p102
    %p105 = scmp.ne.s32.totalorder %s90, %s104
    %p106 = scmp.eq.s32.totalorder %s17, 0
    %p107 = por %p105, %p106
    %s109 = sadd.s32 %s108, 1
    %p112 = scmp.eq.s32.totalorder %s11, 1
    %p113 = scmp.ne.s32.totalorder %s108, %s110
    %p114 = scmp.eq.s32.totalorder %s11, 0
    %p115 = por %p113, %p114
    %p116 = scmp.ne.s32.totalorder %s108, %s110
    %p117 = scmp.eq.s32.totalorder %s16, 1
    %p118 = por %p116, %p117
    %p119 = scmp.ne.s32.totalorder %s110, %s111
    %p120 = scmp.eq.s32.totalorder %s16, 0
    %p121 = por %p119, %p120
    %p122 = scmp.ne.s32.totalorder %s110, %s111
    %p123 = scmp.eq.s32.totalorder %s17, 1
    %p124 = por %p122, %p123
    %p126 = scmp.ne.s32.totalorder %s111, %s125
    %p127 = scmp.eq.s32.totalorder %s17, 0
    %p128 = por %p126, %p127
    %s129 = ssub.s32 %s11, %s18
    %p130 = scmp.eq.s32.totalorder %s129, 0
    %s132 = sadd.s32 %s131, 1
    %s133 = scalar_select %p130, %s131, %s132
    %p136 = pneg %p130
    %p137 = scmp.eq.s32.totalorder %s11, 1
    %p138 = por %p136, %p137
    %p139 = scmp.ne.s32.totalorder %s131, %s134
    %p140 = scmp.eq.s32.totalorder %s11, 0
    %p141 = por %p139, %p140
    %p142 = scmp.ne.s32.totalorder %s131, %s134
    %p143 = scmp.eq.s32.totalorder %s16, 1
    %p144 = por %p142, %p143
    %p145 = scmp.ne.s32.totalorder %s134, %s135
    %p146 = scmp.eq.s32.totalorder %s16, 0
    %p147 = por %p145, %p146
    %p148 = scmp.ne.s32.totalorder %s134, %s135
    %p149 = scmp.eq.s32.totalorder %s17, 1
    %p150 = por %p148, %p149
    %p152 = scmp.ne.s32.totalorder %s135, %s151
    %p153 = scmp.eq.s32.totalorder %s17, 0
    %p154 = por %p152, %p153
    %p155 = scmp.le.s32.totalorder 1, %s11
    %p156 = scmp.lt.s32.totalorder %s11, 3
    %p157 = pnand %p155, %p156
    %p158 = pneg %p157
    // Predicated region
    $region9: #{generator_model_forward.11} parent=5 // pred_check
      _
    $region10: #{generator_model_forward.11} parent=5 // pred_check_branch
      %160 = sbr.rel (%p157) target = $region12
    $region11: #{generator_model_forward.11} parent=5 // pred_region
      %s161 = ssub.s32 %s11, 1
      // Predicated region
      $region13: #{generator_model_forward.11} parent=11 // pred_check
        %p162 = pneg %p58
      $region14: #{generator_model_forward.11} parent=11 // pred_check_branch
        %164 = sbr.rel (%p162) target = $region16
      $region15: #{generator_model_forward.11} parent=11 // pred_region
        _
      $region16: #{generator_model_forward.11} parent=11 // pred_fallthru
        _
      // Predicated region
      $region17: #{generator_model_forward.11} parent=11 // pred_check
        %p165 = pneg %p79
      $region18: #{generator_model_forward.11} parent=11 // pred_check_branch
        %167 = sbr.rel (%p165) target = $region20
      $region19: #{generator_model_forward.11} parent=11 // pred_region
        _
      $region20: #{generator_model_forward.11} parent=11 // pred_fallthru
        _
      // Predicated region
      $region21: #{generator_model_forward.11} parent=11 // pred_check
        %p168 = pneg %p100
      $region22: #{generator_model_forward.11} parent=11 // pred_check_branch
        %170 = sbr.rel (%p168) target = $region24
      $region23: #{generator_model_forward.11} parent=11 // pred_region
        _
      $region24: #{generator_model_forward.11} parent=11 // pred_fallthru
        _
      // Predicated region
      $region25: #{generator_model_forward.11} parent=11 // pred_check
        %p171 = pneg %p121
      $region26: #{generator_model_forward.11} parent=11 // pred_check_branch
        %173 = sbr.rel (%p171) target = $region28
      $region27: #{generator_model_forward.11} parent=11 // pred_region
        _
      $region28: #{generator_model_forward.11} parent=11 // pred_fallthru
        _
    $region12: #{generator_model_forward.11} parent=5 // pred_fallthru
      _
    %p174 = scmp.lt.s32.totalorder %s11, 2
    // Predicated region
    $region29: #{generator_model_forward.11} parent=5 // pred_check
      %p175 = pneg %p174
    $region30: #{generator_model_forward.11} parent=5 // pred_check_branch
      %177 = sbr.rel (%p175) target = $region32
    $region31: #{generator_model_forward.11} parent=5 // pred_region
      // Predicated region
      $region33: #{generator_model_forward.11} parent=31 // pred_check
        %p178 = pneg %p31
      $region34: #{generator_model_forward.11} parent=31 // pred_check_branch
        %180 = sbr.rel (%p178) target = $region36
      $region35: #{generator_model_forward.11} parent=31 // pred_region
        %p181 = scmp.lt.s32.totalorder %s11, 1
        %s182 = scalar_select %p181, %s11, 1
        %s183 = smul.addr %s182, 8
        %s184 = smul.addr %s183, 4
        %s185 = scalar_lea.vmem %s0, %s184
      $region36: #{generator_model_forward.11} parent=31 // pred_fallthru
        _
    $region32: #{generator_model_forward.11} parent=5 // pred_fallthru
      _
    %p186 = scmp.le.s32.totalorder 1, %s11
    %p187 = scmp.lt.s32.totalorder %s11, 3
    %p188 = pnand %p186, %p187
    %p189 = pneg %p188
    // Predicated region
    $region37: #{generator_model_forward.11} parent=5 // pred_check
      _
    $region38: #{generator_model_forward.11} parent=5 // pred_check_branch
      %191 = sbr.rel (%p188) target = $region40
    $region39: #{generator_model_forward.11} parent=5 // pred_region
      %s192 = ssub.s32 %s11, 1
      %p193 = scmp.lt.s32.totalorder %s16, 1
      %s194 = scalar_select %p193, %s16, 1
      %s195 = smul.addr %s194, 8
      %s196 = smul.addr %s195, 4
      %s197 = scalar_lea.vmem %s0, %s196
      %p198 = pneg %p37
      %p199 = pneg %p34
      %p200 = pneg %p58
      %p201 = pneg %p55
      %p202 = pneg %p79
      %p203 = pneg %p76
      %p204 = pneg %p100
      %p205 = pneg %p97
      %p206 = pneg %p121
      %p207 = pneg %p118
      %p208 = pneg %p147
      %p209 = pneg %p144
      %p210 = scmp.lt.s32.totalorder %s16, 1
      %s211 = scalar_select %p210, %s16, 1
      %s212 = smul.addr %s211, 4
      %s213 = smul.addr %s212, 4
      %s214 = scalar_lea.vmem %s5, %s213
      %p215 = scmp.lt.s32.totalorder %s16, 1
      %s216 = scalar_select %p215, %s16, 1
      %s217 = smul.addr %s216, 8
      %s218 = smul.addr %s217, 4
      %s219 = scalar_lea.vmem %s0, %s218
      %p220 = scmp.lt.s32.totalorder %s16, 1
      %s221 = scalar_select %p220, %s16, 1
      %s222 = smul.addr %s221, 4
      %s223 = smul.addr %s222, 4
      %s224 = scalar_lea.vmem %s5, %s223
      %v226 = vld [vmem:[%s219] sm:$0xf]
      %v227 = vld [vmem:[%s219 + $0x4] sm:$0xf]
      %v228 = vld [vmem:[%s1] sm:$0xf]
      %v229 = vld [vmem:[%s1 + $0x4] sm:$0xf]
      %v230 = vld [vmem:[%s1 + $0x8] sm:$0xf]
      %v231 = vld [vmem:[%s1 + $0xc] sm:$0xf]
      %v232 = vld [vmem:[%s219 + $0x8] sm:$0xf]
      %v233 = vld [vmem:[%s219 + $0xc] sm:$0xf]
      %s234 = scalar_lea.vmem %s1, 16
      %v235 = vld [vmem:[%s234] sm:$0xf]
      %v236 = vld [vmem:[%s234 + $0x4] sm:$0xf]
      %v237 = vld [vmem:[%s234 + $0x8] sm:$0xf]
      %v238 = vld [vmem:[%s234 + $0xc] sm:$0xf]
      %v243 = vunpack.c.l.b16 %v235
      %v244 = vunpack.c.l.b16 %v236
      %v245 = vunpack.c.l.b16 %v237
      %v246 = vunpack.c.l.b16 %v238
      %v247 = vpack.c.b16 %v244, %v243
      %v248 = vpack.c.b16 %v246, %v245
      %v251 = vunpack.c.l.b16 %v232
      %v252 = vunpack.c.l.b16 %v233
      %v253 = vpack.c.b16 %v252, %v251
      %vm255 = vcmask 130048
      %v257 = vsel %vm255, %v247, 0
      %v260 = vsel %vm255, %v248, 0
      %262 = vmatprep.subr.bf16.mxu0 0
      %263 = vmatpush1.bf16.msra.mxu0 0
      %264 = vmatprep.subr.bf16.mxu0 0
      %265 = vmatpush1.bf16.msra.mxu0 0
      %266 = vmatprep.subr.bf16.mxu0 0
      %267 = vmatpush1.bf16.msra.mxu0 0
      %268 = vmatprep.subr.bf16.mxu0 0
      %269 = vmatpush1.bf16.msra.mxu0 0
      %270 = vmatprep.subr.bf16.mxu0 0
      %271 = vmatpush1.bf16.msra.mxu0 0
      %272 = vmatprep.subr.bf16.mxu0 0
      %273 = vmatpush1.bf16.msra.mxu0 0
      %274 = vmatprep.subr.bf16.mxu0 0
      %275 = vmatpush1.bf16.msra.mxu0 0
      %276 = vmatprep.subr.bf16.mxu0 0
      %277 = vmatpush1.bf16.msra.mxu0 %v253
      %278 = vmatprep.subr.bf16.mxu0 0
      %279 = vmatpush2.bf16.msra.mxu0 0
      %280 = vmatprep.subr.bf16.mxu0 0
      %281 = vmatpush2.bf16.msra.mxu0 0
      %282 = vmatprep.subr.bf16.mxu0 0
      %283 = vmatpush2.bf16.msra.mxu0 0
      %284 = vmatprep.subr.bf16.mxu0 0
      %285 = vmatpush2.bf16.msra.mxu0 0
      %286 = vmatprep.subr.bf16.mxu0 0
      %287 = vmatpush2.bf16.msra.mxu0 0
      %288 = vmatprep.subr.bf16.mxu0 0
      %289 = vmatpush2.bf16.msra.mxu0 0
      %290 = vmatprep.subr.bf16.mxu0 0
      %291 = vmatpush2.bf16.msra.mxu0 0
      %292 = vmatprep.subr.bf16.mxu0 0
      %293 = vmatpush2.bf16.msra.mxu0 0
      %294 = vmatprep.mubr.bf16.mxu0 0
      %295 = vmatmul.mubr.bf16.gmra.mxu0 %v257
      %v296 = vpop.f32.mrf.mxu0
      %v297 = vadd.f32 0.0, %v296
      %v298 = vpop.f32.mrf.mxu0
      %v299 = vpop.f32.mrf.mxu0
      %v300 = vadd.f32 0.0, %v299
      %v301 = vpop.f32.mrf.mxu0
      %302 = vmatprep.mubr.bf16.mxu0 0
      %303 = vmatmul.mubr.bf16.gmra.mxu0 %v260
      %v304 = vpop.f32.mrf.mxu0
      %v305 = vadd.f32 0.0, %v304
      %v306 = vpop.f32.mrf.mxu0
      %v307 = vpop.f32.mrf.mxu0
      %v308 = vadd.f32 0.0, %v307
      %v309 = vpop.f32.mrf.mxu0
      %310 = vdwg.mxu0
      %v315 = vunpack.c.l.b16 %v228
      %v316 = vunpack.c.l.b16 %v229
      %v317 = vunpack.c.l.b16 %v230
      %v318 = vunpack.c.l.b16 %v231
      %v319 = vpack.c.b16 %v316, %v315
      %v320 = vpack.c.b16 %v318, %v317
      %v323 = vunpack.c.l.b16 %v226
      %v324 = vunpack.c.l.b16 %v227
      %v325 = vpack.c.b16 %v324, %v323
      %v328 = vsel %vm255, %v319, 0
      %v331 = vsel %vm255, %v320, 0
      %333 = vmatprep.subr.bf16.mxu0 0
      %334 = vmatpush1.bf16.msra.mxu0 0
      %335 = vmatprep.subr.bf16.mxu0 0
      %336 = vmatpush1.bf16.msra.mxu0 0
      %337 = vmatprep.subr.bf16.mxu0 0
      %338 = vmatpush1.bf16.msra.mxu0 0
      %339 = vmatprep.subr.bf16.mxu0 0
      %340 = vmatpush1.bf16.msra.mxu0 0
      %341 = vmatprep.subr.bf16.mxu0 0
      %342 = vmatpush1.bf16.msra.mxu0 0
      %343 = vmatprep.subr.bf16.mxu0 0
      %344 = vmatpush1.bf16.msra.mxu0 0
      %345 = vmatprep.subr.bf16.mxu0 0
      %346 = vmatpush1.bf16.msra.mxu0 0
      %347 = vmatprep.subr.bf16.mxu0 0
      %348 = vmatpush1.bf16.msra.mxu0 %v325
      %349 = vmatprep.subr.bf16.mxu0 0
      %350 = vmatpush2.bf16.msra.mxu0 0
      %351 = vmatprep.subr.bf16.mxu0 0
      %352 = vmatpush2.bf16.msra.mxu0 0
      %353 = vmatprep.subr.bf16.mxu0 0
      %354 = vmatpush2.bf16.msra.mxu0 0
      %355 = vmatprep.subr.bf16.mxu0 0
      %356 = vmatpush2.bf16.msra.mxu0 0
      %357 = vmatprep.subr.bf16.mxu0 0
      %358 = vmatpush2.bf16.msra.mxu0 0
      %359 = vmatprep.subr.bf16.mxu0 0
      %360 = vmatpush2.bf16.msra.mxu0 0
      %361 = vmatprep.subr.bf16.mxu0 0
      %362 = vmatpush2.bf16.msra.mxu0 0
      %363 = vmatprep.subr.bf16.mxu0 0
      %364 = vmatpush2.bf16.msra.mxu0 0
      %365 = vmatprep.mubr.bf16.mxu0 0
      %366 = vmatmul.mubr.bf16.gmra.mxu0 %v328
      %v367 = vpop.f32.mrf.mxu0
      %v368 = vadd.f32 %v297, %v367
      %v369 = vpop.f32.mrf.mxu0
      %v370 = vpop.f32.mrf.mxu0
      %v371 = vadd.f32 %v300, %v370
      %v372 = vpop.f32.mrf.mxu0
      %373 = vmatprep.mubr.bf16.mxu0 0
      %374 = vmatmul.mubr.bf16.gmra.mxu0 %v331
      %v375 = vpop.f32.mrf.mxu0
      %v376 = vadd.f32 %v305, %v375
      %v377 = vpop.f32.mrf.mxu0
      %v378 = vpop.f32.mrf.mxu0
      %v379 = vadd.f32 %v308, %v378
      %v380 = vpop.f32.mrf.mxu0
      %381 = vdwg.mxu0
      %s382 = scalar_lea.vmem %s1, 32
      %v383 = vld [vmem:[%s382] sm:$0xf]
      %v384 = vld [vmem:[%s382 + $0x4] sm:$0xf]
      %v385 = vld [vmem:[%s382 + $0x8] sm:$0xf]
      %v386 = vld [vmem:[%s382 + $0xc] sm:$0xf]
      %v391 = vunpack.c.l.b16 %v383
      %v392 = vunpack.c.l.b16 %v384
      %v393 = vunpack.c.l.b16 %v385
      %v394 = vunpack.c.l.b16 %v386
      %v395 = vpack.c.b16 %v392, %v391
      %v396 = vpack.c.b16 %v394, %v393
      %397 = vrot.lane.b32.xlu0 %v325, 127
      %v398 = vpop.permute.xlu0 %397
      %v401 = vsel %vm255, %v395, 0
      %v404 = vsel %vm255, %v396, 0
      %406 = vmatprep.subr.bf16.mxu0 0
      %407 = vmatpush1.bf16.msra.mxu0 0
      %408 = vmatprep.subr.bf16.mxu0 0
      %409 = vmatpush1.bf16.msra.mxu0 0
      %410 = vmatprep.subr.bf16.mxu0 0
      %411 = vmatpush1.bf16.msra.mxu0 0
      %412 = vmatprep.subr.bf16.mxu0 0
      %413 = vmatpush1.bf16.msra.mxu0 0
      %414 = vmatprep.subr.bf16.mxu0 0
      %415 = vmatpush1.bf16.msra.mxu0 0
      %416 = vmatprep.subr.bf16.mxu0 0
      %417 = vmatpush1.bf16.msra.mxu0 0
      %418 = vmatprep.subr.bf16.mxu0 0
      %419 = vmatpush1.bf16.msra.mxu0 0
      %420 = vmatprep.subr.bf16.mxu0 0
      %421 = vmatpush1.bf16.msra.mxu0 %v398
      %422 = vmatprep.subr.bf16.mxu0 0
      %423 = vmatpush2.bf16.msra.mxu0 0
      %424 = vmatprep.subr.bf16.mxu0 0
      %425 = vmatpush2.bf16.msra.mxu0 0
      %426 = vmatprep.subr.bf16.mxu0 0
      %427 = vmatpush2.bf16.msra.mxu0 0
      %428 = vmatprep.subr.bf16.mxu0 0
      %429 = vmatpush2.bf16.msra.mxu0 0
      %430 = vmatprep.subr.bf16.mxu0 0
      %431 = vmatpush2.bf16.msra.mxu0 0
      %432 = vmatprep.subr.bf16.mxu0 0
      %433 = vmatpush2.bf16.msra.mxu0 0
      %434 = vmatprep.subr.bf16.mxu0 0
      %435 = vmatpush2.bf16.msra.mxu0 0
      %436 = vmatprep.subr.bf16.mxu0 0
      %437 = vmatpush2.bf16.msra.mxu0 0
      %438 = vmatprep.mubr.bf16.mxu0 0
      %439 = vmatmul.mubr.bf16.gmra.mxu0 %v401
      %v440 = vpop.f32.mrf.mxu0
      %v441 = vadd.f32 0.0, %v440
      %v442 = vpop.f32.mrf.mxu0
      %v443 = vpop.f32.mrf.mxu0
      %v444 = vadd.f32 0.0, %v443
      %v445 = vpop.f32.mrf.mxu0
      %446 = vmatprep.mubr.bf16.mxu0 0
      %447 = vmatmul.mubr.bf16.gmra.mxu0 %v404
      %v448 = vpop.f32.mrf.mxu0
      %v449 = vadd.f32 0.0, %v448
      %v450 = vpop.f32.mrf.mxu0
      %v451 = vpop.f32.mrf.mxu0
      %v452 = vadd.f32 0.0, %v451
      %v453 = vpop.f32.mrf.mxu0
      %454 = vdwg.mxu0
      %v455 = vadd.f32 %v368, %v441
      %v456 = vadd.f32 %v371, %v444
      %v457 = vadd.f32 %v376, %v449
      %v458 = vadd.f32 %v379, %v452
      %v459 = vld [vmem:[%s219 + $0x10] sm:$0xf]
      %v460 = vld [vmem:[%s219 + $0x14] sm:$0xf]
      %s461 = scalar_lea.vmem %s1, 48
      %v462 = vld [vmem:[%s461] sm:$0xf]
      %v463 = vld [vmem:[%s461 + $0x4] sm:$0xf]
      %v464 = vld [vmem:[%s461 + $0x8] sm:$0xf]
      %v465 = vld [vmem:[%s461 + $0xc] sm:$0xf]
      %v470 = vunpack.c.l.b16 %v462
      %v471 = vunpack.c.l.b16 %v463
      %v472 = vunpack.c.l.b16 %v464
      %v473 = vunpack.c.l.b16 %v465
      %v474 = vpack.c.b16 %v471, %v470
      %v475 = vpack.c.b16 %v473, %v472
      %v478 = vunpack.c.l.b16 %v459
      %v479 = vunpack.c.l.b16 %v460
      %v480 = vpack.c.b16 %v479, %v478
      %v483 = vsel %vm255, %v474, 0
      %v486 = vsel %vm255, %v475, 0
      %488 = vmatprep.subr.bf16.mxu0 0
      %489 = vmatpush1.bf16.msra.mxu0 0
      %490 = vmatprep.subr.bf16.mxu0 0
      %491 = vmatpush1.bf16.msra.mxu0 0
      %492 = vmatprep.subr.bf16.mxu0 0
      %493 = vmatpush1.bf16.msra.mxu0 0
      %494 = vmatprep.subr.bf16.mxu0 0
      %495 = vmatpush1.bf16.msra.mxu0 0
      %496 = vmatprep.subr.bf16.mxu0 0
      %497 = vmatpush1.bf16.msra.mxu0 0
      %498 = vmatprep.subr.bf16.mxu0 0
      %499 = vmatpush1.bf16.msra.mxu0 0
      %500 = vmatprep.subr.bf16.mxu0 0
      %501 = vmatpush1.bf16.msra.mxu0 0
      %502 = vmatprep.subr.bf16.mxu0 0
      %503 = vmatpush1.bf16.msra.mxu0 %v480
      %504 = vmatprep.subr.bf16.mxu0 0
      %505 = vmatpush2.bf16.msra.mxu0 0
      %506 = vmatprep.subr.bf16.mxu0 0
      %507 = vmatpush2.bf16.msra.mxu0 0
      %508 = vmatprep.subr.bf16.mxu0 0
      %509 = vmatpush2.bf16.msra.mxu0 0
      %510 = vmatprep.subr.bf16.mxu0 0
      %511 = vmatpush2.bf16.msra.mxu0 0
      %512 = vmatprep.subr.bf16.mxu0 0
      %513 = vmatpush2.bf16.msra.mxu0 0
      %514 = vmatprep.subr.bf16.mxu0 0
      %515 = vmatpush2.bf16.msra.mxu0 0
      %516 = vmatprep.subr.bf16.mxu0 0
      %517 = vmatpush2.bf16.msra.mxu0 0
      %518 = vmatprep.subr.bf16.mxu0 0
      %519 = vmatpush2.bf16.msra.mxu0 0
      %520 = vmatprep.mubr.bf16.mxu0 0
      %521 = vmatmul.mubr.bf16.gmra.mxu0 %v483
      %v522 = vpop.f32.mrf.mxu0
      %v523 = vadd.f32 0.0, %v522
      %v524 = vpop.f32.mrf.mxu0
      %v525 = vpop.f32.mrf.mxu0
      %v526 = vadd.f32 0.0, %v525
      %v527 = vpop.f32.mrf.mxu0
      %528 = vmatprep.mubr.bf16.mxu0 0
      %529 = vmatmul.mubr.bf16.gmra.mxu0 %v486
      %v530 = vpop.f32.mrf.mxu0
      %v531 = vadd.f32 0.0, %v530
      %v532 = vpop.f32.mrf.mxu0
      %v533 = vpop.f32.mrf.mxu0
      %v534 = vadd.f32 0.0, %v533
      %v535 = vpop.f32.mrf.mxu0
      %536 = vdwg.mxu0
      %v537 = vadd.f32 %v455, %v523
      %v538 = vadd.f32 %v456, %v526
      %v539 = vadd.f32 %v457, %v531
      %v540 = vadd.f32 %v458, %v534
      %v541 = vld [vmem:[%s219 + $0x18] sm:$0xf]
      %v542 = vld [vmem:[%s219 + $0x1c] sm:$0xf]
      %s543 = scalar_lea.vmem %s1, 64
      %v544 = vld [vmem:[%s543] sm:$0xf]
      %v545 = vld [vmem:[%s543 + $0x4] sm:$0xf]
      %v546 = vld [vmem:[%s543 + $0x8] sm:$0xf]
      %v547 = vld [vmem:[%s543 + $0xc] sm:$0xf]
      %v552 = vunpack.c.l.b16 %v544
      %v553 = vunpack.c.l.b16 %v545
      %v554 = vunpack.c.l.b16 %v546
      %v555 = vunpack.c.l.b16 %v547
      %v556 = vpack.c.b16 %v553, %v552
      %v557 = vpack.c.b16 %v555, %v554
      %v560 = vunpack.c.l.b16 %v541
      %v561 = vunpack.c.l.b16 %v542
      %v562 = vpack.c.b16 %v561, %v560
      %v565 = vsel %vm255, %v556, 0
      %v568 = vsel %vm255, %v557, 0
      %570 = vmatprep.subr.bf16.mxu0 0
      %571 = vmatpush1.bf16.msra.mxu0 0
      %572 = vmatprep.subr.bf16.mxu0 0
      %573 = vmatpush1.bf16.msra.mxu0 0
      %574 = vmatprep.subr.bf16.mxu0 0
      %575 = vmatpush1.bf16.msra.mxu0 0
      %576 = vmatprep.subr.bf16.mxu0 0
      %577 = vmatpush1.bf16.msra.mxu0 0
      %578 = vmatprep.subr.bf16.mxu0 0
      %579 = vmatpush1.bf16.msra.mxu0 0
      %580 = vmatprep.subr.bf16.mxu0 0
      %581 = vmatpush1.bf16.msra.mxu0 0
      %582 = vmatprep.subr.bf16.mxu0 0
      %583 = vmatpush1.bf16.msra.mxu0 0
      %584 = vmatprep.subr.bf16.mxu0 0
      %585 = vmatpush1.bf16.msra.mxu0 %v562
      %586 = vmatprep.subr.bf16.mxu0 0
      %587 = vmatpush2.bf16.msra.mxu0 0
      %588 = vmatprep.subr.bf16.mxu0 0
      %589 = vmatpush2.bf16.msra.mxu0 0
      %590 = vmatprep.subr.bf16.mxu0 0
      %591 = vmatpush2.bf16.msra.mxu0 0
      %592 = vmatprep.subr.bf16.mxu0 0
      %593 = vmatpush2.bf16.msra.mxu0 0
      %594 = vmatprep.subr.bf16.mxu0 0
      %595 = vmatpush2.bf16.msra.mxu0 0
      %596 = vmatprep.subr.bf16.mxu0 0
      %597 = vmatpush2.bf16.msra.mxu0 0
      %598 = vmatprep.subr.bf16.mxu0 0
      %599 = vmatpush2.bf16.msra.mxu0 0
      %600 = vmatprep.subr.bf16.mxu0 0
      %601 = vmatpush2.bf16.msra.mxu0 0
      %602 = vmatprep.mubr.bf16.mxu0 0
      %603 = vmatmul.mubr.bf16.gmra.mxu0 %v565
      %v604 = vpop.f32.mrf.mxu0
      %v605 = vadd.f32 0.0, %v604
      %v606 = vpop.f32.mrf.mxu0
      %v607 = vpop.f32.mrf.mxu0
      %v608 = vadd.f32 0.0, %v607
      %v609 = vpop.f32.mrf.mxu0
      %610 = vmatprep.mubr.bf16.mxu0 0
      %611 = vmatmul.mubr.bf16.gmra.mxu0 %v568
      %v612 = vpop.f32.mrf.mxu0
      %v613 = vadd.f32 0.0, %v612
      %v614 = vpop.f32.mrf.mxu0
      %v615 = vpop.f32.mrf.mxu0
      %v616 = vadd.f32 0.0, %v615
      %v617 = vpop.f32.mrf.mxu0
      %618 = vdwg.mxu0
      %v619 = vadd.f32 %v537, %v605
      %v620 = vadd.f32 %v538, %v608
      %v621 = vadd.f32 %v539, %v613
      %v622 = vadd.f32 %v540, %v616
      %s623 = scalar_lea.vmem %s1, 80
      %v624 = vld [vmem:[%s623] sm:$0xf]
      %v625 = vld [vmem:[%s623 + $0x4] sm:$0xf]
      %v626 = vld [vmem:[%s623 + $0x8] sm:$0xf]
      %v627 = vld [vmem:[%s623 + $0xc] sm:$0xf]
      %v632 = vunpack.c.l.b16 %v624
      %v633 = vunpack.c.l.b16 %v625
      %v634 = vunpack.c.l.b16 %v626
      %v635 = vunpack.c.l.b16 %v627
      %v636 = vpack.c.b16 %v633, %v632
      %v637 = vpack.c.b16 %v635, %v634
      %638 = vrot.lane.b32.xlu0 %v480, 127
      %v639 = vpop.permute.xlu0 %638
      %v642 = vsel %vm255, %v636, 0
      %v645 = vsel %vm255, %v637, 0
      %647 = vmatprep.subr.bf16.mxu0 0
      %648 = vmatpush1.bf16.msra.mxu0 0
      %649 = vmatprep.subr.bf16.mxu0 0
      %650 = vmatpush1.bf16.msra.mxu0 0
      %651 = vmatprep.subr.bf16.mxu0 0
      %652 = vmatpush1.bf16.msra.mxu0 0
      %653 = vmatprep.subr.bf16.mxu0 0
      %654 = vmatpush1.bf16.msra.mxu0 0
      %655 = vmatprep.subr.bf16.mxu0 0
      %656 = vmatpush1.bf16.msra.mxu0 0
      %657 = vmatprep.subr.bf16.mxu0 0
      %658 = vmatpush1.bf16.msra.mxu0 0
      %659 = vmatprep.subr.bf16.mxu0 0
      %660 = vmatpush1.bf16.msra.mxu0 0
      %661 = vmatprep.subr.bf16.mxu0 0
      %662 = vmatpush1.bf16.msra.mxu0 %v639
      %663 = vmatprep.subr.bf16.mxu0 0
      %664 = vmatpush2.bf16.msra.mxu0 0
      %665 = vmatprep.subr.bf16.mxu0 0
      %666 = vmatpush2.bf16.msra.mxu0 0
      %667 = vmatprep.subr.bf16.mxu0 0
      %668 = vmatpush2.bf16.msra.mxu0 0
      %669 = vmatprep.subr.bf16.mxu0 0
      %670 = vmatpush2.bf16.msra.mxu0 0
      %671 = vmatprep.subr.bf16.mxu0 0
      %672 = vmatpush2.bf16.msra.mxu0 0
      %673 = vmatprep.subr.bf16.mxu0 0
      %674 = vmatpush2.bf16.msra.mxu0 0
      %675 = vmatprep.subr.bf16.mxu0 0
      %676 = vmatpush2.bf16.msra.mxu0 0
      %677 = vmatprep.subr.bf16.mxu0 0
      %678 = vmatpush2.bf16.msra.mxu0 0
      %679 = vmatprep.mubr.bf16.mxu0 0
      %680 = vmatmul.mubr.bf16.gmra.mxu0 %v642
      %v681 = vpop.f32.mrf.mxu0
      %v682 = vadd.f32 0.0, %v681
      %v683 = vpop.f32.mrf.mxu0
      %v684 = vpop.f32.mrf.mxu0
      %v685 = vadd.f32 0.0, %v684
      %v686 = vpop.f32.mrf.mxu0
      %687 = vmatprep.mubr.bf16.mxu0 0
      %688 = vmatmul.mubr.bf16.gmra.mxu0 %v645
      %v689 = vpop.f32.mrf.mxu0
      %v690 = vadd.f32 0.0, %v689
      %v691 = vpop.f32.mrf.mxu0
      %v692 = vpop.f32.mrf.mxu0
      %v693 = vadd.f32 0.0, %v692
      %v694 = vpop.f32.mrf.mxu0
      %695 = vdwg.mxu0
      %v696 = vadd.f32 %v619, %v682
      %v697 = vadd.f32 %v620, %v685
      %v698 = vadd.f32 %v621, %v690
      %v699 = vadd.f32 %v622, %v693
      %s700 = scalar_lea.vmem %s1, 96
      %v701 = vld [vmem:[%s700] sm:$0xf]
      %v702 = vld [vmem:[%s700 + $0x4] sm:$0xf]
      %v703 = vld [vmem:[%s700 + $0x8] sm:$0xf]
      %v704 = vld [vmem:[%s700 + $0xc] sm:$0xf]
      %v709 = vunpack.c.l.b16 %v701
      %v710 = vunpack.c.l.b16 %v702
      %v711 = vunpack.c.l.b16 %v703
      %v712 = vunpack.c.l.b16 %v704
      %v713 = vpack.c.b16 %v710, %v709
      %v714 = vpack.c.b16 %v712, %v711
      %715 = vrot.lane.b32.xlu0 %v325, 123
      %v716 = vpop.permute.xlu0 %715
      %v719 = vsel %vm255, %v713, 0
      %v722 = vsel %vm255, %v714, 0
      %724 = vmatprep.subr.bf16.mxu0 0
      %725 = vmatpush1.bf16.msra.mxu0 0
      %726 = vmatprep.subr.bf16.mxu0 0
      %727 = vmatpush1.bf16.msra.mxu0 0
      %728 = vmatprep.subr.bf16.mxu0 0
      %729 = vmatpush1.bf16.msra.mxu0 0
      %730 = vmatprep.subr.bf16.mxu0 0
      %731 = vmatpush1.bf16.msra.mxu0 0
      %732 = vmatprep.subr.bf16.mxu0 0
      %733 = vmatpush1.bf16.msra.mxu0 0
      %734 = vmatprep.subr.bf16.mxu0 0
      %735 = vmatpush1.bf16.msra.mxu0 0
      %736 = vmatprep.subr.bf16.mxu0 0
      %737 = vmatpush1.bf16.msra.mxu0 0
      %738 = vmatprep.subr.bf16.mxu0 0
      %739 = vmatpush1.bf16.msra.mxu0 %v716
      %740 = vmatprep.subr.bf16.mxu0 0
      %741 = vmatpush2.bf16.msra.mxu0 0
      %742 = vmatprep.subr.bf16.mxu0 0
      %743 = vmatpush2.bf16.msra.mxu0 0
      %744 = vmatprep.subr.bf16.mxu0 0
      %745 = vmatpush2.bf16.msra.mxu0 0
      %746 = vmatprep.subr.bf16.mxu0 0
      %747 = vmatpush2.bf16.msra.mxu0 0
      %748 = vmatprep.subr.bf16.mxu0 0
      %749 = vmatpush2.bf16.msra.mxu0 0
      %750 = vmatprep.subr.bf16.mxu0 0
      %751 = vmatpush2.bf16.msra.mxu0 0
      %752 = vmatprep.subr.bf16.mxu0 0
      %753 = vmatpush2.bf16.msra.mxu0 0
      %754 = vmatprep.subr.bf16.mxu0 0
      %755 = vmatpush2.bf16.msra.mxu0 0
      %756 = vmatprep.mubr.bf16.mxu0 0
      %757 = vmatmul.mubr.bf16.gmra.mxu0 %v719
      %v758 = vpop.f32.mrf.mxu0
      %v759 = vadd.f32 0.0, %v758
      %v760 = vpop.f32.mrf.mxu0
      %v761 = vpop.f32.mrf.mxu0
      %v762 = vadd.f32 0.0, %v761
      %v763 = vpop.f32.mrf.mxu0
      %764 = vmatprep.mubr.bf16.mxu0 0
      %765 = vmatmul.mubr.bf16.gmra.mxu0 %v722
      %v766 = vpop.f32.mrf.mxu0
      %v767 = vadd.f32 0.0, %v766
      %v768 = vpop.f32.mrf.mxu0
      %v769 = vpop.f32.mrf.mxu0
      %v770 = vadd.f32 0.0, %v769
      %v771 = vpop.f32.mrf.mxu0
      %772 = vdwg.mxu0
      %v773 = vadd.f32 %v696, %v759
      %v774 = vadd.f32 %v697, %v762
      %v775 = vadd.f32 %v698, %v767
      %v776 = vadd.f32 %v699, %v770
      %s777 = scalar_lea.vmem %s1, 112
      %v778 = vld [vmem:[%s777] sm:$0xf]
      %v779 = vld [vmem:[%s777 + $0x4] sm:$0xf]
      %v780 = vld [vmem:[%s777 + $0x8] sm:$0xf]
      %v781 = vld [vmem:[%s777 + $0xc] sm:$0xf]
      %v786 = vunpack.c.l.b16 %v778
      %v787 = vunpack.c.l.b16 %v779
      %v788 = vunpack.c.l.b16 %v780
      %v789 = vunpack.c.l.b16 %v781
      %v790 = vpack.c.b16 %v787, %v786
      %v791 = vpack.c.b16 %v789, %v788
      %792 = vrot.lane.b32.xlu0 %v253, 123
      %v793 = vpop.permute.xlu0 %792
      %v796 = vsel %vm255, %v790, 0
      %v799 = vsel %vm255, %v791, 0
      %801 = vmatprep.subr.bf16.mxu0 0
      %802 = vmatpush1.bf16.msra.mxu0 0
      %803 = vmatprep.subr.bf16.mxu0 0
      %804 = vmatpush1.bf16.msra.mxu0 0
      %805 = vmatprep.subr.bf16.mxu0 0
      %806 = vmatpush1.bf16.msra.mxu0 0
      %807 = vmatprep.subr.bf16.mxu0 0
      %808 = vmatpush1.bf16.msra.mxu0 0
      %809 = vmatprep.subr.bf16.mxu0 0
      %810 = vmatpush1.bf16.msra.mxu0 0
      %811 = vmatprep.subr.bf16.mxu0 0
      %812 = vmatpush1.bf16.msra.mxu0 0
      %813 = vmatprep.subr.bf16.mxu0 0
      %814 = vmatpush1.bf16.msra.mxu0 0
      %815 = vmatprep.subr.bf16.mxu0 0
      %816 = vmatpush1.bf16.msra.mxu0 %v793
      %817 = vmatprep.subr.bf16.mxu0 0
      %818 = vmatpush2.bf16.msra.mxu0 0
      %819 = vmatprep.subr.bf16.mxu0 0
      %820 = vmatpush2.bf16.msra.mxu0 0
      %821 = vmatprep.subr.bf16.mxu0 0
      %822 = vmatpush2.bf16.msra.mxu0 0
      %823 = vmatprep.subr.bf16.mxu0 0
      %824 = vmatpush2.bf16.msra.mxu0 0
      %825 = vmatprep.subr.bf16.mxu0 0
      %826 = vmatpush2.bf16.msra.mxu0 0
      %827 = vmatprep.subr.bf16.mxu0 0
      %828 = vmatpush2.bf16.msra.mxu0 0
      %829 = vmatprep.subr.bf16.mxu0 0
      %830 = vmatpush2.bf16.msra.mxu0 0
      %831 = vmatprep.subr.bf16.mxu0 0
      %832 = vmatpush2.bf16.msra.mxu0 0
      %833 = vmatprep.mubr.bf16.mxu0 0
      %834 = vmatmul.mubr.bf16.gmra.mxu0 %v796
      %v835 = vpop.f32.mrf.mxu0
      %v836 = vadd.f32 0.0, %v835
      %v837 = vpop.f32.mrf.mxu0
      %v838 = vpop.f32.mrf.mxu0
      %v839 = vadd.f32 0.0, %v838
      %v840 = vpop.f32.mrf.mxu0
      %841 = vmatprep.mubr.bf16.mxu0 0
      %842 = vmatmul.mubr.bf16.gmra.mxu0 %v799
      %v843 = vpop.f32.mrf.mxu0
      %v844 = vadd.f32 0.0, %v843
      %v845 = vpop.f32.mrf.mxu0
      %v846 = vpop.f32.mrf.mxu0
      %v847 = vadd.f32 0.0, %v846
      %v848 = vpop.f32.mrf.mxu0
      %849 = vdwg.mxu0
      %v850 = vadd.f32 %v773, %v836
      %v851 = vadd.f32 %v774, %v839
      %v852 = vadd.f32 %v775, %v844
      %v853 = vadd.f32 %v776, %v847
      %s854 = scalar_lea.vmem %s1, 128
      %v855 = vld [vmem:[%s854] sm:$0xf]
      %v856 = vld [vmem:[%s854 + $0x4] sm:$0xf]
      %v857 = vld [vmem:[%s854 + $0x8] sm:$0xf]
      %v858 = vld [vmem:[%s854 + $0xc] sm:$0xf]
      %v863 = vunpack.c.l.b16 %v855
      %v864 = vunpack.c.l.b16 %v856
      %v865 = vunpack.c.l.b16 %v857
      %v866 = vunpack.c.l.b16 %v858
      %v867 = vpack.c.b16 %v864, %v863
      %v868 = vpack.c.b16 %v866, %v865
      %869 = vrot.lane.b32.xlu0 %v325, 122
      %v870 = vpop.permute.xlu0 %869
      %v873 = vsel %vm255, %v867, 0
      %v876 = vsel %vm255, %v868, 0
      %878 = vmatprep.subr.bf16.mxu0 0
      %879 = vmatpush1.bf16.msra.mxu0 0
      %880 = vmatprep.subr.bf16.mxu0 0
      %881 = vmatpush1.bf16.msra.mxu0 0
      %882 = vmatprep.subr.bf16.mxu0 0
      %883 = vmatpush1.bf16.msra.mxu0 0
      %884 = vmatprep.subr.bf16.mxu0 0
      %885 = vmatpush1.bf16.msra.mxu0 0
      %886 = vmatprep.subr.bf16.mxu0 0
      %887 = vmatpush1.bf16.msra.mxu0 0
      %888 = vmatprep.subr.bf16.mxu0 0
      %889 = vmatpush1.bf16.msra.mxu0 0
      %890 = vmatprep.subr.bf16.mxu0 0
      %891 = vmatpush1.bf16.msra.mxu0 0
      %892 = vmatprep.subr.bf16.mxu0 0
      %893 = vmatpush1.bf16.msra.mxu0 %v870
      %894 = vmatprep.subr.bf16.mxu0 0
      %895 = vmatpush2.bf16.msra.mxu0 0
      %896 = vmatprep.subr.bf16.mxu0 0
      %897 = vmatpush2.bf16.msra.mxu0 0
      %898 = vmatprep.subr.bf16.mxu0 0
      %899 = vmatpush2.bf16.msra.mxu0 0
      %900 = vmatprep.subr.bf16.mxu0 0
      %901 = vmatpush2.bf16.msra.mxu0 0
      %902 = vmatprep.subr.bf16.mxu0 0
      %903 = vmatpush2.bf16.msra.mxu0 0
      %904 = vmatprep.subr.bf16.mxu0 0
      %905 = vmatpush2.bf16.msra.mxu0 0
      %906 = vmatprep.subr.bf16.mxu0 0
      %907 = vmatpush2.bf16.msra.mxu0 0
      %908 = vmatprep.subr.bf16.mxu0 0
      %909 = vmatpush2.bf16.msra.mxu0 0
      %910 = vmatprep.mubr.bf16.mxu0 0
      %911 = vmatmul.mubr.bf16.gmra.mxu0 %v873
      %v912 = vpop.f32.mrf.mxu0
      %v913 = vadd.f32 0.0, %v912
      %v914 = vpop.f32.mrf.mxu0
      %v915 = vpop.f32.mrf.mxu0
      %v916 = vadd.f32 0.0, %v915
      %v917 = vpop.f32.mrf.mxu0
      %918 = vmatprep.mubr.bf16.mxu0 0
      %919 = vmatmul.mubr.bf16.gmra.mxu0 %v876
      %v920 = vpop.f32.mrf.mxu0
      %v921 = vadd.f32 0.0, %v920
      %v922 = vpop.f32.mrf.mxu0
      %v923 = vpop.f32.mrf.mxu0
      %v924 = vadd.f32 0.0, %v923
      %v925 = vpop.f32.mrf.mxu0
      %926 = vdwg.mxu0
      %v927 = vadd.f32 %v850, %v913
      %v928 = vadd.f32 %v851, %v916
      %v929 = vadd.f32 %v852, %v921
      %v930 = vadd.f32 %v853, %v924
      %v931 = vld [vmem:[%s2] sm:$0x1]
      %v933 = vlaneseq
      %v934 = vshrl.u32 %v933, 7
      %v935 = vsub.s32 0, %v934
      %v936 = vrot.slane %v931, %v935
      %v938 = vmul.f32 %v927, %v936
      %v939 = vmul.f32 %v928, %v936
      %v940 = vmul.f32 %v929, %v936
      %v941 = vmul.f32 %v930, %v936
      %vm942 = vcmask 162816
      %v943 = vsel %vm942, %v938, 0.0
      %944 = vadd.xlane.f32.xlu0 %v943
      %v945 = vpop.xlane.xlu0 %944
      %v946 = vsel %vm942, %v939, 0.0
      %947 = vadd.xlane.f32.xlu0 %v946
      %v948 = vpop.xlane.xlu0 %947
      %v949 = vsel %vm942, %v940, 0.0
      %950 = vadd.xlane.f32.xlu0 %v949
      %v951 = vpop.xlane.xlu0 %950
      %v952 = vsel %vm942, %v941, 0.0
      %953 = vadd.xlane.f32.xlu0 %v952
      %v954 = vpop.xlane.xlu0 %953
      %v955 = vmul.f32 %v945, 0.0625
      %v956 = vmul.f32 %v948, 0.0625
      %v957 = vmul.f32 %v951, 0.0625
      %v958 = vmul.f32 %v954, 0.0625
      %v959 = vsub.f32 %v927, %v955
      %v960 = vsub.f32 %v928, %v956
      %v961 = vsub.f32 %v929, %v957
      %v962 = vsub.f32 %v930, %v958
      %v963 = vmul.f32 %v959, %v936
      %v964 = vmul.f32 %v960, %v936
      %v965 = vmul.f32 %v961, %v936
      %v966 = vmul.f32 %v962, %v936
      %v967 = vmul.f32 %v963, %v963
      %v968 = vmul.f32 %v964, %v964
      %v969 = vmul.f32 %v965, %v965
      %v970 = vmul.f32 %v966, %v966
      %v971 = vsel %vm942, %v967, 0.0
      %972 = vadd.xlane.f32.xlu0 %v971
      %v973 = vpop.xlane.xlu0 %972
      %v974 = vsel %vm942, %v968, 0.0
      %975 = vadd.xlane.f32.xlu0 %v974
      %v976 = vpop.xlane.xlu0 %975
      %v977 = vsel %vm942, %v969, 0.0
      %978 = vadd.xlane.f32.xlu0 %v977
      %v979 = vpop.xlane.xlu0 %978
      %v980 = vsel %vm942, %v970, 0.0
      %981 = vadd.xlane.f32.xlu0 %v980
      %v982 = vpop.xlane.xlu0 %981
      %v983 = vmul.f32 %v973, 0.0625
      %v984 = vmul.f32 %v976, 0.0625
      %v985 = vmul.f32 %v979, 0.0625
      %v986 = vmul.f32 %v982, 0.0625
      %v987 = vadd.f32 %v983, 1e-05
      %v988 = vadd.f32 %v984, 1e-05
      %v989 = vadd.f32 %v985, 1e-05
      %v990 = vadd.f32 %v986, 1e-05
      %v991 = vrsqrt.pop %v987
      %v992 = vrsqrt.pop %v988
      %v993 = vrsqrt.pop %v989
      %v994 = vrsqrt.pop %v990
      %v995 = vmul.f32 %v959, %v991
      %v996 = vmul.f32 %v960, %v992
      %v997 = vmul.f32 %v961, %v993
      %v998 = vmul.f32 %v962, %v994
      %v999 = vld [vmem:[%s3] sm:$0xff]
      %v1000 = vld [vmem:[%s3 + $0x8] sm:$0xff]
      %v1001 = vld [vmem:[%s3 + $0x10] sm:$0xff]
      %v1002 = vld [vmem:[%s3 + $0x18] sm:$0xff]
      %1004 = vset.pattern.permute.xlu0 0
      %1005 = vperm.xlu0 %1004, %v999
      %v1006 = vpop.permute.xlu0 %1005
      %1009 = vset.pattern.permute.xlu0 0
      %1010 = vperm.xlu0 %1009, %v1000
      %v1011 = vpop.permute.xlu0 %1010
      %1014 = vset.pattern.permute.xlu0 0
      %1015 = vperm.xlu0 %1014, %v1001
      %v1016 = vpop.permute.xlu0 %1015
      %1019 = vset.pattern.permute.xlu0 0
      %1020 = vperm.xlu0 %1019, %v1002
      %v1021 = vpop.permute.xlu0 %1020
      %v1023 = vmul.f32 %v995, %v1006
      %v1024 = vmul.f32 %v996, %v1011
      %v1025 = vmul.f32 %v997, %v1016
      %v1026 = vmul.f32 %v998, %v1021
      %v1027 = vld [vmem:[%s4] sm:$0xff]
      %v1028 = vld [vmem:[%s4 + $0x8] sm:$0xff]
      %v1029 = vld [vmem:[%s4 + $0x10] sm:$0xff]
      %v1030 = vld [vmem:[%s4 + $0x18] sm:$0xff]
      %1032 = vset.pattern.permute.xlu0 0
      %1033 = vperm.xlu0 %1032, %v1027
      %v1034 = vpop.permute.xlu0 %1033
      %1037 = vset.pattern.permute.xlu0 0
      %1038 = vperm.xlu0 %1037, %v1028
      %v1039 = vpop.permute.xlu0 %1038
      %1042 = vset.pattern.permute.xlu0 0
      %1043 = vperm.xlu0 %1042, %v1029
      %v1044 = vpop.permute.xlu0 %1043
      %1047 = vset.pattern.permute.xlu0 0
      %1048 = vperm.xlu0 %1047, %v1030
      %v1049 = vpop.permute.xlu0 %1048
      %v1051 = vadd.f32 %v1023, %v1034
      %v1052 = vadd.f32 %v1024, %v1039
      %v1053 = vadd.f32 %v1025, %v1044
      %v1054 = vadd.f32 %v1026, %v1049
      %vm1055 = vcmp.ge.f32.partialorder %v1051, 0.0
      %vm1056 = vcmp.ge.f32.partialorder %v1052, 0.0
      %vm1057 = vcmp.ge.f32.partialorder %v1053, 0.0
      %vm1058 = vcmp.ge.f32.partialorder %v1054, 0.0
      %v1059 = vmul.f32 %v1051, 0.2
      %v1060 = vmul.f32 %v1052, 0.2
      %v1061 = vmul.f32 %v1053, 0.2
      %v1062 = vmul.f32 %v1054, 0.2
      %v1063 = vsel %vm1055, %v1051, %v1059
      %v1064 = vsel %vm1056, %v1052, %v1060
      %v1065 = vsel %vm1057, %v1053, %v1061
      %v1066 = vsel %vm1058, %v1054, %v1062
      %v1067 = vpack.c.bf16 %v1064, %v1063
      %v1068 = vpack.c.bf16 %v1066, %v1065
      %v1071 = vunpack.c.l.b16 %v1067
      %v1072 = vunpack.c.h.b16 %v1067
      %v1073 = vunpack.c.l.b16 %v1068
      %v1074 = vunpack.c.h.b16 %v1068
      %v1075 = vpack.c.b16 %v1071, %v1071
      %v1076 = vpack.c.b16 %v1072, %v1072
      %v1077 = vpack.c.b16 %v1073, %v1073
      %v1078 = vpack.c.b16 %v1074, %v1074
      %vm1083 = vcmask 158720
      %1084 = vst.msk [vmem:[%s224] sm:$0xf] %vm1083, %v1075
      %1085 = vst.msk [vmem:[%s224 + $0x4] sm:$0xf] %vm1083, %v1076
      %1086 = vst.msk [vmem:[%s224 + $0x8] sm:$0xf] %vm1083, %v1077
      %1087 = vst.msk [vmem:[%s224 + $0xc] sm:$0xf] %vm1083, %v1078
      %p1088 = scmp.lt.s32.totalorder %s16, 1
      %s1089 = scalar_select %p1088, %s16, 1
      %s1090 = smul.addr %s1089, 4
      %s1091 = smul.addr %s1090, 4
      %s1092 = scalar_lea.vmem %s5, %s1091
      // Predicated region
      $region41: #{generator_model_forward.11} parent=39 // pred_check
        %p1093 = pneg %p144
      $region42: #{generator_model_forward.11} parent=39 // pred_check_branch
        %1095 = sbr.rel (%p1093) target = $region44
      $region43: #{generator_model_forward.11} parent=39 // pred_region
        _
      $region44: #{generator_model_forward.11} parent=39 // pred_fallthru
        _
    $region40: #{generator_model_forward.11} parent=5 // pred_fallthru
      _
    %p1096 = scmp.le.s32.totalorder 2, %s11
    // Predicated region
    $region45: #{generator_model_forward.11} parent=5 // pred_check
      %p1097 = pneg %p1096
    $region46: #{generator_model_forward.11} parent=5 // pred_check_branch
      %1099 = sbr.rel (%p1097) target = $region48
    $region47: #{generator_model_forward.11} parent=5 // pred_region
      %s1100 = ssub.s32 %s11, 2
      // Predicated region
      $region49: #{generator_model_forward.11} parent=47 // pred_check
        %p1101 = pneg %p150
      $region50: #{generator_model_forward.11} parent=47 // pred_check_branch
        %1103 = sbr.rel (%p1101) target = $region52
      $region51: #{generator_model_forward.11} parent=47 // pred_region
        %p1104 = scmp.lt.s32.totalorder %s17, 1
        %s1105 = scalar_select %p1104, %s17, 1
        %s1106 = smul.addr %s1105, 4
        %s1107 = smul.addr %s1106, 4
        %s1108 = scalar_lea.vmem %s5, %s1107
      $region52: #{generator_model_forward.11} parent=47 // pred_fallthru
        _
    $region48: #{generator_model_forward.11} parent=5 // pred_fallthru
      _
  $region6: #{generator_model_forward.11} parent=0 // loop_footer
    %s15 = sadd.s32 1, %s11
  $region7: #{generator_model_forward.11} parent=0 // loop_footer_branch
    %10 = sbr.rel target = $region3
  $region8: #{generator_model_forward.11} parent=0 // loop_exit
    _

// kernel: generator_model_forward.12
$region0: #{generator_model_forward.12}
  #allocation0 [shape = 'u32[]', space=smem, size = 0x4, offset = 0x4, fixed_abs, tag = 'smem constant byte address 0x4 - core index']
  #allocation1 [shape = 'u32[144,128]{1,0:T(1,128)}', space=vmem, size = 0x12000, scoped, tag = 'internal scratch']
  %s0 = inlined_call_operand.vmem [shape: bf16[2,32,102], index: 0, kind: input, shape index: {}]
  %s1 = inlined_call_operand.vmem [shape: bf16[9,16,32], index: 1, kind: input, shape index: {}]
  %s2 = inlined_call_operand.vmem [shape: f32[1,80], index: 2, kind: input, shape index: {}]
  %s3 = inlined_call_operand.vmem [shape: f32[16,1], index: 3, kind: input, shape index: {}]
  %s4 = inlined_call_operand.vmem [shape: f32[16,1], index: 4, kind: input, shape index: {}]
  %s5 = inlined_call_operand.vmem [shape: bf16[2,16,80], index: 5, kind: output, shape index: {}]
  %s6 = sld [smem:[#allocation0]]
  $region53: #{generator_model_forward.12} parent=0
    _
  %s8 = ssub.s32 1, %s6
  %s9 = scalar_select 0, %s8, %s6
  loop: start=0, step=1, limit=4
  $region2: #{generator_model_forward.12} parent=0 // loop_pre_header
    _
  $region3: #{generator_model_forward.12} parent=0 // loop_header
    %s11 = sphi 0, %s15
    %p12 = scmp.ge.s32.totalorder %s11, 4
    %s21 = sphi 0, %s23
    %s24 = sphi 0, %s21
    %s25 = sphi 0, %s24
    %s41 = sphi 0, %s25
    %s45 = sphi 0, %s45
    %s47 = sphi 0, %s45
    %s48 = sphi 0, %s47
    %s62 = sphi 0, %s48
    %s66 = sphi 0, %s66
    %s68 = sphi 0, %s66
    %s69 = sphi 0, %s68
    %s83 = sphi 0, %s69
    %s87 = sphi 0, %s87
    %s89 = sphi 0, %s87
    %s90 = sphi 0, %s89
    %s104 = sphi 0, %s90
    %s108 = sphi 0, %s108
    %s110 = sphi 0, %s108
    %s111 = sphi 0, %s110
    %s125 = sphi 0, %s111
    %s131 = sphi 0, %s133
    %s134 = sphi 0, %s131
    %s135 = sphi 0, %s134
    %s151 = sphi 0, %s135
  $region4: #{generator_model_forward.12} parent=0 // loop_header_branch
    %14 = sbr.rel (%p12) target = $region8
  $region5: #{generator_model_forward.12} parent=0 // loop_body
    %s16 = ssub.s32 %s11, 1
    %s17 = ssub.s32 %s11, 2
    %s18 = sadd.s32 %s11, 1
    %s19 = ssub.s32 %s11, %s18
    %p20 = scmp.eq.s32.totalorder %s19, 0
    %s22 = sadd.s32 %s21, 1
    %s23 = scalar_select %p20, %s21, %s22
    %p26 = pneg %p20
    %p27 = scmp.eq.s32.totalorder %s11, 1
    %p28 = por %p26, %p27
    %p29 = scmp.ne.s32.totalorder %s21, %s24
    %p30 = scmp.eq.s32.totalorder %s11, 0
    %p31 = por %p29, %p30
    %p32 = scmp.ne.s32.totalorder %s21, %s24
    %p33 = scmp.eq.s32.totalorder %s16, 1
    %p34 = por %p32, %p33
    %p35 = scmp.ne.s32.totalorder %s24, %s25
    %p36 = scmp.eq.s32.totalorder %s16, 0
    %p37 = por %p35, %p36
    %p38 = scmp.ne.s32.totalorder %s24, %s25
    %p39 = scmp.eq.s32.totalorder %s17, 1
    %p40 = por %p38, %p39
    %p42 = scmp.ne.s32.totalorder %s25, %s41
    %p43 = scmp.eq.s32.totalorder %s17, 0
    %p44 = por %p42, %p43
    %s46 = sadd.s32 %s45, 1
    %p49 = scmp.eq.s32.totalorder %s11, 1
    %p50 = scmp.ne.s32.totalorder %s45, %s47
    %p51 = scmp.eq.s32.totalorder %s11, 0
    %p52 = por %p50, %p51
    %p53 = scmp.ne.s32.totalorder %s45, %s47
    %p54 = scmp.eq.s32.totalorder %s16, 1
    %p55 = por %p53, %p54
    %p56 = scmp.ne.s32.totalorder %s47, %s48
    %p57 = scmp.eq.s32.totalorder %s16, 0
    %p58 = por %p56, %p57
    %p59 = scmp.ne.s32.totalorder %s47, %s48
    %p60 = scmp.eq.s32.totalorder %s17, 1
    %p61 = por %p59, %p60
    %p63 = scmp.ne.s32.totalorder %s48, %s62
    %p64 = scmp.eq.s32.totalorder %s17, 0
    %p65 = por %p63, %p64
    %s67 = sadd.s32 %s66, 1
    %p70 = scmp.eq.s32.totalorder %s11, 1
    %p71 = scmp.ne.s32.totalorder %s66, %s68
    %p72 = scmp.eq.s32.totalorder %s11, 0
    %p73 = por %p71, %p72
    %p74 = scmp.ne.s32.totalorder %s66, %s68
    %p75 = scmp.eq.s32.totalorder %s16, 1
    %p76 = por %p74, %p75
    %p77 = scmp.ne.s32.totalorder %s68, %s69
    %p78 = scmp.eq.s32.totalorder %s16, 0
    %p79 = por %p77, %p78
    %p80 = scmp.ne.s32.totalorder %s68, %s69
    %p81 = scmp.eq.s32.totalorder %s17, 1
    %p82 = por %p80, %p81
    %p84 = scmp.ne.s32.totalorder %s69, %s83
    %p85 = scmp.eq.s32.totalorder %s17, 0
    %p86 = por %p84, %p85
    %s88 = sadd.s32 %s87, 1
    %p91 = scmp.eq.s32.totalorder %s11, 1
    %p92 = scmp.ne.s32.totalorder %s87, %s89
    %p93 = scmp.eq.s32.totalorder %s11, 0
    %p94 = por %p92, %p93
    %p95 = scmp.ne.s32.totalorder %s87, %s89
    %p96 = scmp.eq.s32.totalorder %s16, 1
    %p97 = por %p95, %p96
    %p98 = scmp.ne.s32.totalorder %s89, %s90
    %p99 = scmp.eq.s32.totalorder %s16, 0
    %p100 = por %p98, %p99
    %p101 = scmp.ne.s32.totalorder %s89, %s90
    %p102 = scmp.eq.s32.totalorder %s17, 1
    %p103 = por %p101, %p102
    %p105 = scmp.ne.s32.totalorder %s90, %s104
    %p106 = scmp.eq.s32.totalorder %s17, 0
    %p107 = por %p105, %p106
    %s109 = sadd.s32 %s108, 1
    %p112 = scmp.eq.s32.totalorder %s11, 1
    %p113 = scmp.ne.s32.totalorder %s108, %s110
    %p114 = scmp.eq.s32.totalorder %s11, 0
    %p115 = por %p113, %p114
    %p116 = scmp.ne.s32.totalorder %s108, %s110
    %p117 = scmp.eq.s32.totalorder %s16, 1
    %p118 = por %p116, %p117
    %p119 = scmp.ne.s32.totalorder %s110, %s111
    %p120 = scmp.eq.s32.totalorder %s16, 0
    %p121 = por %p119, %p120
    %p122 = scmp.ne.s32.totalorder %s110, %s111
    %p123 = scmp.eq.s32.totalorder %s17, 1
    %p124 = por %p122, %p123
    %p126 = scmp.ne.s32.totalorder %s111, %s125
    %p127 = scmp.eq.s32.totalorder %s17, 0
    %p128 = por %p126, %p127
    %s129 = ssub.s32 %s11, %s18
    %p130 = scmp.eq.s32.totalorder %s129, 0
    %s132 = sadd.s32 %s131, 1
    %s133 = scalar_select %p130, %s131, %s132
    %p136 = pneg %p130
    %p137 = scmp.eq.s32.totalorder %s11, 1
    %p138 = por %p136, %p137
    %p139 = scmp.ne.s32.totalorder %s131, %s134
    %p140 = scmp.eq.s32.totalorder %s11, 0
    %p141 = por %p139, %p140
    %p142 = scmp.ne.s32.totalorder %s131, %s134
    %p143 = scmp.eq.s32.totalorder %s16, 1
    %p144 = por %p142, %p143
    %p145 = scmp.ne.s32.totalorder %s134, %s135
    %p146 = scmp.eq.s32.totalorder %s16, 0
    %p147 = por %p145, %p146
    %p148 = scmp.ne.s32.totalorder %s134, %s135
    %p149 = scmp.eq.s32.totalorder %s17, 1
    %p150 = por %p148, %p149
    %p152 = scmp.ne.s32.totalorder %s135, %s151
    %p153 = scmp.eq.s32.totalorder %s17, 0
    %p154 = por %p152, %p153
    %p155 = scmp.le.s32.totalorder 1, %s11
    %p156 = scmp.lt.s32.totalorder %s11, 3
    %p157 = pnand %p155, %p156
    %p158 = pneg %p157
    // Predicated region
    $region9: #{generator_model_forward.12} parent=5 // pred_check
      _
    $region10: #{generator_model_forward.12} parent=5 // pred_check_branch
      %160 = sbr.rel (%p157) target = $region12
    $region11: #{generator_model_forward.12} parent=5 // pred_region
      %s161 = ssub.s32 %s11, 1
      // Predicated region
      $region13: #{generator_model_forward.12} parent=11 // pred_check
        %p162 = pneg %p58
      $region14: #{generator_model_forward.12} parent=11 // pred_check_branch
        %164 = sbr.rel (%p162) target = $region16
      $region15: #{generator_model_forward.12} parent=11 // pred_region
        _
      $region16: #{generator_model_forward.12} parent=11 // pred_fallthru
        _
      // Predicated region
      $region17: #{generator_model_forward.12} parent=11 // pred_check
        %p165 = pneg %p79
      $region18: #{generator_model_forward.12} parent=11 // pred_check_branch
        %167 = sbr.rel (%p165) target = $region20
      $region19: #{generator_model_forward.12} parent=11 // pred_region
        _
      $region20: #{generator_model_forward.12} parent=11 // pred_fallthru
        _
      // Predicated region
      $region21: #{generator_model_forward.12} parent=11 // pred_check
        %p168 = pneg %p100
      $region22: #{generator_model_forward.12} parent=11 // pred_check_branch
        %170 = sbr.rel (%p168) target = $region24
      $region23: #{generator_model_forward.12} parent=11 // pred_region
        _
      $region24: #{generator_model_forward.12} parent=11 // pred_fallthru
        _
      // Predicated region
      $region25: #{generator_model_forward.12} parent=11 // pred_check
        %p171 = pneg %p121
      $region26: #{generator_model_forward.12} parent=11 // pred_check_branch
        %173 = sbr.rel (%p171) target = $region28
      $region27: #{generator_model_forward.12} parent=11 // pred_region
        _
      $region28: #{generator_model_forward.12} parent=11 // pred_fallthru
        _
    $region12: #{generator_model_forward.12} parent=5 // pred_fallthru
      _
    %p174 = scmp.lt.s32.totalorder %s11, 2
    // Predicated region
    $region29: #{generator_model_forward.12} parent=5 // pred_check
      %p175 = pneg %p174
    $region30: #{generator_model_forward.12} parent=5 // pred_check_branch
      %177 = sbr.rel (%p175) target = $region32
    $region31: #{generator_model_forward.12} parent=5 // pred_region
      // Predicated region
      $region33: #{generator_model_forward.12} parent=31 // pred_check
        %p178 = pneg %p31
      $region34: #{generator_model_forward.12} parent=31 // pred_check_branch
        %180 = sbr.rel (%p178) target = $region36
      $region35: #{generator_model_forward.12} parent=31 // pred_region
        %p181 = scmp.lt.s32.totalorder %s11, 1
        %s182 = scalar_select %p181, %s11, 1
        %s183 = smul.addr %s182, 4
        %s184 = smul.addr %s183, 4
        %s185 = scalar_lea.vmem %s0, %s184
      $region36: #{generator_model_forward.12} parent=31 // pred_fallthru
        _
    $region32: #{generator_model_forward.12} parent=5 // pred_fallthru
      _
    %p186 = scmp.le.s32.totalorder 1, %s11
    %p187 = scmp.lt.s32.totalorder %s11, 3
    %p188 = pnand %p186, %p187
    %p189 = pneg %p188
    // Predicated region
    $region37: #{generator_model_forward.12} parent=5 // pred_check
      _
    $region38: #{generator_model_forward.12} parent=5 // pred_check_branch
      %191 = sbr.rel (%p188) target = $region40
    $region39: #{generator_model_forward.12} parent=5 // pred_region
      %s192 = ssub.s32 %s11, 1
      %p193 = scmp.lt.s32.totalorder %s16, 1
      %s194 = scalar_select %p193, %s16, 1
      %s195 = smul.addr %s194, 4
      %s196 = smul.addr %s195, 4
      %s197 = scalar_lea.vmem %s0, %s196
      %p198 = pneg %p37
      %p199 = pneg %p34
      %p200 = pneg %p58
      %p201 = pneg %p55
      %p202 = pneg %p79
      %p203 = pneg %p76
      %p204 = pneg %p100
      %p205 = pneg %p97
      %p206 = pneg %p121
      %p207 = pneg %p118
      %p208 = pneg %p147
      %p209 = pneg %p144
      %p210 = scmp.lt.s32.totalorder %s16, 1
      %s211 = scalar_select %p210, %s16, 1
      %s212 = smul.addr %s211, 2
      %s213 = smul.addr %s212, 4
      %s214 = scalar_lea.vmem %s5, %s213
      %p215 = scmp.lt.s32.totalorder %s16, 1
      %s216 = scalar_select %p215, %s16, 1
      %s217 = smul.addr %s216, 4
      %s218 = smul.addr %s217, 4
      %s219 = scalar_lea.vmem %s0, %s218
      %p220 = scmp.lt.s32.totalorder %s16, 1
      %s221 = scalar_select %p220, %s16, 1
      %s222 = smul.addr %s221, 2
      %s223 = smul.addr %s222, 4
      %s224 = scalar_lea.vmem %s5, %s223
      %v226 = vld [vmem:[%s219] sm:$0xf]
      %v227 = vld [vmem:[%s219 + $0x4] sm:$0xf]
      %v228 = vld [vmem:[%s219 + $0x8] sm:$0xf]
      %v229 = vld [vmem:[%s219 + $0xc] sm:$0xf]
      %v230 = vld [vmem:[%s1] sm:$0xf]
      %v231 = vld [vmem:[%s1 + $0x4] sm:$0xf]
      %s232 = scalar_lea.vmem %s1, 8
      %v233 = vld [vmem:[%s232] sm:$0xf]
      %v234 = vld [vmem:[%s232 + $0x4] sm:$0xf]
      %v237 = vunpack.c.l.b16 %v233
      %v238 = vunpack.c.l.b16 %v234
      %v239 = vpack.c.b16 %v238, %v237
      %v244 = vunpack.c.l.b16 %v226
      %v245 = vunpack.c.l.b16 %v227
      %v246 = vunpack.c.l.b16 %v228
      %v247 = vunpack.c.l.b16 %v229
      %v248 = vpack.c.b16 %v245, %v244
      %v249 = vpack.c.b16 %v247, %v246
      %250 = vrot.lane.b32.xlu0 %v248, 127
      %v251 = vpop.permute.xlu0 %250
      %252 = vrot.lane.b32.xlu0 %v249, 127
      %v253 = vpop.permute.xlu0 %252
      %vm256 = vcmask 261120
      %v258 = vsel %vm256, %v239, 0
      %260 = vmatprep.subr.bf16.mxu0 0
      %261 = vmatpush1.bf16.msra.mxu0 0
      %262 = vmatprep.subr.bf16.mxu0 0
      %263 = vmatpush1.bf16.msra.mxu0 0
      %264 = vmatprep.subr.bf16.mxu0 0
      %265 = vmatpush1.bf16.msra.mxu0 0
      %266 = vmatprep.subr.bf16.mxu0 0
      %267 = vmatpush1.bf16.msra.mxu0 0
      %268 = vmatprep.subr.bf16.mxu0 0
      %269 = vmatpush1.bf16.msra.mxu0 0
      %270 = vmatprep.subr.bf16.mxu0 0
      %271 = vmatpush1.bf16.msra.mxu0 0
      %272 = vmatprep.subr.bf16.mxu0 0
      %273 = vmatpush1.bf16.msra.mxu0 %v253
      %274 = vmatprep.subr.bf16.mxu0 0
      %275 = vmatpush1.bf16.msra.mxu0 %v251
      %276 = vmatprep.subr.bf16.mxu0 0
      %277 = vmatpush2.bf16.msra.mxu0 0
      %278 = vmatprep.subr.bf16.mxu0 0
      %279 = vmatpush2.bf16.msra.mxu0 0
      %280 = vmatprep.subr.bf16.mxu0 0
      %281 = vmatpush2.bf16.msra.mxu0 0
      %282 = vmatprep.subr.bf16.mxu0 0
      %283 = vmatpush2.bf16.msra.mxu0 0
      %284 = vmatprep.subr.bf16.mxu0 0
      %285 = vmatpush2.bf16.msra.mxu0 0
      %286 = vmatprep.subr.bf16.mxu0 0
      %287 = vmatpush2.bf16.msra.mxu0 0
      %288 = vmatprep.subr.bf16.mxu0 0
      %289 = vmatpush2.bf16.msra.mxu0 0
      %290 = vmatprep.subr.bf16.mxu0 0
      %291 = vmatpush2.bf16.msra.mxu0 0
      %292 = vmatprep.mubr.bf16.mxu0 0
      %293 = vmatmul.mubr.bf16.gmra.mxu0 %v258
      %v294 = vpop.f32.mrf.mxu0
      %v295 = vadd.f32 0.0, %v294
      %v296 = vpop.f32.mrf.mxu0
      %v297 = vpop.f32.mrf.mxu0
      %v298 = vadd.f32 0.0, %v297
      %v299 = vpop.f32.mrf.mxu0
      %300 = vdwg.mxu0
      %v303 = vunpack.c.l.b16 %v230
      %v304 = vunpack.c.l.b16 %v231
      %v305 = vpack.c.b16 %v304, %v303
      %v309 = vsel %vm256, %v305, 0
      %311 = vmatprep.subr.bf16.mxu0 0
      %312 = vmatpush1.bf16.msra.mxu0 0
      %313 = vmatprep.subr.bf16.mxu0 0
      %314 = vmatpush1.bf16.msra.mxu0 0
      %315 = vmatprep.subr.bf16.mxu0 0
      %316 = vmatpush1.bf16.msra.mxu0 0
      %317 = vmatprep.subr.bf16.mxu0 0
      %318 = vmatpush1.bf16.msra.mxu0 0
      %319 = vmatprep.subr.bf16.mxu0 0
      %320 = vmatpush1.bf16.msra.mxu0 0
      %321 = vmatprep.subr.bf16.mxu0 0
      %322 = vmatpush1.bf16.msra.mxu0 0
      %323 = vmatprep.subr.bf16.mxu0 0
      %324 = vmatpush1.bf16.msra.mxu0 %v249
      %325 = vmatprep.subr.bf16.mxu0 0
      %326 = vmatpush1.bf16.msra.mxu0 %v248
      %327 = vmatprep.subr.bf16.mxu0 0
      %328 = vmatpush2.bf16.msra.mxu0 0
      %329 = vmatprep.subr.bf16.mxu0 0
      %330 = vmatpush2.bf16.msra.mxu0 0
      %331 = vmatprep.subr.bf16.mxu0 0
      %332 = vmatpush2.bf16.msra.mxu0 0
      %333 = vmatprep.subr.bf16.mxu0 0
      %334 = vmatpush2.bf16.msra.mxu0 0
      %335 = vmatprep.subr.bf16.mxu0 0
      %336 = vmatpush2.bf16.msra.mxu0 0
      %337 = vmatprep.subr.bf16.mxu0 0
      %338 = vmatpush2.bf16.msra.mxu0 0
      %339 = vmatprep.subr.bf16.mxu0 0
      %340 = vmatpush2.bf16.msra.mxu0 0
      %341 = vmatprep.subr.bf16.mxu0 0
      %342 = vmatpush2.bf16.msra.mxu0 0
      %343 = vmatprep.mubr.bf16.mxu0 0
      %344 = vmatmul.mubr.bf16.gmra.mxu0 %v309
      %v345 = vpop.f32.mrf.mxu0
      %v346 = vadd.f32 %v295, %v345
      %v347 = vpop.f32.mrf.mxu0
      %v348 = vpop.f32.mrf.mxu0
      %v349 = vadd.f32 %v298, %v348
      %v350 = vpop.f32.mrf.mxu0
      %351 = vdwg.mxu0
      %s352 = scalar_lea.vmem %s1, 16
      %v353 = vld [vmem:[%s352] sm:$0xf]
      %v354 = vld [vmem:[%s352 + $0x4] sm:$0xf]
      %v357 = vunpack.c.l.b16 %v353
      %v358 = vunpack.c.l.b16 %v354
      %v359 = vpack.c.b16 %v358, %v357
      %360 = vrot.lane.b32.xlu0 %v248, 126
      %v361 = vpop.permute.xlu0 %360
      %362 = vrot.lane.b32.xlu0 %v249, 126
      %v363 = vpop.permute.xlu0 %362
      %v367 = vsel %vm256, %v359, 0
      %369 = vmatprep.subr.bf16.mxu0 0
      %370 = vmatpush1.bf16.msra.mxu0 0
      %371 = vmatprep.subr.bf16.mxu0 0
      %372 = vmatpush1.bf16.msra.mxu0 0
      %373 = vmatprep.subr.bf16.mxu0 0
      %374 = vmatpush1.bf16.msra.mxu0 0
      %375 = vmatprep.subr.bf16.mxu0 0
      %376 = vmatpush1.bf16.msra.mxu0 0
      %377 = vmatprep.subr.bf16.mxu0 0
      %378 = vmatpush1.bf16.msra.mxu0 0
      %379 = vmatprep.subr.bf16.mxu0 0
      %380 = vmatpush1.bf16.msra.mxu0 0
      %381 = vmatprep.subr.bf16.mxu0 0
      %382 = vmatpush1.bf16.msra.mxu0 %v363
      %383 = vmatprep.subr.bf16.mxu0 0
      %384 = vmatpush1.bf16.msra.mxu0 %v361
      %385 = vmatprep.subr.bf16.mxu0 0
      %386 = vmatpush2.bf16.msra.mxu0 0
      %387 = vmatprep.subr.bf16.mxu0 0
      %388 = vmatpush2.bf16.msra.mxu0 0
      %389 = vmatprep.subr.bf16.mxu0 0
      %390 = vmatpush2.bf16.msra.mxu0 0
      %391 = vmatprep.subr.bf16.mxu0 0
      %392 = vmatpush2.bf16.msra.mxu0 0
      %393 = vmatprep.subr.bf16.mxu0 0
      %394 = vmatpush2.bf16.msra.mxu0 0
      %395 = vmatprep.subr.bf16.mxu0 0
      %396 = vmatpush2.bf16.msra.mxu0 0
      %397 = vmatprep.subr.bf16.mxu0 0
      %398 = vmatpush2.bf16.msra.mxu0 0
      %399 = vmatprep.subr.bf16.mxu0 0
      %400 = vmatpush2.bf16.msra.mxu0 0
      %401 = vmatprep.mubr.bf16.mxu0 0
      %402 = vmatmul.mubr.bf16.gmra.mxu0 %v367
      %v403 = vpop.f32.mrf.mxu0
      %v404 = vadd.f32 0.0, %v403
      %v405 = vpop.f32.mrf.mxu0
      %v406 = vpop.f32.mrf.mxu0
      %v407 = vadd.f32 0.0, %v406
      %v408 = vpop.f32.mrf.mxu0
      %409 = vdwg.mxu0
      %v410 = vadd.f32 %v346, %v404
      %v411 = vadd.f32 %v349, %v407
      %s412 = scalar_lea.vmem %s1, 24
      %v413 = vld [vmem:[%s412] sm:$0xf]
      %v414 = vld [vmem:[%s412 + $0x4] sm:$0xf]
      %v417 = vunpack.c.l.b16 %v413
      %v418 = vunpack.c.l.b16 %v414
      %v419 = vpack.c.b16 %v418, %v417
      %420 = vrot.lane.b32.xlu0 %v248, 118
      %v421 = vpop.permute.xlu0 %420
      %422 = vrot.lane.b32.xlu0 %v249, 118
      %v423 = vpop.permute.xlu0 %422
      %v427 = vsel %vm256, %v419, 0
      %429 = vmatprep.subr.bf16.mxu0 0
      %430 = vmatpush1.bf16.msra.mxu0 0
      %431 = vmatprep.subr.bf16.mxu0 0
      %432 = vmatpush1.bf16.msra.mxu0 0
      %433 = vmatprep.subr.bf16.mxu0 0
      %434 = vmatpush1.bf16.msra.mxu0 0
      %435 = vmatprep.subr.bf16.mxu0 0
      %436 = vmatpush1.bf16.msra.mxu0 0
      %437 = vmatprep.subr.bf16.mxu0 0
      %438 = vmatpush1.bf16.msra.mxu0 0
      %439 = vmatprep.subr.bf16.mxu0 0
      %440 = vmatpush1.bf16.msra.mxu0 0
      %441 = vmatprep.subr.bf16.mxu0 0
      %442 = vmatpush1.bf16.msra.mxu0 %v423
      %443 = vmatprep.subr.bf16.mxu0 0
      %444 = vmatpush1.bf16.msra.mxu0 %v421
      %445 = vmatprep.subr.bf16.mxu0 0
      %446 = vmatpush2.bf16.msra.mxu0 0
      %447 = vmatprep.subr.bf16.mxu0 0
      %448 = vmatpush2.bf16.msra.mxu0 0
      %449 = vmatprep.subr.bf16.mxu0 0
      %450 = vmatpush2.bf16.msra.mxu0 0
      %451 = vmatprep.subr.bf16.mxu0 0
      %452 = vmatpush2.bf16.msra.mxu0 0
      %453 = vmatprep.subr.bf16.mxu0 0
      %454 = vmatpush2.bf16.msra.mxu0 0
      %455 = vmatprep.subr.bf16.mxu0 0
      %456 = vmatpush2.bf16.msra.mxu0 0
      %457 = vmatprep.subr.bf16.mxu0 0
      %458 = vmatpush2.bf16.msra.mxu0 0
      %459 = vmatprep.subr.bf16.mxu0 0
      %460 = vmatpush2.bf16.msra.mxu0 0
      %461 = vmatprep.mubr.bf16.mxu0 0
      %462 = vmatmul.mubr.bf16.gmra.mxu0 %v427
      %v463 = vpop.f32.mrf.mxu0
      %v464 = vadd.f32 0.0, %v463
      %v465 = vpop.f32.mrf.mxu0
      %v466 = vpop.f32.mrf.mxu0
      %v467 = vadd.f32 0.0, %v466
      %v468 = vpop.f32.mrf.mxu0
      %469 = vdwg.mxu0
      %v470 = vadd.f32 %v410, %v464
      %v471 = vadd.f32 %v411, %v467
      %s472 = scalar_lea.vmem %s1, 32
      %v473 = vld [vmem:[%s472] sm:$0xf]
      %v474 = vld [vmem:[%s472 + $0x4] sm:$0xf]
      %v477 = vunpack.c.l.b16 %v473
      %v478 = vunpack.c.l.b16 %v474
      %v479 = vpack.c.b16 %v478, %v477
      %480 = vrot.lane.b32.xlu0 %v248, 117
      %v481 = vpop.permute.xlu0 %480
      %482 = vrot.lane.b32.xlu0 %v249, 117
      %v483 = vpop.permute.xlu0 %482
      %v487 = vsel %vm256, %v479, 0
      %489 = vmatprep.subr.bf16.mxu0 0
      %490 = vmatpush1.bf16.msra.mxu0 0
      %491 = vmatprep.subr.bf16.mxu0 0
      %492 = vmatpush1.bf16.msra.mxu0 0
      %493 = vmatprep.subr.bf16.mxu0 0
      %494 = vmatpush1.bf16.msra.mxu0 0
      %495 = vmatprep.subr.bf16.mxu0 0
      %496 = vmatpush1.bf16.msra.mxu0 0
      %497 = vmatprep.subr.bf16.mxu0 0
      %498 = vmatpush1.bf16.msra.mxu0 0
      %499 = vmatprep.subr.bf16.mxu0 0
      %500 = vmatpush1.bf16.msra.mxu0 0
      %501 = vmatprep.subr.bf16.mxu0 0
      %502 = vmatpush1.bf16.msra.mxu0 %v483
      %503 = vmatprep.subr.bf16.mxu0 0
      %504 = vmatpush1.bf16.msra.mxu0 %v481
      %505 = vmatprep.subr.bf16.mxu0 0
      %506 = vmatpush2.bf16.msra.mxu0 0
      %507 = vmatprep.subr.bf16.mxu0 0
      %508 = vmatpush2.bf16.msra.mxu0 0
      %509 = vmatprep.subr.bf16.mxu0 0
      %510 = vmatpush2.bf16.msra.mxu0 0
      %511 = vmatprep.subr.bf16.mxu0 0
      %512 = vmatpush2.bf16.msra.mxu0 0
      %513 = vmatprep.subr.bf16.mxu0 0
      %514 = vmatpush2.bf16.msra.mxu0 0
      %515 = vmatprep.subr.bf16.mxu0 0
      %516 = vmatpush2.bf16.msra.mxu0 0
      %517 = vmatprep.subr.bf16.mxu0 0
      %518 = vmatpush2.bf16.msra.mxu0 0
      %519 = vmatprep.subr.bf16.mxu0 0
      %520 = vmatpush2.bf16.msra.mxu0 0
      %521 = vmatprep.mubr.bf16.mxu0 0
      %522 = vmatmul.mubr.bf16.gmra.mxu0 %v487
      %v523 = vpop.f32.mrf.mxu0
      %v524 = vadd.f32 0.0, %v523
      %v525 = vpop.f32.mrf.mxu0
      %v526 = vpop.f32.mrf.mxu0
      %v527 = vadd.f32 0.0, %v526
      %v528 = vpop.f32.mrf.mxu0
      %529 = vdwg.mxu0
      %v530 = vadd.f32 %v470, %v524
      %v531 = vadd.f32 %v471, %v527
      %s532 = scalar_lea.vmem %s1, 40
      %v533 = vld [vmem:[%s532] sm:$0xf]
      %v534 = vld [vmem:[%s532 + $0x4] sm:$0xf]
      %v537 = vunpack.c.l.b16 %v533
      %v538 = vunpack.c.l.b16 %v534
      %v539 = vpack.c.b16 %v538, %v537
      %540 = vrot.lane.b32.xlu0 %v248, 116
      %v541 = vpop.permute.xlu0 %540
      %542 = vrot.lane.b32.xlu0 %v249, 116
      %v543 = vpop.permute.xlu0 %542
      %v547 = vsel %vm256, %v539, 0
      %549 = vmatprep.subr.bf16.mxu0 0
      %550 = vmatpush1.bf16.msra.mxu0 0
      %551 = vmatprep.subr.bf16.mxu0 0
      %552 = vmatpush1.bf16.msra.mxu0 0
      %553 = vmatprep.subr.bf16.mxu0 0
      %554 = vmatpush1.bf16.msra.mxu0 0
      %555 = vmatprep.subr.bf16.mxu0 0
      %556 = vmatpush1.bf16.msra.mxu0 0
      %557 = vmatprep.subr.bf16.mxu0 0
      %558 = vmatpush1.bf16.msra.mxu0 0
      %559 = vmatprep.subr.bf16.mxu0 0
      %560 = vmatpush1.bf16.msra.mxu0 0
      %561 = vmatprep.subr.bf16.mxu0 0
      %562 = vmatpush1.bf16.msra.mxu0 %v543
      %563 = vmatprep.subr.bf16.mxu0 0
      %564 = vmatpush1.bf16.msra.mxu0 %v541
      %565 = vmatprep.subr.bf16.mxu0 0
      %566 = vmatpush2.bf16.msra.mxu0 0
      %567 = vmatprep.subr.bf16.mxu0 0
      %568 = vmatpush2.bf16.msra.mxu0 0
      %569 = vmatprep.subr.bf16.mxu0 0
      %570 = vmatpush2.bf16.msra.mxu0 0
      %571 = vmatprep.subr.bf16.mxu0 0
      %572 = vmatpush2.bf16.msra.mxu0 0
      %573 = vmatprep.subr.bf16.mxu0 0
      %574 = vmatpush2.bf16.msra.mxu0 0
      %575 = vmatprep.subr.bf16.mxu0 0
      %576 = vmatpush2.bf16.msra.mxu0 0
      %577 = vmatprep.subr.bf16.mxu0 0
      %578 = vmatpush2.bf16.msra.mxu0 0
      %579 = vmatprep.subr.bf16.mxu0 0
      %580 = vmatpush2.bf16.msra.mxu0 0
      %581 = vmatprep.mubr.bf16.mxu0 0
      %582 = vmatmul.mubr.bf16.gmra.mxu0 %v547
      %v583 = vpop.f32.mrf.mxu0
      %v584 = vadd.f32 0.0, %v583
      %v585 = vpop.f32.mrf.mxu0
      %v586 = vpop.f32.mrf.mxu0
      %v587 = vadd.f32 0.0, %v586
      %v588 = vpop.f32.mrf.mxu0
      %589 = vdwg.mxu0
      %v590 = vadd.f32 %v530, %v584
      %v591 = vadd.f32 %v531, %v587
      %s592 = scalar_lea.vmem %s1, 48
      %v593 = vld [vmem:[%s592] sm:$0xf]
      %v594 = vld [vmem:[%s592 + $0x4] sm:$0xf]
      %v597 = vunpack.c.l.b16 %v593
      %v598 = vunpack.c.l.b16 %v594
      %v599 = vpack.c.b16 %v598, %v597
      %600 = vrot.lane.b32.xlu0 %v248, 108
      %v601 = vpop.permute.xlu0 %600
      %602 = vrot.lane.b32.xlu0 %v249, 108
      %v603 = vpop.permute.xlu0 %602
      %v607 = vsel %vm256, %v599, 0
      %609 = vmatprep.subr.bf16.mxu0 0
      %610 = vmatpush1.bf16.msra.mxu0 0
      %611 = vmatprep.subr.bf16.mxu0 0
      %612 = vmatpush1.bf16.msra.mxu0 0
      %613 = vmatprep.subr.bf16.mxu0 0
      %614 = vmatpush1.bf16.msra.mxu0 0
      %615 = vmatprep.subr.bf16.mxu0 0
      %616 = vmatpush1.bf16.msra.mxu0 0
      %617 = vmatprep.subr.bf16.mxu0 0
      %618 = vmatpush1.bf16.msra.mxu0 0
      %619 = vmatprep.subr.bf16.mxu0 0
      %620 = vmatpush1.bf16.msra.mxu0 0
      %621 = vmatprep.subr.bf16.mxu0 0
      %622 = vmatpush1.bf16.msra.mxu0 %v603
      %623 = vmatprep.subr.bf16.mxu0 0
      %624 = vmatpush1.bf16.msra.mxu0 %v601
      %625 = vmatprep.subr.bf16.mxu0 0
      %626 = vmatpush2.bf16.msra.mxu0 0
      %627 = vmatprep.subr.bf16.mxu0 0
      %628 = vmatpush2.bf16.msra.mxu0 0
      %629 = vmatprep.subr.bf16.mxu0 0
      %630 = vmatpush2.bf16.msra.mxu0 0
      %631 = vmatprep.subr.bf16.mxu0 0
      %632 = vmatpush2.bf16.msra.mxu0 0
      %633 = vmatprep.subr.bf16.mxu0 0
      %634 = vmatpush2.bf16.msra.mxu0 0
      %635 = vmatprep.subr.bf16.mxu0 0
      %636 = vmatpush2.bf16.msra.mxu0 0
      %637 = vmatprep.subr.bf16.mxu0 0
      %638 = vmatpush2.bf16.msra.mxu0 0
      %639 = vmatprep.subr.bf16.mxu0 0
      %640 = vmatpush2.bf16.msra.mxu0 0
      %641 = vmatprep.mubr.bf16.mxu0 0
      %642 = vmatmul.mubr.bf16.gmra.mxu0 %v607
      %v643 = vpop.f32.mrf.mxu0
      %v644 = vadd.f32 0.0, %v643
      %v645 = vpop.f32.mrf.mxu0
      %v646 = vpop.f32.mrf.mxu0
      %v647 = vadd.f32 0.0, %v646
      %v648 = vpop.f32.mrf.mxu0
      %649 = vdwg.mxu0
      %v650 = vadd.f32 %v590, %v644
      %v651 = vadd.f32 %v591, %v647
      %s652 = scalar_lea.vmem %s1, 56
      %v653 = vld [vmem:[%s652] sm:$0xf]
      %v654 = vld [vmem:[%s652 + $0x4] sm:$0xf]
      %v657 = vunpack.c.l.b16 %v653
      %v658 = vunpack.c.l.b16 %v654
      %v659 = vpack.c.b16 %v658, %v657
      %660 = vrot.lane.b32.xlu0 %v248, 107
      %v661 = vpop.permute.xlu0 %660
      %662 = vrot.lane.b32.xlu0 %v249, 107
      %v663 = vpop.permute.xlu0 %662
      %v667 = vsel %vm256, %v659, 0
      %669 = vmatprep.subr.bf16.mxu0 0
      %670 = vmatpush1.bf16.msra.mxu0 0
      %671 = vmatprep.subr.bf16.mxu0 0
      %672 = vmatpush1.bf16.msra.mxu0 0
      %673 = vmatprep.subr.bf16.mxu0 0
      %674 = vmatpush1.bf16.msra.mxu0 0
      %675 = vmatprep.subr.bf16.mxu0 0
      %676 = vmatpush1.bf16.msra.mxu0 0
      %677 = vmatprep.subr.bf16.mxu0 0
      %678 = vmatpush1.bf16.msra.mxu0 0
      %679 = vmatprep.subr.bf16.mxu0 0
      %680 = vmatpush1.bf16.msra.mxu0 0
      %681 = vmatprep.subr.bf16.mxu0 0
      %682 = vmatpush1.bf16.msra.mxu0 %v663
      %683 = vmatprep.subr.bf16.mxu0 0
      %684 = vmatpush1.bf16.msra.mxu0 %v661
      %685 = vmatprep.subr.bf16.mxu0 0
      %686 = vmatpush2.bf16.msra.mxu0 0
      %687 = vmatprep.subr.bf16.mxu0 0
      %688 = vmatpush2.bf16.msra.mxu0 0
      %689 = vmatprep.subr.bf16.mxu0 0
      %690 = vmatpush2.bf16.msra.mxu0 0
      %691 = vmatprep.subr.bf16.mxu0 0
      %692 = vmatpush2.bf16.msra.mxu0 0
      %693 = vmatprep.subr.bf16.mxu0 0
      %694 = vmatpush2.bf16.msra.mxu0 0
      %695 = vmatprep.subr.bf16.mxu0 0
      %696 = vmatpush2.bf16.msra.mxu0 0
      %697 = vmatprep.subr.bf16.mxu0 0
      %698 = vmatpush2.bf16.msra.mxu0 0
      %699 = vmatprep.subr.bf16.mxu0 0
      %700 = vmatpush2.bf16.msra.mxu0 0
      %701 = vmatprep.mubr.bf16.mxu0 0
      %702 = vmatmul.mubr.bf16.gmra.mxu0 %v667
      %v703 = vpop.f32.mrf.mxu0
      %v704 = vadd.f32 0.0, %v703
      %v705 = vpop.f32.mrf.mxu0
      %v706 = vpop.f32.mrf.mxu0
      %v707 = vadd.f32 0.0, %v706
      %v708 = vpop.f32.mrf.mxu0
      %709 = vdwg.mxu0
      %v710 = vadd.f32 %v650, %v704
      %v711 = vadd.f32 %v651, %v707
      %s712 = scalar_lea.vmem %s1, 64
      %v713 = vld [vmem:[%s712] sm:$0xf]
      %v714 = vld [vmem:[%s712 + $0x4] sm:$0xf]
      %v717 = vunpack.c.l.b16 %v713
      %v718 = vunpack.c.l.b16 %v714
      %v719 = vpack.c.b16 %v718, %v717
      %720 = vrot.lane.b32.xlu0 %v248, 106
      %v721 = vpop.permute.xlu0 %720
      %722 = vrot.lane.b32.xlu0 %v249, 106
      %v723 = vpop.permute.xlu0 %722
      %v727 = vsel %vm256, %v719, 0
      %729 = vmatprep.subr.bf16.mxu0 0
      %730 = vmatpush1.bf16.msra.mxu0 0
      %731 = vmatprep.subr.bf16.mxu0 0
      %732 = vmatpush1.bf16.msra.mxu0 0
      %733 = vmatprep.subr.bf16.mxu0 0
      %734 = vmatpush1.bf16.msra.mxu0 0
      %735 = vmatprep.subr.bf16.mxu0 0
      %736 = vmatpush1.bf16.msra.mxu0 0
      %737 = vmatprep.subr.bf16.mxu0 0
      %738 = vmatpush1.bf16.msra.mxu0 0
      %739 = vmatprep.subr.bf16.mxu0 0
      %740 = vmatpush1.bf16.msra.mxu0 0
      %741 = vmatprep.subr.bf16.mxu0 0
      %742 = vmatpush1.bf16.msra.mxu0 %v723
      %743 = vmatprep.subr.bf16.mxu0 0
      %744 = vmatpush1.bf16.msra.mxu0 %v721
      %745 = vmatprep.subr.bf16.mxu0 0
      %746 = vmatpush2.bf16.msra.mxu0 0
      %747 = vmatprep.subr.bf16.mxu0 0
      %748 = vmatpush2.bf16.msra.mxu0 0
      %749 = vmatprep.subr.bf16.mxu0 0
      %750 = vmatpush2.bf16.msra.mxu0 0
      %751 = vmatprep.subr.bf16.mxu0 0
      %752 = vmatpush2.bf16.msra.mxu0 0
      %753 = vmatprep.subr.bf16.mxu0 0
      %754 = vmatpush2.bf16.msra.mxu0 0
      %755 = vmatprep.subr.bf16.mxu0 0
      %756 = vmatpush2.bf16.msra.mxu0 0
      %757 = vmatprep.subr.bf16.mxu0 0
      %758 = vmatpush2.bf16.msra.mxu0 0
      %759 = vmatprep.subr.bf16.mxu0 0
      %760 = vmatpush2.bf16.msra.mxu0 0
      %761 = vmatprep.mubr.bf16.mxu0 0
      %762 = vmatmul.mubr.bf16.gmra.mxu0 %v727
      %v763 = vpop.f32.mrf.mxu0
      %v764 = vadd.f32 0.0, %v763
      %v765 = vpop.f32.mrf.mxu0
      %v766 = vpop.f32.mrf.mxu0
      %v767 = vadd.f32 0.0, %v766
      %v768 = vpop.f32.mrf.mxu0
      %769 = vdwg.mxu0
      %v770 = vadd.f32 %v710, %v764
      %v771 = vadd.f32 %v711, %v767
      %v772 = vld [vmem:[%s2] sm:$0x1]
      %v774 = vlaneseq
      %v775 = vshrl.u32 %v774, 7
      %v776 = vsub.s32 0, %v775
      %v777 = vrot.slane %v772, %v776
      %v779 = vmul.f32 %v770, %v777
      %v780 = vmul.f32 %v771, %v777
      %vm781 = vcmask 654336
      %v782 = vsel %vm781, %v779, 0.0
      %783 = vadd.xlane.f32.xlu0 %v782
      %v784 = vpop.xlane.xlu0 %783
      %v785 = vsel %vm781, %v780, 0.0
      %786 = vadd.xlane.f32.xlu0 %v785
      %v787 = vpop.xlane.xlu0 %786
      %v788 = vmul.f32 %v784, 0.015625
      %v789 = vmul.f32 %v787, 0.015625
      %v790 = vsub.f32 %v770, %v788
      %v791 = vsub.f32 %v771, %v789
      %v792 = vmul.f32 %v790, %v777
      %v793 = vmul.f32 %v791, %v777
      %v794 = vmul.f32 %v792, %v792
      %v795 = vmul.f32 %v793, %v793
      %v796 = vsel %vm781, %v794, 0.0
      %797 = vadd.xlane.f32.xlu0 %v796
      %v798 = vpop.xlane.xlu0 %797
      %v799 = vsel %vm781, %v795, 0.0
      %800 = vadd.xlane.f32.xlu0 %v799
      %v801 = vpop.xlane.xlu0 %800
      %v802 = vmul.f32 %v798, 0.015625
      %v803 = vmul.f32 %v801, 0.015625
      %v804 = vadd.f32 %v802, 1e-05
      %v805 = vadd.f32 %v803, 1e-05
      %v806 = vrsqrt.pop %v804
      %v807 = vrsqrt.pop %v805
      %v808 = vmul.f32 %v790, %v806
      %v809 = vmul.f32 %v791, %v807
      %v810 = vld [vmem:[%s3] sm:$0xff]
      %v811 = vld [vmem:[%s3 + $0x8] sm:$0xff]
      %813 = vset.pattern.permute.xlu0 0
      %814 = vperm.xlu0 %813, %v810
      %v815 = vpop.permute.xlu0 %814
      %818 = vset.pattern.permute.xlu0 0
      %819 = vperm.xlu0 %818, %v811
      %v820 = vpop.permute.xlu0 %819
      %v822 = vmul.f32 %v808, %v815
      %v823 = vmul.f32 %v809, %v820
      %v824 = vld [vmem:[%s4] sm:$0xff]
      %v825 = vld [vmem:[%s4 + $0x8] sm:$0xff]
      %827 = vset.pattern.permute.xlu0 0
      %828 = vperm.xlu0 %827, %v824
      %v829 = vpop.permute.xlu0 %828
      %832 = vset.pattern.permute.xlu0 0
      %833 = vperm.xlu0 %832, %v825
      %v834 = vpop.permute.xlu0 %833
      %v836 = vadd.f32 %v822, %v829
      %v837 = vadd.f32 %v823, %v834
      %vm838 = vcmp.ge.f32.partialorder %v836, 0.0
      %vm839 = vcmp.ge.f32.partialorder %v837, 0.0
      %v840 = vmul.f32 %v836, 0.2
      %v841 = vmul.f32 %v837, 0.2
      %v842 = vsel %vm838, %v836, %v840
      %v843 = vsel %vm839, %v837, %v841
      %v844 = vpack.c.bf16 %v843, %v842
      %v846 = vunpack.c.l.b16 %v844
      %v847 = vunpack.c.h.b16 %v844
      %v848 = vpack.c.b16 %v846, %v846
      %v849 = vpack.c.b16 %v847, %v847
      %vm852 = vcmask 650240
      %853 = vst.msk [vmem:[%s224] sm:$0xf] %vm852, %v848
      %854 = vst.msk [vmem:[%s224 + $0x4] sm:$0xf] %vm852, %v849
      %p855 = scmp.lt.s32.totalorder %s16, 1
      %s856 = scalar_select %p855, %s16, 1
      %s857 = smul.addr %s856, 2
      %s858 = smul.addr %s857, 4
      %s859 = scalar_lea.vmem %s5, %s858
      // Predicated region
      $region41: #{generator_model_forward.12} parent=39 // pred_check
        %p860 = pneg %p144
      $region42: #{generator_model_forward.12} parent=39 // pred_check_branch
        %862 = sbr.rel (%p860) target = $region44
      $region43: #{generator_model_forward.12} parent=39 // pred_region
        _
      $region44: #{generator_model_forward.12} parent=39 // pred_fallthru
        _
    $region40: #{generator_model_forward.12} parent=5 // pred_fallthru
      _
    %p863 = scmp.le.s32.totalorder 2, %s11
    // Predicated region
    $region45: #{generator_model_forward.12} parent=5 // pred_check
      %p864 = pneg %p863
    $region46: #{generator_model_forward.12} parent=5 // pred_check_branch
      %866 = sbr.rel (%p864) target = $region48
    $region47: #{generator_model_forward.12} parent=5 // pred_region
      %s867 = ssub.s32 %s11, 2
      // Predicated region
      $region49: #{generator_model_forward.12} parent=47 // pred_check
        %p868 = pneg %p150
      $region50: #{generator_model_forward.12} parent=47 // pred_check_branch
        %870 = sbr.rel (%p868) target = $region52
      $region51: #{generator_model_forward.12} parent=47 // pred_region
        %p871 = scmp.lt.s32.totalorder %s17, 1
        %s872 = scalar_select %p871, %s17, 1
        %s873 = smul.addr %s872, 2
        %s874 = smul.addr %s873, 4
        %s875 = scalar_lea.vmem %s5, %s874
      $region52: #{generator_model_forward.12} parent=47 // pred_fallthru
        _
    $region48: #{generator_model_forward.12} parent=5 // pred_fallthru
      _
  $region6: #{generator_model_forward.12} parent=0 // loop_footer
    %s15 = sadd.s32 1, %s11
  $region7: #{generator_model_forward.12} parent=0 // loop_footer_branch
    %10 = sbr.rel target = $region3
  $region8: #{generator_model_forward.12} parent=0 // loop_exit
    _

// kernel: generator_model_forward.13
$region0: #{generator_model_forward.13}
  #allocation0 [shape = 'u32[]', space=smem, size = 0x4, offset = 0x4, fixed_abs, tag = 'smem constant byte address 0x4 - core index']
  #allocation1 [shape = 'u32[144,128]{1,0:T(1,128)}', space=vmem, size = 0x12000, scoped, tag = 'internal scratch']
  %s0 = inlined_call_operand.vmem [shape: bf16[2,32,326], index: 0, kind: input, shape index: {}]
  %s1 = inlined_call_operand.vmem [shape: bf16[9,8,32], index: 1, kind: input, shape index: {}]
  %s2 = inlined_call_operand.vmem [shape: f32[1,288], index: 2, kind: input, shape index: {}]
  %s3 = inlined_call_operand.vmem [shape: f32[8,1], index: 3, kind: input, shape index: {}]
  %s4 = inlined_call_operand.vmem [shape: f32[8,1], index: 4, kind: input, shape index: {}]
  %s5 = inlined_call_operand.vmem [shape: bf16[2,8,288], index: 5, kind: output, shape index: {}]
  %s6 = sld [smem:[#allocation0]]
  $region53: #{generator_model_forward.13} parent=0
    _
  %s8 = ssub.s32 1, %s6
  %s9 = scalar_select 0, %s8, %s6
  loop: start=0, step=1, limit=4
  $region2: #{generator_model_forward.13} parent=0 // loop_pre_header
    _
  $region3: #{generator_model_forward.13} parent=0 // loop_header
    %s11 = sphi 0, %s15
    %p12 = scmp.ge.s32.totalorder %s11, 4
    %s21 = sphi 0, %s23
    %s24 = sphi 0, %s21
    %s25 = sphi 0, %s24
    %s41 = sphi 0, %s25
    %s45 = sphi 0, %s45
    %s47 = sphi 0, %s45
    %s48 = sphi 0, %s47
    %s62 = sphi 0, %s48
    %s66 = sphi 0, %s66
    %s68 = sphi 0, %s66
    %s69 = sphi 0, %s68
    %s83 = sphi 0, %s69
    %s87 = sphi 0, %s87
    %s89 = sphi 0, %s87
    %s90 = sphi 0, %s89
    %s104 = sphi 0, %s90
    %s108 = sphi 0, %s108
    %s110 = sphi 0, %s108
    %s111 = sphi 0, %s110
    %s125 = sphi 0, %s111
    %s131 = sphi 0, %s133
    %s134 = sphi 0, %s131
    %s135 = sphi 0, %s134
    %s151 = sphi 0, %s135
  $region4: #{generator_model_forward.13} parent=0 // loop_header_branch
    %14 = sbr.rel (%p12) target = $region8
  $region5: #{generator_model_forward.13} parent=0 // loop_body
    %s16 = ssub.s32 %s11, 1
    %s17 = ssub.s32 %s11, 2
    %s18 = sadd.s32 %s11, 1
    %s19 = ssub.s32 %s11, %s18
    %p20 = scmp.eq.s32.totalorder %s19, 0
    %s22 = sadd.s32 %s21, 1
    %s23 = scalar_select %p20, %s21, %s22
    %p26 = pneg %p20
    %p27 = scmp.eq.s32.totalorder %s11, 1
    %p28 = por %p26, %p27
    %p29 = scmp.ne.s32.totalorder %s21, %s24
    %p30 = scmp.eq.s32.totalorder %s11, 0
    %p31 = por %p29, %p30
    %p32 = scmp.ne.s32.totalorder %s21, %s24
    %p33 = scmp.eq.s32.totalorder %s16, 1
    %p34 = por %p32, %p33
    %p35 = scmp.ne.s32.totalorder %s24, %s25
    %p36 = scmp.eq.s32.totalorder %s16, 0
    %p37 = por %p35, %p36
    %p38 = scmp.ne.s32.totalorder %s24, %s25
    %p39 = scmp.eq.s32.totalorder %s17, 1
    %p40 = por %p38, %p39
    %p42 = scmp.ne.s32.totalorder %s25, %s41
    %p43 = scmp.eq.s32.totalorder %s17, 0
    %p44 = por %p42, %p43
    %s46 = sadd.s32 %s45, 1
    %p49 = scmp.eq.s32.totalorder %s11, 1
    %p50 = scmp.ne.s32.totalorder %s45, %s47
    %p51 = scmp.eq.s32.totalorder %s11, 0
    %p52 = por %p50, %p51
    %p53 = scmp.ne.s32.totalorder %s45, %s47
    %p54 = scmp.eq.s32.totalorder %s16, 1
    %p55 = por %p53, %p54
    %p56 = scmp.ne.s32.totalorder %s47, %s48
    %p57 = scmp.eq.s32.totalorder %s16, 0
    %p58 = por %p56, %p57
    %p59 = scmp.ne.s32.totalorder %s47, %s48
    %p60 = scmp.eq.s32.totalorder %s17, 1
    %p61 = por %p59, %p60
    %p63 = scmp.ne.s32.totalorder %s48, %s62
    %p64 = scmp.eq.s32.totalorder %s17, 0
    %p65 = por %p63, %p64
    %s67 = sadd.s32 %s66, 1
    %p70 = scmp.eq.s32.totalorder %s11, 1
    %p71 = scmp.ne.s32.totalorder %s66, %s68
    %p72 = scmp.eq.s32.totalorder %s11, 0
    %p73 = por %p71, %p72
    %p74 = scmp.ne.s32.totalorder %s66, %s68
    %p75 = scmp.eq.s32.totalorder %s16, 1
    %p76 = por %p74, %p75
    %p77 = scmp.ne.s32.totalorder %s68, %s69
    %p78 = scmp.eq.s32.totalorder %s16, 0
    %p79 = por %p77, %p78
    %p80 = scmp.ne.s32.totalorder %s68, %s69
    %p81 = scmp.eq.s32.totalorder %s17, 1
    %p82 = por %p80, %p81
    %p84 = scmp.ne.s32.totalorder %s69, %s83
    %p85 = scmp.eq.s32.totalorder %s17, 0
    %p86 = por %p84, %p85
    %s88 = sadd.s32 %s87, 1
    %p91 = scmp.eq.s32.totalorder %s11, 1
    %p92 = scmp.ne.s32.totalorder %s87, %s89
    %p93 = scmp.eq.s32.totalorder %s11, 0
    %p94 = por %p92, %p93
    %p95 = scmp.ne.s32.totalorder %s87, %s89
    %p96 = scmp.eq.s32.totalorder %s16, 1
    %p97 = por %p95, %p96
    %p98 = scmp.ne.s32.totalorder %s89, %s90
    %p99 = scmp.eq.s32.totalorder %s16, 0
    %p100 = por %p98, %p99
    %p101 = scmp.ne.s32.totalorder %s89, %s90
    %p102 = scmp.eq.s32.totalorder %s17, 1
    %p103 = por %p101, %p102
    %p105 = scmp.ne.s32.totalorder %s90, %s104
    %p106 = scmp.eq.s32.totalorder %s17, 0
    %p107 = por %p105, %p106
    %s109 = sadd.s32 %s108, 1
    %p112 = scmp.eq.s32.totalorder %s11, 1
    %p113 = scmp.ne.s32.totalorder %s108, %s110
    %p114 = scmp.eq.s32.totalorder %s11, 0
    %p115 = por %p113, %p114
    %p116 = scmp.ne.s32.totalorder %s108, %s110
    %p117 = scmp.eq.s32.totalorder %s16, 1
    %p118 = por %p116, %p117
    %p119 = scmp.ne.s32.totalorder %s110, %s111
    %p120 = scmp.eq.s32.totalorder %s16, 0
    %p121 = por %p119, %p120
    %p122 = scmp.ne.s32.totalorder %s110, %s111
    %p123 = scmp.eq.s32.totalorder %s17, 1
    %p124 = por %p122, %p123
    %p126 = scmp.ne.s32.totalorder %s111, %s125
    %p127 = scmp.eq.s32.totalorder %s17, 0
    %p128 = por %p126, %p127
    %s129 = ssub.s32 %s11, %s18
    %p130 = scmp.eq.s32.totalorder %s129, 0
    %s132 = sadd.s32 %s131, 1
    %s133 = scalar_select %p130, %s131, %s132
    %p136 = pneg %p130
    %p137 = scmp.eq.s32.totalorder %s11, 1
    %p138 = por %p136, %p137
    %p139 = scmp.ne.s32.totalorder %s131, %s134
    %p140 = scmp.eq.s32.totalorder %s11, 0
    %p141 = por %p139, %p140
    %p142 = scmp.ne.s32.totalorder %s131, %s134
    %p143 = scmp.eq.s32.totalorder %s16, 1
    %p144 = por %p142, %p143
    %p145 = scmp.ne.s32.totalorder %s134, %s135
    %p146 = scmp.eq.s32.totalorder %s16, 0
    %p147 = por %p145, %p146
    %p148 = scmp.ne.s32.totalorder %s134, %s135
    %p149 = scmp.eq.s32.totalorder %s17, 1
    %p150 = por %p148, %p149
    %p152 = scmp.ne.s32.totalorder %s135, %s151
    %p153 = scmp.eq.s32.totalorder %s17, 0
    %p154 = por %p152, %p153
    %p155 = scmp.le.s32.totalorder 1, %s11
    %p156 = scmp.lt.s32.totalorder %s11, 3
    %p157 = pnand %p155, %p156
    %p158 = pneg %p157
    // Predicated region
    $region9: #{generator_model_forward.13} parent=5 // pred_check
      _
    $region10: #{generator_model_forward.13} parent=5 // pred_check_branch
      %160 = sbr.rel (%p157) target = $region12
    $region11: #{generator_model_forward.13} parent=5 // pred_region
      %s161 = ssub.s32 %s11, 1
      // Predicated region
      $region13: #{generator_model_forward.13} parent=11 // pred_check
        %p162 = pneg %p58
      $region14: #{generator_model_forward.13} parent=11 // pred_check_branch
        %164 = sbr.rel (%p162) target = $region16
      $region15: #{generator_model_forward.13} parent=11 // pred_region
        _
      $region16: #{generator_model_forward.13} parent=11 // pred_fallthru
        _
      // Predicated region
      $region17: #{generator_model_forward.13} parent=11 // pred_check
        %p165 = pneg %p79
      $region18: #{generator_model_forward.13} parent=11 // pred_check_branch
        %167 = sbr.rel (%p165) target = $region20
      $region19: #{generator_model_forward.13} parent=11 // pred_region
        _
      $region20: #{generator_model_forward.13} parent=11 // pred_fallthru
        _
      // Predicated region
      $region21: #{generator_model_forward.13} parent=11 // pred_check
        %p168 = pneg %p100
      $region22: #{generator_model_forward.13} parent=11 // pred_check_branch
        %170 = sbr.rel (%p168) target = $region24
      $region23: #{generator_model_forward.13} parent=11 // pred_region
        _
      $region24: #{generator_model_forward.13} parent=11 // pred_fallthru
        _
      // Predicated region
      $region25: #{generator_model_forward.13} parent=11 // pred_check
        %p171 = pneg %p121
      $region26: #{generator_model_forward.13} parent=11 // pred_check_branch
        %173 = sbr.rel (%p171) target = $region28
      $region27: #{generator_model_forward.13} parent=11 // pred_region
        _
      $region28: #{generator_model_forward.13} parent=11 // pred_fallthru
        _
    $region12: #{generator_model_forward.13} parent=5 // pred_fallthru
      _
    %p174 = scmp.lt.s32.totalorder %s11, 2
    // Predicated region
    $region29: #{generator_model_forward.13} parent=5 // pred_check
      %p175 = pneg %p174
    $region30: #{generator_model_forward.13} parent=5 // pred_check_branch
      %177 = sbr.rel (%p175) target = $region32
    $region31: #{generator_model_forward.13} parent=5 // pred_region
      // Predicated region
      $region33: #{generator_model_forward.13} parent=31 // pred_check
        %p178 = pneg %p31
      $region34: #{generator_model_forward.13} parent=31 // pred_check_branch
        %180 = sbr.rel (%p178) target = $region36
      $region35: #{generator_model_forward.13} parent=31 // pred_region
        %p181 = scmp.lt.s32.totalorder %s11, 1
        %s182 = scalar_select %p181, %s11, 1
        %s183 = smul.addr %s182, 12
        %s184 = smul.addr %s183, 4
        %s185 = scalar_lea.vmem %s0, %s184
      $region36: #{generator_model_forward.13} parent=31 // pred_fallthru
        _
    $region32: #{generator_model_forward.13} parent=5 // pred_fallthru
      _
    %p186 = scmp.le.s32.totalorder 1, %s11
    %p187 = scmp.lt.s32.totalorder %s11, 3
    %p188 = pnand %p186, %p187
    %p189 = pneg %p188
    // Predicated region
    $region37: #{generator_model_forward.13} parent=5 // pred_check
      _
    $region38: #{generator_model_forward.13} parent=5 // pred_check_branch
      %191 = sbr.rel (%p188) target = $region40
    $region39: #{generator_model_forward.13} parent=5 // pred_region
      %s192 = ssub.s32 %s11, 1
      %p193 = scmp.lt.s32.totalorder %s16, 1
      %s194 = scalar_select %p193, %s16, 1
      %s195 = smul.addr %s194, 12
      %s196 = smul.addr %s195, 4
      %s197 = scalar_lea.vmem %s0, %s196
      %p198 = pneg %p37
      %p199 = pneg %p34
      %p200 = pneg %p58
      %p201 = pneg %p55
      %p202 = pneg %p79
      %p203 = pneg %p76
      %p204 = pneg %p100
      %p205 = pneg %p97
      %p206 = pneg %p121
      %p207 = pneg %p118
      %p208 = pneg %p147
      %p209 = pneg %p144
      %p210 = scmp.lt.s32.totalorder %s16, 1
      %s211 = scalar_select %p210, %s16, 1
      %s212 = smul.addr %s211, 3
      %s213 = smul.addr %s212, 4
      %s214 = scalar_lea.vmem %s5, %s213
      %p215 = scmp.lt.s32.totalorder %s16, 1
      %s216 = scalar_select %p215, %s16, 1
      %s217 = smul.addr %s216, 12
      %s218 = smul.addr %s217, 4
      %s219 = scalar_lea.vmem %s0, %s218
      %p220 = scmp.lt.s32.totalorder %s16, 1
      %s221 = scalar_select %p220, %s16, 1
      %s222 = smul.addr %s221, 3
      %s223 = smul.addr %s222, 4
      %s224 = scalar_lea.vmem %s5, %s223
      %v226 = vld [vmem:[%s219] sm:$0xff]
      %v227 = vld [vmem:[%s219 + $0x8] sm:$0xf]
      %v228 = vld [vmem:[%s219 + $0xc] sm:$0xff]
      %v229 = vld [vmem:[%s219 + $0x14] sm:$0xf]
      %v230 = vld [vmem:[%s219 + $0x18] sm:$0xff]
      %v231 = vld [vmem:[%s219 + $0x20] sm:$0xf]
      %v232 = vld [vmem:[%s219 + $0x24] sm:$0xff]
      %v233 = vld [vmem:[%s219 + $0x2c] sm:$0xf]
      %v234 = vld [vmem:[%s1] sm:$0xf]
      %s235 = scalar_lea.vmem %s1, 4
      %v236 = vld [vmem:[%s235] sm:$0xf]
      %v245 = vunpack.c.l.b16 %v226
      %v246 = vunpack.c.h.b16 %v226
      %v247 = vunpack.c.l.b16 %v227
      %v248 = vunpack.c.l.b16 %v228
      %v249 = vunpack.c.h.b16 %v228
      %v250 = vunpack.c.l.b16 %v229
      %v251 = vunpack.c.l.b16 %v230
      %v252 = vunpack.c.h.b16 %v230
      %v253 = vunpack.c.l.b16 %v231
      %v254 = vunpack.c.l.b16 %v232
      %v255 = vunpack.c.h.b16 %v232
      %v256 = vunpack.c.l.b16 %v233
      %v257 = vpack.c.b16 %v248, %v245
      %v258 = vpack.c.b16 %v249, %v246
      %v259 = vpack.c.b16 %v250, %v247
      %v260 = vpack.c.b16 %v254, %v251
      %v261 = vpack.c.b16 %v255, %v252
      %v262 = vpack.c.b16 %v256, %v253
      %263 = vrot.lane.b32.xlu0 %v257, 127
      %v264 = vpop.permute.xlu0 %263
      %265 = vrot.lane.b32.xlu0 %v258, 127
      %v266 = vpop.permute.xlu0 %265
      %267 = vrot.lane.b32.xlu0 %v259, 127
      %v268 = vpop.permute.xlu0 %267
      %269 = vrot.lane.b32.xlu0 %v260, 127
      %v270 = vpop.permute.xlu0 %269
      %271 = vrot.lane.b32.xlu0 %v261, 127
      %v272 = vpop.permute.xlu0 %271
      %273 = vrot.lane.b32.xlu0 %v262, 127
      %v274 = vpop.permute.xlu0 %273
      %vm275 = vcmask 1039360
      %v276 = vsel %vm275, %v264, %v266
      %v277 = vsel %vm275, %v266, %v268
      %v278 = vsel %vm275, %v270, %v272
      %v279 = vsel %vm275, %v272, %v274
      %vm286 = vcmask 261120
      %v288 = vsel %vm286, %v236, 0
      %290 = vmatprep.subr.bf16.mxu0 0
      %291 = vmatpush1.bf16.msra.mxu0 0
      %292 = vmatprep.subr.bf16.mxu0 0
      %293 = vmatpush1.bf16.msra.mxu0 0
      %294 = vmatprep.subr.bf16.mxu0 0
      %295 = vmatpush1.bf16.msra.mxu0 0
      %296 = vmatprep.subr.bf16.mxu0 0
      %297 = vmatpush1.bf16.msra.mxu0 0
      %298 = vmatprep.subr.bf16.mxu0 0
      %299 = vmatpush1.bf16.msra.mxu0 0
      %300 = vmatprep.subr.bf16.mxu0 0
      %301 = vmatpush1.bf16.msra.mxu0 0
      %302 = vmatprep.subr.bf16.mxu0 %v279
      %303 = vmatpush1.bf16.msra.mxu0 %v278
      %304 = vmatprep.subr.bf16.mxu0 %v277
      %305 = vmatpush1.bf16.msra.mxu0 %v276
      %306 = vmatprep.subr.bf16.mxu0 0
      %307 = vmatpush2.bf16.msra.mxu0 0
      %308 = vmatprep.subr.bf16.mxu0 0
      %309 = vmatpush2.bf16.msra.mxu0 0
      %310 = vmatprep.subr.bf16.mxu0 0
      %311 = vmatpush2.bf16.msra.mxu0 0
      %312 = vmatprep.subr.bf16.mxu0 0
      %313 = vmatpush2.bf16.msra.mxu0 0
      %314 = vmatprep.subr.bf16.mxu0 0
      %315 = vmatpush2.bf16.msra.mxu0 0
      %316 = vmatprep.subr.bf16.mxu0 0
      %317 = vmatpush2.bf16.msra.mxu0 0
      %318 = vmatprep.subr.bf16.mxu0 0
      %319 = vmatpush2.bf16.msra.mxu0 0
      %320 = vmatprep.subr.bf16.mxu0 0
      %321 = vmatpush2.bf16.msra.mxu0 0
      %322 = vmatprep.mubr.bf16.mxu0 0
      %323 = vmatmul.mubr.bf16.gmra.mxu0 %v288
      %v324 = vpop.f32.mrf.mxu0
      %v325 = vadd.f32 0.0, %v324
      %v326 = vpop.f32.mrf.mxu0
      %v327 = vadd.f32 0.0, %v326
      %v328 = vpop.f32.mrf.mxu0
      %v329 = vpop.f32.mrf.mxu0
      %330 = vdwg.mxu0
      %331 = vmatprep.subr.bf16.mxu0 0
      %332 = vmatpush1.bf16.msra.mxu0 0
      %333 = vmatprep.subr.bf16.mxu0 0
      %334 = vmatpush1.bf16.msra.mxu0 0
      %335 = vmatprep.subr.bf16.mxu0 0
      %336 = vmatpush1.bf16.msra.mxu0 0
      %337 = vmatprep.subr.bf16.mxu0 0
      %338 = vmatpush1.bf16.msra.mxu0 0
      %339 = vmatprep.subr.bf16.mxu0 0
      %340 = vmatpush1.bf16.msra.mxu0 0
      %341 = vmatprep.subr.bf16.mxu0 0
      %342 = vmatpush1.bf16.msra.mxu0 0
      %343 = vmatprep.subr.bf16.mxu0 0
      %344 = vmatpush1.bf16.msra.mxu0 %v274
      %345 = vmatprep.subr.bf16.mxu0 0
      %346 = vmatpush1.bf16.msra.mxu0 %v268
      %347 = vmatprep.subr.bf16.mxu0 0
      %348 = vmatpush2.bf16.msra.mxu0 0
      %349 = vmatprep.subr.bf16.mxu0 0
      %350 = vmatpush2.bf16.msra.mxu0 0
      %351 = vmatprep.subr.bf16.mxu0 0
      %352 = vmatpush2.bf16.msra.mxu0 0
      %353 = vmatprep.subr.bf16.mxu0 0
      %354 = vmatpush2.bf16.msra.mxu0 0
      %355 = vmatprep.subr.bf16.mxu0 0
      %356 = vmatpush2.bf16.msra.mxu0 0
      %357 = vmatprep.subr.bf16.mxu0 0
      %358 = vmatpush2.bf16.msra.mxu0 0
      %359 = vmatprep.subr.bf16.mxu0 0
      %360 = vmatpush2.bf16.msra.mxu0 0
      %361 = vmatprep.subr.bf16.mxu0 0
      %362 = vmatpush2.bf16.msra.mxu0 0
      %363 = vmatprep.mubr.bf16.mxu0 0
      %364 = vmatmul.mubr.bf16.gmra.mxu0 %v288
      %v365 = vpop.f32.mrf.mxu0
      %v366 = vadd.f32 0.0, %v365
      %v367 = vpop.f32.mrf.mxu0
      %v368 = vpop.f32.mrf.mxu0
      %v369 = vpop.f32.mrf.mxu0
      %370 = vdwg.mxu0
      %v378 = vsel %vm286, %v234, 0
      %380 = vmatprep.subr.bf16.mxu0 0
      %381 = vmatpush1.bf16.msra.mxu0 0
      %382 = vmatprep.subr.bf16.mxu0 0
      %383 = vmatpush1.bf16.msra.mxu0 0
      %384 = vmatprep.subr.bf16.mxu0 0
      %385 = vmatpush1.bf16.msra.mxu0 0
      %386 = vmatprep.subr.bf16.mxu0 0
      %387 = vmatpush1.bf16.msra.mxu0 0
      %388 = vmatprep.subr.bf16.mxu0 0
      %389 = vmatpush1.bf16.msra.mxu0 0
      %390 = vmatprep.subr.bf16.mxu0 0
      %391 = vmatpush1.bf16.msra.mxu0 0
      %392 = vmatprep.subr.bf16.mxu0 %v261
      %393 = vmatpush1.bf16.msra.mxu0 %v260
      %394 = vmatprep.subr.bf16.mxu0 %v258
      %395 = vmatpush1.bf16.msra.mxu0 %v257
      %396 = vmatprep.subr.bf16.mxu0 0
      %397 = vmatpush2.bf16.msra.mxu0 0
      %398 = vmatprep.subr.bf16.mxu0 0
      %399 = vmatpush2.bf16.msra.mxu0 0
      %400 = vmatprep.subr.bf16.mxu0 0
      %401 = vmatpush2.bf16.msra.mxu0 0
      %402 = vmatprep.subr.bf16.mxu0 0
      %403 = vmatpush2.bf16.msra.mxu0 0
      %404 = vmatprep.subr.bf16.mxu0 0
      %405 = vmatpush2.bf16.msra.mxu0 0
      %406 = vmatprep.subr.bf16.mxu0 0
      %407 = vmatpush2.bf16.msra.mxu0 0
      %408 = vmatprep.subr.bf16.mxu0 0
      %409 = vmatpush2.bf16.msra.mxu0 0
      %410 = vmatprep.subr.bf16.mxu0 0
      %411 = vmatpush2.bf16.msra.mxu0 0
      %412 = vmatprep.mubr.bf16.mxu0 0
      %413 = vmatmul.mubr.bf16.gmra.mxu0 %v378
      %v414 = vpop.f32.mrf.mxu0
      %v415 = vadd.f32 %v325, %v414
      %v416 = vpop.f32.mrf.mxu0
      %v417 = vadd.f32 %v327, %v416
      %v418 = vpop.f32.mrf.mxu0
      %v419 = vpop.f32.mrf.mxu0
      %420 = vdwg.mxu0
      %421 = vmatprep.subr.bf16.mxu0 0
      %422 = vmatpush1.bf16.msra.mxu0 0
      %423 = vmatprep.subr.bf16.mxu0 0
      %424 = vmatpush1.bf16.msra.mxu0 0
      %425 = vmatprep.subr.bf16.mxu0 0
      %426 = vmatpush1.bf16.msra.mxu0 0
      %427 = vmatprep.subr.bf16.mxu0 0
      %428 = vmatpush1.bf16.msra.mxu0 0
      %429 = vmatprep.subr.bf16.mxu0 0
      %430 = vmatpush1.bf16.msra.mxu0 0
      %431 = vmatprep.subr.bf16.mxu0 0
      %432 = vmatpush1.bf16.msra.mxu0 0
      %433 = vmatprep.subr.bf16.mxu0 0
      %434 = vmatpush1.bf16.msra.mxu0 %v262
      %435 = vmatprep.subr.bf16.mxu0 0
      %436 = vmatpush1.bf16.msra.mxu0 %v259
      %437 = vmatprep.subr.bf16.mxu0 0
      %438 = vmatpush2.bf16.msra.mxu0 0
      %439 = vmatprep.subr.bf16.mxu0 0
      %440 = vmatpush2.bf16.msra.mxu0 0
      %441 = vmatprep.subr.bf16.mxu0 0
      %442 = vmatpush2.bf16.msra.mxu0 0
      %443 = vmatprep.subr.bf16.mxu0 0
      %444 = vmatpush2.bf16.msra.mxu0 0
      %445 = vmatprep.subr.bf16.mxu0 0
      %446 = vmatpush2.bf16.msra.mxu0 0
      %447 = vmatprep.subr.bf16.mxu0 0
      %448 = vmatpush2.bf16.msra.mxu0 0
      %449 = vmatprep.subr.bf16.mxu0 0
      %450 = vmatpush2.bf16.msra.mxu0 0
      %451 = vmatprep.subr.bf16.mxu0 0
      %452 = vmatpush2.bf16.msra.mxu0 0
      %453 = vmatprep.mubr.bf16.mxu0 0
      %454 = vmatmul.mubr.bf16.gmra.mxu0 %v378
      %v455 = vpop.f32.mrf.mxu0
      %v456 = vadd.f32 %v366, %v455
      %v457 = vpop.f32.mrf.mxu0
      %v458 = vpop.f32.mrf.mxu0
      %v459 = vpop.f32.mrf.mxu0
      %460 = vdwg.mxu0
      %s461 = scalar_lea.vmem %s1, 8
      %v462 = vld [vmem:[%s461] sm:$0xf]
      %463 = vrot.lane.b32.xlu0 %v257, 126
      %v464 = vpop.permute.xlu0 %463
      %465 = vrot.lane.b32.xlu0 %v258, 126
      %v466 = vpop.permute.xlu0 %465
      %467 = vrot.lane.b32.xlu0 %v259, 126
      %v468 = vpop.permute.xlu0 %467
      %469 = vrot.lane.b32.xlu0 %v260, 126
      %v470 = vpop.permute.xlu0 %469
      %471 = vrot.lane.b32.xlu0 %v261, 126
      %v472 = vpop.permute.xlu0 %471
      %473 = vrot.lane.b32.xlu0 %v262, 126
      %v474 = vpop.permute.xlu0 %473
      %vm475 = vcmask 1031168
      %v476 = vsel %vm475, %v464, %v466
      %v477 = vsel %vm475, %v466, %v468
      %v478 = vsel %vm475, %v470, %v472
      %v479 = vsel %vm475, %v472, %v474
      %v487 = vsel %vm286, %v462, 0
      %489 = vmatprep.subr.bf16.mxu0 0
      %490 = vmatpush1.bf16.msra.mxu0 0
      %491 = vmatprep.subr.bf16.mxu0 0
      %492 = vmatpush1.bf16.msra.mxu0 0
      %493 = vmatprep.subr.bf16.mxu0 0
      %494 = vmatpush1.bf16.msra.mxu0 0
      %495 = vmatprep.subr.bf16.mxu0 0
      %496 = vmatpush1.bf16.msra.mxu0 0
      %497 = vmatprep.subr.bf16.mxu0 0
      %498 = vmatpush1.bf16.msra.mxu0 0
      %499 = vmatprep.subr.bf16.mxu0 0
      %500 = vmatpush1.bf16.msra.mxu0 0
      %501 = vmatprep.subr.bf16.mxu0 %v479
      %502 = vmatpush1.bf16.msra.mxu0 %v478
      %503 = vmatprep.subr.bf16.mxu0 %v477
      %504 = vmatpush1.bf16.msra.mxu0 %v476
      %505 = vmatprep.subr.bf16.mxu0 0
      %506 = vmatpush2.bf16.msra.mxu0 0
      %507 = vmatprep.subr.bf16.mxu0 0
      %508 = vmatpush2.bf16.msra.mxu0 0
      %509 = vmatprep.subr.bf16.mxu0 0
      %510 = vmatpush2.bf16.msra.mxu0 0
      %511 = vmatprep.subr.bf16.mxu0 0
      %512 = vmatpush2.bf16.msra.mxu0 0
      %513 = vmatprep.subr.bf16.mxu0 0
      %514 = vmatpush2.bf16.msra.mxu0 0
      %515 = vmatprep.subr.bf16.mxu0 0
      %516 = vmatpush2.bf16.msra.mxu0 0
      %517 = vmatprep.subr.bf16.mxu0 0
      %518 = vmatpush2.bf16.msra.mxu0 0
      %519 = vmatprep.subr.bf16.mxu0 0
      %520 = vmatpush2.bf16.msra.mxu0 0
      %521 = vmatprep.mubr.bf16.mxu0 0
      %522 = vmatmul.mubr.bf16.gmra.mxu0 %v487
      %v523 = vpop.f32.mrf.mxu0
      %v524 = vadd.f32 0.0, %v523
      %v525 = vpop.f32.mrf.mxu0
      %v526 = vadd.f32 0.0, %v525
      %v527 = vpop.f32.mrf.mxu0
      %v528 = vpop.f32.mrf.mxu0
      %529 = vdwg.mxu0
      %530 = vmatprep.subr.bf16.mxu0 0
      %531 = vmatpush1.bf16.msra.mxu0 0
      %532 = vmatprep.subr.bf16.mxu0 0
      %533 = vmatpush1.bf16.msra.mxu0 0
      %534 = vmatprep.subr.bf16.mxu0 0
      %535 = vmatpush1.bf16.msra.mxu0 0
      %536 = vmatprep.subr.bf16.mxu0 0
      %537 = vmatpush1.bf16.msra.mxu0 0
      %538 = vmatprep.subr.bf16.mxu0 0
      %539 = vmatpush1.bf16.msra.mxu0 0
      %540 = vmatprep.subr.bf16.mxu0 0
      %541 = vmatpush1.bf16.msra.mxu0 0
      %542 = vmatprep.subr.bf16.mxu0 0
      %543 = vmatpush1.bf16.msra.mxu0 %v474
      %544 = vmatprep.subr.bf16.mxu0 0
      %545 = vmatpush1.bf16.msra.mxu0 %v468
      %546 = vmatprep.subr.bf16.mxu0 0
      %547 = vmatpush2.bf16.msra.mxu0 0
      %548 = vmatprep.subr.bf16.mxu0 0
      %549 = vmatpush2.bf16.msra.mxu0 0
      %550 = vmatprep.subr.bf16.mxu0 0
      %551 = vmatpush2.bf16.msra.mxu0 0
      %552 = vmatprep.subr.bf16.mxu0 0
      %553 = vmatpush2.bf16.msra.mxu0 0
      %554 = vmatprep.subr.bf16.mxu0 0
      %555 = vmatpush2.bf16.msra.mxu0 0
      %556 = vmatprep.subr.bf16.mxu0 0
      %557 = vmatpush2.bf16.msra.mxu0 0
      %558 = vmatprep.subr.bf16.mxu0 0
      %559 = vmatpush2.bf16.msra.mxu0 0
      %560 = vmatprep.subr.bf16.mxu0 0
      %561 = vmatpush2.bf16.msra.mxu0 0
      %562 = vmatprep.mubr.bf16.mxu0 0
      %563 = vmatmul.mubr.bf16.gmra.mxu0 %v487
      %v564 = vpop.f32.mrf.mxu0
      %v565 = vadd.f32 0.0, %v564
      %v566 = vpop.f32.mrf.mxu0
      %v567 = vpop.f32.mrf.mxu0
      %v568 = vpop.f32.mrf.mxu0
      %569 = vdwg.mxu0
      %v570 = vadd.f32 %v415, %v524
      %v571 = vadd.f32 %v417, %v526
      %v572 = vadd.f32 %v456, %v565
      %s573 = scalar_lea.vmem %s1, 12
      %v574 = vld [vmem:[%s573] sm:$0xf]
      %575 = vrot.lane.b32.xlu0 %v257, 110
      %v576 = vpop.permute.xlu0 %575
      %577 = vrot.lane.b32.xlu0 %v258, 110
      %v578 = vpop.permute.xlu0 %577
      %579 = vrot.lane.b32.xlu0 %v259, 110
      %v580 = vpop.permute.xlu0 %579
      %581 = vrot.lane.b32.xlu0 %v260, 110
      %v582 = vpop.permute.xlu0 %581
      %583 = vrot.lane.b32.xlu0 %v261, 110
      %v584 = vpop.permute.xlu0 %583
      %585 = vrot.lane.b32.xlu0 %v262, 110
      %v586 = vpop.permute.xlu0 %585
      %vm587 = vcmask 900096
      %v588 = vsel %vm587, %v576, %v578
      %v589 = vsel %vm587, %v578, %v580
      %v590 = vsel %vm587, %v582, %v584
      %v591 = vsel %vm587, %v584, %v586
      %v599 = vsel %vm286, %v574, 0
      %601 = vmatprep.subr.bf16.mxu0 0
      %602 = vmatpush1.bf16.msra.mxu0 0
      %603 = vmatprep.subr.bf16.mxu0 0
      %604 = vmatpush1.bf16.msra.mxu0 0
      %605 = vmatprep.subr.bf16.mxu0 0
      %606 = vmatpush1.bf16.msra.mxu0 0
      %607 = vmatprep.subr.bf16.mxu0 0
      %608 = vmatpush1.bf16.msra.mxu0 0
      %609 = vmatprep.subr.bf16.mxu0 0
      %610 = vmatpush1.bf16.msra.mxu0 0
      %611 = vmatprep.subr.bf16.mxu0 0
      %612 = vmatpush1.bf16.msra.mxu0 0
      %613 = vmatprep.subr.bf16.mxu0 %v591
      %614 = vmatpush1.bf16.msra.mxu0 %v590
      %615 = vmatprep.subr.bf16.mxu0 %v589
      %616 = vmatpush1.bf16.msra.mxu0 %v588
      %617 = vmatprep.subr.bf16.mxu0 0
      %618 = vmatpush2.bf16.msra.mxu0 0
      %619 = vmatprep.subr.bf16.mxu0 0
      %620 = vmatpush2.bf16.msra.mxu0 0
      %621 = vmatprep.subr.bf16.mxu0 0
      %622 = vmatpush2.bf16.msra.mxu0 0
      %623 = vmatprep.subr.bf16.mxu0 0
      %624 = vmatpush2.bf16.msra.mxu0 0
      %625 = vmatprep.subr.bf16.mxu0 0
      %626 = vmatpush2.bf16.msra.mxu0 0
      %627 = vmatprep.subr.bf16.mxu0 0
      %628 = vmatpush2.bf16.msra.mxu0 0
      %629 = vmatprep.subr.bf16.mxu0 0
      %630 = vmatpush2.bf16.msra.mxu0 0
      %631 = vmatprep.subr.bf16.mxu0 0
      %632 = vmatpush2.bf16.msra.mxu0 0
      %633 = vmatprep.mubr.bf16.mxu0 0
      %634 = vmatmul.mubr.bf16.gmra.mxu0 %v599
      %v635 = vpop.f32.mrf.mxu0
      %v636 = vadd.f32 0.0, %v635
      %v637 = vpop.f32.mrf.mxu0
      %v638 = vadd.f32 0.0, %v637
      %v639 = vpop.f32.mrf.mxu0
      %v640 = vpop.f32.mrf.mxu0
      %641 = vdwg.mxu0
      %642 = vmatprep.subr.bf16.mxu0 0
      %643 = vmatpush1.bf16.msra.mxu0 0
      %644 = vmatprep.subr.bf16.mxu0 0
      %645 = vmatpush1.bf16.msra.mxu0 0
      %646 = vmatprep.subr.bf16.mxu0 0
      %647 = vmatpush1.bf16.msra.mxu0 0
      %648 = vmatprep.subr.bf16.mxu0 0
      %649 = vmatpush1.bf16.msra.mxu0 0
      %650 = vmatprep.subr.bf16.mxu0 0
      %651 = vmatpush1.bf16.msra.mxu0 0
      %652 = vmatprep.subr.bf16.mxu0 0
      %653 = vmatpush1.bf16.msra.mxu0 0
      %654 = vmatprep.subr.bf16.mxu0 0
      %655 = vmatpush1.bf16.msra.mxu0 %v586
      %656 = vmatprep.subr.bf16.mxu0 0
      %657 = vmatpush1.bf16.msra.mxu0 %v580
      %658 = vmatprep.subr.bf16.mxu0 0
      %659 = vmatpush2.bf16.msra.mxu0 0
      %660 = vmatprep.subr.bf16.mxu0 0
      %661 = vmatpush2.bf16.msra.mxu0 0
      %662 = vmatprep.subr.bf16.mxu0 0
      %663 = vmatpush2.bf16.msra.mxu0 0
      %664 = vmatprep.subr.bf16.mxu0 0
      %665 = vmatpush2.bf16.msra.mxu0 0
      %666 = vmatprep.subr.bf16.mxu0 0
      %667 = vmatpush2.bf16.msra.mxu0 0
      %668 = vmatprep.subr.bf16.mxu0 0
      %669 = vmatpush2.bf16.msra.mxu0 0
      %670 = vmatprep.subr.bf16.mxu0 0
      %671 = vmatpush2.bf16.msra.mxu0 0
      %672 = vmatprep.subr.bf16.mxu0 0
      %673 = vmatpush2.bf16.msra.mxu0 0
      %674 = vmatprep.mubr.bf16.mxu0 0
      %675 = vmatmul.mubr.bf16.gmra.mxu0 %v599
      %v676 = vpop.f32.mrf.mxu0
      %v677 = vadd.f32 0.0, %v676
      %v678 = vpop.f32.mrf.mxu0
      %v679 = vpop.f32.mrf.mxu0
      %v680 = vpop.f32.mrf.mxu0
      %681 = vdwg.mxu0
      %v682 = vadd.f32 %v570, %v636
      %v683 = vadd.f32 %v571, %v638
      %v684 = vadd.f32 %v572, %v677
      %s685 = scalar_lea.vmem %s1, 16
      %v686 = vld [vmem:[%s685] sm:$0xf]
      %687 = vrot.lane.b32.xlu0 %v257, 109
      %v688 = vpop.permute.xlu0 %687
      %689 = vrot.lane.b32.xlu0 %v258, 109
      %v690 = vpop.permute.xlu0 %689
      %691 = vrot.lane.b32.xlu0 %v259, 109
      %v692 = vpop.permute.xlu0 %691
      %693 = vrot.lane.b32.xlu0 %v260, 109
      %v694 = vpop.permute.xlu0 %693
      %695 = vrot.lane.b32.xlu0 %v261, 109
      %v696 = vpop.permute.xlu0 %695
      %697 = vrot.lane.b32.xlu0 %v262, 109
      %v698 = vpop.permute.xlu0 %697
      %vm699 = vcmask 891904
      %v700 = vsel %vm699, %v688, %v690
      %v701 = vsel %vm699, %v690, %v692
      %v702 = vsel %vm699, %v694, %v696
      %v703 = vsel %vm699, %v696, %v698
      %v711 = vsel %vm286, %v686, 0
      %713 = vmatprep.subr.bf16.mxu0 0
      %714 = vmatpush1.bf16.msra.mxu0 0
      %715 = vmatprep.subr.bf16.mxu0 0
      %716 = vmatpush1.bf16.msra.mxu0 0
      %717 = vmatprep.subr.bf16.mxu0 0
      %718 = vmatpush1.bf16.msra.mxu0 0
      %719 = vmatprep.subr.bf16.mxu0 0
      %720 = vmatpush1.bf16.msra.mxu0 0
      %721 = vmatprep.subr.bf16.mxu0 0
      %722 = vmatpush1.bf16.msra.mxu0 0
      %723 = vmatprep.subr.bf16.mxu0 0
      %724 = vmatpush1.bf16.msra.mxu0 0
      %725 = vmatprep.subr.bf16.mxu0 %v703
      %726 = vmatpush1.bf16.msra.mxu0 %v702
      %727 = vmatprep.subr.bf16.mxu0 %v701
      %728 = vmatpush1.bf16.msra.mxu0 %v700
      %729 = vmatprep.subr.bf16.mxu0 0
      %730 = vmatpush2.bf16.msra.mxu0 0
      %731 = vmatprep.subr.bf16.mxu0 0
      %732 = vmatpush2.bf16.msra.mxu0 0
      %733 = vmatprep.subr.bf16.mxu0 0
      %734 = vmatpush2.bf16.msra.mxu0 0
      %735 = vmatprep.subr.bf16.mxu0 0
      %736 = vmatpush2.bf16.msra.mxu0 0
      %737 = vmatprep.subr.bf16.mxu0 0
      %738 = vmatpush2.bf16.msra.mxu0 0
      %739 = vmatprep.subr.bf16.mxu0 0
      %740 = vmatpush2.bf16.msra.mxu0 0
      %741 = vmatprep.subr.bf16.mxu0 0
      %742 = vmatpush2.bf16.msra.mxu0 0
      %743 = vmatprep.subr.bf16.mxu0 0
      %744 = vmatpush2.bf16.msra.mxu0 0
      %745 = vmatprep.mubr.bf16.mxu0 0
      %746 = vmatmul.mubr.bf16.gmra.mxu0 %v711
      %v747 = vpop.f32.mrf.mxu0
      %v748 = vadd.f32 0.0, %v747
      %v749 = vpop.f32.mrf.mxu0
      %v750 = vadd.f32 0.0, %v749
      %v751 = vpop.f32.mrf.mxu0
      %v752 = vpop.f32.mrf.mxu0
      %753 = vdwg.mxu0
      %754 = vmatprep.subr.bf16.mxu0 0
      %755 = vmatpush1.bf16.msra.mxu0 0
      %756 = vmatprep.subr.bf16.mxu0 0
      %757 = vmatpush1.bf16.msra.mxu0 0
      %758 = vmatprep.subr.bf16.mxu0 0
      %759 = vmatpush1.bf16.msra.mxu0 0
      %760 = vmatprep.subr.bf16.mxu0 0
      %761 = vmatpush1.bf16.msra.mxu0 0
      %762 = vmatprep.subr.bf16.mxu0 0
      %763 = vmatpush1.bf16.msra.mxu0 0
      %764 = vmatprep.subr.bf16.mxu0 0
      %765 = vmatpush1.bf16.msra.mxu0 0
      %766 = vmatprep.subr.bf16.mxu0 0
      %767 = vmatpush1.bf16.msra.mxu0 %v698
      %768 = vmatprep.subr.bf16.mxu0 0
      %769 = vmatpush1.bf16.msra.mxu0 %v692
      %770 = vmatprep.subr.bf16.mxu0 0
      %771 = vmatpush2.bf16.msra.mxu0 0
      %772 = vmatprep.subr.bf16.mxu0 0
      %773 = vmatpush2.bf16.msra.mxu0 0
      %774 = vmatprep.subr.bf16.mxu0 0
      %775 = vmatpush2.bf16.msra.mxu0 0
      %776 = vmatprep.subr.bf16.mxu0 0
      %777 = vmatpush2.bf16.msra.mxu0 0
      %778 = vmatprep.subr.bf16.mxu0 0
      %779 = vmatpush2.bf16.msra.mxu0 0
      %780 = vmatprep.subr.bf16.mxu0 0
      %781 = vmatpush2.bf16.msra.mxu0 0
      %782 = vmatprep.subr.bf16.mxu0 0
      %783 = vmatpush2.bf16.msra.mxu0 0
      %784 = vmatprep.subr.bf16.mxu0 0
      %785 = vmatpush2.bf16.msra.mxu0 0
      %786 = vmatprep.mubr.bf16.mxu0 0
      %787 = vmatmul.mubr.bf16.gmra.mxu0 %v711
      %v788 = vpop.f32.mrf.mxu0
      %v789 = vadd.f32 0.0, %v788
      %v790 = vpop.f32.mrf.mxu0
      %v791 = vpop.f32.mrf.mxu0
      %v792 = vpop.f32.mrf.mxu0
      %793 = vdwg.mxu0
      %v794 = vadd.f32 %v682, %v748
      %v795 = vadd.f32 %v683, %v750
      %v796 = vadd.f32 %v684, %v789
      %s797 = scalar_lea.vmem %s1, 20
      %v798 = vld [vmem:[%s797] sm:$0xf]
      %799 = vrot.lane.b32.xlu0 %v257, 108
      %v800 = vpop.permute.xlu0 %799
      %801 = vrot.lane.b32.xlu0 %v258, 108
      %v802 = vpop.permute.xlu0 %801
      %803 = vrot.lane.b32.xlu0 %v259, 108
      %v804 = vpop.permute.xlu0 %803
      %805 = vrot.lane.b32.xlu0 %v260, 108
      %v806 = vpop.permute.xlu0 %805
      %807 = vrot.lane.b32.xlu0 %v261, 108
      %v808 = vpop.permute.xlu0 %807
      %809 = vrot.lane.b32.xlu0 %v262, 108
      %v810 = vpop.permute.xlu0 %809
      %vm811 = vcmask 883712
      %v812 = vsel %vm811, %v800, %v802
      %v813 = vsel %vm811, %v802, %v804
      %v814 = vsel %vm811, %v806, %v808
      %v815 = vsel %vm811, %v808, %v810
      %v823 = vsel %vm286, %v798, 0
      %825 = vmatprep.subr.bf16.mxu0 0
      %826 = vmatpush1.bf16.msra.mxu0 0
      %827 = vmatprep.subr.bf16.mxu0 0
      %828 = vmatpush1.bf16.msra.mxu0 0
      %829 = vmatprep.subr.bf16.mxu0 0
      %830 = vmatpush1.bf16.msra.mxu0 0
      %831 = vmatprep.subr.bf16.mxu0 0
      %832 = vmatpush1.bf16.msra.mxu0 0
      %833 = vmatprep.subr.bf16.mxu0 0
      %834 = vmatpush1.bf16.msra.mxu0 0
      %835 = vmatprep.subr.bf16.mxu0 0
      %836 = vmatpush1.bf16.msra.mxu0 0
      %837 = vmatprep.subr.bf16.mxu0 %v815
      %838 = vmatpush1.bf16.msra.mxu0 %v814
      %839 = vmatprep.subr.bf16.mxu0 %v813
      %840 = vmatpush1.bf16.msra.mxu0 %v812
      %841 = vmatprep.subr.bf16.mxu0 0
      %842 = vmatpush2.bf16.msra.mxu0 0
      %843 = vmatprep.subr.bf16.mxu0 0
      %844 = vmatpush2.bf16.msra.mxu0 0
      %845 = vmatprep.subr.bf16.mxu0 0
      %846 = vmatpush2.bf16.msra.mxu0 0
      %847 = vmatprep.subr.bf16.mxu0 0
      %848 = vmatpush2.bf16.msra.mxu0 0
      %849 = vmatprep.subr.bf16.mxu0 0
      %850 = vmatpush2.bf16.msra.mxu0 0
      %851 = vmatprep.subr.bf16.mxu0 0
      %852 = vmatpush2.bf16.msra.mxu0 0
      %853 = vmatprep.subr.bf16.mxu0 0
      %854 = vmatpush2.bf16.msra.mxu0 0
      %855 = vmatprep.subr.bf16.mxu0 0
      %856 = vmatpush2.bf16.msra.mxu0 0
      %857 = vmatprep.mubr.bf16.mxu0 0
      %858 = vmatmul.mubr.bf16.gmra.mxu0 %v823
      %v859 = vpop.f32.mrf.mxu0
      %v860 = vadd.f32 0.0, %v859
      %v861 = vpop.f32.mrf.mxu0
      %v862 = vadd.f32 0.0, %v861
      %v863 = vpop.f32.mrf.mxu0
      %v864 = vpop.f32.mrf.mxu0
      %865 = vdwg.mxu0
      %866 = vmatprep.subr.bf16.mxu0 0
      %867 = vmatpush1.bf16.msra.mxu0 0
      %868 = vmatprep.subr.bf16.mxu0 0
      %869 = vmatpush1.bf16.msra.mxu0 0
      %870 = vmatprep.subr.bf16.mxu0 0
      %871 = vmatpush1.bf16.msra.mxu0 0
      %872 = vmatprep.subr.bf16.mxu0 0
      %873 = vmatpush1.bf16.msra.mxu0 0
      %874 = vmatprep.subr.bf16.mxu0 0
      %875 = vmatpush1.bf16.msra.mxu0 0
      %876 = vmatprep.subr.bf16.mxu0 0
      %877 = vmatpush1.bf16.msra.mxu0 0
      %878 = vmatprep.subr.bf16.mxu0 0
      %879 = vmatpush1.bf16.msra.mxu0 %v810
      %880 = vmatprep.subr.bf16.mxu0 0
      %881 = vmatpush1.bf16.msra.mxu0 %v804
      %882 = vmatprep.subr.bf16.mxu0 0
      %883 = vmatpush2.bf16.msra.mxu0 0
      %884 = vmatprep.subr.bf16.mxu0 0
      %885 = vmatpush2.bf16.msra.mxu0 0
      %886 = vmatprep.subr.bf16.mxu0 0
      %887 = vmatpush2.bf16.msra.mxu0 0
      %888 = vmatprep.subr.bf16.mxu0 0
      %889 = vmatpush2.bf16.msra.mxu0 0
      %890 = vmatprep.subr.bf16.mxu0 0
      %891 = vmatpush2.bf16.msra.mxu0 0
      %892 = vmatprep.subr.bf16.mxu0 0
      %893 = vmatpush2.bf16.msra.mxu0 0
      %894 = vmatprep.subr.bf16.mxu0 0
      %895 = vmatpush2.bf16.msra.mxu0 0
      %896 = vmatprep.subr.bf16.mxu0 0
      %897 = vmatpush2.bf16.msra.mxu0 0
      %898 = vmatprep.mubr.bf16.mxu0 0
      %899 = vmatmul.mubr.bf16.gmra.mxu0 %v823
      %v900 = vpop.f32.mrf.mxu0
      %v901 = vadd.f32 0.0, %v900
      %v902 = vpop.f32.mrf.mxu0
      %v903 = vpop.f32.mrf.mxu0
      %v904 = vpop.f32.mrf.mxu0
      %905 = vdwg.mxu0
      %v906 = vadd.f32 %v794, %v860
      %v907 = vadd.f32 %v795, %v862
      %v908 = vadd.f32 %v796, %v901
      %s909 = scalar_lea.vmem %s1, 24
      %v910 = vld [vmem:[%s909] sm:$0xf]
      %911 = vrot.lane.b32.xlu0 %v257, 92
      %v912 = vpop.permute.xlu0 %911
      %913 = vrot.lane.b32.xlu0 %v258, 92
      %v914 = vpop.permute.xlu0 %913
      %915 = vrot.lane.b32.xlu0 %v259, 92
      %v916 = vpop.permute.xlu0 %915
      %917 = vrot.lane.b32.xlu0 %v260, 92
      %v918 = vpop.permute.xlu0 %917
      %919 = vrot.lane.b32.xlu0 %v261, 92
      %v920 = vpop.permute.xlu0 %919
      %921 = vrot.lane.b32.xlu0 %v262, 92
      %v922 = vpop.permute.xlu0 %921
      %vm923 = vcmask 752640
      %v924 = vsel %vm923, %v912, %v914
      %v925 = vsel %vm923, %v914, %v916
      %v926 = vsel %vm923, %v918, %v920
      %v927 = vsel %vm923, %v920, %v922
      %v935 = vsel %vm286, %v910, 0
      %937 = vmatprep.subr.bf16.mxu0 0
      %938 = vmatpush1.bf16.msra.mxu0 0
      %939 = vmatprep.subr.bf16.mxu0 0
      %940 = vmatpush1.bf16.msra.mxu0 0
      %941 = vmatprep.subr.bf16.mxu0 0
      %942 = vmatpush1.bf16.msra.mxu0 0
      %943 = vmatprep.subr.bf16.mxu0 0
      %944 = vmatpush1.bf16.msra.mxu0 0
      %945 = vmatprep.subr.bf16.mxu0 0
      %946 = vmatpush1.bf16.msra.mxu0 0
      %947 = vmatprep.subr.bf16.mxu0 0
      %948 = vmatpush1.bf16.msra.mxu0 0
      %949 = vmatprep.subr.bf16.mxu0 %v927
      %950 = vmatpush1.bf16.msra.mxu0 %v926
      %951 = vmatprep.subr.bf16.mxu0 %v925
      %952 = vmatpush1.bf16.msra.mxu0 %v924
      %953 = vmatprep.subr.bf16.mxu0 0
      %954 = vmatpush2.bf16.msra.mxu0 0
      %955 = vmatprep.subr.bf16.mxu0 0
      %956 = vmatpush2.bf16.msra.mxu0 0
      %957 = vmatprep.subr.bf16.mxu0 0
      %958 = vmatpush2.bf16.msra.mxu0 0
      %959 = vmatprep.subr.bf16.mxu0 0
      %960 = vmatpush2.bf16.msra.mxu0 0
      %961 = vmatprep.subr.bf16.mxu0 0
      %962 = vmatpush2.bf16.msra.mxu0 0
      %963 = vmatprep.subr.bf16.mxu0 0
      %964 = vmatpush2.bf16.msra.mxu0 0
      %965 = vmatprep.subr.bf16.mxu0 0
      %966 = vmatpush2.bf16.msra.mxu0 0
      %967 = vmatprep.subr.bf16.mxu0 0
      %968 = vmatpush2.bf16.msra.mxu0 0
      %969 = vmatprep.mubr.bf16.mxu0 0
      %970 = vmatmul.mubr.bf16.gmra.mxu0 %v935
      %v971 = vpop.f32.mrf.mxu0
      %v972 = vadd.f32 0.0, %v971
      %v973 = vpop.f32.mrf.mxu0
      %v974 = vadd.f32 0.0, %v973
      %v975 = vpop.f32.mrf.mxu0
      %v976 = vpop.f32.mrf.mxu0
      %977 = vdwg.mxu0
      %978 = vmatprep.subr.bf16.mxu0 0
      %979 = vmatpush1.bf16.msra.mxu0 0
      %980 = vmatprep.subr.bf16.mxu0 0
      %981 = vmatpush1.bf16.msra.mxu0 0
      %982 = vmatprep.subr.bf16.mxu0 0
      %983 = vmatpush1.bf16.msra.mxu0 0
      %984 = vmatprep.subr.bf16.mxu0 0
      %985 = vmatpush1.bf16.msra.mxu0 0
      %986 = vmatprep.subr.bf16.mxu0 0
      %987 = vmatpush1.bf16.msra.mxu0 0
      %988 = vmatprep.subr.bf16.mxu0 0
      %989 = vmatpush1.bf16.msra.mxu0 0
      %990 = vmatprep.subr.bf16.mxu0 0
      %991 = vmatpush1.bf16.msra.mxu0 %v922
      %992 = vmatprep.subr.bf16.mxu0 0
      %993 = vmatpush1.bf16.msra.mxu0 %v916
      %994 = vmatprep.subr.bf16.mxu0 0
      %995 = vmatpush2.bf16.msra.mxu0 0
      %996 = vmatprep.subr.bf16.mxu0 0
      %997 = vmatpush2.bf16.msra.mxu0 0
      %998 = vmatprep.subr.bf16.mxu0 0
      %999 = vmatpush2.bf16.msra.mxu0 0
      %1000 = vmatprep.subr.bf16.mxu0 0
      %1001 = vmatpush2.bf16.msra.mxu0 0
      %1002 = vmatprep.subr.bf16.mxu0 0
      %1003 = vmatpush2.bf16.msra.mxu0 0
      %1004 = vmatprep.subr.bf16.mxu0 0
      %1005 = vmatpush2.bf16.msra.mxu0 0
      %1006 = vmatprep.subr.bf16.mxu0 0
      %1007 = vmatpush2.bf16.msra.mxu0 0
      %1008 = vmatprep.subr.bf16.mxu0 0
      %1009 = vmatpush2.bf16.msra.mxu0 0
      %1010 = vmatprep.mubr.bf16.mxu0 0
      %1011 = vmatmul.mubr.bf16.gmra.mxu0 %v935
      %v1012 = vpop.f32.mrf.mxu0
      %v1013 = vadd.f32 0.0, %v1012
      %v1014 = vpop.f32.mrf.mxu0
      %v1015 = vpop.f32.mrf.mxu0
      %v1016 = vpop.f32.mrf.mxu0
      %1017 = vdwg.mxu0
      %v1018 = vadd.f32 %v906, %v972
      %v1019 = vadd.f32 %v907, %v974
      %v1020 = vadd.f32 %v908, %v1013
      %s1021 = scalar_lea.vmem %s1, 28
      %v1022 = vld [vmem:[%s1021] sm:$0xf]
      %1023 = vrot.lane.b32.xlu0 %v257, 91
      %v1024 = vpop.permute.xlu0 %1023
      %1025 = vrot.lane.b32.xlu0 %v258, 91
      %v1026 = vpop.permute.xlu0 %1025
      %1027 = vrot.lane.b32.xlu0 %v259, 91
      %v1028 = vpop.permute.xlu0 %1027
      %1029 = vrot.lane.b32.xlu0 %v260, 91
      %v1030 = vpop.permute.xlu0 %1029
      %1031 = vrot.lane.b32.xlu0 %v261, 91
      %v1032 = vpop.permute.xlu0 %1031
      %1033 = vrot.lane.b32.xlu0 %v262, 91
      %v1034 = vpop.permute.xlu0 %1033
      %vm1035 = vcmask 744448
      %v1036 = vsel %vm1035, %v1024, %v1026
      %v1037 = vsel %vm1035, %v1026, %v1028
      %v1038 = vsel %vm1035, %v1030, %v1032
      %v1039 = vsel %vm1035, %v1032, %v1034
      %v1047 = vsel %vm286, %v1022, 0
      %1049 = vmatprep.subr.bf16.mxu0 0
      %1050 = vmatpush1.bf16.msra.mxu0 0
      %1051 = vmatprep.subr.bf16.mxu0 0
      %1052 = vmatpush1.bf16.msra.mxu0 0
      %1053 = vmatprep.subr.bf16.mxu0 0
      %1054 = vmatpush1.bf16.msra.mxu0 0
      %1055 = vmatprep.subr.bf16.mxu0 0
      %1056 = vmatpush1.bf16.msra.mxu0 0
      %1057 = vmatprep.subr.bf16.mxu0 0
      %1058 = vmatpush1.bf16.msra.mxu0 0
      %1059 = vmatprep.subr.bf16.mxu0 0
      %1060 = vmatpush1.bf16.msra.mxu0 0
      %1061 = vmatprep.subr.bf16.mxu0 %v1039
      %1062 = vmatpush1.bf16.msra.mxu0 %v1038
      %1063 = vmatprep.subr.bf16.mxu0 %v1037
      %1064 = vmatpush1.bf16.msra.mxu0 %v1036
      %1065 = vmatprep.subr.bf16.mxu0 0
      %1066 = vmatpush2.bf16.msra.mxu0 0
      %1067 = vmatprep.subr.bf16.mxu0 0
      %1068 = vmatpush2.bf16.msra.mxu0 0
      %1069 = vmatprep.subr.bf16.mxu0 0
      %1070 = vmatpush2.bf16.msra.mxu0 0
      %1071 = vmatprep.subr.bf16.mxu0 0
      %1072 = vmatpush2.bf16.msra.mxu0 0
      %1073 = vmatprep.subr.bf16.mxu0 0
      %1074 = vmatpush2.bf16.msra.mxu0 0
      %1075 = vmatprep.subr.bf16.mxu0 0
      %1076 = vmatpush2.bf16.msra.mxu0 0
      %1077 = vmatprep.subr.bf16.mxu0 0
      %1078 = vmatpush2.bf16.msra.mxu0 0
      %1079 = vmatprep.subr.bf16.mxu0 0
      %1080 = vmatpush2.bf16.msra.mxu0 0
      %1081 = vmatprep.mubr.bf16.mxu0 0
      %1082 = vmatmul.mubr.bf16.gmra.mxu0 %v1047
      %v1083 = vpop.f32.mrf.mxu0
      %v1084 = vadd.f32 0.0, %v1083
      %v1085 = vpop.f32.mrf.mxu0
      %v1086 = vadd.f32 0.0, %v1085
      %v1087 = vpop.f32.mrf.mxu0
      %v1088 = vpop.f32.mrf.mxu0
      %1089 = vdwg.mxu0
      %1090 = vmatprep.subr.bf16.mxu0 0
      %1091 = vmatpush1.bf16.msra.mxu0 0
      %1092 = vmatprep.subr.bf16.mxu0 0
      %1093 = vmatpush1.bf16.msra.mxu0 0
      %1094 = vmatprep.subr.bf16.mxu0 0
      %1095 = vmatpush1.bf16.msra.mxu0 0
      %1096 = vmatprep.subr.bf16.mxu0 0
      %1097 = vmatpush1.bf16.msra.mxu0 0
      %1098 = vmatprep.subr.bf16.mxu0 0
      %1099 = vmatpush1.bf16.msra.mxu0 0
      %1100 = vmatprep.subr.bf16.mxu0 0
      %1101 = vmatpush1.bf16.msra.mxu0 0
      %1102 = vmatprep.subr.bf16.mxu0 0
      %1103 = vmatpush1.bf16.msra.mxu0 %v1034
      %1104 = vmatprep.subr.bf16.mxu0 0
      %1105 = vmatpush1.bf16.msra.mxu0 %v1028
      %1106 = vmatprep.subr.bf16.mxu0 0
      %1107 = vmatpush2.bf16.msra.mxu0 0
      %1108 = vmatprep.subr.bf16.mxu0 0
      %1109 = vmatpush2.bf16.msra.mxu0 0
      %1110 = vmatprep.subr.bf16.mxu0 0
      %1111 = vmatpush2.bf16.msra.mxu0 0
      %1112 = vmatprep.subr.bf16.mxu0 0
      %1113 = vmatpush2.bf16.msra.mxu0 0
      %1114 = vmatprep.subr.bf16.mxu0 0
      %1115 = vmatpush2.bf16.msra.mxu0 0
      %1116 = vmatprep.subr.bf16.mxu0 0
      %1117 = vmatpush2.bf16.msra.mxu0 0
      %1118 = vmatprep.subr.bf16.mxu0 0
      %1119 = vmatpush2.bf16.msra.mxu0 0
      %1120 = vmatprep.subr.bf16.mxu0 0
      %1121 = vmatpush2.bf16.msra.mxu0 0
      %1122 = vmatprep.mubr.bf16.mxu0 0
      %1123 = vmatmul.mubr.bf16.gmra.mxu0 %v1047
      %v1124 = vpop.f32.mrf.mxu0
      %v1125 = vadd.f32 0.0, %v1124
      %v1126 = vpop.f32.mrf.mxu0
      %v1127 = vpop.f32.mrf.mxu0
      %v1128 = vpop.f32.mrf.mxu0
      %1129 = vdwg.mxu0
      %v1130 = vadd.f32 %v1018, %v1084
      %v1131 = vadd.f32 %v1019, %v1086
      %v1132 = vadd.f32 %v1020, %v1125
      %s1133 = scalar_lea.vmem %s1, 32
      %v1134 = vld [vmem:[%s1133] sm:$0xf]
      %1135 = vrot.lane.b32.xlu0 %v257, 90
      %v1136 = vpop.permute.xlu0 %1135
      %1137 = vrot.lane.b32.xlu0 %v258, 90
      %v1138 = vpop.permute.xlu0 %1137
      %1139 = vrot.lane.b32.xlu0 %v259, 90
      %v1140 = vpop.permute.xlu0 %1139
      %1141 = vrot.lane.b32.xlu0 %v260, 90
      %v1142 = vpop.permute.xlu0 %1141
      %1143 = vrot.lane.b32.xlu0 %v261, 90
      %v1144 = vpop.permute.xlu0 %1143
      %1145 = vrot.lane.b32.xlu0 %v262, 90
      %v1146 = vpop.permute.xlu0 %1145
      %vm1147 = vcmask 736256
      %v1148 = vsel %vm1147, %v1136, %v1138
      %v1149 = vsel %vm1147, %v1138, %v1140
      %v1150 = vsel %vm1147, %v1142, %v1144
      %v1151 = vsel %vm1147, %v1144, %v1146
      %v1159 = vsel %vm286, %v1134, 0
      %1161 = vmatprep.subr.bf16.mxu0 0
      %1162 = vmatpush1.bf16.msra.mxu0 0
      %1163 = vmatprep.subr.bf16.mxu0 0
      %1164 = vmatpush1.bf16.msra.mxu0 0
      %1165 = vmatprep.subr.bf16.mxu0 0
      %1166 = vmatpush1.bf16.msra.mxu0 0
      %1167 = vmatprep.subr.bf16.mxu0 0
      %1168 = vmatpush1.bf16.msra.mxu0 0
      %1169 = vmatprep.subr.bf16.mxu0 0
      %1170 = vmatpush1.bf16.msra.mxu0 0
      %1171 = vmatprep.subr.bf16.mxu0 0
      %1172 = vmatpush1.bf16.msra.mxu0 0
      %1173 = vmatprep.subr.bf16.mxu0 %v1151
      %1174 = vmatpush1.bf16.msra.mxu0 %v1150
      %1175 = vmatprep.subr.bf16.mxu0 %v1149
      %1176 = vmatpush1.bf16.msra.mxu0 %v1148
      %1177 = vmatprep.subr.bf16.mxu0 0
      %1178 = vmatpush2.bf16.msra.mxu0 0
      %1179 = vmatprep.subr.bf16.mxu0 0
      %1180 = vmatpush2.bf16.msra.mxu0 0
      %1181 = vmatprep.subr.bf16.mxu0 0
      %1182 = vmatpush2.bf16.msra.mxu0 0
      %1183 = vmatprep.subr.bf16.mxu0 0
      %1184 = vmatpush2.bf16.msra.mxu0 0
      %1185 = vmatprep.subr.bf16.mxu0 0
      %1186 = vmatpush2.bf16.msra.mxu0 0
      %1187 = vmatprep.subr.bf16.mxu0 0
      %1188 = vmatpush2.bf16.msra.mxu0 0
      %1189 = vmatprep.subr.bf16.mxu0 0
      %1190 = vmatpush2.bf16.msra.mxu0 0
      %1191 = vmatprep.subr.bf16.mxu0 0
      %1192 = vmatpush2.bf16.msra.mxu0 0
      %1193 = vmatprep.mubr.bf16.mxu0 0
      %1194 = vmatmul.mubr.bf16.gmra.mxu0 %v1159
      %v1195 = vpop.f32.mrf.mxu0
      %v1196 = vadd.f32 0.0, %v1195
      %v1197 = vpop.f32.mrf.mxu0
      %v1198 = vadd.f32 0.0, %v1197
      %v1199 = vpop.f32.mrf.mxu0
      %v1200 = vpop.f32.mrf.mxu0
      %1201 = vdwg.mxu0
      %1202 = vmatprep.subr.bf16.mxu0 0
      %1203 = vmatpush1.bf16.msra.mxu0 0
      %1204 = vmatprep.subr.bf16.mxu0 0
      %1205 = vmatpush1.bf16.msra.mxu0 0
      %1206 = vmatprep.subr.bf16.mxu0 0
      %1207 = vmatpush1.bf16.msra.mxu0 0
      %1208 = vmatprep.subr.bf16.mxu0 0
      %1209 = vmatpush1.bf16.msra.mxu0 0
      %1210 = vmatprep.subr.bf16.mxu0 0
      %1211 = vmatpush1.bf16.msra.mxu0 0
      %1212 = vmatprep.subr.bf16.mxu0 0
      %1213 = vmatpush1.bf16.msra.mxu0 0
      %1214 = vmatprep.subr.bf16.mxu0 0
      %1215 = vmatpush1.bf16.msra.mxu0 %v1146
      %1216 = vmatprep.subr.bf16.mxu0 0
      %1217 = vmatpush1.bf16.msra.mxu0 %v1140
      %1218 = vmatprep.subr.bf16.mxu0 0
      %1219 = vmatpush2.bf16.msra.mxu0 0
      %1220 = vmatprep.subr.bf16.mxu0 0
      %1221 = vmatpush2.bf16.msra.mxu0 0
      %1222 = vmatprep.subr.bf16.mxu0 0
      %1223 = vmatpush2.bf16.msra.mxu0 0
      %1224 = vmatprep.subr.bf16.mxu0 0
      %1225 = vmatpush2.bf16.msra.mxu0 0
      %1226 = vmatprep.subr.bf16.mxu0 0
      %1227 = vmatpush2.bf16.msra.mxu0 0
      %1228 = vmatprep.subr.bf16.mxu0 0
      %1229 = vmatpush2.bf16.msra.mxu0 0
      %1230 = vmatprep.subr.bf16.mxu0 0
      %1231 = vmatpush2.bf16.msra.mxu0 0
      %1232 = vmatprep.subr.bf16.mxu0 0
      %1233 = vmatpush2.bf16.msra.mxu0 0
      %1234 = vmatprep.mubr.bf16.mxu0 0
      %1235 = vmatmul.mubr.bf16.gmra.mxu0 %v1159
      %v1236 = vpop.f32.mrf.mxu0
      %v1237 = vadd.f32 0.0, %v1236
      %v1238 = vpop.f32.mrf.mxu0
      %v1239 = vpop.f32.mrf.mxu0
      %v1240 = vpop.f32.mrf.mxu0
      %1241 = vdwg.mxu0
      %v1242 = vadd.f32 %v1130, %v1196
      %v1243 = vadd.f32 %v1131, %v1198
      %v1244 = vadd.f32 %v1132, %v1237
      %v1245 = vld [vmem:[%s2] sm:$0x7]
      %v1247 = vlaneseq
      %v1248 = vshrl.u32 %v1247, 7
      %v1249 = vsub.s32 0, %v1248
      %v1250 = vrot.slane %v1245, %v1249
      %v1251 = vlaneseq
      %v1252 = vshrl.u32 %v1251, 7
      %v1253 = vsub.s32 1, %v1252
      %v1254 = vrot.slane %v1245, %v1253
      %v1255 = vlaneseq
      %v1256 = vshrl.u32 %v1255, 7
      %v1257 = vsub.s32 2, %v1256
      %v1258 = vrot.slane %v1245, %v1257
      %v1262 = vmul.f32 %v1242, %v1250
      %v1263 = vmul.f32 %v1243, %v1254
      %v1264 = vmul.f32 %v1244, %v1258
      %v1265 = vadd.f32 %v1262, %v1263
      %v1266 = vsel %vm286, %v1264, 0.0
      %v1267 = vadd.f32 %v1265, %v1266
      %1268 = vadd.xlane.f32.xlu0 %v1267
      %v1269 = vpop.xlane.xlu0 %1268
      %v1270 = vmul.f32 %v1269, 0.00390625
      %v1271 = vsub.f32 %v1242, %v1270
      %v1272 = vsub.f32 %v1243, %v1270
      %v1273 = vsub.f32 %v1244, %v1270
      %v1274 = vmul.f32 %v1271, %v1250
      %v1275 = vmul.f32 %v1272, %v1254
      %v1276 = vmul.f32 %v1273, %v1258
      %v1277 = vmul.f32 %v1274, %v1274
      %v1278 = vmul.f32 %v1275, %v1275
      %v1279 = vmul.f32 %v1276, %v1276
      %v1280 = vadd.f32 %v1277, %v1278
      %v1281 = vsel %vm286, %v1279, 0.0
      %v1282 = vadd.f32 %v1280, %v1281
      %1283 = vadd.xlane.f32.xlu0 %v1282
      %v1284 = vpop.xlane.xlu0 %1283
      %v1285 = vmul.f32 %v1284, 0.00390625
      %v1286 = vadd.f32 %v1285, 1e-05
      %v1287 = vrsqrt.pop %v1286
      %v1288 = vmul.f32 %v1271, %v1287
      %v1289 = vmul.f32 %v1272, %v1287
      %v1290 = vmul.f32 %v1273, %v1287
      %v1291 = vld [vmem:[%s3] sm:$0xff]
      %1293 = vset.pattern.permute.xlu0 0
      %1294 = vperm.xlu0 %1293, %v1291
      %v1295 = vpop.permute.xlu0 %1294
      %v1297 = vmul.f32 %v1288, %v1295
      %v1298 = vmul.f32 %v1289, %v1295
      %v1299 = vmul.f32 %v1290, %v1295
      %v1300 = vld [vmem:[%s4] sm:$0xff]
      %1302 = vset.pattern.permute.xlu0 0
      %1303 = vperm.xlu0 %1302, %v1300
      %v1304 = vpop.permute.xlu0 %1303
      %v1306 = vadd.f32 %v1297, %v1304
      %v1307 = vadd.f32 %v1298, %v1304
      %v1308 = vadd.f32 %v1299, %v1304
      %vm1309 = vcmp.ge.f32.partialorder %v1306, 0.0
      %vm1310 = vcmp.ge.f32.partialorder %v1307, 0.0
      %vm1311 = vcmp.ge.f32.partialorder %v1308, 0.0
      %v1312 = vmul.f32 %v1306, 0.2
      %v1313 = vmul.f32 %v1307, 0.2
      %v1314 = vmul.f32 %v1308, 0.2
      %v1315 = vsel %vm1309, %v1306, %v1312
      %v1316 = vsel %vm1310, %v1307, %v1313
      %v1317 = vsel %vm1311, %v1308, %v1314
      %v1318 = vpack.c.bf16 %v1315, %v1315
      %v1319 = vpack.c.bf16 %v1316, %v1316
      %v1320 = vpack.c.bf16 %v1317, %v1317
      %v1324 = vunpack.c.l.b16 %v1318
      %v1325 = vunpack.c.l.b16 %v1319
      %v1326 = vunpack.c.l.b16 %v1320
      %v1327 = vpack.c.b16 %v1325, %v1324
      %v1328 = vpack.c.b16 %v1326, %v1326
      %1331 = vst [vmem:[%s224] sm:$0xff] %v1327
      %vm1332 = vcmask 257024
      %1333 = vst.msk [vmem:[%s224 + $0x8] sm:$0xf] %vm1332, %v1328
      %p1334 = scmp.lt.s32.totalorder %s16, 1
      %s1335 = scalar_select %p1334, %s16, 1
      %s1336 = smul.addr %s1335, 3
      %s1337 = smul.addr %s1336, 4
      %s1338 = scalar_lea.vmem %s5, %s1337
      // Predicated region
      $region41: #{generator_model_forward.13} parent=39 // pred_check
        %p1339 = pneg %p144
      $region42: #{generator_model_forward.13} parent=39 // pred_check_branch
        %1341 = sbr.rel (%p1339) target = $region44
      $region43: #{generator_model_forward.13} parent=39 // pred_region
        _
      $region44: #{generator_model_forward.13} parent=39 // pred_fallthru
        _
    $region40: #{generator_model_forward.13} parent=5 // pred_fallthru
      _
    %p1342 = scmp.le.s32.totalorder 2, %s11
    // Predicated region
    $region45: #{generator_model_forward.13} parent=5 // pred_check
      %p1343 = pneg %p1342
    $region46: #{generator_model_forward.13} parent=5 // pred_check_branch
      %1345 = sbr.rel (%p1343) target = $region48
    $region47: #{generator_model_forward.13} parent=5 // pred_region
      %s1346 = ssub.s32 %s11, 2
      // Predicated region
      $region49: #{generator_model_forward.13} parent=47 // pred_check
        %p1347 = pneg %p150
      $region50: #{generator_model_forward.13} parent=47 // pred_check_branch
        %1349 = sbr.rel (%p1347) target = $region52
      $region51: #{generator_model_forward.13} parent=47 // pred_region
        %p1350 = scmp.lt.s32.totalorder %s17, 1
        %s1351 = scalar_select %p1350, %s17, 1
        %s1352 = smul.addr %s1351, 3
        %s1353 = smul.addr %s1352, 4
        %s1354 = scalar_lea.vmem %s5, %s1353
      $region52: #{generator_model_forward.13} parent=47 // pred_fallthru
        _
    $region48: #{generator_model_forward.13} parent=5 // pred_fallthru
      _
  $region6: #{generator_model_forward.13} parent=0 // loop_footer
    %s15 = sadd.s32 1, %s11
  $region7: #{generator_model_forward.13} parent=0 // loop_footer_branch
    %10 = sbr.rel target = $region3
  $region8: #{generator_model_forward.13} parent=0 // loop_exit
    _

// kernel: generator_model_forward.16
$region0: #{generator_model_forward.16}
  #allocation0 [shape = 'u32[]', space=smem, size = 0x4, offset = 0x4, fixed_abs, tag = 'smem constant byte address 0x4 - core index']
  #allocation1 [shape = 'u32[144,128]{1,0:T(1,128)}', space=vmem, size = 0x12000, scoped, tag = 'internal scratch']
  %s0 = inlined_call_operand.vmem [shape: bf16[2,16,326], index: 0, kind: input, shape index: {}]
  %s1 = inlined_call_operand.vmem [shape: bf16[9,8,16], index: 1, kind: input, shape index: {}]
  %s2 = inlined_call_operand.vmem [shape: f32[1,288], index: 2, kind: input, shape index: {}]
  %s3 = inlined_call_operand.vmem [shape: f32[8,1], index: 3, kind: input, shape index: {}]
  %s4 = inlined_call_operand.vmem [shape: f32[8,1], index: 4, kind: input, shape index: {}]
  %s5 = inlined_call_operand.vmem [shape: bf16[2,8,288], index: 5, kind: output, shape index: {}]
  %s6 = sld [smem:[#allocation0]]
  $region53: #{generator_model_forward.16} parent=0
    _
  %s8 = ssub.s32 1, %s6
  %s9 = scalar_select 0, %s8, %s6
  loop: start=0, step=1, limit=4
  $region2: #{generator_model_forward.16} parent=0 // loop_pre_header
    _
  $region3: #{generator_model_forward.16} parent=0 // loop_header
    %s11 = sphi 0, %s15
    %p12 = scmp.ge.s32.totalorder %s11, 4
    %s21 = sphi 0, %s23
    %s24 = sphi 0, %s21
    %s25 = sphi 0, %s24
    %s41 = sphi 0, %s25
    %s45 = sphi 0, %s45
    %s47 = sphi 0, %s45
    %s48 = sphi 0, %s47
    %s62 = sphi 0, %s48
    %s66 = sphi 0, %s66
    %s68 = sphi 0, %s66
    %s69 = sphi 0, %s68
    %s83 = sphi 0, %s69
    %s87 = sphi 0, %s87
    %s89 = sphi 0, %s87
    %s90 = sphi 0, %s89
    %s104 = sphi 0, %s90
    %s108 = sphi 0, %s108
    %s110 = sphi 0, %s108
    %s111 = sphi 0, %s110
    %s125 = sphi 0, %s111
    %s131 = sphi 0, %s133
    %s134 = sphi 0, %s131
    %s135 = sphi 0, %s134
    %s151 = sphi 0, %s135
  $region4: #{generator_model_forward.16} parent=0 // loop_header_branch
    %14 = sbr.rel (%p12) target = $region8
  $region5: #{generator_model_forward.16} parent=0 // loop_body
    %s16 = ssub.s32 %s11, 1
    %s17 = ssub.s32 %s11, 2
    %s18 = sadd.s32 %s11, 1
    %s19 = ssub.s32 %s11, %s18
    %p20 = scmp.eq.s32.totalorder %s19, 0
    %s22 = sadd.s32 %s21, 1
    %s23 = scalar_select %p20, %s21, %s22
    %p26 = pneg %p20
    %p27 = scmp.eq.s32.totalorder %s11, 1
    %p28 = por %p26, %p27
    %p29 = scmp.ne.s32.totalorder %s21, %s24
    %p30 = scmp.eq.s32.totalorder %s11, 0
    %p31 = por %p29, %p30
    %p32 = scmp.ne.s32.totalorder %s21, %s24
    %p33 = scmp.eq.s32.totalorder %s16, 1
    %p34 = por %p32, %p33
    %p35 = scmp.ne.s32.totalorder %s24, %s25
    %p36 = scmp.eq.s32.totalorder %s16, 0
    %p37 = por %p35, %p36
    %p38 = scmp.ne.s32.totalorder %s24, %s25
    %p39 = scmp.eq.s32.totalorder %s17, 1
    %p40 = por %p38, %p39
    %p42 = scmp.ne.s32.totalorder %s25, %s41
    %p43 = scmp.eq.s32.totalorder %s17, 0
    %p44 = por %p42, %p43
    %s46 = sadd.s32 %s45, 1
    %p49 = scmp.eq.s32.totalorder %s11, 1
    %p50 = scmp.ne.s32.totalorder %s45, %s47
    %p51 = scmp.eq.s32.totalorder %s11, 0
    %p52 = por %p50, %p51
    %p53 = scmp.ne.s32.totalorder %s45, %s47
    %p54 = scmp.eq.s32.totalorder %s16, 1
    %p55 = por %p53, %p54
    %p56 = scmp.ne.s32.totalorder %s47, %s48
    %p57 = scmp.eq.s32.totalorder %s16, 0
    %p58 = por %p56, %p57
    %p59 = scmp.ne.s32.totalorder %s47, %s48
    %p60 = scmp.eq.s32.totalorder %s17, 1
    %p61 = por %p59, %p60
    %p63 = scmp.ne.s32.totalorder %s48, %s62
    %p64 = scmp.eq.s32.totalorder %s17, 0
    %p65 = por %p63, %p64
    %s67 = sadd.s32 %s66, 1
    %p70 = scmp.eq.s32.totalorder %s11, 1
    %p71 = scmp.ne.s32.totalorder %s66, %s68
    %p72 = scmp.eq.s32.totalorder %s11, 0
    %p73 = por %p71, %p72
    %p74 = scmp.ne.s32.totalorder %s66, %s68
    %p75 = scmp.eq.s32.totalorder %s16, 1
    %p76 = por %p74, %p75
    %p77 = scmp.ne.s32.totalorder %s68, %s69
    %p78 = scmp.eq.s32.totalorder %s16, 0
    %p79 = por %p77, %p78
    %p80 = scmp.ne.s32.totalorder %s68, %s69
    %p81 = scmp.eq.s32.totalorder %s17, 1
    %p82 = por %p80, %p81
    %p84 = scmp.ne.s32.totalorder %s69, %s83
    %p85 = scmp.eq.s32.totalorder %s17, 0
    %p86 = por %p84, %p85
    %s88 = sadd.s32 %s87, 1
    %p91 = scmp.eq.s32.totalorder %s11, 1
    %p92 = scmp.ne.s32.totalorder %s87, %s89
    %p93 = scmp.eq.s32.totalorder %s11, 0
    %p94 = por %p92, %p93
    %p95 = scmp.ne.s32.totalorder %s87, %s89
    %p96 = scmp.eq.s32.totalorder %s16, 1
    %p97 = por %p95, %p96
    %p98 = scmp.ne.s32.totalorder %s89, %s90
    %p99 = scmp.eq.s32.totalorder %s16, 0
    %p100 = por %p98, %p99
    %p101 = scmp.ne.s32.totalorder %s89, %s90
    %p102 = scmp.eq.s32.totalorder %s17, 1
    %p103 = por %p101, %p102
    %p105 = scmp.ne.s32.totalorder %s90, %s104
    %p106 = scmp.eq.s32.totalorder %s17, 0
    %p107 = por %p105, %p106
    %s109 = sadd.s32 %s108, 1
    %p112 = scmp.eq.s32.totalorder %s11, 1
    %p113 = scmp.ne.s32.totalorder %s108, %s110
    %p114 = scmp.eq.s32.totalorder %s11, 0
    %p115 = por %p113, %p114
    %p116 = scmp.ne.s32.totalorder %s108, %s110
    %p117 = scmp.eq.s32.totalorder %s16, 1
    %p118 = por %p116, %p117
    %p119 = scmp.ne.s32.totalorder %s110, %s111
    %p120 = scmp.eq.s32.totalorder %s16, 0
    %p121 = por %p119, %p120
    %p122 = scmp.ne.s32.totalorder %s110, %s111
    %p123 = scmp.eq.s32.totalorder %s17, 1
    %p124 = por %p122, %p123
    %p126 = scmp.ne.s32.totalorder %s111, %s125
    %p127 = scmp.eq.s32.totalorder %s17, 0
    %p128 = por %p126, %p127
    %s129 = ssub.s32 %s11, %s18
    %p130 = scmp.eq.s32.totalorder %s129, 0
    %s132 = sadd.s32 %s131, 1
    %s133 = scalar_select %p130, %s131, %s132
    %p136 = pneg %p130
    %p137 = scmp.eq.s32.totalorder %s11, 1
    %p138 = por %p136, %p137
    %p139 = scmp.ne.s32.totalorder %s131, %s134
    %p140 = scmp.eq.s32.totalorder %s11, 0
    %p141 = por %p139, %p140
    %p142 = scmp.ne.s32.totalorder %s131, %s134
    %p143 = scmp.eq.s32.totalorder %s16, 1
    %p144 = por %p142, %p143
    %p145 = scmp.ne.s32.totalorder %s134, %s135
    %p146 = scmp.eq.s32.totalorder %s16, 0
    %p147 = por %p145, %p146
    %p148 = scmp.ne.s32.totalorder %s134, %s135
    %p149 = scmp.eq.s32.totalorder %s17, 1
    %p150 = por %p148, %p149
    %p152 = scmp.ne.s32.totalorder %s135, %s151
    %p153 = scmp.eq.s32.totalorder %s17, 0
    %p154 = por %p152, %p153
    %p155 = scmp.le.s32.totalorder 1, %s11
    %p156 = scmp.lt.s32.totalorder %s11, 3
    %p157 = pnand %p155, %p156
    %p158 = pneg %p157
    // Predicated region
    $region9: #{generator_model_forward.16} parent=5 // pred_check
      _
    $region10: #{generator_model_forward.16} parent=5 // pred_check_branch
      %160 = sbr.rel (%p157) target = $region12
    $region11: #{generator_model_forward.16} parent=5 // pred_region
      %s161 = ssub.s32 %s11, 1
      // Predicated region
      $region13: #{generator_model_forward.16} parent=11 // pred_check
        %p162 = pneg %p58
      $region14: #{generator_model_forward.16} parent=11 // pred_check_branch
        %164 = sbr.rel (%p162) target = $region16
      $region15: #{generator_model_forward.16} parent=11 // pred_region
        _
      $region16: #{generator_model_forward.16} parent=11 // pred_fallthru
        _
      // Predicated region
      $region17: #{generator_model_forward.16} parent=11 // pred_check
        %p165 = pneg %p79
      $region18: #{generator_model_forward.16} parent=11 // pred_check_branch
        %167 = sbr.rel (%p165) target = $region20
      $region19: #{generator_model_forward.16} parent=11 // pred_region
        _
      $region20: #{generator_model_forward.16} parent=11 // pred_fallthru
        _
      // Predicated region
      $region21: #{generator_model_forward.16} parent=11 // pred_check
        %p168 = pneg %p100
      $region22: #{generator_model_forward.16} parent=11 // pred_check_branch
        %170 = sbr.rel (%p168) target = $region24
      $region23: #{generator_model_forward.16} parent=11 // pred_region
        _
      $region24: #{generator_model_forward.16} parent=11 // pred_fallthru
        _
      // Predicated region
      $region25: #{generator_model_forward.16} parent=11 // pred_check
        %p171 = pneg %p121
      $region26: #{generator_model_forward.16} parent=11 // pred_check_branch
        %173 = sbr.rel (%p171) target = $region28
      $region27: #{generator_model_forward.16} parent=11 // pred_region
        _
      $region28: #{generator_model_forward.16} parent=11 // pred_fallthru
        _
    $region12: #{generator_model_forward.16} parent=5 // pred_fallthru
      _
    %p174 = scmp.lt.s32.totalorder %s11, 2
    // Predicated region
    $region29: #{generator_model_forward.16} parent=5 // pred_check
      %p175 = pneg %p174
    $region30: #{generator_model_forward.16} parent=5 // pred_check_branch
      %177 = sbr.rel (%p175) target = $region32
    $region31: #{generator_model_forward.16} parent=5 // pred_region
      // Predicated region
      $region33: #{generator_model_forward.16} parent=31 // pred_check
        %p178 = pneg %p31
      $region34: #{generator_model_forward.16} parent=31 // pred_check_branch
        %180 = sbr.rel (%p178) target = $region36
      $region35: #{generator_model_forward.16} parent=31 // pred_region
        %p181 = scmp.lt.s32.totalorder %s11, 1
        %s182 = scalar_select %p181, %s11, 1
        %s183 = smul.addr %s182, 6
        %s184 = smul.addr %s183, 4
        %s185 = scalar_lea.vmem %s0, %s184
      $region36: #{generator_model_forward.16} parent=31 // pred_fallthru
        _
    $region32: #{generator_model_forward.16} parent=5 // pred_fallthru
      _
    %p186 = scmp.le.s32.totalorder 1, %s11
    %p187 = scmp.lt.s32.totalorder %s11, 3
    %p188 = pnand %p186, %p187
    %p189 = pneg %p188
    // Predicated region
    $region37: #{generator_model_forward.16} parent=5 // pred_check
      _
    $region38: #{generator_model_forward.16} parent=5 // pred_check_branch
      %191 = sbr.rel (%p188) target = $region40
    $region39: #{generator_model_forward.16} parent=5 // pred_region
      %s192 = ssub.s32 %s11, 1
      %p193 = scmp.lt.s32.totalorder %s16, 1
      %s194 = scalar_select %p193, %s16, 1
      %s195 = smul.addr %s194, 6
      %s196 = smul.addr %s195, 4
      %s197 = scalar_lea.vmem %s0, %s196
      %p198 = pneg %p37
      %p199 = pneg %p34
      %p200 = pneg %p58
      %p201 = pneg %p55
      %p202 = pneg %p79
      %p203 = pneg %p76
      %p204 = pneg %p100
      %p205 = pneg %p97
      %p206 = pneg %p121
      %p207 = pneg %p118
      %p208 = pneg %p147
      %p209 = pneg %p144
      %p210 = scmp.lt.s32.totalorder %s16, 1
      %s211 = scalar_select %p210, %s16, 1
      %s212 = smul.addr %s211, 3
      %s213 = smul.addr %s212, 4
      %s214 = scalar_lea.vmem %s5, %s213
      %p215 = scmp.lt.s32.totalorder %s16, 1
      %s216 = scalar_select %p215, %s16, 1
      %s217 = smul.addr %s216, 6
      %s218 = smul.addr %s217, 4
      %s219 = scalar_lea.vmem %s0, %s218
      %p220 = scmp.lt.s32.totalorder %s16, 1
      %s221 = scalar_select %p220, %s16, 1
      %s222 = smul.addr %s221, 3
      %s223 = smul.addr %s222, 4
      %s224 = scalar_lea.vmem %s5, %s223
      %v226 = vld [vmem:[%s219] sm:$0xff]
      %v227 = vld [vmem:[%s219 + $0x8] sm:$0xf]
      %v228 = vld [vmem:[%s219 + $0xc] sm:$0xff]
      %v229 = vld [vmem:[%s219 + $0x14] sm:$0xf]
      %v230 = vld [vmem:[%s1] sm:$0xf]
      %s231 = scalar_lea.vmem %s1, 4
      %v232 = vld [vmem:[%s231] sm:$0xf]
      %v237 = vunpack.c.l.b16 %v226
      %v238 = vunpack.c.h.b16 %v226
      %v239 = vunpack.c.l.b16 %v227
      %v240 = vunpack.c.l.b16 %v228
      %v241 = vunpack.c.h.b16 %v228
      %v242 = vunpack.c.l.b16 %v229
      %v243 = vpack.c.b16 %v240, %v237
      %v244 = vpack.c.b16 %v241, %v238
      %v245 = vpack.c.b16 %v242, %v239
      %246 = vrot.lane.b32.xlu0 %v243, 127
      %v247 = vpop.permute.xlu0 %246
      %248 = vrot.lane.b32.xlu0 %v244, 127
      %v249 = vpop.permute.xlu0 %248
      %250 = vrot.lane.b32.xlu0 %v245, 127
      %v251 = vpop.permute.xlu0 %250
      %vm252 = vcmask 1039360
      %v253 = vsel %vm252, %v247, %v249
      %v254 = vsel %vm252, %v249, %v251
      %vm258 = vcmask 130048
      %v260 = vsel %vm258, %v232, 0
      %262 = vmatprep.subr.bf16.mxu0 0
      %263 = vmatpush1.bf16.msra.mxu0 0
      %264 = vmatprep.subr.bf16.mxu0 0
      %265 = vmatpush1.bf16.msra.mxu0 0
      %266 = vmatprep.subr.bf16.mxu0 0
      %267 = vmatpush1.bf16.msra.mxu0 0
      %268 = vmatprep.subr.bf16.mxu0 0
      %269 = vmatpush1.bf16.msra.mxu0 0
      %270 = vmatprep.subr.bf16.mxu0 0
      %271 = vmatpush1.bf16.msra.mxu0 0
      %272 = vmatprep.subr.bf16.mxu0 0
      %273 = vmatpush1.bf16.msra.mxu0 0
      %274 = vmatprep.subr.bf16.mxu0 0
      %275 = vmatpush1.bf16.msra.mxu0 0
      %276 = vmatprep.subr.bf16.mxu0 %v254
      %277 = vmatpush1.bf16.msra.mxu0 %v253
      %278 = vmatprep.subr.bf16.mxu0 0
      %279 = vmatpush2.bf16.msra.mxu0 0
      %280 = vmatprep.subr.bf16.mxu0 0
      %281 = vmatpush2.bf16.msra.mxu0 0
      %282 = vmatprep.subr.bf16.mxu0 0
      %283 = vmatpush2.bf16.msra.mxu0 0
      %284 = vmatprep.subr.bf16.mxu0 0
      %285 = vmatpush2.bf16.msra.mxu0 0
      %286 = vmatprep.subr.bf16.mxu0 0
      %287 = vmatpush2.bf16.msra.mxu0 0
      %288 = vmatprep.subr.bf16.mxu0 0
      %289 = vmatpush2.bf16.msra.mxu0 0
      %290 = vmatprep.subr.bf16.mxu0 0
      %291 = vmatpush2.bf16.msra.mxu0 0
      %292 = vmatprep.subr.bf16.mxu0 0
      %293 = vmatpush2.bf16.msra.mxu0 0
      %294 = vmatprep.mubr.bf16.mxu0 0
      %295 = vmatmul.mubr.bf16.gmra.mxu0 %v260
      %v296 = vpop.f32.mrf.mxu0
      %v297 = vadd.f32 0.0, %v296
      %v298 = vpop.f32.mrf.mxu0
      %v299 = vadd.f32 0.0, %v298
      %v300 = vpop.f32.mrf.mxu0
      %v301 = vpop.f32.mrf.mxu0
      %302 = vdwg.mxu0
      %303 = vmatprep.subr.bf16.mxu0 0
      %304 = vmatpush1.bf16.msra.mxu0 0
      %305 = vmatprep.subr.bf16.mxu0 0
      %306 = vmatpush1.bf16.msra.mxu0 0
      %307 = vmatprep.subr.bf16.mxu0 0
      %308 = vmatpush1.bf16.msra.mxu0 0
      %309 = vmatprep.subr.bf16.mxu0 0
      %310 = vmatpush1.bf16.msra.mxu0 0
      %311 = vmatprep.subr.bf16.mxu0 0
      %312 = vmatpush1.bf16.msra.mxu0 0
      %313 = vmatprep.subr.bf16.mxu0 0
      %314 = vmatpush1.bf16.msra.mxu0 0
      %315 = vmatprep.subr.bf16.mxu0 0
      %316 = vmatpush1.bf16.msra.mxu0 0
      %317 = vmatprep.subr.bf16.mxu0 0
      %318 = vmatpush1.bf16.msra.mxu0 %v251
      %319 = vmatprep.subr.bf16.mxu0 0
      %320 = vmatpush2.bf16.msra.mxu0 0
      %321 = vmatprep.subr.bf16.mxu0 0
      %322 = vmatpush2.bf16.msra.mxu0 0
      %323 = vmatprep.subr.bf16.mxu0 0
      %324 = vmatpush2.bf16.msra.mxu0 0
      %325 = vmatprep.subr.bf16.mxu0 0
      %326 = vmatpush2.bf16.msra.mxu0 0
      %327 = vmatprep.subr.bf16.mxu0 0
      %328 = vmatpush2.bf16.msra.mxu0 0
      %329 = vmatprep.subr.bf16.mxu0 0
      %330 = vmatpush2.bf16.msra.mxu0 0
      %331 = vmatprep.subr.bf16.mxu0 0
      %332 = vmatpush2.bf16.msra.mxu0 0
      %333 = vmatprep.subr.bf16.mxu0 0
      %334 = vmatpush2.bf16.msra.mxu0 0
      %335 = vmatprep.mubr.bf16.mxu0 0
      %336 = vmatmul.mubr.bf16.gmra.mxu0 %v260
      %v337 = vpop.f32.mrf.mxu0
      %v338 = vadd.f32 0.0, %v337
      %v339 = vpop.f32.mrf.mxu0
      %v340 = vpop.f32.mrf.mxu0
      %v341 = vpop.f32.mrf.mxu0
      %342 = vdwg.mxu0
      %v347 = vsel %vm258, %v230, 0
      %349 = vmatprep.subr.bf16.mxu0 0
      %350 = vmatpush1.bf16.msra.mxu0 0
      %351 = vmatprep.subr.bf16.mxu0 0
      %352 = vmatpush1.bf16.msra.mxu0 0
      %353 = vmatprep.subr.bf16.mxu0 0
      %354 = vmatpush1.bf16.msra.mxu0 0
      %355 = vmatprep.subr.bf16.mxu0 0
      %356 = vmatpush1.bf16.msra.mxu0 0
      %357 = vmatprep.subr.bf16.mxu0 0
      %358 = vmatpush1.bf16.msra.mxu0 0
      %359 = vmatprep.subr.bf16.mxu0 0
      %360 = vmatpush1.bf16.msra.mxu0 0
      %361 = vmatprep.subr.bf16.mxu0 0
      %362 = vmatpush1.bf16.msra.mxu0 0
      %363 = vmatprep.subr.bf16.mxu0 %v244
      %364 = vmatpush1.bf16.msra.mxu0 %v243
      %365 = vmatprep.subr.bf16.mxu0 0
      %366 = vmatpush2.bf16.msra.mxu0 0
      %367 = vmatprep.subr.bf16.mxu0 0
      %368 = vmatpush2.bf16.msra.mxu0 0
      %369 = vmatprep.subr.bf16.mxu0 0
      %370 = vmatpush2.bf16.msra.mxu0 0
      %371 = vmatprep.subr.bf16.mxu0 0
      %372 = vmatpush2.bf16.msra.mxu0 0
      %373 = vmatprep.subr.bf16.mxu0 0
      %374 = vmatpush2.bf16.msra.mxu0 0
      %375 = vmatprep.subr.bf16.mxu0 0
      %376 = vmatpush2.bf16.msra.mxu0 0
      %377 = vmatprep.subr.bf16.mxu0 0
      %378 = vmatpush2.bf16.msra.mxu0 0
      %379 = vmatprep.subr.bf16.mxu0 0
      %380 = vmatpush2.bf16.msra.mxu0 0
      %381 = vmatprep.mubr.bf16.mxu0 0
      %382 = vmatmul.mubr.bf16.gmra.mxu0 %v347
      %v383 = vpop.f32.mrf.mxu0
      %v384 = vadd.f32 %v297, %v383
      %v385 = vpop.f32.mrf.mxu0
      %v386 = vadd.f32 %v299, %v385
      %v387 = vpop.f32.mrf.mxu0
      %v388 = vpop.f32.mrf.mxu0
      %389 = vdwg.mxu0
      %390 = vmatprep.subr.bf16.mxu0 0
      %391 = vmatpush1.bf16.msra.mxu0 0
      %392 = vmatprep.subr.bf16.mxu0 0
      %393 = vmatpush1.bf16.msra.mxu0 0
      %394 = vmatprep.subr.bf16.mxu0 0
      %395 = vmatpush1.bf16.msra.mxu0 0
      %396 = vmatprep.subr.bf16.mxu0 0
      %397 = vmatpush1.bf16.msra.mxu0 0
      %398 = vmatprep.subr.bf16.mxu0 0
      %399 = vmatpush1.bf16.msra.mxu0 0
      %400 = vmatprep.subr.bf16.mxu0 0
      %401 = vmatpush1.bf16.msra.mxu0 0
      %402 = vmatprep.subr.bf16.mxu0 0
      %403 = vmatpush1.bf16.msra.mxu0 0
      %404 = vmatprep.subr.bf16.mxu0 0
      %405 = vmatpush1.bf16.msra.mxu0 %v245
      %406 = vmatprep.subr.bf16.mxu0 0
      %407 = vmatpush2.bf16.msra.mxu0 0
      %408 = vmatprep.subr.bf16.mxu0 0
      %409 = vmatpush2.bf16.msra.mxu0 0
      %410 = vmatprep.subr.bf16.mxu0 0
      %411 = vmatpush2.bf16.msra.mxu0 0
      %412 = vmatprep.subr.bf16.mxu0 0
      %413 = vmatpush2.bf16.msra.mxu0 0
      %414 = vmatprep.subr.bf16.mxu0 0
      %415 = vmatpush2.bf16.msra.mxu0 0
      %416 = vmatprep.subr.bf16.mxu0 0
      %417 = vmatpush2.bf16.msra.mxu0 0
      %418 = vmatprep.subr.bf16.mxu0 0
      %419 = vmatpush2.bf16.msra.mxu0 0
      %420 = vmatprep.subr.bf16.mxu0 0
      %421 = vmatpush2.bf16.msra.mxu0 0
      %422 = vmatprep.mubr.bf16.mxu0 0
      %423 = vmatmul.mubr.bf16.gmra.mxu0 %v347
      %v424 = vpop.f32.mrf.mxu0
      %v425 = vadd.f32 %v338, %v424
      %v426 = vpop.f32.mrf.mxu0
      %v427 = vpop.f32.mrf.mxu0
      %v428 = vpop.f32.mrf.mxu0
      %429 = vdwg.mxu0
      %s430 = scalar_lea.vmem %s1, 8
      %v431 = vld [vmem:[%s430] sm:$0xf]
      %432 = vrot.lane.b32.xlu0 %v243, 126
      %v433 = vpop.permute.xlu0 %432
      %434 = vrot.lane.b32.xlu0 %v244, 126
      %v435 = vpop.permute.xlu0 %434
      %436 = vrot.lane.b32.xlu0 %v245, 126
      %v437 = vpop.permute.xlu0 %436
      %vm438 = vcmask 1031168
      %v439 = vsel %vm438, %v433, %v435
      %v440 = vsel %vm438, %v435, %v437
      %v445 = vsel %vm258, %v431, 0
      %447 = vmatprep.subr.bf16.mxu0 0
      %448 = vmatpush1.bf16.msra.mxu0 0
      %449 = vmatprep.subr.bf16.mxu0 0
      %450 = vmatpush1.bf16.msra.mxu0 0
      %451 = vmatprep.subr.bf16.mxu0 0
      %452 = vmatpush1.bf16.msra.mxu0 0
      %453 = vmatprep.subr.bf16.mxu0 0
      %454 = vmatpush1.bf16.msra.mxu0 0
      %455 = vmatprep.subr.bf16.mxu0 0
      %456 = vmatpush1.bf16.msra.mxu0 0
      %457 = vmatprep.subr.bf16.mxu0 0
      %458 = vmatpush1.bf16.msra.mxu0 0
      %459 = vmatprep.subr.bf16.mxu0 0
      %460 = vmatpush1.bf16.msra.mxu0 0
      %461 = vmatprep.subr.bf16.mxu0 %v440
      %462 = vmatpush1.bf16.msra.mxu0 %v439
      %463 = vmatprep.subr.bf16.mxu0 0
      %464 = vmatpush2.bf16.msra.mxu0 0
      %465 = vmatprep.subr.bf16.mxu0 0
      %466 = vmatpush2.bf16.msra.mxu0 0
      %467 = vmatprep.subr.bf16.mxu0 0
      %468 = vmatpush2.bf16.msra.mxu0 0
      %469 = vmatprep.subr.bf16.mxu0 0
      %470 = vmatpush2.bf16.msra.mxu0 0
      %471 = vmatprep.subr.bf16.mxu0 0
      %472 = vmatpush2.bf16.msra.mxu0 0
      %473 = vmatprep.subr.bf16.mxu0 0
      %474 = vmatpush2.bf16.msra.mxu0 0
      %475 = vmatprep.subr.bf16.mxu0 0
      %476 = vmatpush2.bf16.msra.mxu0 0
      %477 = vmatprep.subr.bf16.mxu0 0
      %478 = vmatpush2.bf16.msra.mxu0 0
      %479 = vmatprep.mubr.bf16.mxu0 0
      %480 = vmatmul.mubr.bf16.gmra.mxu0 %v445
      %v481 = vpop.f32.mrf.mxu0
      %v482 = vadd.f32 0.0, %v481
      %v483 = vpop.f32.mrf.mxu0
      %v484 = vadd.f32 0.0, %v483
      %v485 = vpop.f32.mrf.mxu0
      %v486 = vpop.f32.mrf.mxu0
      %487 = vdwg.mxu0
      %488 = vmatprep.subr.bf16.mxu0 0
      %489 = vmatpush1.bf16.msra.mxu0 0
      %490 = vmatprep.subr.bf16.mxu0 0
      %491 = vmatpush1.bf16.msra.mxu0 0
      %492 = vmatprep.subr.bf16.mxu0 0
      %493 = vmatpush1.bf16.msra.mxu0 0
      %494 = vmatprep.subr.bf16.mxu0 0
      %495 = vmatpush1.bf16.msra.mxu0 0
      %496 = vmatprep.subr.bf16.mxu0 0
      %497 = vmatpush1.bf16.msra.mxu0 0
      %498 = vmatprep.subr.bf16.mxu0 0
      %499 = vmatpush1.bf16.msra.mxu0 0
      %500 = vmatprep.subr.bf16.mxu0 0
      %501 = vmatpush1.bf16.msra.mxu0 0
      %502 = vmatprep.subr.bf16.mxu0 0
      %503 = vmatpush1.bf16.msra.mxu0 %v437
      %504 = vmatprep.subr.bf16.mxu0 0
      %505 = vmatpush2.bf16.msra.mxu0 0
      %506 = vmatprep.subr.bf16.mxu0 0
      %507 = vmatpush2.bf16.msra.mxu0 0
      %508 = vmatprep.subr.bf16.mxu0 0
      %509 = vmatpush2.bf16.msra.mxu0 0
      %510 = vmatprep.subr.bf16.mxu0 0
      %511 = vmatpush2.bf16.msra.mxu0 0
      %512 = vmatprep.subr.bf16.mxu0 0
      %513 = vmatpush2.bf16.msra.mxu0 0
      %514 = vmatprep.subr.bf16.mxu0 0
      %515 = vmatpush2.bf16.msra.mxu0 0
      %516 = vmatprep.subr.bf16.mxu0 0
      %517 = vmatpush2.bf16.msra.mxu0 0
      %518 = vmatprep.subr.bf16.mxu0 0
      %519 = vmatpush2.bf16.msra.mxu0 0
      %520 = vmatprep.mubr.bf16.mxu0 0
      %521 = vmatmul.mubr.bf16.gmra.mxu0 %v445
      %v522 = vpop.f32.mrf.mxu0
      %v523 = vadd.f32 0.0, %v522
      %v524 = vpop.f32.mrf.mxu0
      %v525 = vpop.f32.mrf.mxu0
      %v526 = vpop.f32.mrf.mxu0
      %527 = vdwg.mxu0
      %v528 = vadd.f32 %v384, %v482
      %v529 = vadd.f32 %v386, %v484
      %v530 = vadd.f32 %v425, %v523
      %s531 = scalar_lea.vmem %s1, 12
      %v532 = vld [vmem:[%s531] sm:$0xf]
      %533 = vrot.lane.b32.xlu0 %v243, 110
      %v534 = vpop.permute.xlu0 %533
      %535 = vrot.lane.b32.xlu0 %v244, 110
      %v536 = vpop.permute.xlu0 %535
      %537 = vrot.lane.b32.xlu0 %v245, 110
      %v538 = vpop.permute.xlu0 %537
      %vm539 = vcmask 900096
      %v540 = vsel %vm539, %v534, %v536
      %v541 = vsel %vm539, %v536, %v538
      %v546 = vsel %vm258, %v532, 0
      %548 = vmatprep.subr.bf16.mxu0 0
      %549 = vmatpush1.bf16.msra.mxu0 0
      %550 = vmatprep.subr.bf16.mxu0 0
      %551 = vmatpush1.bf16.msra.mxu0 0
      %552 = vmatprep.subr.bf16.mxu0 0
      %553 = vmatpush1.bf16.msra.mxu0 0
      %554 = vmatprep.subr.bf16.mxu0 0
      %555 = vmatpush1.bf16.msra.mxu0 0
      %556 = vmatprep.subr.bf16.mxu0 0
      %557 = vmatpush1.bf16.msra.mxu0 0
      %558 = vmatprep.subr.bf16.mxu0 0
      %559 = vmatpush1.bf16.msra.mxu0 0
      %560 = vmatprep.subr.bf16.mxu0 0
      %561 = vmatpush1.bf16.msra.mxu0 0
      %562 = vmatprep.subr.bf16.mxu0 %v541
      %563 = vmatpush1.bf16.msra.mxu0 %v540
      %564 = vmatprep.subr.bf16.mxu0 0
      %565 = vmatpush2.bf16.msra.mxu0 0
      %566 = vmatprep.subr.bf16.mxu0 0
      %567 = vmatpush2.bf16.msra.mxu0 0
      %568 = vmatprep.subr.bf16.mxu0 0
      %569 = vmatpush2.bf16.msra.mxu0 0
      %570 = vmatprep.subr.bf16.mxu0 0
      %571 = vmatpush2.bf16.msra.mxu0 0
      %572 = vmatprep.subr.bf16.mxu0 0
      %573 = vmatpush2.bf16.msra.mxu0 0
      %574 = vmatprep.subr.bf16.mxu0 0
      %575 = vmatpush2.bf16.msra.mxu0 0
      %576 = vmatprep.subr.bf16.mxu0 0
      %577 = vmatpush2.bf16.msra.mxu0 0
      %578 = vmatprep.subr.bf16.mxu0 0
      %579 = vmatpush2.bf16.msra.mxu0 0
      %580 = vmatprep.mubr.bf16.mxu0 0
      %581 = vmatmul.mubr.bf16.gmra.mxu0 %v546
      %v582 = vpop.f32.mrf.mxu0
      %v583 = vadd.f32 0.0, %v582
      %v584 = vpop.f32.mrf.mxu0
      %v585 = vadd.f32 0.0, %v584
      %v586 = vpop.f32.mrf.mxu0
      %v587 = vpop.f32.mrf.mxu0
      %588 = vdwg.mxu0
      %589 = vmatprep.subr.bf16.mxu0 0
      %590 = vmatpush1.bf16.msra.mxu0 0
      %591 = vmatprep.subr.bf16.mxu0 0
      %592 = vmatpush1.bf16.msra.mxu0 0
      %593 = vmatprep.subr.bf16.mxu0 0
      %594 = vmatpush1.bf16.msra.mxu0 0
      %595 = vmatprep.subr.bf16.mxu0 0
      %596 = vmatpush1.bf16.msra.mxu0 0
      %597 = vmatprep.subr.bf16.mxu0 0
      %598 = vmatpush1.bf16.msra.mxu0 0
      %599 = vmatprep.subr.bf16.mxu0 0
      %600 = vmatpush1.bf16.msra.mxu0 0
      %601 = vmatprep.subr.bf16.mxu0 0
      %602 = vmatpush1.bf16.msra.mxu0 0
      %603 = vmatprep.subr.bf16.mxu0 0
      %604 = vmatpush1.bf16.msra.mxu0 %v538
      %605 = vmatprep.subr.bf16.mxu0 0
      %606 = vmatpush2.bf16.msra.mxu0 0
      %607 = vmatprep.subr.bf16.mxu0 0
      %608 = vmatpush2.bf16.msra.mxu0 0
      %609 = vmatprep.subr.bf16.mxu0 0
      %610 = vmatpush2.bf16.msra.mxu0 0
      %611 = vmatprep.subr.bf16.mxu0 0
      %612 = vmatpush2.bf16.msra.mxu0 0
      %613 = vmatprep.subr.bf16.mxu0 0
      %614 = vmatpush2.bf16.msra.mxu0 0
      %615 = vmatprep.subr.bf16.mxu0 0
      %616 = vmatpush2.bf16.msra.mxu0 0
      %617 = vmatprep.subr.bf16.mxu0 0
      %618 = vmatpush2.bf16.msra.mxu0 0
      %619 = vmatprep.subr.bf16.mxu0 0
      %620 = vmatpush2.bf16.msra.mxu0 0
      %621 = vmatprep.mubr.bf16.mxu0 0
      %622 = vmatmul.mubr.bf16.gmra.mxu0 %v546
      %v623 = vpop.f32.mrf.mxu0
      %v624 = vadd.f32 0.0, %v623
      %v625 = vpop.f32.mrf.mxu0
      %v626 = vpop.f32.mrf.mxu0
      %v627 = vpop.f32.mrf.mxu0
      %628 = vdwg.mxu0
      %v629 = vadd.f32 %v528, %v583
      %v630 = vadd.f32 %v529, %v585
      %v631 = vadd.f32 %v530, %v624
      %s632 = scalar_lea.vmem %s1, 16
      %v633 = vld [vmem:[%s632] sm:$0xf]
      %634 = vrot.lane.b32.xlu0 %v243, 109
      %v635 = vpop.permute.xlu0 %634
      %636 = vrot.lane.b32.xlu0 %v244, 109
      %v637 = vpop.permute.xlu0 %636
      %638 = vrot.lane.b32.xlu0 %v245, 109
      %v639 = vpop.permute.xlu0 %638
      %vm640 = vcmask 891904
      %v641 = vsel %vm640, %v635, %v637
      %v642 = vsel %vm640, %v637, %v639
      %v647 = vsel %vm258, %v633, 0
      %649 = vmatprep.subr.bf16.mxu0 0
      %650 = vmatpush1.bf16.msra.mxu0 0
      %651 = vmatprep.subr.bf16.mxu0 0
      %652 = vmatpush1.bf16.msra.mxu0 0
      %653 = vmatprep.subr.bf16.mxu0 0
      %654 = vmatpush1.bf16.msra.mxu0 0
      %655 = vmatprep.subr.bf16.mxu0 0
      %656 = vmatpush1.bf16.msra.mxu0 0
      %657 = vmatprep.subr.bf16.mxu0 0
      %658 = vmatpush1.bf16.msra.mxu0 0
      %659 = vmatprep.subr.bf16.mxu0 0
      %660 = vmatpush1.bf16.msra.mxu0 0
      %661 = vmatprep.subr.bf16.mxu0 0
      %662 = vmatpush1.bf16.msra.mxu0 0
      %663 = vmatprep.subr.bf16.mxu0 %v642
      %664 = vmatpush1.bf16.msra.mxu0 %v641
      %665 = vmatprep.subr.bf16.mxu0 0
      %666 = vmatpush2.bf16.msra.mxu0 0
      %667 = vmatprep.subr.bf16.mxu0 0
      %668 = vmatpush2.bf16.msra.mxu0 0
      %669 = vmatprep.subr.bf16.mxu0 0
      %670 = vmatpush2.bf16.msra.mxu0 0
      %671 = vmatprep.subr.bf16.mxu0 0
      %672 = vmatpush2.bf16.msra.mxu0 0
      %673 = vmatprep.subr.bf16.mxu0 0
      %674 = vmatpush2.bf16.msra.mxu0 0
      %675 = vmatprep.subr.bf16.mxu0 0
      %676 = vmatpush2.bf16.msra.mxu0 0
      %677 = vmatprep.subr.bf16.mxu0 0
      %678 = vmatpush2.bf16.msra.mxu0 0
      %679 = vmatprep.subr.bf16.mxu0 0
      %680 = vmatpush2.bf16.msra.mxu0 0
      %681 = vmatprep.mubr.bf16.mxu0 0
      %682 = vmatmul.mubr.bf16.gmra.mxu0 %v647
      %v683 = vpop.f32.mrf.mxu0
      %v684 = vadd.f32 0.0, %v683
      %v685 = vpop.f32.mrf.mxu0
      %v686 = vadd.f32 0.0, %v685
      %v687 = vpop.f32.mrf.mxu0
      %v688 = vpop.f32.mrf.mxu0
      %689 = vdwg.mxu0
      %690 = vmatprep.subr.bf16.mxu0 0
      %691 = vmatpush1.bf16.msra.mxu0 0
      %692 = vmatprep.subr.bf16.mxu0 0
      %693 = vmatpush1.bf16.msra.mxu0 0
      %694 = vmatprep.subr.bf16.mxu0 0
      %695 = vmatpush1.bf16.msra.mxu0 0
      %696 = vmatprep.subr.bf16.mxu0 0
      %697 = vmatpush1.bf16.msra.mxu0 0
      %698 = vmatprep.subr.bf16.mxu0 0
      %699 = vmatpush1.bf16.msra.mxu0 0
      %700 = vmatprep.subr.bf16.mxu0 0
      %701 = vmatpush1.bf16.msra.mxu0 0
      %702 = vmatprep.subr.bf16.mxu0 0
      %703 = vmatpush1.bf16.msra.mxu0 0
      %704 = vmatprep.subr.bf16.mxu0 0
      %705 = vmatpush1.bf16.msra.mxu0 %v639
      %706 = vmatprep.subr.bf16.mxu0 0
      %707 = vmatpush2.bf16.msra.mxu0 0
      %708 = vmatprep.subr.bf16.mxu0 0
      %709 = vmatpush2.bf16.msra.mxu0 0
      %710 = vmatprep.subr.bf16.mxu0 0
      %711 = vmatpush2.bf16.msra.mxu0 0
      %712 = vmatprep.subr.bf16.mxu0 0
      %713 = vmatpush2.bf16.msra.mxu0 0
      %714 = vmatprep.subr.bf16.mxu0 0
      %715 = vmatpush2.bf16.msra.mxu0 0
      %716 = vmatprep.subr.bf16.mxu0 0
      %717 = vmatpush2.bf16.msra.mxu0 0
      %718 = vmatprep.subr.bf16.mxu0 0
      %719 = vmatpush2.bf16.msra.mxu0 0
      %720 = vmatprep.subr.bf16.mxu0 0
      %721 = vmatpush2.bf16.msra.mxu0 0
      %722 = vmatprep.mubr.bf16.mxu0 0
      %723 = vmatmul.mubr.bf16.gmra.mxu0 %v647
      %v724 = vpop.f32.mrf.mxu0
      %v725 = vadd.f32 0.0, %v724
      %v726 = vpop.f32.mrf.mxu0
      %v727 = vpop.f32.mrf.mxu0
      %v728 = vpop.f32.mrf.mxu0
      %729 = vdwg.mxu0
      %v730 = vadd.f32 %v629, %v684
      %v731 = vadd.f32 %v630, %v686
      %v732 = vadd.f32 %v631, %v725
      %s733 = scalar_lea.vmem %s1, 20
      %v734 = vld [vmem:[%s733] sm:$0xf]
      %735 = vrot.lane.b32.xlu0 %v243, 108
      %v736 = vpop.permute.xlu0 %735
      %737 = vrot.lane.b32.xlu0 %v244, 108
      %v738 = vpop.permute.xlu0 %737
      %739 = vrot.lane.b32.xlu0 %v245, 108
      %v740 = vpop.permute.xlu0 %739
      %vm741 = vcmask 883712
      %v742 = vsel %vm741, %v736, %v738
      %v743 = vsel %vm741, %v738, %v740
      %v748 = vsel %vm258, %v734, 0
      %750 = vmatprep.subr.bf16.mxu0 0
      %751 = vmatpush1.bf16.msra.mxu0 0
      %752 = vmatprep.subr.bf16.mxu0 0
      %753 = vmatpush1.bf16.msra.mxu0 0
      %754 = vmatprep.subr.bf16.mxu0 0
      %755 = vmatpush1.bf16.msra.mxu0 0
      %756 = vmatprep.subr.bf16.mxu0 0
      %757 = vmatpush1.bf16.msra.mxu0 0
      %758 = vmatprep.subr.bf16.mxu0 0
      %759 = vmatpush1.bf16.msra.mxu0 0
      %760 = vmatprep.subr.bf16.mxu0 0
      %761 = vmatpush1.bf16.msra.mxu0 0
      %762 = vmatprep.subr.bf16.mxu0 0
      %763 = vmatpush1.bf16.msra.mxu0 0
      %764 = vmatprep.subr.bf16.mxu0 %v743
      %765 = vmatpush1.bf16.msra.mxu0 %v742
      %766 = vmatprep.subr.bf16.mxu0 0
      %767 = vmatpush2.bf16.msra.mxu0 0
      %768 = vmatprep.subr.bf16.mxu0 0
      %769 = vmatpush2.bf16.msra.mxu0 0
      %770 = vmatprep.subr.bf16.mxu0 0
      %771 = vmatpush2.bf16.msra.mxu0 0
      %772 = vmatprep.subr.bf16.mxu0 0
      %773 = vmatpush2.bf16.msra.mxu0 0
      %774 = vmatprep.subr.bf16.mxu0 0
      %775 = vmatpush2.bf16.msra.mxu0 0
      %776 = vmatprep.subr.bf16.mxu0 0
      %777 = vmatpush2.bf16.msra.mxu0 0
      %778 = vmatprep.subr.bf16.mxu0 0
      %779 = vmatpush2.bf16.msra.mxu0 0
      %780 = vmatprep.subr.bf16.mxu0 0
      %781 = vmatpush2.bf16.msra.mxu0 0
      %782 = vmatprep.mubr.bf16.mxu0 0
      %783 = vmatmul.mubr.bf16.gmra.mxu0 %v748
      %v784 = vpop.f32.mrf.mxu0
      %v785 = vadd.f32 0.0, %v784
      %v786 = vpop.f32.mrf.mxu0
      %v787 = vadd.f32 0.0, %v786
      %v788 = vpop.f32.mrf.mxu0
      %v789 = vpop.f32.mrf.mxu0
      %790 = vdwg.mxu0
      %791 = vmatprep.subr.bf16.mxu0 0
      %792 = vmatpush1.bf16.msra.mxu0 0
      %793 = vmatprep.subr.bf16.mxu0 0
      %794 = vmatpush1.bf16.msra.mxu0 0
      %795 = vmatprep.subr.bf16.mxu0 0
      %796 = vmatpush1.bf16.msra.mxu0 0
      %797 = vmatprep.subr.bf16.mxu0 0
      %798 = vmatpush1.bf16.msra.mxu0 0
      %799 = vmatprep.subr.bf16.mxu0 0
      %800 = vmatpush1.bf16.msra.mxu0 0
      %801 = vmatprep.subr.bf16.mxu0 0
      %802 = vmatpush1.bf16.msra.mxu0 0
      %803 = vmatprep.subr.bf16.mxu0 0
      %804 = vmatpush1.bf16.msra.mxu0 0
      %805 = vmatprep.subr.bf16.mxu0 0
      %806 = vmatpush1.bf16.msra.mxu0 %v740
      %807 = vmatprep.subr.bf16.mxu0 0
      %808 = vmatpush2.bf16.msra.mxu0 0
      %809 = vmatprep.subr.bf16.mxu0 0
      %810 = vmatpush2.bf16.msra.mxu0 0
      %811 = vmatprep.subr.bf16.mxu0 0
      %812 = vmatpush2.bf16.msra.mxu0 0
      %813 = vmatprep.subr.bf16.mxu0 0
      %814 = vmatpush2.bf16.msra.mxu0 0
      %815 = vmatprep.subr.bf16.mxu0 0
      %816 = vmatpush2.bf16.msra.mxu0 0
      %817 = vmatprep.subr.bf16.mxu0 0
      %818 = vmatpush2.bf16.msra.mxu0 0
      %819 = vmatprep.subr.bf16.mxu0 0
      %820 = vmatpush2.bf16.msra.mxu0 0
      %821 = vmatprep.subr.bf16.mxu0 0
      %822 = vmatpush2.bf16.msra.mxu0 0
      %823 = vmatprep.mubr.bf16.mxu0 0
      %824 = vmatmul.mubr.bf16.gmra.mxu0 %v748
      %v825 = vpop.f32.mrf.mxu0
      %v826 = vadd.f32 0.0, %v825
      %v827 = vpop.f32.mrf.mxu0
      %v828 = vpop.f32.mrf.mxu0
      %v829 = vpop.f32.mrf.mxu0
      %830 = vdwg.mxu0
      %v831 = vadd.f32 %v730, %v785
      %v832 = vadd.f32 %v731, %v787
      %v833 = vadd.f32 %v732, %v826
      %s834 = scalar_lea.vmem %s1, 24
      %v835 = vld [vmem:[%s834] sm:$0xf]
      %836 = vrot.lane.b32.xlu0 %v243, 92
      %v837 = vpop.permute.xlu0 %836
      %838 = vrot.lane.b32.xlu0 %v244, 92
      %v839 = vpop.permute.xlu0 %838
      %840 = vrot.lane.b32.xlu0 %v245, 92
      %v841 = vpop.permute.xlu0 %840
      %vm842 = vcmask 752640
      %v843 = vsel %vm842, %v837, %v839
      %v844 = vsel %vm842, %v839, %v841
      %v849 = vsel %vm258, %v835, 0
      %851 = vmatprep.subr.bf16.mxu0 0
      %852 = vmatpush1.bf16.msra.mxu0 0
      %853 = vmatprep.subr.bf16.mxu0 0
      %854 = vmatpush1.bf16.msra.mxu0 0
      %855 = vmatprep.subr.bf16.mxu0 0
      %856 = vmatpush1.bf16.msra.mxu0 0
      %857 = vmatprep.subr.bf16.mxu0 0
      %858 = vmatpush1.bf16.msra.mxu0 0
      %859 = vmatprep.subr.bf16.mxu0 0
      %860 = vmatpush1.bf16.msra.mxu0 0
      %861 = vmatprep.subr.bf16.mxu0 0
      %862 = vmatpush1.bf16.msra.mxu0 0
      %863 = vmatprep.subr.bf16.mxu0 0
      %864 = vmatpush1.bf16.msra.mxu0 0
      %865 = vmatprep.subr.bf16.mxu0 %v844
      %866 = vmatpush1.bf16.msra.mxu0 %v843
      %867 = vmatprep.subr.bf16.mxu0 0
      %868 = vmatpush2.bf16.msra.mxu0 0
      %869 = vmatprep.subr.bf16.mxu0 0
      %870 = vmatpush2.bf16.msra.mxu0 0
      %871 = vmatprep.subr.bf16.mxu0 0
      %872 = vmatpush2.bf16.msra.mxu0 0
      %873 = vmatprep.subr.bf16.mxu0 0
      %874 = vmatpush2.bf16.msra.mxu0 0
      %875 = vmatprep.subr.bf16.mxu0 0
      %876 = vmatpush2.bf16.msra.mxu0 0
      %877 = vmatprep.subr.bf16.mxu0 0
      %878 = vmatpush2.bf16.msra.mxu0 0
      %879 = vmatprep.subr.bf16.mxu0 0
      %880 = vmatpush2.bf16.msra.mxu0 0
      %881 = vmatprep.subr.bf16.mxu0 0
      %882 = vmatpush2.bf16.msra.mxu0 0
      %883 = vmatprep.mubr.bf16.mxu0 0
      %884 = vmatmul.mubr.bf16.gmra.mxu0 %v849
      %v885 = vpop.f32.mrf.mxu0
      %v886 = vadd.f32 0.0, %v885
      %v887 = vpop.f32.mrf.mxu0
      %v888 = vadd.f32 0.0, %v887
      %v889 = vpop.f32.mrf.mxu0
      %v890 = vpop.f32.mrf.mxu0
      %891 = vdwg.mxu0
      %892 = vmatprep.subr.bf16.mxu0 0
      %893 = vmatpush1.bf16.msra.mxu0 0
      %894 = vmatprep.subr.bf16.mxu0 0
      %895 = vmatpush1.bf16.msra.mxu0 0
      %896 = vmatprep.subr.bf16.mxu0 0
      %897 = vmatpush1.bf16.msra.mxu0 0
      %898 = vmatprep.subr.bf16.mxu0 0
      %899 = vmatpush1.bf16.msra.mxu0 0
      %900 = vmatprep.subr.bf16.mxu0 0
      %901 = vmatpush1.bf16.msra.mxu0 0
      %902 = vmatprep.subr.bf16.mxu0 0
      %903 = vmatpush1.bf16.msra.mxu0 0
      %904 = vmatprep.subr.bf16.mxu0 0
      %905 = vmatpush1.bf16.msra.mxu0 0
      %906 = vmatprep.subr.bf16.mxu0 0
      %907 = vmatpush1.bf16.msra.mxu0 %v841
      %908 = vmatprep.subr.bf16.mxu0 0
      %909 = vmatpush2.bf16.msra.mxu0 0
      %910 = vmatprep.subr.bf16.mxu0 0
      %911 = vmatpush2.bf16.msra.mxu0 0
      %912 = vmatprep.subr.bf16.mxu0 0
      %913 = vmatpush2.bf16.msra.mxu0 0
      %914 = vmatprep.subr.bf16.mxu0 0
      %915 = vmatpush2.bf16.msra.mxu0 0
      %916 = vmatprep.subr.bf16.mxu0 0
      %917 = vmatpush2.bf16.msra.mxu0 0
      %918 = vmatprep.subr.bf16.mxu0 0
      %919 = vmatpush2.bf16.msra.mxu0 0
      %920 = vmatprep.subr.bf16.mxu0 0
      %921 = vmatpush2.bf16.msra.mxu0 0
      %922 = vmatprep.subr.bf16.mxu0 0
      %923 = vmatpush2.bf16.msra.mxu0 0
      %924 = vmatprep.mubr.bf16.mxu0 0
      %925 = vmatmul.mubr.bf16.gmra.mxu0 %v849
      %v926 = vpop.f32.mrf.mxu0
      %v927 = vadd.f32 0.0, %v926
      %v928 = vpop.f32.mrf.mxu0
      %v929 = vpop.f32.mrf.mxu0
      %v930 = vpop.f32.mrf.mxu0
      %931 = vdwg.mxu0
      %v932 = vadd.f32 %v831, %v886
      %v933 = vadd.f32 %v832, %v888
      %v934 = vadd.f32 %v833, %v927
      %s935 = scalar_lea.vmem %s1, 28
      %v936 = vld [vmem:[%s935] sm:$0xf]
      %937 = vrot.lane.b32.xlu0 %v243, 91
      %v938 = vpop.permute.xlu0 %937
      %939 = vrot.lane.b32.xlu0 %v244, 91
      %v940 = vpop.permute.xlu0 %939
      %941 = vrot.lane.b32.xlu0 %v245, 91
      %v942 = vpop.permute.xlu0 %941
      %vm943 = vcmask 744448
      %v944 = vsel %vm943, %v938, %v940
      %v945 = vsel %vm943, %v940, %v942
      %v950 = vsel %vm258, %v936, 0
      %952 = vmatprep.subr.bf16.mxu0 0
      %953 = vmatpush1.bf16.msra.mxu0 0
      %954 = vmatprep.subr.bf16.mxu0 0
      %955 = vmatpush1.bf16.msra.mxu0 0
      %956 = vmatprep.subr.bf16.mxu0 0
      %957 = vmatpush1.bf16.msra.mxu0 0
      %958 = vmatprep.subr.bf16.mxu0 0
      %959 = vmatpush1.bf16.msra.mxu0 0
      %960 = vmatprep.subr.bf16.mxu0 0
      %961 = vmatpush1.bf16.msra.mxu0 0
      %962 = vmatprep.subr.bf16.mxu0 0
      %963 = vmatpush1.bf16.msra.mxu0 0
      %964 = vmatprep.subr.bf16.mxu0 0
      %965 = vmatpush1.bf16.msra.mxu0 0
      %966 = vmatprep.subr.bf16.mxu0 %v945
      %967 = vmatpush1.bf16.msra.mxu0 %v944
      %968 = vmatprep.subr.bf16.mxu0 0
      %969 = vmatpush2.bf16.msra.mxu0 0
      %970 = vmatprep.subr.bf16.mxu0 0
      %971 = vmatpush2.bf16.msra.mxu0 0
      %972 = vmatprep.subr.bf16.mxu0 0
      %973 = vmatpush2.bf16.msra.mxu0 0
      %974 = vmatprep.subr.bf16.mxu0 0
      %975 = vmatpush2.bf16.msra.mxu0 0
      %976 = vmatprep.subr.bf16.mxu0 0
      %977 = vmatpush2.bf16.msra.mxu0 0
      %978 = vmatprep.subr.bf16.mxu0 0
      %979 = vmatpush2.bf16.msra.mxu0 0
      %980 = vmatprep.subr.bf16.mxu0 0
      %981 = vmatpush2.bf16.msra.mxu0 0
      %982 = vmatprep.subr.bf16.mxu0 0
      %983 = vmatpush2.bf16.msra.mxu0 0
      %984 = vmatprep.mubr.bf16.mxu0 0
      %985 = vmatmul.mubr.bf16.gmra.mxu0 %v950
      %v986 = vpop.f32.mrf.mxu0
      %v987 = vadd.f32 0.0, %v986
      %v988 = vpop.f32.mrf.mxu0
      %v989 = vadd.f32 0.0, %v988
      %v990 = vpop.f32.mrf.mxu0
      %v991 = vpop.f32.mrf.mxu0
      %992 = vdwg.mxu0
      %993 = vmatprep.subr.bf16.mxu0 0
      %994 = vmatpush1.bf16.msra.mxu0 0
      %995 = vmatprep.subr.bf16.mxu0 0
      %996 = vmatpush1.bf16.msra.mxu0 0
      %997 = vmatprep.subr.bf16.mxu0 0
      %998 = vmatpush1.bf16.msra.mxu0 0
      %999 = vmatprep.subr.bf16.mxu0 0
      %1000 = vmatpush1.bf16.msra.mxu0 0
      %1001 = vmatprep.subr.bf16.mxu0 0
      %1002 = vmatpush1.bf16.msra.mxu0 0
      %1003 = vmatprep.subr.bf16.mxu0 0
      %1004 = vmatpush1.bf16.msra.mxu0 0
      %1005 = vmatprep.subr.bf16.mxu0 0
      %1006 = vmatpush1.bf16.msra.mxu0 0
      %1007 = vmatprep.subr.bf16.mxu0 0
      %1008 = vmatpush1.bf16.msra.mxu0 %v942
      %1009 = vmatprep.subr.bf16.mxu0 0
      %1010 = vmatpush2.bf16.msra.mxu0 0
      %1011 = vmatprep.subr.bf16.mxu0 0
      %1012 = vmatpush2.bf16.msra.mxu0 0
      %1013 = vmatprep.subr.bf16.mxu0 0
      %1014 = vmatpush2.bf16.msra.mxu0 0
      %1015 = vmatprep.subr.bf16.mxu0 0
      %1016 = vmatpush2.bf16.msra.mxu0 0
      %1017 = vmatprep.subr.bf16.mxu0 0
      %1018 = vmatpush2.bf16.msra.mxu0 0
      %1019 = vmatprep.subr.bf16.mxu0 0
      %1020 = vmatpush2.bf16.msra.mxu0 0
      %1021 = vmatprep.subr.bf16.mxu0 0
      %1022 = vmatpush2.bf16.msra.mxu0 0
      %1023 = vmatprep.subr.bf16.mxu0 0
      %1024 = vmatpush2.bf16.msra.mxu0 0
      %1025 = vmatprep.mubr.bf16.mxu0 0
      %1026 = vmatmul.mubr.bf16.gmra.mxu0 %v950
      %v1027 = vpop.f32.mrf.mxu0
      %v1028 = vadd.f32 0.0, %v1027
      %v1029 = vpop.f32.mrf.mxu0
      %v1030 = vpop.f32.mrf.mxu0
      %v1031 = vpop.f32.mrf.mxu0
      %1032 = vdwg.mxu0
      %v1033 = vadd.f32 %v932, %v987
      %v1034 = vadd.f32 %v933, %v989
      %v1035 = vadd.f32 %v934, %v1028
      %s1036 = scalar_lea.vmem %s1, 32
      %v1037 = vld [vmem:[%s1036] sm:$0xf]
      %1038 = vrot.lane.b32.xlu0 %v243, 90
      %v1039 = vpop.permute.xlu0 %1038
      %1040 = vrot.lane.b32.xlu0 %v244, 90
      %v1041 = vpop.permute.xlu0 %1040
      %1042 = vrot.lane.b32.xlu0 %v245, 90
      %v1043 = vpop.permute.xlu0 %1042
      %vm1044 = vcmask 736256
      %v1045 = vsel %vm1044, %v1039, %v1041
      %v1046 = vsel %vm1044, %v1041, %v1043
      %v1051 = vsel %vm258, %v1037, 0
      %1053 = vmatprep.subr.bf16.mxu0 0
      %1054 = vmatpush1.bf16.msra.mxu0 0
      %1055 = vmatprep.subr.bf16.mxu0 0
      %1056 = vmatpush1.bf16.msra.mxu0 0
      %1057 = vmatprep.subr.bf16.mxu0 0
      %1058 = vmatpush1.bf16.msra.mxu0 0
      %1059 = vmatprep.subr.bf16.mxu0 0
      %1060 = vmatpush1.bf16.msra.mxu0 0
      %1061 = vmatprep.subr.bf16.mxu0 0
      %1062 = vmatpush1.bf16.msra.mxu0 0
      %1063 = vmatprep.subr.bf16.mxu0 0
      %1064 = vmatpush1.bf16.msra.mxu0 0
      %1065 = vmatprep.subr.bf16.mxu0 0
      %1066 = vmatpush1.bf16.msra.mxu0 0
      %1067 = vmatprep.subr.bf16.mxu0 %v1046
      %1068 = vmatpush1.bf16.msra.mxu0 %v1045
      %1069 = vmatprep.subr.bf16.mxu0 0
      %1070 = vmatpush2.bf16.msra.mxu0 0
      %1071 = vmatprep.subr.bf16.mxu0 0
      %1072 = vmatpush2.bf16.msra.mxu0 0
      %1073 = vmatprep.subr.bf16.mxu0 0
      %1074 = vmatpush2.bf16.msra.mxu0 0
      %1075 = vmatprep.subr.bf16.mxu0 0
      %1076 = vmatpush2.bf16.msra.mxu0 0
      %1077 = vmatprep.subr.bf16.mxu0 0
      %1078 = vmatpush2.bf16.msra.mxu0 0
      %1079 = vmatprep.subr.bf16.mxu0 0
      %1080 = vmatpush2.bf16.msra.mxu0 0
      %1081 = vmatprep.subr.bf16.mxu0 0
      %1082 = vmatpush2.bf16.msra.mxu0 0
      %1083 = vmatprep.subr.bf16.mxu0 0
      %1084 = vmatpush2.bf16.msra.mxu0 0
      %1085 = vmatprep.mubr.bf16.mxu0 0
      %1086 = vmatmul.mubr.bf16.gmra.mxu0 %v1051
      %v1087 = vpop.f32.mrf.mxu0
      %v1088 = vadd.f32 0.0, %v1087
      %v1089 = vpop.f32.mrf.mxu0
      %v1090 = vadd.f32 0.0, %v1089
      %v1091 = vpop.f32.mrf.mxu0
      %v1092 = vpop.f32.mrf.mxu0
      %1093 = vdwg.mxu0
      %1094 = vmatprep.subr.bf16.mxu0 0
      %1095 = vmatpush1.bf16.msra.mxu0 0
      %1096 = vmatprep.subr.bf16.mxu0 0
      %1097 = vmatpush1.bf16.msra.mxu0 0
      %1098 = vmatprep.subr.bf16.mxu0 0
      %1099 = vmatpush1.bf16.msra.mxu0 0
      %1100 = vmatprep.subr.bf16.mxu0 0
      %1101 = vmatpush1.bf16.msra.mxu0 0
      %1102 = vmatprep.subr.bf16.mxu0 0
      %1103 = vmatpush1.bf16.msra.mxu0 0
      %1104 = vmatprep.subr.bf16.mxu0 0
      %1105 = vmatpush1.bf16.msra.mxu0 0
      %1106 = vmatprep.subr.bf16.mxu0 0
      %1107 = vmatpush1.bf16.msra.mxu0 0
      %1108 = vmatprep.subr.bf16.mxu0 0
      %1109 = vmatpush1.bf16.msra.mxu0 %v1043
      %1110 = vmatprep.subr.bf16.mxu0 0
      %1111 = vmatpush2.bf16.msra.mxu0 0
      %1112 = vmatprep.subr.bf16.mxu0 0
      %1113 = vmatpush2.bf16.msra.mxu0 0
      %1114 = vmatprep.subr.bf16.mxu0 0
      %1115 = vmatpush2.bf16.msra.mxu0 0
      %1116 = vmatprep.subr.bf16.mxu0 0
      %1117 = vmatpush2.bf16.msra.mxu0 0
      %1118 = vmatprep.subr.bf16.mxu0 0
      %1119 = vmatpush2.bf16.msra.mxu0 0
      %1120 = vmatprep.subr.bf16.mxu0 0
      %1121 = vmatpush2.bf16.msra.mxu0 0
      %1122 = vmatprep.subr.bf16.mxu0 0
      %1123 = vmatpush2.bf16.msra.mxu0 0
      %1124 = vmatprep.subr.bf16.mxu0 0
      %1125 = vmatpush2.bf16.msra.mxu0 0
      %1126 = vmatprep.mubr.bf16.mxu0 0
      %1127 = vmatmul.mubr.bf16.gmra.mxu0 %v1051
      %v1128 = vpop.f32.mrf.mxu0
      %v1129 = vadd.f32 0.0, %v1128
      %v1130 = vpop.f32.mrf.mxu0
      %v1131 = vpop.f32.mrf.mxu0
      %v1132 = vpop.f32.mrf.mxu0
      %1133 = vdwg.mxu0
      %v1134 = vadd.f32 %v1033, %v1088
      %v1135 = vadd.f32 %v1034, %v1090
      %v1136 = vadd.f32 %v1035, %v1129
      %v1137 = vld [vmem:[%s2] sm:$0x7]
      %v1139 = vlaneseq
      %v1140 = vshrl.u32 %v1139, 7
      %v1141 = vsub.s32 0, %v1140
      %v1142 = vrot.slane %v1137, %v1141
      %v1143 = vlaneseq
      %v1144 = vshrl.u32 %v1143, 7
      %v1145 = vsub.s32 1, %v1144
      %v1146 = vrot.slane %v1137, %v1145
      %v1147 = vlaneseq
      %v1148 = vshrl.u32 %v1147, 7
      %v1149 = vsub.s32 2, %v1148
      %v1150 = vrot.slane %v1137, %v1149
      %v1154 = vmul.f32 %v1134, %v1142
      %v1155 = vmul.f32 %v1135, %v1146
      %v1156 = vmul.f32 %v1136, %v1150
      %v1157 = vadd.f32 %v1154, %v1155
      %vm1158 = vcmask 261120
      %v1159 = vsel %vm1158, %v1156, 0.0
      %v1160 = vadd.f32 %v1157, %v1159
      %1161 = vadd.xlane.f32.xlu0 %v1160
      %v1162 = vpop.xlane.xlu0 %1161
      %v1163 = vmul.f32 %v1162, 0.00390625
      %v1164 = vsub.f32 %v1134, %v1163
      %v1165 = vsub.f32 %v1135, %v1163
      %v1166 = vsub.f32 %v1136, %v1163
      %v1167 = vmul.f32 %v1164, %v1142
      %v1168 = vmul.f32 %v1165, %v1146
      %v1169 = vmul.f32 %v1166, %v1150
      %v1170 = vmul.f32 %v1167, %v1167
      %v1171 = vmul.f32 %v1168, %v1168
      %v1172 = vmul.f32 %v1169, %v1169
      %v1173 = vadd.f32 %v1170, %v1171
      %v1174 = vsel %vm1158, %v1172, 0.0
      %v1175 = vadd.f32 %v1173, %v1174
      %1176 = vadd.xlane.f32.xlu0 %v1175
      %v1177 = vpop.xlane.xlu0 %1176
      %v1178 = vmul.f32 %v1177, 0.00390625
      %v1179 = vadd.f32 %v1178, 1e-05
      %v1180 = vrsqrt.pop %v1179
      %v1181 = vmul.f32 %v1164, %v1180
      %v1182 = vmul.f32 %v1165, %v1180
      %v1183 = vmul.f32 %v1166, %v1180
      %v1184 = vld [vmem:[%s3] sm:$0xff]
      %1186 = vset.pattern.permute.xlu0 0
      %1187 = vperm.xlu0 %1186, %v1184
      %v1188 = vpop.permute.xlu0 %1187
      %v1190 = vmul.f32 %v1181, %v1188
      %v1191 = vmul.f32 %v1182, %v1188
      %v1192 = vmul.f32 %v1183, %v1188
      %v1193 = vld [vmem:[%s4] sm:$0xff]
      %1195 = vset.pattern.permute.xlu0 0
      %1196 = vperm.xlu0 %1195, %v1193
      %v1197 = vpop.permute.xlu0 %1196
      %v1199 = vadd.f32 %v1190, %v1197
      %v1200 = vadd.f32 %v1191, %v1197
      %v1201 = vadd.f32 %v1192, %v1197
      %vm1202 = vcmp.ge.f32.partialorder %v1199, 0.0
      %vm1203 = vcmp.ge.f32.partialorder %v1200, 0.0
      %vm1204 = vcmp.ge.f32.partialorder %v1201, 0.0
      %v1205 = vmul.f32 %v1199, 0.2
      %v1206 = vmul.f32 %v1200, 0.2
      %v1207 = vmul.f32 %v1201, 0.2
      %v1208 = vsel %vm1202, %v1199, %v1205
      %v1209 = vsel %vm1203, %v1200, %v1206
      %v1210 = vsel %vm1204, %v1201, %v1207
      %v1211 = vpack.c.bf16 %v1208, %v1208
      %v1212 = vpack.c.bf16 %v1209, %v1209
      %v1213 = vpack.c.bf16 %v1210, %v1210
      %v1217 = vunpack.c.l.b16 %v1211
      %v1218 = vunpack.c.l.b16 %v1212
      %v1219 = vunpack.c.l.b16 %v1213
      %v1220 = vpack.c.b16 %v1218, %v1217
      %v1221 = vpack.c.b16 %v1219, %v1219
      %1224 = vst [vmem:[%s224] sm:$0xff] %v1220
      %vm1225 = vcmask 257024
      %1226 = vst.msk [vmem:[%s224 + $0x8] sm:$0xf] %vm1225, %v1221
      %p1227 = scmp.lt.s32.totalorder %s16, 1
      %s1228 = scalar_select %p1227, %s16, 1
      %s1229 = smul.addr %s1228, 3
      %s1230 = smul.addr %s1229, 4
      %s1231 = scalar_lea.vmem %s5, %s1230
      // Predicated region
      $region41: #{generator_model_forward.16} parent=39 // pred_check
        %p1232 = pneg %p144
      $region42: #{generator_model_forward.16} parent=39 // pred_check_branch
        %1234 = sbr.rel (%p1232) target = $region44
      $region43: #{generator_model_forward.16} parent=39 // pred_region
        _
      $region44: #{generator_model_forward.16} parent=39 // pred_fallthru
        _
    $region40: #{generator_model_forward.16} parent=5 // pred_fallthru
      _
    %p1235 = scmp.le.s32.totalorder 2, %s11
    // Predicated region
    $region45: #{generator_model_forward.16} parent=5 // pred_check
      %p1236 = pneg %p1235
    $region46: #{generator_model_forward.16} parent=5 // pred_check_branch
      %1238 = sbr.rel (%p1236) target = $region48
    $region47: #{generator_model_forward.16} parent=5 // pred_region
      %s1239 = ssub.s32 %s11, 2
      // Predicated region
      $region49: #{generator_model_forward.16} parent=47 // pred_check
        %p1240 = pneg %p150
      $region50: #{generator_model_forward.16} parent=47 // pred_check_branch
        %1242 = sbr.rel (%p1240) target = $region52
      $region51: #{generator_model_forward.16} parent=47 // pred_region
        %p1243 = scmp.lt.s32.totalorder %s17, 1
        %s1244 = scalar_select %p1243, %s17, 1
        %s1245 = smul.addr %s1244, 3
        %s1246 = smul.addr %s1245, 4
        %s1247 = scalar_lea.vmem %s5, %s1246
      $region52: #{generator_model_forward.16} parent=47 // pred_fallthru
        _
    $region48: #{generator_model_forward.16} parent=5 // pred_fallthru
      _
  $region6: #{generator_model_forward.16} parent=0 // loop_footer
    %s15 = sadd.s32 1, %s11
  $region7: #{generator_model_forward.16} parent=0 // loop_footer_branch
    %10 = sbr.rel target = $region3
  $region8: #{generator_model_forward.16} parent=0 // loop_exit
    _

// kernel: generator_model_forward.14
$region0: #{generator_model_forward.14}
  #allocation0 [shape = 'u32[]', space=smem, size = 0x4, offset = 0x4, fixed_abs, tag = 'smem constant byte address 0x4 - core index']
  #allocation1 [shape = 'u32[144,128]{1,0:T(1,128)}', space=vmem, size = 0x12000, scoped, tag = 'internal scratch']
  %s0 = inlined_call_operand.vmem [shape: bf16[2,16,326], index: 0, kind: input, shape index: {}]
  %s1 = inlined_call_operand.vmem [shape: bf16[9,3,16], index: 1, kind: input, shape index: {}]
  %s2 = inlined_call_operand.vmem [shape: f32[3,1], index: 2, kind: input, shape index: {}]
  %s3 = inlined_call_operand.vmem [shape: f32[2,3,288], index: 3, kind: output, shape index: {}]
  %s4 = sld [smem:[#allocation0]]
  $region45: #{generator_model_forward.14} parent=0
    _
  %s6 = ssub.s32 1, %s4
  %s7 = scalar_select 0, %s6, %s4
  loop: start=0, step=1, limit=4
  $region2: #{generator_model_forward.14} parent=0 // loop_pre_header
    _
  $region3: #{generator_model_forward.14} parent=0 // loop_header
    %s9 = sphi 0, %s13
    %p10 = scmp.ge.s32.totalorder %s9, 4
    %s19 = sphi 0, %s21
    %s22 = sphi 0, %s19
    %s23 = sphi 0, %s22
    %s39 = sphi 0, %s23
    %s43 = sphi 0, %s43
    %s45 = sphi 0, %s43
    %s46 = sphi 0, %s45
    %s60 = sphi 0, %s46
    %s64 = sphi 0, %s64
    %s66 = sphi 0, %s64
    %s67 = sphi 0, %s66
    %s81 = sphi 0, %s67
    %s87 = sphi 0, %s89
    %s90 = sphi 0, %s87
    %s91 = sphi 0, %s90
    %s107 = sphi 0, %s91
  $region4: #{generator_model_forward.14} parent=0 // loop_header_branch
    %12 = sbr.rel (%p10) target = $region8
  $region5: #{generator_model_forward.14} parent=0 // loop_body
    %s14 = ssub.s32 %s9, 1
    %s15 = ssub.s32 %s9, 2
    %s16 = sadd.s32 %s9, 1
    %s17 = ssub.s32 %s9, %s16
    %p18 = scmp.eq.s32.totalorder %s17, 0
    %s20 = sadd.s32 %s19, 1
    %s21 = scalar_select %p18, %s19, %s20
    %p24 = pneg %p18
    %p25 = scmp.eq.s32.totalorder %s9, 1
    %p26 = por %p24, %p25
    %p27 = scmp.ne.s32.totalorder %s19, %s22
    %p28 = scmp.eq.s32.totalorder %s9, 0
    %p29 = por %p27, %p28
    %p30 = scmp.ne.s32.totalorder %s19, %s22
    %p31 = scmp.eq.s32.totalorder %s14, 1
    %p32 = por %p30, %p31
    %p33 = scmp.ne.s32.totalorder %s22, %s23
    %p34 = scmp.eq.s32.totalorder %s14, 0
    %p35 = por %p33, %p34
    %p36 = scmp.ne.s32.totalorder %s22, %s23
    %p37 = scmp.eq.s32.totalorder %s15, 1
    %p38 = por %p36, %p37
    %p40 = scmp.ne.s32.totalorder %s23, %s39
    %p41 = scmp.eq.s32.totalorder %s15, 0
    %p42 = por %p40, %p41
    %s44 = sadd.s32 %s43, 1
    %p47 = scmp.eq.s32.totalorder %s9, 1
    %p48 = scmp.ne.s32.totalorder %s43, %s45
    %p49 = scmp.eq.s32.totalorder %s9, 0
    %p50 = por %p48, %p49
    %p51 = scmp.ne.s32.totalorder %s43, %s45
    %p52 = scmp.eq.s32.totalorder %s14, 1
    %p53 = por %p51, %p52
    %p54 = scmp.ne.s32.totalorder %s45, %s46
    %p55 = scmp.eq.s32.totalorder %s14, 0
    %p56 = por %p54, %p55
    %p57 = scmp.ne.s32.totalorder %s45, %s46
    %p58 = scmp.eq.s32.totalorder %s15, 1
    %p59 = por %p57, %p58
    %p61 = scmp.ne.s32.totalorder %s46, %s60
    %p62 = scmp.eq.s32.totalorder %s15, 0
    %p63 = por %p61, %p62
    %s65 = sadd.s32 %s64, 1
    %p68 = scmp.eq.s32.totalorder %s9, 1
    %p69 = scmp.ne.s32.totalorder %s64, %s66
    %p70 = scmp.eq.s32.totalorder %s9, 0
    %p71 = por %p69, %p70
    %p72 = scmp.ne.s32.totalorder %s64, %s66
    %p73 = scmp.eq.s32.totalorder %s14, 1
    %p74 = por %p72, %p73
    %p75 = scmp.ne.s32.totalorder %s66, %s67
    %p76 = scmp.eq.s32.totalorder %s14, 0
    %p77 = por %p75, %p76
    %p78 = scmp.ne.s32.totalorder %s66, %s67
    %p79 = scmp.eq.s32.totalorder %s15, 1
    %p80 = por %p78, %p79
    %p82 = scmp.ne.s32.totalorder %s67, %s81
    %p83 = scmp.eq.s32.totalorder %s15, 0
    %p84 = por %p82, %p83
    %s85 = ssub.s32 %s9, %s16
    %p86 = scmp.eq.s32.totalorder %s85, 0
    %s88 = sadd.s32 %s87, 1
    %s89 = scalar_select %p86, %s87, %s88
    %p92 = pneg %p86
    %p93 = scmp.eq.s32.totalorder %s9, 1
    %p94 = por %p92, %p93
    %p95 = scmp.ne.s32.totalorder %s87, %s90
    %p96 = scmp.eq.s32.totalorder %s9, 0
    %p97 = por %p95, %p96
    %p98 = scmp.ne.s32.totalorder %s87, %s90
    %p99 = scmp.eq.s32.totalorder %s14, 1
    %p100 = por %p98, %p99
    %p101 = scmp.ne.s32.totalorder %s90, %s91
    %p102 = scmp.eq.s32.totalorder %s14, 0
    %p103 = por %p101, %p102
    %p104 = scmp.ne.s32.totalorder %s90, %s91
    %p105 = scmp.eq.s32.totalorder %s15, 1
    %p106 = por %p104, %p105
    %p108 = scmp.ne.s32.totalorder %s91, %s107
    %p109 = scmp.eq.s32.totalorder %s15, 0
    %p110 = por %p108, %p109
    %p111 = scmp.le.s32.totalorder 1, %s9
    %p112 = scmp.lt.s32.totalorder %s9, 3
    %p113 = pnand %p111, %p112
    %p114 = pneg %p113
    // Predicated region
    $region9: #{generator_model_forward.14} parent=5 // pred_check
      _
    $region10: #{generator_model_forward.14} parent=5 // pred_check_branch
      %116 = sbr.rel (%p113) target = $region12
    $region11: #{generator_model_forward.14} parent=5 // pred_region
      %s117 = ssub.s32 %s9, 1
      // Predicated region
      $region13: #{generator_model_forward.14} parent=11 // pred_check
        %p118 = pneg %p56
      $region14: #{generator_model_forward.14} parent=11 // pred_check_branch
        %120 = sbr.rel (%p118) target = $region16
      $region15: #{generator_model_forward.14} parent=11 // pred_region
        _
      $region16: #{generator_model_forward.14} parent=11 // pred_fallthru
        _
      // Predicated region
      $region17: #{generator_model_forward.14} parent=11 // pred_check
        %p121 = pneg %p77
      $region18: #{generator_model_forward.14} parent=11 // pred_check_branch
        %123 = sbr.rel (%p121) target = $region20
      $region19: #{generator_model_forward.14} parent=11 // pred_region
        _
      $region20: #{generator_model_forward.14} parent=11 // pred_fallthru
        _
    $region12: #{generator_model_forward.14} parent=5 // pred_fallthru
      _
    %p124 = scmp.lt.s32.totalorder %s9, 2
    // Predicated region
    $region21: #{generator_model_forward.14} parent=5 // pred_check
      %p125 = pneg %p124
    $region22: #{generator_model_forward.14} parent=5 // pred_check_branch
      %127 = sbr.rel (%p125) target = $region24
    $region23: #{generator_model_forward.14} parent=5 // pred_region
      // Predicated region
      $region25: #{generator_model_forward.14} parent=23 // pred_check
        %p128 = pneg %p29
      $region26: #{generator_model_forward.14} parent=23 // pred_check_branch
        %130 = sbr.rel (%p128) target = $region28
      $region27: #{generator_model_forward.14} parent=23 // pred_region
        %p131 = scmp.lt.s32.totalorder %s9, 1
        %s132 = scalar_select %p131, %s9, 1
        %s133 = smul.addr %s132, 6
        %s134 = smul.addr %s133, 4
        %s135 = scalar_lea.vmem %s0, %s134
      $region28: #{generator_model_forward.14} parent=23 // pred_fallthru
        _
    $region24: #{generator_model_forward.14} parent=5 // pred_fallthru
      _
    %p136 = scmp.le.s32.totalorder 1, %s9
    %p137 = scmp.lt.s32.totalorder %s9, 3
    %p138 = pnand %p136, %p137
    %p139 = pneg %p138
    // Predicated region
    $region29: #{generator_model_forward.14} parent=5 // pred_check
      _
    $region30: #{generator_model_forward.14} parent=5 // pred_check_branch
      %141 = sbr.rel (%p138) target = $region32
    $region31: #{generator_model_forward.14} parent=5 // pred_region
      %s142 = ssub.s32 %s9, 1
      %p143 = scmp.lt.s32.totalorder %s14, 1
      %s144 = scalar_select %p143, %s14, 1
      %s145 = smul.addr %s144, 6
      %s146 = smul.addr %s145, 4
      %s147 = scalar_lea.vmem %s0, %s146
      %p148 = pneg %p35
      %p149 = pneg %p32
      %p150 = pneg %p56
      %p151 = pneg %p53
      %p152 = pneg %p77
      %p153 = pneg %p74
      %p154 = pneg %p103
      %p155 = pneg %p100
      %p156 = scmp.lt.s32.totalorder %s14, 1
      %s157 = scalar_select %p156, %s14, 1
      %s158 = smul.addr %s157, 3
      %s159 = smul.addr %s158, 4
      %s160 = scalar_lea.vmem %s3, %s159
      %p161 = scmp.lt.s32.totalorder %s14, 1
      %s162 = scalar_select %p161, %s14, 1
      %s163 = smul.addr %s162, 6
      %s164 = smul.addr %s163, 4
      %s165 = scalar_lea.vmem %s0, %s164
      %p166 = scmp.lt.s32.totalorder %s14, 1
      %s167 = scalar_select %p166, %s14, 1
      %s168 = smul.addr %s167, 3
      %s169 = smul.addr %s168, 4
      %s170 = scalar_lea.vmem %s3, %s169
      %v172 = vld [vmem:[%s165] sm:$0xff]
      %v173 = vld [vmem:[%s165 + $0x8] sm:$0xf]
      %v174 = vld [vmem:[%s165 + $0xc] sm:$0xff]
      %v175 = vld [vmem:[%s165 + $0x14] sm:$0xf]
      %v176 = vld [vmem:[%s1] sm:$0x3]
      %s177 = scalar_lea.vmem %s1, 2
      %v178 = vld [vmem:[%s177] sm:$0x3]
      %v183 = vunpack.c.l.b16 %v172
      %v184 = vunpack.c.h.b16 %v172
      %v185 = vunpack.c.l.b16 %v173
      %v186 = vunpack.c.l.b16 %v174
      %v187 = vunpack.c.h.b16 %v174
      %v188 = vunpack.c.l.b16 %v175
      %v189 = vpack.c.b16 %v186, %v183
      %v190 = vpack.c.b16 %v187, %v184
      %v191 = vpack.c.b16 %v188, %v185
      %192 = vrot.lane.b32.xlu0 %v189, 127
      %v193 = vpop.permute.xlu0 %192
      %194 = vrot.lane.b32.xlu0 %v190, 127
      %v195 = vpop.permute.xlu0 %194
      %196 = vrot.lane.b32.xlu0 %v191, 127
      %v197 = vpop.permute.xlu0 %196
      %vm198 = vcmask 1039360
      %v199 = vsel %vm198, %v193, %v195
      %v200 = vsel %vm198, %v195, %v197
      %vm204 = vcmask 130048
      %v206 = vsel %vm204, %v178, 0
      %208 = vmatprep.subr.bf16.mxu0 0
      %209 = vmatpush1.bf16.msra.mxu0 0
      %210 = vmatprep.subr.bf16.mxu0 0
      %211 = vmatpush1.bf16.msra.mxu0 0
      %212 = vmatprep.subr.bf16.mxu0 0
      %213 = vmatpush1.bf16.msra.mxu0 0
      %214 = vmatprep.subr.bf16.mxu0 0
      %215 = vmatpush1.bf16.msra.mxu0 0
      %216 = vmatprep.subr.bf16.mxu0 0
      %217 = vmatpush1.bf16.msra.mxu0 0
      %218 = vmatprep.subr.bf16.mxu0 0
      %219 = vmatpush1.bf16.msra.mxu0 0
      %220 = vmatprep.subr.bf16.mxu0 0
      %221 = vmatpush1.bf16.msra.mxu0 0
      %222 = vmatprep.subr.bf16.mxu0 %v200
      %223 = vmatpush1.bf16.msra.mxu0 %v199
      %224 = vmatprep.subr.bf16.mxu0 0
      %225 = vmatpush2.bf16.msra.mxu0 0
      %226 = vmatprep.subr.bf16.mxu0 0
      %227 = vmatpush2.bf16.msra.mxu0 0
      %228 = vmatprep.subr.bf16.mxu0 0
      %229 = vmatpush2.bf16.msra.mxu0 0
      %230 = vmatprep.subr.bf16.mxu0 0
      %231 = vmatpush2.bf16.msra.mxu0 0
      %232 = vmatprep.subr.bf16.mxu0 0
      %233 = vmatpush2.bf16.msra.mxu0 0
      %234 = vmatprep.subr.bf16.mxu0 0
      %235 = vmatpush2.bf16.msra.mxu0 0
      %236 = vmatprep.subr.bf16.mxu0 0
      %237 = vmatpush2.bf16.msra.mxu0 0
      %238 = vmatprep.subr.bf16.mxu0 0
      %239 = vmatpush2.bf16.msra.mxu0 0
      %240 = vmatprep.mubr.bf16.mxu0 0
      %241 = vmatmul.mubr.bf16.gmra.mxu0 %v206
      %v242 = vpop.f32.mrf.mxu0
      %v243 = vadd.f32 0.0, %v242
      %v244 = vpop.f32.mrf.mxu0
      %v245 = vadd.f32 0.0, %v244
      %v246 = vpop.f32.mrf.mxu0
      %v247 = vpop.f32.mrf.mxu0
      %248 = vdwg.mxu0
      %249 = vmatprep.subr.bf16.mxu0 0
      %250 = vmatpush1.bf16.msra.mxu0 0
      %251 = vmatprep.subr.bf16.mxu0 0
      %252 = vmatpush1.bf16.msra.mxu0 0
      %253 = vmatprep.subr.bf16.mxu0 0
      %254 = vmatpush1.bf16.msra.mxu0 0
      %255 = vmatprep.subr.bf16.mxu0 0
      %256 = vmatpush1.bf16.msra.mxu0 0
      %257 = vmatprep.subr.bf16.mxu0 0
      %258 = vmatpush1.bf16.msra.mxu0 0
      %259 = vmatprep.subr.bf16.mxu0 0
      %260 = vmatpush1.bf16.msra.mxu0 0
      %261 = vmatprep.subr.bf16.mxu0 0
      %262 = vmatpush1.bf16.msra.mxu0 0
      %263 = vmatprep.subr.bf16.mxu0 0
      %264 = vmatpush1.bf16.msra.mxu0 %v197
      %265 = vmatprep.subr.bf16.mxu0 0
      %266 = vmatpush2.bf16.msra.mxu0 0
      %267 = vmatprep.subr.bf16.mxu0 0
      %268 = vmatpush2.bf16.msra.mxu0 0
      %269 = vmatprep.subr.bf16.mxu0 0
      %270 = vmatpush2.bf16.msra.mxu0 0
      %271 = vmatprep.subr.bf16.mxu0 0
      %272 = vmatpush2.bf16.msra.mxu0 0
      %273 = vmatprep.subr.bf16.mxu0 0
      %274 = vmatpush2.bf16.msra.mxu0 0
      %275 = vmatprep.subr.bf16.mxu0 0
      %276 = vmatpush2.bf16.msra.mxu0 0
      %277 = vmatprep.subr.bf16.mxu0 0
      %278 = vmatpush2.bf16.msra.mxu0 0
      %279 = vmatprep.subr.bf16.mxu0 0
      %280 = vmatpush2.bf16.msra.mxu0 0
      %281 = vmatprep.mubr.bf16.mxu0 0
      %282 = vmatmul.mubr.bf16.gmra.mxu0 %v206
      %v283 = vpop.f32.mrf.mxu0
      %v284 = vadd.f32 0.0, %v283
      %v285 = vpop.f32.mrf.mxu0
      %v286 = vpop.f32.mrf.mxu0
      %v287 = vpop.f32.mrf.mxu0
      %288 = vdwg.mxu0
      %v293 = vsel %vm204, %v176, 0
      %295 = vmatprep.subr.bf16.mxu0 0
      %296 = vmatpush1.bf16.msra.mxu0 0
      %297 = vmatprep.subr.bf16.mxu0 0
      %298 = vmatpush1.bf16.msra.mxu0 0
      %299 = vmatprep.subr.bf16.mxu0 0
      %300 = vmatpush1.bf16.msra.mxu0 0
      %301 = vmatprep.subr.bf16.mxu0 0
      %302 = vmatpush1.bf16.msra.mxu0 0
      %303 = vmatprep.subr.bf16.mxu0 0
      %304 = vmatpush1.bf16.msra.mxu0 0
      %305 = vmatprep.subr.bf16.mxu0 0
      %306 = vmatpush1.bf16.msra.mxu0 0
      %307 = vmatprep.subr.bf16.mxu0 0
      %308 = vmatpush1.bf16.msra.mxu0 0
      %309 = vmatprep.subr.bf16.mxu0 %v190
      %310 = vmatpush1.bf16.msra.mxu0 %v189
      %311 = vmatprep.subr.bf16.mxu0 0
      %312 = vmatpush2.bf16.msra.mxu0 0
      %313 = vmatprep.subr.bf16.mxu0 0
      %314 = vmatpush2.bf16.msra.mxu0 0
      %315 = vmatprep.subr.bf16.mxu0 0
      %316 = vmatpush2.bf16.msra.mxu0 0
      %317 = vmatprep.subr.bf16.mxu0 0
      %318 = vmatpush2.bf16.msra.mxu0 0
      %319 = vmatprep.subr.bf16.mxu0 0
      %320 = vmatpush2.bf16.msra.mxu0 0
      %321 = vmatprep.subr.bf16.mxu0 0
      %322 = vmatpush2.bf16.msra.mxu0 0
      %323 = vmatprep.subr.bf16.mxu0 0
      %324 = vmatpush2.bf16.msra.mxu0 0
      %325 = vmatprep.subr.bf16.mxu0 0
      %326 = vmatpush2.bf16.msra.mxu0 0
      %327 = vmatprep.mubr.bf16.mxu0 0
      %328 = vmatmul.mubr.bf16.gmra.mxu0 %v293
      %v329 = vpop.f32.mrf.mxu0
      %v330 = vadd.f32 %v243, %v329
      %v331 = vpop.f32.mrf.mxu0
      %v332 = vadd.f32 %v245, %v331
      %v333 = vpop.f32.mrf.mxu0
      %v334 = vpop.f32.mrf.mxu0
      %335 = vdwg.mxu0
      %336 = vmatprep.subr.bf16.mxu0 0
      %337 = vmatpush1.bf16.msra.mxu0 0
      %338 = vmatprep.subr.bf16.mxu0 0
      %339 = vmatpush1.bf16.msra.mxu0 0
      %340 = vmatprep.subr.bf16.mxu0 0
      %341 = vmatpush1.bf16.msra.mxu0 0
      %342 = vmatprep.subr.bf16.mxu0 0
      %343 = vmatpush1.bf16.msra.mxu0 0
      %344 = vmatprep.subr.bf16.mxu0 0
      %345 = vmatpush1.bf16.msra.mxu0 0
      %346 = vmatprep.subr.bf16.mxu0 0
      %347 = vmatpush1.bf16.msra.mxu0 0
      %348 = vmatprep.subr.bf16.mxu0 0
      %349 = vmatpush1.bf16.msra.mxu0 0
      %350 = vmatprep.subr.bf16.mxu0 0
      %351 = vmatpush1.bf16.msra.mxu0 %v191
      %352 = vmatprep.subr.bf16.mxu0 0
      %353 = vmatpush2.bf16.msra.mxu0 0
      %354 = vmatprep.subr.bf16.mxu0 0
      %355 = vmatpush2.bf16.msra.mxu0 0
      %356 = vmatprep.subr.bf16.mxu0 0
      %357 = vmatpush2.bf16.msra.mxu0 0
      %358 = vmatprep.subr.bf16.mxu0 0
      %359 = vmatpush2.bf16.msra.mxu0 0
      %360 = vmatprep.subr.bf16.mxu0 0
      %361 = vmatpush2.bf16.msra.mxu0 0
      %362 = vmatprep.subr.bf16.mxu0 0
      %363 = vmatpush2.bf16.msra.mxu0 0
      %364 = vmatprep.subr.bf16.mxu0 0
      %365 = vmatpush2.bf16.msra.mxu0 0
      %366 = vmatprep.subr.bf16.mxu0 0
      %367 = vmatpush2.bf16.msra.mxu0 0
      %368 = vmatprep.mubr.bf16.mxu0 0
      %369 = vmatmul.mubr.bf16.gmra.mxu0 %v293
      %v370 = vpop.f32.mrf.mxu0
      %v371 = vadd.f32 %v284, %v370
      %v372 = vpop.f32.mrf.mxu0
      %v373 = vpop.f32.mrf.mxu0
      %v374 = vpop.f32.mrf.mxu0
      %375 = vdwg.mxu0
      %s376 = scalar_lea.vmem %s1, 4
      %v377 = vld [vmem:[%s376] sm:$0x3]
      %378 = vrot.lane.b32.xlu0 %v189, 126
      %v379 = vpop.permute.xlu0 %378
      %380 = vrot.lane.b32.xlu0 %v190, 126
      %v381 = vpop.permute.xlu0 %380
      %382 = vrot.lane.b32.xlu0 %v191, 126
      %v383 = vpop.permute.xlu0 %382
      %vm384 = vcmask 1031168
      %v385 = vsel %vm384, %v379, %v381
      %v386 = vsel %vm384, %v381, %v383
      %v391 = vsel %vm204, %v377, 0
      %393 = vmatprep.subr.bf16.mxu0 0
      %394 = vmatpush1.bf16.msra.mxu0 0
      %395 = vmatprep.subr.bf16.mxu0 0
      %396 = vmatpush1.bf16.msra.mxu0 0
      %397 = vmatprep.subr.bf16.mxu0 0
      %398 = vmatpush1.bf16.msra.mxu0 0
      %399 = vmatprep.subr.bf16.mxu0 0
      %400 = vmatpush1.bf16.msra.mxu0 0
      %401 = vmatprep.subr.bf16.mxu0 0
      %402 = vmatpush1.bf16.msra.mxu0 0
      %403 = vmatprep.subr.bf16.mxu0 0
      %404 = vmatpush1.bf16.msra.mxu0 0
      %405 = vmatprep.subr.bf16.mxu0 0
      %406 = vmatpush1.bf16.msra.mxu0 0
      %407 = vmatprep.subr.bf16.mxu0 %v386
      %408 = vmatpush1.bf16.msra.mxu0 %v385
      %409 = vmatprep.subr.bf16.mxu0 0
      %410 = vmatpush2.bf16.msra.mxu0 0
      %411 = vmatprep.subr.bf16.mxu0 0
      %412 = vmatpush2.bf16.msra.mxu0 0
      %413 = vmatprep.subr.bf16.mxu0 0
      %414 = vmatpush2.bf16.msra.mxu0 0
      %415 = vmatprep.subr.bf16.mxu0 0
      %416 = vmatpush2.bf16.msra.mxu0 0
      %417 = vmatprep.subr.bf16.mxu0 0
      %418 = vmatpush2.bf16.msra.mxu0 0
      %419 = vmatprep.subr.bf16.mxu0 0
      %420 = vmatpush2.bf16.msra.mxu0 0
      %421 = vmatprep.subr.bf16.mxu0 0
      %422 = vmatpush2.bf16.msra.mxu0 0
      %423 = vmatprep.subr.bf16.mxu0 0
      %424 = vmatpush2.bf16.msra.mxu0 0
      %425 = vmatprep.mubr.bf16.mxu0 0
      %426 = vmatmul.mubr.bf16.gmra.mxu0 %v391
      %v427 = vpop.f32.mrf.mxu0
      %v428 = vadd.f32 0.0, %v427
      %v429 = vpop.f32.mrf.mxu0
      %v430 = vadd.f32 0.0, %v429
      %v431 = vpop.f32.mrf.mxu0
      %v432 = vpop.f32.mrf.mxu0
      %433 = vdwg.mxu0
      %434 = vmatprep.subr.bf16.mxu0 0
      %435 = vmatpush1.bf16.msra.mxu0 0
      %436 = vmatprep.subr.bf16.mxu0 0
      %437 = vmatpush1.bf16.msra.mxu0 0
      %438 = vmatprep.subr.bf16.mxu0 0
      %439 = vmatpush1.bf16.msra.mxu0 0
      %440 = vmatprep.subr.bf16.mxu0 0
      %441 = vmatpush1.bf16.msra.mxu0 0
      %442 = vmatprep.subr.bf16.mxu0 0
      %443 = vmatpush1.bf16.msra.mxu0 0
      %444 = vmatprep.subr.bf16.mxu0 0
      %445 = vmatpush1.bf16.msra.mxu0 0
      %446 = vmatprep.subr.bf16.mxu0 0
      %447 = vmatpush1.bf16.msra.mxu0 0
      %448 = vmatprep.subr.bf16.mxu0 0
      %449 = vmatpush1.bf16.msra.mxu0 %v383
      %450 = vmatprep.subr.bf16.mxu0 0
      %451 = vmatpush2.bf16.msra.mxu0 0
      %452 = vmatprep.subr.bf16.mxu0 0
      %453 = vmatpush2.bf16.msra.mxu0 0
      %454 = vmatprep.subr.bf16.mxu0 0
      %455 = vmatpush2.bf16.msra.mxu0 0
      %456 = vmatprep.subr.bf16.mxu0 0
      %457 = vmatpush2.bf16.msra.mxu0 0
      %458 = vmatprep.subr.bf16.mxu0 0
      %459 = vmatpush2.bf16.msra.mxu0 0
      %460 = vmatprep.subr.bf16.mxu0 0
      %461 = vmatpush2.bf16.msra.mxu0 0
      %462 = vmatprep.subr.bf16.mxu0 0
      %463 = vmatpush2.bf16.msra.mxu0 0
      %464 = vmatprep.subr.bf16.mxu0 0
      %465 = vmatpush2.bf16.msra.mxu0 0
      %466 = vmatprep.mubr.bf16.mxu0 0
      %467 = vmatmul.mubr.bf16.gmra.mxu0 %v391
      %v468 = vpop.f32.mrf.mxu0
      %v469 = vadd.f32 0.0, %v468
      %v470 = vpop.f32.mrf.mxu0
      %v471 = vpop.f32.mrf.mxu0
      %v472 = vpop.f32.mrf.mxu0
      %473 = vdwg.mxu0
      %v474 = vadd.f32 %v330, %v428
      %v475 = vadd.f32 %v332, %v430
      %v476 = vadd.f32 %v371, %v469
      %s477 = scalar_lea.vmem %s1, 6
      %v478 = vld [vmem:[%s477] sm:$0x3]
      %479 = vrot.lane.b32.xlu0 %v189, 110
      %v480 = vpop.permute.xlu0 %479
      %481 = vrot.lane.b32.xlu0 %v190, 110
      %v482 = vpop.permute.xlu0 %481
      %483 = vrot.lane.b32.xlu0 %v191, 110
      %v484 = vpop.permute.xlu0 %483
      %vm485 = vcmask 900096
      %v486 = vsel %vm485, %v480, %v482
      %v487 = vsel %vm485, %v482, %v484
      %v492 = vsel %vm204, %v478, 0
      %494 = vmatprep.subr.bf16.mxu0 0
      %495 = vmatpush1.bf16.msra.mxu0 0
      %496 = vmatprep.subr.bf16.mxu0 0
      %497 = vmatpush1.bf16.msra.mxu0 0
      %498 = vmatprep.subr.bf16.mxu0 0
      %499 = vmatpush1.bf16.msra.mxu0 0
      %500 = vmatprep.subr.bf16.mxu0 0
      %501 = vmatpush1.bf16.msra.mxu0 0
      %502 = vmatprep.subr.bf16.mxu0 0
      %503 = vmatpush1.bf16.msra.mxu0 0
      %504 = vmatprep.subr.bf16.mxu0 0
      %505 = vmatpush1.bf16.msra.mxu0 0
      %506 = vmatprep.subr.bf16.mxu0 0
      %507 = vmatpush1.bf16.msra.mxu0 0
      %508 = vmatprep.subr.bf16.mxu0 %v487
      %509 = vmatpush1.bf16.msra.mxu0 %v486
      %510 = vmatprep.subr.bf16.mxu0 0
      %511 = vmatpush2.bf16.msra.mxu0 0
      %512 = vmatprep.subr.bf16.mxu0 0
      %513 = vmatpush2.bf16.msra.mxu0 0
      %514 = vmatprep.subr.bf16.mxu0 0
      %515 = vmatpush2.bf16.msra.mxu0 0
      %516 = vmatprep.subr.bf16.mxu0 0
      %517 = vmatpush2.bf16.msra.mxu0 0
      %518 = vmatprep.subr.bf16.mxu0 0
      %519 = vmatpush2.bf16.msra.mxu0 0
      %520 = vmatprep.subr.bf16.mxu0 0
      %521 = vmatpush2.bf16.msra.mxu0 0
      %522 = vmatprep.subr.bf16.mxu0 0
      %523 = vmatpush2.bf16.msra.mxu0 0
      %524 = vmatprep.subr.bf16.mxu0 0
      %525 = vmatpush2.bf16.msra.mxu0 0
      %526 = vmatprep.mubr.bf16.mxu0 0
      %527 = vmatmul.mubr.bf16.gmra.mxu0 %v492
      %v528 = vpop.f32.mrf.mxu0
      %v529 = vadd.f32 0.0, %v528
      %v530 = vpop.f32.mrf.mxu0
      %v531 = vadd.f32 0.0, %v530
      %v532 = vpop.f32.mrf.mxu0
      %v533 = vpop.f32.mrf.mxu0
      %534 = vdwg.mxu0
      %535 = vmatprep.subr.bf16.mxu0 0
      %536 = vmatpush1.bf16.msra.mxu0 0
      %537 = vmatprep.subr.bf16.mxu0 0
      %538 = vmatpush1.bf16.msra.mxu0 0
      %539 = vmatprep.subr.bf16.mxu0 0
      %540 = vmatpush1.bf16.msra.mxu0 0
      %541 = vmatprep.subr.bf16.mxu0 0
      %542 = vmatpush1.bf16.msra.mxu0 0
      %543 = vmatprep.subr.bf16.mxu0 0
      %544 = vmatpush1.bf16.msra.mxu0 0
      %545 = vmatprep.subr.bf16.mxu0 0
      %546 = vmatpush1.bf16.msra.mxu0 0
      %547 = vmatprep.subr.bf16.mxu0 0
      %548 = vmatpush1.bf16.msra.mxu0 0
      %549 = vmatprep.subr.bf16.mxu0 0
      %550 = vmatpush1.bf16.msra.mxu0 %v484
      %551 = vmatprep.subr.bf16.mxu0 0
      %552 = vmatpush2.bf16.msra.mxu0 0
      %553 = vmatprep.subr.bf16.mxu0 0
      %554 = vmatpush2.bf16.msra.mxu0 0
      %555 = vmatprep.subr.bf16.mxu0 0
      %556 = vmatpush2.bf16.msra.mxu0 0
      %557 = vmatprep.subr.bf16.mxu0 0
      %558 = vmatpush2.bf16.msra.mxu0 0
      %559 = vmatprep.subr.bf16.mxu0 0
      %560 = vmatpush2.bf16.msra.mxu0 0
      %561 = vmatprep.subr.bf16.mxu0 0
      %562 = vmatpush2.bf16.msra.mxu0 0
      %563 = vmatprep.subr.bf16.mxu0 0
      %564 = vmatpush2.bf16.msra.mxu0 0
      %565 = vmatprep.subr.bf16.mxu0 0
      %566 = vmatpush2.bf16.msra.mxu0 0
      %567 = vmatprep.mubr.bf16.mxu0 0
      %568 = vmatmul.mubr.bf16.gmra.mxu0 %v492
      %v569 = vpop.f32.mrf.mxu0
      %v570 = vadd.f32 0.0, %v569
      %v571 = vpop.f32.mrf.mxu0
      %v572 = vpop.f32.mrf.mxu0
      %v573 = vpop.f32.mrf.mxu0
      %574 = vdwg.mxu0
      %v575 = vadd.f32 %v474, %v529
      %v576 = vadd.f32 %v475, %v531
      %v577 = vadd.f32 %v476, %v570
      %s578 = scalar_lea.vmem %s1, 8
      %v579 = vld [vmem:[%s578] sm:$0x3]
      %580 = vrot.lane.b32.xlu0 %v189, 109
      %v581 = vpop.permute.xlu0 %580
      %582 = vrot.lane.b32.xlu0 %v190, 109
      %v583 = vpop.permute.xlu0 %582
      %584 = vrot.lane.b32.xlu0 %v191, 109
      %v585 = vpop.permute.xlu0 %584
      %vm586 = vcmask 891904
      %v587 = vsel %vm586, %v581, %v583
      %v588 = vsel %vm586, %v583, %v585
      %v593 = vsel %vm204, %v579, 0
      %595 = vmatprep.subr.bf16.mxu0 0
      %596 = vmatpush1.bf16.msra.mxu0 0
      %597 = vmatprep.subr.bf16.mxu0 0
      %598 = vmatpush1.bf16.msra.mxu0 0
      %599 = vmatprep.subr.bf16.mxu0 0
      %600 = vmatpush1.bf16.msra.mxu0 0
      %601 = vmatprep.subr.bf16.mxu0 0
      %602 = vmatpush1.bf16.msra.mxu0 0
      %603 = vmatprep.subr.bf16.mxu0 0
      %604 = vmatpush1.bf16.msra.mxu0 0
      %605 = vmatprep.subr.bf16.mxu0 0
      %606 = vmatpush1.bf16.msra.mxu0 0
      %607 = vmatprep.subr.bf16.mxu0 0
      %608 = vmatpush1.bf16.msra.mxu0 0
      %609 = vmatprep.subr.bf16.mxu0 %v588
      %610 = vmatpush1.bf16.msra.mxu0 %v587
      %611 = vmatprep.subr.bf16.mxu0 0
      %612 = vmatpush2.bf16.msra.mxu0 0
      %613 = vmatprep.subr.bf16.mxu0 0
      %614 = vmatpush2.bf16.msra.mxu0 0
      %615 = vmatprep.subr.bf16.mxu0 0
      %616 = vmatpush2.bf16.msra.mxu0 0
      %617 = vmatprep.subr.bf16.mxu0 0
      %618 = vmatpush2.bf16.msra.mxu0 0
      %619 = vmatprep.subr.bf16.mxu0 0
      %620 = vmatpush2.bf16.msra.mxu0 0
      %621 = vmatprep.subr.bf16.mxu0 0
      %622 = vmatpush2.bf16.msra.mxu0 0
      %623 = vmatprep.subr.bf16.mxu0 0
      %624 = vmatpush2.bf16.msra.mxu0 0
      %625 = vmatprep.subr.bf16.mxu0 0
      %626 = vmatpush2.bf16.msra.mxu0 0
      %627 = vmatprep.mubr.bf16.mxu0 0
      %628 = vmatmul.mubr.bf16.gmra.mxu0 %v593
      %v629 = vpop.f32.mrf.mxu0
      %v630 = vadd.f32 0.0, %v629
      %v631 = vpop.f32.mrf.mxu0
      %v632 = vadd.f32 0.0, %v631
      %v633 = vpop.f32.mrf.mxu0
      %v634 = vpop.f32.mrf.mxu0
      %635 = vdwg.mxu0
      %636 = vmatprep.subr.bf16.mxu0 0
      %637 = vmatpush1.bf16.msra.mxu0 0
      %638 = vmatprep.subr.bf16.mxu0 0
      %639 = vmatpush1.bf16.msra.mxu0 0
      %640 = vmatprep.subr.bf16.mxu0 0
      %641 = vmatpush1.bf16.msra.mxu0 0
      %642 = vmatprep.subr.bf16.mxu0 0
      %643 = vmatpush1.bf16.msra.mxu0 0
      %644 = vmatprep.subr.bf16.mxu0 0
      %645 = vmatpush1.bf16.msra.mxu0 0
      %646 = vmatprep.subr.bf16.mxu0 0
      %647 = vmatpush1.bf16.msra.mxu0 0
      %648 = vmatprep.subr.bf16.mxu0 0
      %649 = vmatpush1.bf16.msra.mxu0 0
      %650 = vmatprep.subr.bf16.mxu0 0
      %651 = vmatpush1.bf16.msra.mxu0 %v585
      %652 = vmatprep.subr.bf16.mxu0 0
      %653 = vmatpush2.bf16.msra.mxu0 0
      %654 = vmatprep.subr.bf16.mxu0 0
      %655 = vmatpush2.bf16.msra.mxu0 0
      %656 = vmatprep.subr.bf16.mxu0 0
      %657 = vmatpush2.bf16.msra.mxu0 0
      %658 = vmatprep.subr.bf16.mxu0 0
      %659 = vmatpush2.bf16.msra.mxu0 0
      %660 = vmatprep.subr.bf16.mxu0 0
      %661 = vmatpush2.bf16.msra.mxu0 0
      %662 = vmatprep.subr.bf16.mxu0 0
      %663 = vmatpush2.bf16.msra.mxu0 0
      %664 = vmatprep.subr.bf16.mxu0 0
      %665 = vmatpush2.bf16.msra.mxu0 0
      %666 = vmatprep.subr.bf16.mxu0 0
      %667 = vmatpush2.bf16.msra.mxu0 0
      %668 = vmatprep.mubr.bf16.mxu0 0
      %669 = vmatmul.mubr.bf16.gmra.mxu0 %v593
      %v670 = vpop.f32.mrf.mxu0
      %v671 = vadd.f32 0.0, %v670
      %v672 = vpop.f32.mrf.mxu0
      %v673 = vpop.f32.mrf.mxu0
      %v674 = vpop.f32.mrf.mxu0
      %675 = vdwg.mxu0
      %v676 = vadd.f32 %v575, %v630
      %v677 = vadd.f32 %v576, %v632
      %v678 = vadd.f32 %v577, %v671
      %s679 = scalar_lea.vmem %s1, 10
      %v680 = vld [vmem:[%s679] sm:$0x3]
      %681 = vrot.lane.b32.xlu0 %v189, 108
      %v682 = vpop.permute.xlu0 %681
      %683 = vrot.lane.b32.xlu0 %v190, 108
      %v684 = vpop.permute.xlu0 %683
      %685 = vrot.lane.b32.xlu0 %v191, 108
      %v686 = vpop.permute.xlu0 %685
      %vm687 = vcmask 883712
      %v688 = vsel %vm687, %v682, %v684
      %v689 = vsel %vm687, %v684, %v686
      %v694 = vsel %vm204, %v680, 0
      %696 = vmatprep.subr.bf16.mxu0 0
      %697 = vmatpush1.bf16.msra.mxu0 0
      %698 = vmatprep.subr.bf16.mxu0 0
      %699 = vmatpush1.bf16.msra.mxu0 0
      %700 = vmatprep.subr.bf16.mxu0 0
      %701 = vmatpush1.bf16.msra.mxu0 0
      %702 = vmatprep.subr.bf16.mxu0 0
      %703 = vmatpush1.bf16.msra.mxu0 0
      %704 = vmatprep.subr.bf16.mxu0 0
      %705 = vmatpush1.bf16.msra.mxu0 0
      %706 = vmatprep.subr.bf16.mxu0 0
      %707 = vmatpush1.bf16.msra.mxu0 0
      %708 = vmatprep.subr.bf16.mxu0 0
      %709 = vmatpush1.bf16.msra.mxu0 0
      %710 = vmatprep.subr.bf16.mxu0 %v689
      %711 = vmatpush1.bf16.msra.mxu0 %v688
      %712 = vmatprep.subr.bf16.mxu0 0
      %713 = vmatpush2.bf16.msra.mxu0 0
      %714 = vmatprep.subr.bf16.mxu0 0
      %715 = vmatpush2.bf16.msra.mxu0 0
      %716 = vmatprep.subr.bf16.mxu0 0
      %717 = vmatpush2.bf16.msra.mxu0 0
      %718 = vmatprep.subr.bf16.mxu0 0
      %719 = vmatpush2.bf16.msra.mxu0 0
      %720 = vmatprep.subr.bf16.mxu0 0
      %721 = vmatpush2.bf16.msra.mxu0 0
      %722 = vmatprep.subr.bf16.mxu0 0
      %723 = vmatpush2.bf16.msra.mxu0 0
      %724 = vmatprep.subr.bf16.mxu0 0
      %725 = vmatpush2.bf16.msra.mxu0 0
      %726 = vmatprep.subr.bf16.mxu0 0
      %727 = vmatpush2.bf16.msra.mxu0 0
      %728 = vmatprep.mubr.bf16.mxu0 0
      %729 = vmatmul.mubr.bf16.gmra.mxu0 %v694
      %v730 = vpop.f32.mrf.mxu0
      %v731 = vadd.f32 0.0, %v730
      %v732 = vpop.f32.mrf.mxu0
      %v733 = vadd.f32 0.0, %v732
      %v734 = vpop.f32.mrf.mxu0
      %v735 = vpop.f32.mrf.mxu0
      %736 = vdwg.mxu0
      %737 = vmatprep.subr.bf16.mxu0 0
      %738 = vmatpush1.bf16.msra.mxu0 0
      %739 = vmatprep.subr.bf16.mxu0 0
      %740 = vmatpush1.bf16.msra.mxu0 0
      %741 = vmatprep.subr.bf16.mxu0 0
      %742 = vmatpush1.bf16.msra.mxu0 0
      %743 = vmatprep.subr.bf16.mxu0 0
      %744 = vmatpush1.bf16.msra.mxu0 0
      %745 = vmatprep.subr.bf16.mxu0 0
      %746 = vmatpush1.bf16.msra.mxu0 0
      %747 = vmatprep.subr.bf16.mxu0 0
      %748 = vmatpush1.bf16.msra.mxu0 0
      %749 = vmatprep.subr.bf16.mxu0 0
      %750 = vmatpush1.bf16.msra.mxu0 0
      %751 = vmatprep.subr.bf16.mxu0 0
      %752 = vmatpush1.bf16.msra.mxu0 %v686
      %753 = vmatprep.subr.bf16.mxu0 0
      %754 = vmatpush2.bf16.msra.mxu0 0
      %755 = vmatprep.subr.bf16.mxu0 0
      %756 = vmatpush2.bf16.msra.mxu0 0
      %757 = vmatprep.subr.bf16.mxu0 0
      %758 = vmatpush2.bf16.msra.mxu0 0
      %759 = vmatprep.subr.bf16.mxu0 0
      %760 = vmatpush2.bf16.msra.mxu0 0
      %761 = vmatprep.subr.bf16.mxu0 0
      %762 = vmatpush2.bf16.msra.mxu0 0
      %763 = vmatprep.subr.bf16.mxu0 0
      %764 = vmatpush2.bf16.msra.mxu0 0
      %765 = vmatprep.subr.bf16.mxu0 0
      %766 = vmatpush2.bf16.msra.mxu0 0
      %767 = vmatprep.subr.bf16.mxu0 0
      %768 = vmatpush2.bf16.msra.mxu0 0
      %769 = vmatprep.mubr.bf16.mxu0 0
      %770 = vmatmul.mubr.bf16.gmra.mxu0 %v694
      %v771 = vpop.f32.mrf.mxu0
      %v772 = vadd.f32 0.0, %v771
      %v773 = vpop.f32.mrf.mxu0
      %v774 = vpop.f32.mrf.mxu0
      %v775 = vpop.f32.mrf.mxu0
      %776 = vdwg.mxu0
      %v777 = vadd.f32 %v676, %v731
      %v778 = vadd.f32 %v677, %v733
      %v779 = vadd.f32 %v678, %v772
      %s780 = scalar_lea.vmem %s1, 12
      %v781 = vld [vmem:[%s780] sm:$0x3]
      %782 = vrot.lane.b32.xlu0 %v189, 92
      %v783 = vpop.permute.xlu0 %782
      %784 = vrot.lane.b32.xlu0 %v190, 92
      %v785 = vpop.permute.xlu0 %784
      %786 = vrot.lane.b32.xlu0 %v191, 92
      %v787 = vpop.permute.xlu0 %786
      %vm788 = vcmask 752640
      %v789 = vsel %vm788, %v783, %v785
      %v790 = vsel %vm788, %v785, %v787
      %v795 = vsel %vm204, %v781, 0
      %797 = vmatprep.subr.bf16.mxu0 0
      %798 = vmatpush1.bf16.msra.mxu0 0
      %799 = vmatprep.subr.bf16.mxu0 0
      %800 = vmatpush1.bf16.msra.mxu0 0
      %801 = vmatprep.subr.bf16.mxu0 0
      %802 = vmatpush1.bf16.msra.mxu0 0
      %803 = vmatprep.subr.bf16.mxu0 0
      %804 = vmatpush1.bf16.msra.mxu0 0
      %805 = vmatprep.subr.bf16.mxu0 0
      %806 = vmatpush1.bf16.msra.mxu0 0
      %807 = vmatprep.subr.bf16.mxu0 0
      %808 = vmatpush1.bf16.msra.mxu0 0
      %809 = vmatprep.subr.bf16.mxu0 0
      %810 = vmatpush1.bf16.msra.mxu0 0
      %811 = vmatprep.subr.bf16.mxu0 %v790
      %812 = vmatpush1.bf16.msra.mxu0 %v789
      %813 = vmatprep.subr.bf16.mxu0 0
      %814 = vmatpush2.bf16.msra.mxu0 0
      %815 = vmatprep.subr.bf16.mxu0 0
      %816 = vmatpush2.bf16.msra.mxu0 0
      %817 = vmatprep.subr.bf16.mxu0 0
      %818 = vmatpush2.bf16.msra.mxu0 0
      %819 = vmatprep.subr.bf16.mxu0 0
      %820 = vmatpush2.bf16.msra.mxu0 0
      %821 = vmatprep.subr.bf16.mxu0 0
      %822 = vmatpush2.bf16.msra.mxu0 0
      %823 = vmatprep.subr.bf16.mxu0 0
      %824 = vmatpush2.bf16.msra.mxu0 0
      %825 = vmatprep.subr.bf16.mxu0 0
      %826 = vmatpush2.bf16.msra.mxu0 0
      %827 = vmatprep.subr.bf16.mxu0 0
      %828 = vmatpush2.bf16.msra.mxu0 0
      %829 = vmatprep.mubr.bf16.mxu0 0
      %830 = vmatmul.mubr.bf16.gmra.mxu0 %v795
      %v831 = vpop.f32.mrf.mxu0
      %v832 = vadd.f32 0.0, %v831
      %v833 = vpop.f32.mrf.mxu0
      %v834 = vadd.f32 0.0, %v833
      %v835 = vpop.f32.mrf.mxu0
      %v836 = vpop.f32.mrf.mxu0
      %837 = vdwg.mxu0
      %838 = vmatprep.subr.bf16.mxu0 0
      %839 = vmatpush1.bf16.msra.mxu0 0
      %840 = vmatprep.subr.bf16.mxu0 0
      %841 = vmatpush1.bf16.msra.mxu0 0
      %842 = vmatprep.subr.bf16.mxu0 0
      %843 = vmatpush1.bf16.msra.mxu0 0
      %844 = vmatprep.subr.bf16.mxu0 0
      %845 = vmatpush1.bf16.msra.mxu0 0
      %846 = vmatprep.subr.bf16.mxu0 0
      %847 = vmatpush1.bf16.msra.mxu0 0
      %848 = vmatprep.subr.bf16.mxu0 0
      %849 = vmatpush1.bf16.msra.mxu0 0
      %850 = vmatprep.subr.bf16.mxu0 0
      %851 = vmatpush1.bf16.msra.mxu0 0
      %852 = vmatprep.subr.bf16.mxu0 0
      %853 = vmatpush1.bf16.msra.mxu0 %v787
      %854 = vmatprep.subr.bf16.mxu0 0
      %855 = vmatpush2.bf16.msra.mxu0 0
      %856 = vmatprep.subr.bf16.mxu0 0
      %857 = vmatpush2.bf16.msra.mxu0 0
      %858 = vmatprep.subr.bf16.mxu0 0
      %859 = vmatpush2.bf16.msra.mxu0 0
      %860 = vmatprep.subr.bf16.mxu0 0
      %861 = vmatpush2.bf16.msra.mxu0 0
      %862 = vmatprep.subr.bf16.mxu0 0
      %863 = vmatpush2.bf16.msra.mxu0 0
      %864 = vmatprep.subr.bf16.mxu0 0
      %865 = vmatpush2.bf16.msra.mxu0 0
      %866 = vmatprep.subr.bf16.mxu0 0
      %867 = vmatpush2.bf16.msra.mxu0 0
      %868 = vmatprep.subr.bf16.mxu0 0
      %869 = vmatpush2.bf16.msra.mxu0 0
      %870 = vmatprep.mubr.bf16.mxu0 0
      %871 = vmatmul.mubr.bf16.gmra.mxu0 %v795
      %v872 = vpop.f32.mrf.mxu0
      %v873 = vadd.f32 0.0, %v872
      %v874 = vpop.f32.mrf.mxu0
      %v875 = vpop.f32.mrf.mxu0
      %v876 = vpop.f32.mrf.mxu0
      %877 = vdwg.mxu0
      %v878 = vadd.f32 %v777, %v832
      %v879 = vadd.f32 %v778, %v834
      %v880 = vadd.f32 %v779, %v873
      %s881 = scalar_lea.vmem %s1, 14
      %v882 = vld [vmem:[%s881] sm:$0x3]
      %883 = vrot.lane.b32.xlu0 %v189, 91
      %v884 = vpop.permute.xlu0 %883
      %885 = vrot.lane.b32.xlu0 %v190, 91
      %v886 = vpop.permute.xlu0 %885
      %887 = vrot.lane.b32.xlu0 %v191, 91
      %v888 = vpop.permute.xlu0 %887
      %vm889 = vcmask 744448
      %v890 = vsel %vm889, %v884, %v886
      %v891 = vsel %vm889, %v886, %v888
      %v896 = vsel %vm204, %v882, 0
      %898 = vmatprep.subr.bf16.mxu0 0
      %899 = vmatpush1.bf16.msra.mxu0 0
      %900 = vmatprep.subr.bf16.mxu0 0
      %901 = vmatpush1.bf16.msra.mxu0 0
      %902 = vmatprep.subr.bf16.mxu0 0
      %903 = vmatpush1.bf16.msra.mxu0 0
      %904 = vmatprep.subr.bf16.mxu0 0
      %905 = vmatpush1.bf16.msra.mxu0 0
      %906 = vmatprep.subr.bf16.mxu0 0
      %907 = vmatpush1.bf16.msra.mxu0 0
      %908 = vmatprep.subr.bf16.mxu0 0
      %909 = vmatpush1.bf16.msra.mxu0 0
      %910 = vmatprep.subr.bf16.mxu0 0
      %911 = vmatpush1.bf16.msra.mxu0 0
      %912 = vmatprep.subr.bf16.mxu0 %v891
      %913 = vmatpush1.bf16.msra.mxu0 %v890
      %914 = vmatprep.subr.bf16.mxu0 0
      %915 = vmatpush2.bf16.msra.mxu0 0
      %916 = vmatprep.subr.bf16.mxu0 0
      %917 = vmatpush2.bf16.msra.mxu0 0
      %918 = vmatprep.subr.bf16.mxu0 0
      %919 = vmatpush2.bf16.msra.mxu0 0
      %920 = vmatprep.subr.bf16.mxu0 0
      %921 = vmatpush2.bf16.msra.mxu0 0
      %922 = vmatprep.subr.bf16.mxu0 0
      %923 = vmatpush2.bf16.msra.mxu0 0
      %924 = vmatprep.subr.bf16.mxu0 0
      %925 = vmatpush2.bf16.msra.mxu0 0
      %926 = vmatprep.subr.bf16.mxu0 0
      %927 = vmatpush2.bf16.msra.mxu0 0
      %928 = vmatprep.subr.bf16.mxu0 0
      %929 = vmatpush2.bf16.msra.mxu0 0
      %930 = vmatprep.mubr.bf16.mxu0 0
      %931 = vmatmul.mubr.bf16.gmra.mxu0 %v896
      %v932 = vpop.f32.mrf.mxu0
      %v933 = vadd.f32 0.0, %v932
      %v934 = vpop.f32.mrf.mxu0
      %v935 = vadd.f32 0.0, %v934
      %v936 = vpop.f32.mrf.mxu0
      %v937 = vpop.f32.mrf.mxu0
      %938 = vdwg.mxu0
      %939 = vmatprep.subr.bf16.mxu0 0
      %940 = vmatpush1.bf16.msra.mxu0 0
      %941 = vmatprep.subr.bf16.mxu0 0
      %942 = vmatpush1.bf16.msra.mxu0 0
      %943 = vmatprep.subr.bf16.mxu0 0
      %944 = vmatpush1.bf16.msra.mxu0 0
      %945 = vmatprep.subr.bf16.mxu0 0
      %946 = vmatpush1.bf16.msra.mxu0 0
      %947 = vmatprep.subr.bf16.mxu0 0
      %948 = vmatpush1.bf16.msra.mxu0 0
      %949 = vmatprep.subr.bf16.mxu0 0
      %950 = vmatpush1.bf16.msra.mxu0 0
      %951 = vmatprep.subr.bf16.mxu0 0
      %952 = vmatpush1.bf16.msra.mxu0 0
      %953 = vmatprep.subr.bf16.mxu0 0
      %954 = vmatpush1.bf16.msra.mxu0 %v888
      %955 = vmatprep.subr.bf16.mxu0 0
      %956 = vmatpush2.bf16.msra.mxu0 0
      %957 = vmatprep.subr.bf16.mxu0 0
      %958 = vmatpush2.bf16.msra.mxu0 0
      %959 = vmatprep.subr.bf16.mxu0 0
      %960 = vmatpush2.bf16.msra.mxu0 0
      %961 = vmatprep.subr.bf16.mxu0 0
      %962 = vmatpush2.bf16.msra.mxu0 0
      %963 = vmatprep.subr.bf16.mxu0 0
      %964 = vmatpush2.bf16.msra.mxu0 0
      %965 = vmatprep.subr.bf16.mxu0 0
      %966 = vmatpush2.bf16.msra.mxu0 0
      %967 = vmatprep.subr.bf16.mxu0 0
      %968 = vmatpush2.bf16.msra.mxu0 0
      %969 = vmatprep.subr.bf16.mxu0 0
      %970 = vmatpush2.bf16.msra.mxu0 0
      %971 = vmatprep.mubr.bf16.mxu0 0
      %972 = vmatmul.mubr.bf16.gmra.mxu0 %v896
      %v973 = vpop.f32.mrf.mxu0
      %v974 = vadd.f32 0.0, %v973
      %v975 = vpop.f32.mrf.mxu0
      %v976 = vpop.f32.mrf.mxu0
      %v977 = vpop.f32.mrf.mxu0
      %978 = vdwg.mxu0
      %v979 = vadd.f32 %v878, %v933
      %v980 = vadd.f32 %v879, %v935
      %v981 = vadd.f32 %v880, %v974
      %s982 = scalar_lea.vmem %s1, 16
      %v983 = vld [vmem:[%s982] sm:$0x3]
      %984 = vrot.lane.b32.xlu0 %v189, 90
      %v985 = vpop.permute.xlu0 %984
      %986 = vrot.lane.b32.xlu0 %v190, 90
      %v987 = vpop.permute.xlu0 %986
      %988 = vrot.lane.b32.xlu0 %v191, 90
      %v989 = vpop.permute.xlu0 %988
      %vm990 = vcmask 736256
      %v991 = vsel %vm990, %v985, %v987
      %v992 = vsel %vm990, %v987, %v989
      %v997 = vsel %vm204, %v983, 0
      %999 = vmatprep.subr.bf16.mxu0 0
      %1000 = vmatpush1.bf16.msra.mxu0 0
      %1001 = vmatprep.subr.bf16.mxu0 0
      %1002 = vmatpush1.bf16.msra.mxu0 0
      %1003 = vmatprep.subr.bf16.mxu0 0
      %1004 = vmatpush1.bf16.msra.mxu0 0
      %1005 = vmatprep.subr.bf16.mxu0 0
      %1006 = vmatpush1.bf16.msra.mxu0 0
      %1007 = vmatprep.subr.bf16.mxu0 0
      %1008 = vmatpush1.bf16.msra.mxu0 0
      %1009 = vmatprep.subr.bf16.mxu0 0
      %1010 = vmatpush1.bf16.msra.mxu0 0
      %1011 = vmatprep.subr.bf16.mxu0 0
      %1012 = vmatpush1.bf16.msra.mxu0 0
      %1013 = vmatprep.subr.bf16.mxu0 %v992
      %1014 = vmatpush1.bf16.msra.mxu0 %v991
      %1015 = vmatprep.subr.bf16.mxu0 0
      %1016 = vmatpush2.bf16.msra.mxu0 0
      %1017 = vmatprep.subr.bf16.mxu0 0
      %1018 = vmatpush2.bf16.msra.mxu0 0
      %1019 = vmatprep.subr.bf16.mxu0 0
      %1020 = vmatpush2.bf16.msra.mxu0 0
      %1021 = vmatprep.subr.bf16.mxu0 0
      %1022 = vmatpush2.bf16.msra.mxu0 0
      %1023 = vmatprep.subr.bf16.mxu0 0
      %1024 = vmatpush2.bf16.msra.mxu0 0
      %1025 = vmatprep.subr.bf16.mxu0 0
      %1026 = vmatpush2.bf16.msra.mxu0 0
      %1027 = vmatprep.subr.bf16.mxu0 0
      %1028 = vmatpush2.bf16.msra.mxu0 0
      %1029 = vmatprep.subr.bf16.mxu0 0
      %1030 = vmatpush2.bf16.msra.mxu0 0
      %1031 = vmatprep.mubr.bf16.mxu0 0
      %1032 = vmatmul.mubr.bf16.gmra.mxu0 %v997
      %v1033 = vpop.f32.mrf.mxu0
      %v1034 = vadd.f32 0.0, %v1033
      %v1035 = vpop.f32.mrf.mxu0
      %v1036 = vadd.f32 0.0, %v1035
      %v1037 = vpop.f32.mrf.mxu0
      %v1038 = vpop.f32.mrf.mxu0
      %1039 = vdwg.mxu0
      %1040 = vmatprep.subr.bf16.mxu0 0
      %1041 = vmatpush1.bf16.msra.mxu0 0
      %1042 = vmatprep.subr.bf16.mxu0 0
      %1043 = vmatpush1.bf16.msra.mxu0 0
      %1044 = vmatprep.subr.bf16.mxu0 0
      %1045 = vmatpush1.bf16.msra.mxu0 0
      %1046 = vmatprep.subr.bf16.mxu0 0
      %1047 = vmatpush1.bf16.msra.mxu0 0
      %1048 = vmatprep.subr.bf16.mxu0 0
      %1049 = vmatpush1.bf16.msra.mxu0 0
      %1050 = vmatprep.subr.bf16.mxu0 0
      %1051 = vmatpush1.bf16.msra.mxu0 0
      %1052 = vmatprep.subr.bf16.mxu0 0
      %1053 = vmatpush1.bf16.msra.mxu0 0
      %1054 = vmatprep.subr.bf16.mxu0 0
      %1055 = vmatpush1.bf16.msra.mxu0 %v989
      %1056 = vmatprep.subr.bf16.mxu0 0
      %1057 = vmatpush2.bf16.msra.mxu0 0
      %1058 = vmatprep.subr.bf16.mxu0 0
      %1059 = vmatpush2.bf16.msra.mxu0 0
      %1060 = vmatprep.subr.bf16.mxu0 0
      %1061 = vmatpush2.bf16.msra.mxu0 0
      %1062 = vmatprep.subr.bf16.mxu0 0
      %1063 = vmatpush2.bf16.msra.mxu0 0
      %1064 = vmatprep.subr.bf16.mxu0 0
      %1065 = vmatpush2.bf16.msra.mxu0 0
      %1066 = vmatprep.subr.bf16.mxu0 0
      %1067 = vmatpush2.bf16.msra.mxu0 0
      %1068 = vmatprep.subr.bf16.mxu0 0
      %1069 = vmatpush2.bf16.msra.mxu0 0
      %1070 = vmatprep.subr.bf16.mxu0 0
      %1071 = vmatpush2.bf16.msra.mxu0 0
      %1072 = vmatprep.mubr.bf16.mxu0 0
      %1073 = vmatmul.mubr.bf16.gmra.mxu0 %v997
      %v1074 = vpop.f32.mrf.mxu0
      %v1075 = vadd.f32 0.0, %v1074
      %v1076 = vpop.f32.mrf.mxu0
      %v1077 = vpop.f32.mrf.mxu0
      %v1078 = vpop.f32.mrf.mxu0
      %1079 = vdwg.mxu0
      %v1080 = vadd.f32 %v979, %v1034
      %v1081 = vadd.f32 %v980, %v1036
      %v1082 = vadd.f32 %v981, %v1075
      %v1083 = vld [vmem:[%s2] sm:$0x7]
      %1085 = vset.pattern.permute.xlu0 0
      %1086 = vperm.xlu0 %1085, %v1083
      %v1087 = vpop.permute.xlu0 %1086
      %v1089 = vadd.f32 %v1080, %v1087
      %v1090 = vadd.f32 %v1081, %v1087
      %v1091 = vadd.f32 %v1082, %v1087
      %v1092 = vtanh.pop %v1089
      %v1093 = vtanh.pop %v1090
      %v1094 = vtanh.pop %v1091
      %v1097 = vcombine.low %v1092, %v1093
      %1099 = vst [vmem:[%s170] sm:$0x77] %v1097
      %vm1100 = vcmask 256000
      %1101 = vst.msk [vmem:[%s170 + $0x8] sm:$0x7] %vm1100, %v1094
      %p1102 = scmp.lt.s32.totalorder %s14, 1
      %s1103 = scalar_select %p1102, %s14, 1
      %s1104 = smul.addr %s1103, 3
      %s1105 = smul.addr %s1104, 4
      %s1106 = scalar_lea.vmem %s3, %s1105
      // Predicated region
      $region33: #{generator_model_forward.14} parent=31 // pred_check
        %p1107 = pneg %p100
      $region34: #{generator_model_forward.14} parent=31 // pred_check_branch
        %1109 = sbr.rel (%p1107) target = $region36
      $region35: #{generator_model_forward.14} parent=31 // pred_region
        _
      $region36: #{generator_model_forward.14} parent=31 // pred_fallthru
        _
    $region32: #{generator_model_forward.14} parent=5 // pred_fallthru
      _
    %p1110 = scmp.le.s32.totalorder 2, %s9
    // Predicated region
    $region37: #{generator_model_forward.14} parent=5 // pred_check
      %p1111 = pneg %p1110
    $region38: #{generator_model_forward.14} parent=5 // pred_check_branch
      %1113 = sbr.rel (%p1111) target = $region40
    $region39: #{generator_model_forward.14} parent=5 // pred_region
      %s1114 = ssub.s32 %s9, 2
      // Predicated region
      $region41: #{generator_model_forward.14} parent=39 // pred_check
        %p1115 = pneg %p106
      $region42: #{generator_model_forward.14} parent=39 // pred_check_branch
        %1117 = sbr.rel (%p1115) target = $region44
      $region43: #{generator_model_forward.14} parent=39 // pred_region
        %p1118 = scmp.lt.s32.totalorder %s15, 1
        %s1119 = scalar_select %p1118, %s15, 1
        %s1120 = smul.addr %s1119, 3
        %s1121 = smul.addr %s1120, 4
        %s1122 = scalar_lea.vmem %s3, %s1121
      $region44: #{generator_model_forward.14} parent=39 // pred_fallthru
        _
    $region40: #{generator_model_forward.14} parent=5 // pred_fallthru
      _
  $region6: #{generator_model_forward.14} parent=0 // loop_footer
    %s13 = sadd.s32 1, %s9
  $region7: #{generator_model_forward.14} parent=0 // loop_footer_branch
    %8 = sbr.rel target = $region3
  $region8: #{generator_model_forward.14} parent=0 // loop_exit
    _

// kernel: generator_model_forward.17
$region0: #{generator_model_forward.17}
  #allocation0 [shape = 'u32[]', space=smem, size = 0x4, offset = 0x4, fixed_abs, tag = 'smem constant byte address 0x4 - core index']
  #allocation1 [shape = 'u32[144,128]{1,0:T(1,128)}', space=vmem, size = 0x12000, scoped, tag = 'internal scratch']
  #allocation2 [shape = 'f32[1,1]{1,0:T(1,128)S(1)}', space=vmem, size = 0x200, scoped, tag = 'scoped memory for generator_model_forward.17']
  %s0 = inlined_call_operand.vmem [shape: bf16[2,16,326], index: 0, kind: input, shape index: {}]
  %s1 = inlined_call_operand.vmem [shape: bf16[9,1,16], index: 1, kind: input, shape index: {}]
  %s2 = inlined_call_operand.<no memory space> [shape: f32[1,1], index: 2, kind: input, shape index: {}]
  %s3 = inlined_call_operand.vmem [shape: f32[2,1,288], index: 3, kind: output, shape index: {}]
  %s4 = sld [smem:[#allocation0]]
  $region45: #{generator_model_forward.17} parent=0
    _
  %s6 = ssub.s32 1, %s4
  %s7 = scalar_select 0, %s6, %s4
  %v8 = vstv %s2
  %9 = vst [vmem:[#allocation2] sm:$0x1] %v8
  loop: start=0, step=1, limit=4
  $region2: #{generator_model_forward.17} parent=0 // loop_pre_header
    _
  $region3: #{generator_model_forward.17} parent=0 // loop_header
    %s11 = sphi 0, %s15
    %p12 = scmp.ge.s32.totalorder %s11, 4
    %s21 = sphi 0, %s23
    %s24 = sphi 0, %s21
    %s25 = sphi 0, %s24
    %s41 = sphi 0, %s25
    %s45 = sphi 0, %s45
    %s47 = sphi 0, %s45
    %s48 = sphi 0, %s47
    %s62 = sphi 0, %s48
    %s66 = sphi 0, %s66
    %s68 = sphi 0, %s66
    %s69 = sphi 0, %s68
    %s83 = sphi 0, %s69
    %s89 = sphi 0, %s91
    %s92 = sphi 0, %s89
    %s93 = sphi 0, %s92
    %s109 = sphi 0, %s93
  $region4: #{generator_model_forward.17} parent=0 // loop_header_branch
    %14 = sbr.rel (%p12) target = $region8
  $region5: #{generator_model_forward.17} parent=0 // loop_body
    %s16 = ssub.s32 %s11, 1
    %s17 = ssub.s32 %s11, 2
    %s18 = sadd.s32 %s11, 1
    %s19 = ssub.s32 %s11, %s18
    %p20 = scmp.eq.s32.totalorder %s19, 0
    %s22 = sadd.s32 %s21, 1
    %s23 = scalar_select %p20, %s21, %s22
    %p26 = pneg %p20
    %p27 = scmp.eq.s32.totalorder %s11, 1
    %p28 = por %p26, %p27
    %p29 = scmp.ne.s32.totalorder %s21, %s24
    %p30 = scmp.eq.s32.totalorder %s11, 0
    %p31 = por %p29, %p30
    %p32 = scmp.ne.s32.totalorder %s21, %s24
    %p33 = scmp.eq.s32.totalorder %s16, 1
    %p34 = por %p32, %p33
    %p35 = scmp.ne.s32.totalorder %s24, %s25
    %p36 = scmp.eq.s32.totalorder %s16, 0
    %p37 = por %p35, %p36
    %p38 = scmp.ne.s32.totalorder %s24, %s25
    %p39 = scmp.eq.s32.totalorder %s17, 1
    %p40 = por %p38, %p39
    %p42 = scmp.ne.s32.totalorder %s25, %s41
    %p43 = scmp.eq.s32.totalorder %s17, 0
    %p44 = por %p42, %p43
    %s46 = sadd.s32 %s45, 1
    %p49 = scmp.eq.s32.totalorder %s11, 1
    %p50 = scmp.ne.s32.totalorder %s45, %s47
    %p51 = scmp.eq.s32.totalorder %s11, 0
    %p52 = por %p50, %p51
    %p53 = scmp.ne.s32.totalorder %s45, %s47
    %p54 = scmp.eq.s32.totalorder %s16, 1
    %p55 = por %p53, %p54
    %p56 = scmp.ne.s32.totalorder %s47, %s48
    %p57 = scmp.eq.s32.totalorder %s16, 0
    %p58 = por %p56, %p57
    %p59 = scmp.ne.s32.totalorder %s47, %s48
    %p60 = scmp.eq.s32.totalorder %s17, 1
    %p61 = por %p59, %p60
    %p63 = scmp.ne.s32.totalorder %s48, %s62
    %p64 = scmp.eq.s32.totalorder %s17, 0
    %p65 = por %p63, %p64
    %s67 = sadd.s32 %s66, 1
    %p70 = scmp.eq.s32.totalorder %s11, 1
    %p71 = scmp.ne.s32.totalorder %s66, %s68
    %p72 = scmp.eq.s32.totalorder %s11, 0
    %p73 = por %p71, %p72
    %p74 = scmp.ne.s32.totalorder %s66, %s68
    %p75 = scmp.eq.s32.totalorder %s16, 1
    %p76 = por %p74, %p75
    %p77 = scmp.ne.s32.totalorder %s68, %s69
    %p78 = scmp.eq.s32.totalorder %s16, 0
    %p79 = por %p77, %p78
    %p80 = scmp.ne.s32.totalorder %s68, %s69
    %p81 = scmp.eq.s32.totalorder %s17, 1
    %p82 = por %p80, %p81
    %p84 = scmp.ne.s32.totalorder %s69, %s83
    %p85 = scmp.eq.s32.totalorder %s17, 0
    %p86 = por %p84, %p85
    %s87 = ssub.s32 %s11, %s18
    %p88 = scmp.eq.s32.totalorder %s87, 0
    %s90 = sadd.s32 %s89, 1
    %s91 = scalar_select %p88, %s89, %s90
    %p94 = pneg %p88
    %p95 = scmp.eq.s32.totalorder %s11, 1
    %p96 = por %p94, %p95
    %p97 = scmp.ne.s32.totalorder %s89, %s92
    %p98 = scmp.eq.s32.totalorder %s11, 0
    %p99 = por %p97, %p98
    %p100 = scmp.ne.s32.totalorder %s89, %s92
    %p101 = scmp.eq.s32.totalorder %s16, 1
    %p102 = por %p100, %p101
    %p103 = scmp.ne.s32.totalorder %s92, %s93
    %p104 = scmp.eq.s32.totalorder %s16, 0
    %p105 = por %p103, %p104
    %p106 = scmp.ne.s32.totalorder %s92, %s93
    %p107 = scmp.eq.s32.totalorder %s17, 1
    %p108 = por %p106, %p107
    %p110 = scmp.ne.s32.totalorder %s93, %s109
    %p111 = scmp.eq.s32.totalorder %s17, 0
    %p112 = por %p110, %p111
    %p113 = scmp.le.s32.totalorder 1, %s11
    %p114 = scmp.lt.s32.totalorder %s11, 3
    %p115 = pnand %p113, %p114
    %p116 = pneg %p115
    // Predicated region
    $region9: #{generator_model_forward.17} parent=5 // pred_check
      _
    $region10: #{generator_model_forward.17} parent=5 // pred_check_branch
      %118 = sbr.rel (%p115) target = $region12
    $region11: #{generator_model_forward.17} parent=5 // pred_region
      %s119 = ssub.s32 %s11, 1
      // Predicated region
      $region13: #{generator_model_forward.17} parent=11 // pred_check
        %p120 = pneg %p58
      $region14: #{generator_model_forward.17} parent=11 // pred_check_branch
        %122 = sbr.rel (%p120) target = $region16
      $region15: #{generator_model_forward.17} parent=11 // pred_region
        _
      $region16: #{generator_model_forward.17} parent=11 // pred_fallthru
        _
      // Predicated region
      $region17: #{generator_model_forward.17} parent=11 // pred_check
        %p123 = pneg %p79
      $region18: #{generator_model_forward.17} parent=11 // pred_check_branch
        %125 = sbr.rel (%p123) target = $region20
      $region19: #{generator_model_forward.17} parent=11 // pred_region
        _
      $region20: #{generator_model_forward.17} parent=11 // pred_fallthru
        _
    $region12: #{generator_model_forward.17} parent=5 // pred_fallthru
      _
    %p126 = scmp.lt.s32.totalorder %s11, 2
    // Predicated region
    $region21: #{generator_model_forward.17} parent=5 // pred_check
      %p127 = pneg %p126
    $region22: #{generator_model_forward.17} parent=5 // pred_check_branch
      %129 = sbr.rel (%p127) target = $region24
    $region23: #{generator_model_forward.17} parent=5 // pred_region
      // Predicated region
      $region25: #{generator_model_forward.17} parent=23 // pred_check
        %p130 = pneg %p31
      $region26: #{generator_model_forward.17} parent=23 // pred_check_branch
        %132 = sbr.rel (%p130) target = $region28
      $region27: #{generator_model_forward.17} parent=23 // pred_region
        %p133 = scmp.lt.s32.totalorder %s11, 1
        %s134 = scalar_select %p133, %s11, 1
        %s135 = smul.addr %s134, 6
        %s136 = smul.addr %s135, 4
        %s137 = scalar_lea.vmem %s0, %s136
      $region28: #{generator_model_forward.17} parent=23 // pred_fallthru
        _
    $region24: #{generator_model_forward.17} parent=5 // pred_fallthru
      _
    %p138 = scmp.le.s32.totalorder 1, %s11
    %p139 = scmp.lt.s32.totalorder %s11, 3
    %p140 = pnand %p138, %p139
    %p141 = pneg %p140
    // Predicated region
    $region29: #{generator_model_forward.17} parent=5 // pred_check
      _
    $region30: #{generator_model_forward.17} parent=5 // pred_check_branch
      %143 = sbr.rel (%p140) target = $region32
    $region31: #{generator_model_forward.17} parent=5 // pred_region
      %s144 = ssub.s32 %s11, 1
      %p145 = scmp.lt.s32.totalorder %s16, 1
      %s146 = scalar_select %p145, %s16, 1
      %s147 = smul.addr %s146, 6
      %s148 = smul.addr %s147, 4
      %s149 = scalar_lea.vmem %s0, %s148
      %p150 = pneg %p37
      %p151 = pneg %p34
      %p152 = pneg %p58
      %p153 = pneg %p55
      %p154 = pneg %p79
      %p155 = pneg %p76
      %p156 = pneg %p105
      %p157 = pneg %p102
      %p158 = scmp.lt.s32.totalorder %s16, 1
      %s159 = scalar_select %p158, %s16, 1
      %s160 = smul.addr %s159, 3
      %s161 = scalar_lea.vmem %s3, %s160
      %p162 = scmp.lt.s32.totalorder %s16, 1
      %s163 = scalar_select %p162, %s16, 1
      %s164 = smul.addr %s163, 6
      %s165 = smul.addr %s164, 4
      %s166 = scalar_lea.vmem %s0, %s165
      %p167 = scmp.lt.s32.totalorder %s16, 1
      %s168 = scalar_select %p167, %s16, 1
      %s169 = smul.addr %s168, 3
      %s170 = scalar_lea.vmem %s3, %s169
      %v172 = vld [vmem:[%s166] sm:$0xff]
      %v173 = vld [vmem:[%s166 + $0x8] sm:$0xf]
      %v174 = vld [vmem:[%s166 + $0xc] sm:$0xff]
      %v175 = vld [vmem:[%s166 + $0x14] sm:$0xf]
      %v176 = vld [vmem:[%s1] sm:$0x1]
      %s177 = scalar_lea.vmem %s1, 1
      %v178 = vld [vmem:[%s177] sm:$0x1]
      %v183 = vunpack.c.l.b16 %v172
      %v184 = vunpack.c.h.b16 %v172
      %v185 = vunpack.c.l.b16 %v173
      %v186 = vunpack.c.l.b16 %v174
      %v187 = vunpack.c.h.b16 %v174
      %v188 = vunpack.c.l.b16 %v175
      %v189 = vpack.c.b16 %v186, %v183
      %v190 = vpack.c.b16 %v187, %v184
      %v191 = vpack.c.b16 %v188, %v185
      %192 = vrot.lane.b32.xlu0 %v189, 127
      %v193 = vpop.permute.xlu0 %192
      %194 = vrot.lane.b32.xlu0 %v190, 127
      %v195 = vpop.permute.xlu0 %194
      %196 = vrot.lane.b32.xlu0 %v191, 127
      %v197 = vpop.permute.xlu0 %196
      %vm198 = vcmask 1039360
      %v199 = vsel %vm198, %v193, %v195
      %v200 = vsel %vm198, %v195, %v197
      %vm204 = vcmask 130048
      %v206 = vsel %vm204, %v178, 0
      %208 = vmatprep.subr.bf16.mxu0 0
      %209 = vmatpush1.bf16.msra.mxu0 0
      %210 = vmatprep.subr.bf16.mxu0 0
      %211 = vmatpush1.bf16.msra.mxu0 0
      %212 = vmatprep.subr.bf16.mxu0 0
      %213 = vmatpush1.bf16.msra.mxu0 0
      %214 = vmatprep.subr.bf16.mxu0 0
      %215 = vmatpush1.bf16.msra.mxu0 0
      %216 = vmatprep.subr.bf16.mxu0 0
      %217 = vmatpush1.bf16.msra.mxu0 0
      %218 = vmatprep.subr.bf16.mxu0 0
      %219 = vmatpush1.bf16.msra.mxu0 0
      %220 = vmatprep.subr.bf16.mxu0 0
      %221 = vmatpush1.bf16.msra.mxu0 0
      %222 = vmatprep.subr.bf16.mxu0 %v200
      %223 = vmatpush1.bf16.msra.mxu0 %v199
      %224 = vmatprep.subr.bf16.mxu0 0
      %225 = vmatpush2.bf16.msra.mxu0 0
      %226 = vmatprep.subr.bf16.mxu0 0
      %227 = vmatpush2.bf16.msra.mxu0 0
      %228 = vmatprep.subr.bf16.mxu0 0
      %229 = vmatpush2.bf16.msra.mxu0 0
      %230 = vmatprep.subr.bf16.mxu0 0
      %231 = vmatpush2.bf16.msra.mxu0 0
      %232 = vmatprep.subr.bf16.mxu0 0
      %233 = vmatpush2.bf16.msra.mxu0 0
      %234 = vmatprep.subr.bf16.mxu0 0
      %235 = vmatpush2.bf16.msra.mxu0 0
      %236 = vmatprep.subr.bf16.mxu0 0
      %237 = vmatpush2.bf16.msra.mxu0 0
      %238 = vmatprep.subr.bf16.mxu0 0
      %239 = vmatpush2.bf16.msra.mxu0 0
      %240 = vmatprep.mubr.bf16.mxu0 0
      %241 = vmatmul.mubr.bf16.gmra.mxu0 %v206
      %v242 = vpop.f32.mrf.mxu0
      %v243 = vadd.f32 0.0, %v242
      %v244 = vpop.f32.mrf.mxu0
      %v245 = vadd.f32 0.0, %v244
      %v246 = vpop.f32.mrf.mxu0
      %v247 = vpop.f32.mrf.mxu0
      %248 = vdwg.mxu0
      %249 = vmatprep.subr.bf16.mxu0 0
      %250 = vmatpush1.bf16.msra.mxu0 0
      %251 = vmatprep.subr.bf16.mxu0 0
      %252 = vmatpush1.bf16.msra.mxu0 0
      %253 = vmatprep.subr.bf16.mxu0 0
      %254 = vmatpush1.bf16.msra.mxu0 0
      %255 = vmatprep.subr.bf16.mxu0 0
      %256 = vmatpush1.bf16.msra.mxu0 0
      %257 = vmatprep.subr.bf16.mxu0 0
      %258 = vmatpush1.bf16.msra.mxu0 0
      %259 = vmatprep.subr.bf16.mxu0 0
      %260 = vmatpush1.bf16.msra.mxu0 0
      %261 = vmatprep.subr.bf16.mxu0 0
      %262 = vmatpush1.bf16.msra.mxu0 0
      %263 = vmatprep.subr.bf16.mxu0 0
      %264 = vmatpush1.bf16.msra.mxu0 %v197
      %265 = vmatprep.subr.bf16.mxu0 0
      %266 = vmatpush2.bf16.msra.mxu0 0
      %267 = vmatprep.subr.bf16.mxu0 0
      %268 = vmatpush2.bf16.msra.mxu0 0
      %269 = vmatprep.subr.bf16.mxu0 0
      %270 = vmatpush2.bf16.msra.mxu0 0
      %271 = vmatprep.subr.bf16.mxu0 0
      %272 = vmatpush2.bf16.msra.mxu0 0
      %273 = vmatprep.subr.bf16.mxu0 0
      %274 = vmatpush2.bf16.msra.mxu0 0
      %275 = vmatprep.subr.bf16.mxu0 0
      %276 = vmatpush2.bf16.msra.mxu0 0
      %277 = vmatprep.subr.bf16.mxu0 0
      %278 = vmatpush2.bf16.msra.mxu0 0
      %279 = vmatprep.subr.bf16.mxu0 0
      %280 = vmatpush2.bf16.msra.mxu0 0
      %281 = vmatprep.mubr.bf16.mxu0 0
      %282 = vmatmul.mubr.bf16.gmra.mxu0 %v206
      %v283 = vpop.f32.mrf.mxu0
      %v284 = vadd.f32 0.0, %v283
      %v285 = vpop.f32.mrf.mxu0
      %v286 = vpop.f32.mrf.mxu0
      %v287 = vpop.f32.mrf.mxu0
      %288 = vdwg.mxu0
      %v293 = vsel %vm204, %v176, 0
      %295 = vmatprep.subr.bf16.mxu0 0
      %296 = vmatpush1.bf16.msra.mxu0 0
      %297 = vmatprep.subr.bf16.mxu0 0
      %298 = vmatpush1.bf16.msra.mxu0 0
      %299 = vmatprep.subr.bf16.mxu0 0
      %300 = vmatpush1.bf16.msra.mxu0 0
      %301 = vmatprep.subr.bf16.mxu0 0
      %302 = vmatpush1.bf16.msra.mxu0 0
      %303 = vmatprep.subr.bf16.mxu0 0
      %304 = vmatpush1.bf16.msra.mxu0 0
      %305 = vmatprep.subr.bf16.mxu0 0
      %306 = vmatpush1.bf16.msra.mxu0 0
      %307 = vmatprep.subr.bf16.mxu0 0
      %308 = vmatpush1.bf16.msra.mxu0 0
      %309 = vmatprep.subr.bf16.mxu0 %v190
      %310 = vmatpush1.bf16.msra.mxu0 %v189
      %311 = vmatprep.subr.bf16.mxu0 0
      %312 = vmatpush2.bf16.msra.mxu0 0
      %313 = vmatprep.subr.bf16.mxu0 0
      %314 = vmatpush2.bf16.msra.mxu0 0
      %315 = vmatprep.subr.bf16.mxu0 0
      %316 = vmatpush2.bf16.msra.mxu0 0
      %317 = vmatprep.subr.bf16.mxu0 0
      %318 = vmatpush2.bf16.msra.mxu0 0
      %319 = vmatprep.subr.bf16.mxu0 0
      %320 = vmatpush2.bf16.msra.mxu0 0
      %321 = vmatprep.subr.bf16.mxu0 0
      %322 = vmatpush2.bf16.msra.mxu0 0
      %323 = vmatprep.subr.bf16.mxu0 0
      %324 = vmatpush2.bf16.msra.mxu0 0
      %325 = vmatprep.subr.bf16.mxu0 0
      %326 = vmatpush2.bf16.msra.mxu0 0
      %327 = vmatprep.mubr.bf16.mxu0 0
      %328 = vmatmul.mubr.bf16.gmra.mxu0 %v293
      %v329 = vpop.f32.mrf.mxu0
      %v330 = vadd.f32 %v243, %v329
      %v331 = vpop.f32.mrf.mxu0
      %v332 = vadd.f32 %v245, %v331
      %v333 = vpop.f32.mrf.mxu0
      %v334 = vpop.f32.mrf.mxu0
      %335 = vdwg.mxu0
      %336 = vmatprep.subr.bf16.mxu0 0
      %337 = vmatpush1.bf16.msra.mxu0 0
      %338 = vmatprep.subr.bf16.mxu0 0
      %339 = vmatpush1.bf16.msra.mxu0 0
      %340 = vmatprep.subr.bf16.mxu0 0
      %341 = vmatpush1.bf16.msra.mxu0 0
      %342 = vmatprep.subr.bf16.mxu0 0
      %343 = vmatpush1.bf16.msra.mxu0 0
      %344 = vmatprep.subr.bf16.mxu0 0
      %345 = vmatpush1.bf16.msra.mxu0 0
      %346 = vmatprep.subr.bf16.mxu0 0
      %347 = vmatpush1.bf16.msra.mxu0 0
      %348 = vmatprep.subr.bf16.mxu0 0
      %349 = vmatpush1.bf16.msra.mxu0 0
      %350 = vmatprep.subr.bf16.mxu0 0
      %351 = vmatpush1.bf16.msra.mxu0 %v191
      %352 = vmatprep.subr.bf16.mxu0 0
      %353 = vmatpush2.bf16.msra.mxu0 0
      %354 = vmatprep.subr.bf16.mxu0 0
      %355 = vmatpush2.bf16.msra.mxu0 0
      %356 = vmatprep.subr.bf16.mxu0 0
      %357 = vmatpush2.bf16.msra.mxu0 0
      %358 = vmatprep.subr.bf16.mxu0 0
      %359 = vmatpush2.bf16.msra.mxu0 0
      %360 = vmatprep.subr.bf16.mxu0 0
      %361 = vmatpush2.bf16.msra.mxu0 0
      %362 = vmatprep.subr.bf16.mxu0 0
      %363 = vmatpush2.bf16.msra.mxu0 0
      %364 = vmatprep.subr.bf16.mxu0 0
      %365 = vmatpush2.bf16.msra.mxu0 0
      %366 = vmatprep.subr.bf16.mxu0 0
      %367 = vmatpush2.bf16.msra.mxu0 0
      %368 = vmatprep.mubr.bf16.mxu0 0
      %369 = vmatmul.mubr.bf16.gmra.mxu0 %v293
      %v370 = vpop.f32.mrf.mxu0
      %v371 = vadd.f32 %v284, %v370
      %v372 = vpop.f32.mrf.mxu0
      %v373 = vpop.f32.mrf.mxu0
      %v374 = vpop.f32.mrf.mxu0
      %375 = vdwg.mxu0
      %s376 = scalar_lea.vmem %s1, 2
      %v377 = vld [vmem:[%s376] sm:$0x1]
      %378 = vrot.lane.b32.xlu0 %v189, 126
      %v379 = vpop.permute.xlu0 %378
      %380 = vrot.lane.b32.xlu0 %v190, 126
      %v381 = vpop.permute.xlu0 %380
      %382 = vrot.lane.b32.xlu0 %v191, 126
      %v383 = vpop.permute.xlu0 %382
      %vm384 = vcmask 1031168
      %v385 = vsel %vm384, %v379, %v381
      %v386 = vsel %vm384, %v381, %v383
      %v391 = vsel %vm204, %v377, 0
      %393 = vmatprep.subr.bf16.mxu0 0
      %394 = vmatpush1.bf16.msra.mxu0 0
      %395 = vmatprep.subr.bf16.mxu0 0
      %396 = vmatpush1.bf16.msra.mxu0 0
      %397 = vmatprep.subr.bf16.mxu0 0
      %398 = vmatpush1.bf16.msra.mxu0 0
      %399 = vmatprep.subr.bf16.mxu0 0
      %400 = vmatpush1.bf16.msra.mxu0 0
      %401 = vmatprep.subr.bf16.mxu0 0
      %402 = vmatpush1.bf16.msra.mxu0 0
      %403 = vmatprep.subr.bf16.mxu0 0
      %404 = vmatpush1.bf16.msra.mxu0 0
      %405 = vmatprep.subr.bf16.mxu0 0
      %406 = vmatpush1.bf16.msra.mxu0 0
      %407 = vmatprep.subr.bf16.mxu0 %v386
      %408 = vmatpush1.bf16.msra.mxu0 %v385
      %409 = vmatprep.subr.bf16.mxu0 0
      %410 = vmatpush2.bf16.msra.mxu0 0
      %411 = vmatprep.subr.bf16.mxu0 0
      %412 = vmatpush2.bf16.msra.mxu0 0
      %413 = vmatprep.subr.bf16.mxu0 0
      %414 = vmatpush2.bf16.msra.mxu0 0
      %415 = vmatprep.subr.bf16.mxu0 0
      %416 = vmatpush2.bf16.msra.mxu0 0
      %417 = vmatprep.subr.bf16.mxu0 0
      %418 = vmatpush2.bf16.msra.mxu0 0
      %419 = vmatprep.subr.bf16.mxu0 0
      %420 = vmatpush2.bf16.msra.mxu0 0
      %421 = vmatprep.subr.bf16.mxu0 0
      %422 = vmatpush2.bf16.msra.mxu0 0
      %423 = vmatprep.subr.bf16.mxu0 0
      %424 = vmatpush2.bf16.msra.mxu0 0
      %425 = vmatprep.mubr.bf16.mxu0 0
      %426 = vmatmul.mubr.bf16.gmra.mxu0 %v391
      %v427 = vpop.f32.mrf.mxu0
      %v428 = vadd.f32 0.0, %v427
      %v429 = vpop.f32.mrf.mxu0
      %v430 = vadd.f32 0.0, %v429
      %v431 = vpop.f32.mrf.mxu0
      %v432 = vpop.f32.mrf.mxu0
      %433 = vdwg.mxu0
      %434 = vmatprep.subr.bf16.mxu0 0
      %435 = vmatpush1.bf16.msra.mxu0 0
      %436 = vmatprep.subr.bf16.mxu0 0
      %437 = vmatpush1.bf16.msra.mxu0 0
      %438 = vmatprep.subr.bf16.mxu0 0
      %439 = vmatpush1.bf16.msra.mxu0 0
      %440 = vmatprep.subr.bf16.mxu0 0
      %441 = vmatpush1.bf16.msra.mxu0 0
      %442 = vmatprep.subr.bf16.mxu0 0
      %443 = vmatpush1.bf16.msra.mxu0 0
      %444 = vmatprep.subr.bf16.mxu0 0
      %445 = vmatpush1.bf16.msra.mxu0 0
      %446 = vmatprep.subr.bf16.mxu0 0
      %447 = vmatpush1.bf16.msra.mxu0 0
      %448 = vmatprep.subr.bf16.mxu0 0
      %449 = vmatpush1.bf16.msra.mxu0 %v383
      %450 = vmatprep.subr.bf16.mxu0 0
      %451 = vmatpush2.bf16.msra.mxu0 0
      %452 = vmatprep.subr.bf16.mxu0 0
      %453 = vmatpush2.bf16.msra.mxu0 0
      %454 = vmatprep.subr.bf16.mxu0 0
      %455 = vmatpush2.bf16.msra.mxu0 0
      %456 = vmatprep.subr.bf16.mxu0 0
      %457 = vmatpush2.bf16.msra.mxu0 0
      %458 = vmatprep.subr.bf16.mxu0 0
      %459 = vmatpush2.bf16.msra.mxu0 0
      %460 = vmatprep.subr.bf16.mxu0 0
      %461 = vmatpush2.bf16.msra.mxu0 0
      %462 = vmatprep.subr.bf16.mxu0 0
      %463 = vmatpush2.bf16.msra.mxu0 0
      %464 = vmatprep.subr.bf16.mxu0 0
      %465 = vmatpush2.bf16.msra.mxu0 0
      %466 = vmatprep.mubr.bf16.mxu0 0
      %467 = vmatmul.mubr.bf16.gmra.mxu0 %v391
      %v468 = vpop.f32.mrf.mxu0
      %v469 = vadd.f32 0.0, %v468
      %v470 = vpop.f32.mrf.mxu0
      %v471 = vpop.f32.mrf.mxu0
      %v472 = vpop.f32.mrf.mxu0
      %473 = vdwg.mxu0
      %v474 = vadd.f32 %v330, %v428
      %v475 = vadd.f32 %v332, %v430
      %v476 = vadd.f32 %v371, %v469
      %s477 = scalar_lea.vmem %s1, 3
      %v478 = vld [vmem:[%s477] sm:$0x1]
      %479 = vrot.lane.b32.xlu0 %v189, 110
      %v480 = vpop.permute.xlu0 %479
      %481 = vrot.lane.b32.xlu0 %v190, 110
      %v482 = vpop.permute.xlu0 %481
      %483 = vrot.lane.b32.xlu0 %v191, 110
      %v484 = vpop.permute.xlu0 %483
      %vm485 = vcmask 900096
      %v486 = vsel %vm485, %v480, %v482
      %v487 = vsel %vm485, %v482, %v484
      %v492 = vsel %vm204, %v478, 0
      %494 = vmatprep.subr.bf16.mxu0 0
      %495 = vmatpush1.bf16.msra.mxu0 0
      %496 = vmatprep.subr.bf16.mxu0 0
      %497 = vmatpush1.bf16.msra.mxu0 0
      %498 = vmatprep.subr.bf16.mxu0 0
      %499 = vmatpush1.bf16.msra.mxu0 0
      %500 = vmatprep.subr.bf16.mxu0 0
      %501 = vmatpush1.bf16.msra.mxu0 0
      %502 = vmatprep.subr.bf16.mxu0 0
      %503 = vmatpush1.bf16.msra.mxu0 0
      %504 = vmatprep.subr.bf16.mxu0 0
      %505 = vmatpush1.bf16.msra.mxu0 0
      %506 = vmatprep.subr.bf16.mxu0 0
      %507 = vmatpush1.bf16.msra.mxu0 0
      %508 = vmatprep.subr.bf16.mxu0 %v487
      %509 = vmatpush1.bf16.msra.mxu0 %v486
      %510 = vmatprep.subr.bf16.mxu0 0
      %511 = vmatpush2.bf16.msra.mxu0 0
      %512 = vmatprep.subr.bf16.mxu0 0
      %513 = vmatpush2.bf16.msra.mxu0 0
      %514 = vmatprep.subr.bf16.mxu0 0
      %515 = vmatpush2.bf16.msra.mxu0 0
      %516 = vmatprep.subr.bf16.mxu0 0
      %517 = vmatpush2.bf16.msra.mxu0 0
      %518 = vmatprep.subr.bf16.mxu0 0
      %519 = vmatpush2.bf16.msra.mxu0 0
      %520 = vmatprep.subr.bf16.mxu0 0
      %521 = vmatpush2.bf16.msra.mxu0 0
      %522 = vmatprep.subr.bf16.mxu0 0
      %523 = vmatpush2.bf16.msra.mxu0 0
      %524 = vmatprep.subr.bf16.mxu0 0
      %525 = vmatpush2.bf16.msra.mxu0 0
      %526 = vmatprep.mubr.bf16.mxu0 0
      %527 = vmatmul.mubr.bf16.gmra.mxu0 %v492
      %v528 = vpop.f32.mrf.mxu0
      %v529 = vadd.f32 0.0, %v528
      %v530 = vpop.f32.mrf.mxu0
      %v531 = vadd.f32 0.0, %v530
      %v532 = vpop.f32.mrf.mxu0
      %v533 = vpop.f32.mrf.mxu0
      %534 = vdwg.mxu0
      %535 = vmatprep.subr.bf16.mxu0 0
      %536 = vmatpush1.bf16.msra.mxu0 0
      %537 = vmatprep.subr.bf16.mxu0 0
      %538 = vmatpush1.bf16.msra.mxu0 0
      %539 = vmatprep.subr.bf16.mxu0 0
      %540 = vmatpush1.bf16.msra.mxu0 0
      %541 = vmatprep.subr.bf16.mxu0 0
      %542 = vmatpush1.bf16.msra.mxu0 0
      %543 = vmatprep.subr.bf16.mxu0 0
      %544 = vmatpush1.bf16.msra.mxu0 0
      %545 = vmatprep.subr.bf16.mxu0 0
      %546 = vmatpush1.bf16.msra.mxu0 0
      %547 = vmatprep.subr.bf16.mxu0 0
      %548 = vmatpush1.bf16.msra.mxu0 0
      %549 = vmatprep.subr.bf16.mxu0 0
      %550 = vmatpush1.bf16.msra.mxu0 %v484
      %551 = vmatprep.subr.bf16.mxu0 0
      %552 = vmatpush2.bf16.msra.mxu0 0
      %553 = vmatprep.subr.bf16.mxu0 0
      %554 = vmatpush2.bf16.msra.mxu0 0
      %555 = vmatprep.subr.bf16.mxu0 0
      %556 = vmatpush2.bf16.msra.mxu0 0
      %557 = vmatprep.subr.bf16.mxu0 0
      %558 = vmatpush2.bf16.msra.mxu0 0
      %559 = vmatprep.subr.bf16.mxu0 0
      %560 = vmatpush2.bf16.msra.mxu0 0
      %561 = vmatprep.subr.bf16.mxu0 0
      %562 = vmatpush2.bf16.msra.mxu0 0
      %563 = vmatprep.subr.bf16.mxu0 0
      %564 = vmatpush2.bf16.msra.mxu0 0
      %565 = vmatprep.subr.bf16.mxu0 0
      %566 = vmatpush2.bf16.msra.mxu0 0
      %567 = vmatprep.mubr.bf16.mxu0 0
      %568 = vmatmul.mubr.bf16.gmra.mxu0 %v492
      %v569 = vpop.f32.mrf.mxu0
      %v570 = vadd.f32 0.0, %v569
      %v571 = vpop.f32.mrf.mxu0
      %v572 = vpop.f32.mrf.mxu0
      %v573 = vpop.f32.mrf.mxu0
      %574 = vdwg.mxu0
      %v575 = vadd.f32 %v474, %v529
      %v576 = vadd.f32 %v475, %v531
      %v577 = vadd.f32 %v476, %v570
      %s578 = scalar_lea.vmem %s1, 4
      %v579 = vld [vmem:[%s578] sm:$0x1]
      %580 = vrot.lane.b32.xlu0 %v189, 109
      %v581 = vpop.permute.xlu0 %580
      %582 = vrot.lane.b32.xlu0 %v190, 109
      %v583 = vpop.permute.xlu0 %582
      %584 = vrot.lane.b32.xlu0 %v191, 109
      %v585 = vpop.permute.xlu0 %584
      %vm586 = vcmask 891904
      %v587 = vsel %vm586, %v581, %v583
      %v588 = vsel %vm586, %v583, %v585
      %v593 = vsel %vm204, %v579, 0
      %595 = vmatprep.subr.bf16.mxu0 0
      %596 = vmatpush1.bf16.msra.mxu0 0
      %597 = vmatprep.subr.bf16.mxu0 0
      %598 = vmatpush1.bf16.msra.mxu0 0
      %599 = vmatprep.subr.bf16.mxu0 0
      %600 = vmatpush1.bf16.msra.mxu0 0
      %601 = vmatprep.subr.bf16.mxu0 0
      %602 = vmatpush1.bf16.msra.mxu0 0
      %603 = vmatprep.subr.bf16.mxu0 0
      %604 = vmatpush1.bf16.msra.mxu0 0
      %605 = vmatprep.subr.bf16.mxu0 0
      %606 = vmatpush1.bf16.msra.mxu0 0
      %607 = vmatprep.subr.bf16.mxu0 0
      %608 = vmatpush1.bf16.msra.mxu0 0
      %609 = vmatprep.subr.bf16.mxu0 %v588
      %610 = vmatpush1.bf16.msra.mxu0 %v587
      %611 = vmatprep.subr.bf16.mxu0 0
      %612 = vmatpush2.bf16.msra.mxu0 0
      %613 = vmatprep.subr.bf16.mxu0 0
      %614 = vmatpush2.bf16.msra.mxu0 0
      %615 = vmatprep.subr.bf16.mxu0 0
      %616 = vmatpush2.bf16.msra.mxu0 0
      %617 = vmatprep.subr.bf16.mxu0 0
      %618 = vmatpush2.bf16.msra.mxu0 0
      %619 = vmatprep.subr.bf16.mxu0 0
      %620 = vmatpush2.bf16.msra.mxu0 0
      %621 = vmatprep.subr.bf16.mxu0 0
      %622 = vmatpush2.bf16.msra.mxu0 0
      %623 = vmatprep.subr.bf16.mxu0 0
      %624 = vmatpush2.bf16.msra.mxu0 0
      %625 = vmatprep.subr.bf16.mxu0 0
      %626 = vmatpush2.bf16.msra.mxu0 0
      %627 = vmatprep.mubr.bf16.mxu0 0
      %628 = vmatmul.mubr.bf16.gmra.mxu0 %v593
      %v629 = vpop.f32.mrf.mxu0
      %v630 = vadd.f32 0.0, %v629
      %v631 = vpop.f32.mrf.mxu0
      %v632 = vadd.f32 0.0, %v631
      %v633 = vpop.f32.mrf.mxu0
      %v634 = vpop.f32.mrf.mxu0
      %635 = vdwg.mxu0
      %636 = vmatprep.subr.bf16.mxu0 0
      %637 = vmatpush1.bf16.msra.mxu0 0
      %638 = vmatprep.subr.bf16.mxu0 0
      %639 = vmatpush1.bf16.msra.mxu0 0
      %640 = vmatprep.subr.bf16.mxu0 0
      %641 = vmatpush1.bf16.msra.mxu0 0
      %642 = vmatprep.subr.bf16.mxu0 0
      %643 = vmatpush1.bf16.msra.mxu0 0
      %644 = vmatprep.subr.bf16.mxu0 0
      %645 = vmatpush1.bf16.msra.mxu0 0
      %646 = vmatprep.subr.bf16.mxu0 0
      %647 = vmatpush1.bf16.msra.mxu0 0
      %648 = vmatprep.subr.bf16.mxu0 0
      %649 = vmatpush1.bf16.msra.mxu0 0
      %650 = vmatprep.subr.bf16.mxu0 0
      %651 = vmatpush1.bf16.msra.mxu0 %v585
      %652 = vmatprep.subr.bf16.mxu0 0
      %653 = vmatpush2.bf16.msra.mxu0 0
      %654 = vmatprep.subr.bf16.mxu0 0
      %655 = vmatpush2.bf16.msra.mxu0 0
      %656 = vmatprep.subr.bf16.mxu0 0
      %657 = vmatpush2.bf16.msra.mxu0 0
      %658 = vmatprep.subr.bf16.mxu0 0
      %659 = vmatpush2.bf16.msra.mxu0 0
      %660 = vmatprep.subr.bf16.mxu0 0
      %661 = vmatpush2.bf16.msra.mxu0 0
      %662 = vmatprep.subr.bf16.mxu0 0
      %663 = vmatpush2.bf16.msra.mxu0 0
      %664 = vmatprep.subr.bf16.mxu0 0
      %665 = vmatpush2.bf16.msra.mxu0 0
      %666 = vmatprep.subr.bf16.mxu0 0
      %667 = vmatpush2.bf16.msra.mxu0 0
      %668 = vmatprep.mubr.bf16.mxu0 0
      %669 = vmatmul.mubr.bf16.gmra.mxu0 %v593
      %v670 = vpop.f32.mrf.mxu0
      %v671 = vadd.f32 0.0, %v670
      %v672 = vpop.f32.mrf.mxu0
      %v673 = vpop.f32.mrf.mxu0
      %v674 = vpop.f32.mrf.mxu0
      %675 = vdwg.mxu0
      %v676 = vadd.f32 %v575, %v630
      %v677 = vadd.f32 %v576, %v632
      %v678 = vadd.f32 %v577, %v671
      %s679 = scalar_lea.vmem %s1, 5
      %v680 = vld [vmem:[%s679] sm:$0x1]
      %681 = vrot.lane.b32.xlu0 %v189, 108
      %v682 = vpop.permute.xlu0 %681
      %683 = vrot.lane.b32.xlu0 %v190, 108
      %v684 = vpop.permute.xlu0 %683
      %685 = vrot.lane.b32.xlu0 %v191, 108
      %v686 = vpop.permute.xlu0 %685
      %vm687 = vcmask 883712
      %v688 = vsel %vm687, %v682, %v684
      %v689 = vsel %vm687, %v684, %v686
      %v694 = vsel %vm204, %v680, 0
      %696 = vmatprep.subr.bf16.mxu0 0
      %697 = vmatpush1.bf16.msra.mxu0 0
      %698 = vmatprep.subr.bf16.mxu0 0
      %699 = vmatpush1.bf16.msra.mxu0 0
      %700 = vmatprep.subr.bf16.mxu0 0
      %701 = vmatpush1.bf16.msra.mxu0 0
      %702 = vmatprep.subr.bf16.mxu0 0
      %703 = vmatpush1.bf16.msra.mxu0 0
      %704 = vmatprep.subr.bf16.mxu0 0
      %705 = vmatpush1.bf16.msra.mxu0 0
      %706 = vmatprep.subr.bf16.mxu0 0
      %707 = vmatpush1.bf16.msra.mxu0 0
      %708 = vmatprep.subr.bf16.mxu0 0
      %709 = vmatpush1.bf16.msra.mxu0 0
      %710 = vmatprep.subr.bf16.mxu0 %v689
      %711 = vmatpush1.bf16.msra.mxu0 %v688
      %712 = vmatprep.subr.bf16.mxu0 0
      %713 = vmatpush2.bf16.msra.mxu0 0
      %714 = vmatprep.subr.bf16.mxu0 0
      %715 = vmatpush2.bf16.msra.mxu0 0
      %716 = vmatprep.subr.bf16.mxu0 0
      %717 = vmatpush2.bf16.msra.mxu0 0
      %718 = vmatprep.subr.bf16.mxu0 0
      %719 = vmatpush2.bf16.msra.mxu0 0
      %720 = vmatprep.subr.bf16.mxu0 0
      %721 = vmatpush2.bf16.msra.mxu0 0
      %722 = vmatprep.subr.bf16.mxu0 0
      %723 = vmatpush2.bf16.msra.mxu0 0
      %724 = vmatprep.subr.bf16.mxu0 0
      %725 = vmatpush2.bf16.msra.mxu0 0
      %726 = vmatprep.subr.bf16.mxu0 0
      %727 = vmatpush2.bf16.msra.mxu0 0
      %728 = vmatprep.mubr.bf16.mxu0 0
      %729 = vmatmul.mubr.bf16.gmra.mxu0 %v694
      %v730 = vpop.f32.mrf.mxu0
      %v731 = vadd.f32 0.0, %v730
      %v732 = vpop.f32.mrf.mxu0
      %v733 = vadd.f32 0.0, %v732
      %v734 = vpop.f32.mrf.mxu0
      %v735 = vpop.f32.mrf.mxu0
      %736 = vdwg.mxu0
      %737 = vmatprep.subr.bf16.mxu0 0
      %738 = vmatpush1.bf16.msra.mxu0 0
      %739 = vmatprep.subr.bf16.mxu0 0
      %740 = vmatpush1.bf16.msra.mxu0 0
      %741 = vmatprep.subr.bf16.mxu0 0
      %742 = vmatpush1.bf16.msra.mxu0 0
      %743 = vmatprep.subr.bf16.mxu0 0
      %744 = vmatpush1.bf16.msra.mxu0 0
      %745 = vmatprep.subr.bf16.mxu0 0
      %746 = vmatpush1.bf16.msra.mxu0 0
      %747 = vmatprep.subr.bf16.mxu0 0
      %748 = vmatpush1.bf16.msra.mxu0 0
      %749 = vmatprep.subr.bf16.mxu0 0
      %750 = vmatpush1.bf16.msra.mxu0 0
      %751 = vmatprep.subr.bf16.mxu0 0
      %752 = vmatpush1.bf16.msra.mxu0 %v686
      %753 = vmatprep.subr.bf16.mxu0 0
      %754 = vmatpush2.bf16.msra.mxu0 0
      %755 = vmatprep.subr.bf16.mxu0 0
      %756 = vmatpush2.bf16.msra.mxu0 0
      %757 = vmatprep.subr.bf16.mxu0 0
      %758 = vmatpush2.bf16.msra.mxu0 0
      %759 = vmatprep.subr.bf16.mxu0 0
      %760 = vmatpush2.bf16.msra.mxu0 0
      %761 = vmatprep.subr.bf16.mxu0 0
      %762 = vmatpush2.bf16.msra.mxu0 0
      %763 = vmatprep.subr.bf16.mxu0 0
      %764 = vmatpush2.bf16.msra.mxu0 0
      %765 = vmatprep.subr.bf16.mxu0 0
      %766 = vmatpush2.bf16.msra.mxu0 0
      %767 = vmatprep.subr.bf16.mxu0 0
      %768 = vmatpush2.bf16.msra.mxu0 0
      %769 = vmatprep.mubr.bf16.mxu0 0
      %770 = vmatmul.mubr.bf16.gmra.mxu0 %v694
      %v771 = vpop.f32.mrf.mxu0
      %v772 = vadd.f32 0.0, %v771
      %v773 = vpop.f32.mrf.mxu0
      %v774 = vpop.f32.mrf.mxu0
      %v775 = vpop.f32.mrf.mxu0
      %776 = vdwg.mxu0
      %v777 = vadd.f32 %v676, %v731
      %v778 = vadd.f32 %v677, %v733
      %v779 = vadd.f32 %v678, %v772
      %s780 = scalar_lea.vmem %s1, 6
      %v781 = vld [vmem:[%s780] sm:$0x1]
      %782 = vrot.lane.b32.xlu0 %v189, 92
      %v783 = vpop.permute.xlu0 %782
      %784 = vrot.lane.b32.xlu0 %v190, 92
      %v785 = vpop.permute.xlu0 %784
      %786 = vrot.lane.b32.xlu0 %v191, 92
      %v787 = vpop.permute.xlu0 %786
      %vm788 = vcmask 752640
      %v789 = vsel %vm788, %v783, %v785
      %v790 = vsel %vm788, %v785, %v787
      %v795 = vsel %vm204, %v781, 0
      %797 = vmatprep.subr.bf16.mxu0 0
      %798 = vmatpush1.bf16.msra.mxu0 0
      %799 = vmatprep.subr.bf16.mxu0 0
      %800 = vmatpush1.bf16.msra.mxu0 0
      %801 = vmatprep.subr.bf16.mxu0 0
      %802 = vmatpush1.bf16.msra.mxu0 0
      %803 = vmatprep.subr.bf16.mxu0 0
      %804 = vmatpush1.bf16.msra.mxu0 0
      %805 = vmatprep.subr.bf16.mxu0 0
      %806 = vmatpush1.bf16.msra.mxu0 0
      %807 = vmatprep.subr.bf16.mxu0 0
      %808 = vmatpush1.bf16.msra.mxu0 0
      %809 = vmatprep.subr.bf16.mxu0 0
      %810 = vmatpush1.bf16.msra.mxu0 0
      %811 = vmatprep.subr.bf16.mxu0 %v790
      %812 = vmatpush1.bf16.msra.mxu0 %v789
      %813 = vmatprep.subr.bf16.mxu0 0
      %814 = vmatpush2.bf16.msra.mxu0 0
      %815 = vmatprep.subr.bf16.mxu0 0
      %816 = vmatpush2.bf16.msra.mxu0 0
      %817 = vmatprep.subr.bf16.mxu0 0
      %818 = vmatpush2.bf16.msra.mxu0 0
      %819 = vmatprep.subr.bf16.mxu0 0
      %820 = vmatpush2.bf16.msra.mxu0 0
      %821 = vmatprep.subr.bf16.mxu0 0
      %822 = vmatpush2.bf16.msra.mxu0 0
      %823 = vmatprep.subr.bf16.mxu0 0
      %824 = vmatpush2.bf16.msra.mxu0 0
      %825 = vmatprep.subr.bf16.mxu0 0
      %826 = vmatpush2.bf16.msra.mxu0 0
      %827 = vmatprep.subr.bf16.mxu0 0
      %828 = vmatpush2.bf16.msra.mxu0 0
      %829 = vmatprep.mubr.bf16.mxu0 0
      %830 = vmatmul.mubr.bf16.gmra.mxu0 %v795
      %v831 = vpop.f32.mrf.mxu0
      %v832 = vadd.f32 0.0, %v831
      %v833 = vpop.f32.mrf.mxu0
      %v834 = vadd.f32 0.0, %v833
      %v835 = vpop.f32.mrf.mxu0
      %v836 = vpop.f32.mrf.mxu0
      %837 = vdwg.mxu0
      %838 = vmatprep.subr.bf16.mxu0 0
      %839 = vmatpush1.bf16.msra.mxu0 0
      %840 = vmatprep.subr.bf16.mxu0 0
      %841 = vmatpush1.bf16.msra.mxu0 0
      %842 = vmatprep.subr.bf16.mxu0 0
      %843 = vmatpush1.bf16.msra.mxu0 0
      %844 = vmatprep.subr.bf16.mxu0 0
      %845 = vmatpush1.bf16.msra.mxu0 0
      %846 = vmatprep.subr.bf16.mxu0 0
      %847 = vmatpush1.bf16.msra.mxu0 0
      %848 = vmatprep.subr.bf16.mxu0 0
      %849 = vmatpush1.bf16.msra.mxu0 0
      %850 = vmatprep.subr.bf16.mxu0 0
      %851 = vmatpush1.bf16.msra.mxu0 0
      %852 = vmatprep.subr.bf16.mxu0 0
      %853 = vmatpush1.bf16.msra.mxu0 %v787
      %854 = vmatprep.subr.bf16.mxu0 0
      %855 = vmatpush2.bf16.msra.mxu0 0
      %856 = vmatprep.subr.bf16.mxu0 0
      %857 = vmatpush2.bf16.msra.mxu0 0
      %858 = vmatprep.subr.bf16.mxu0 0
      %859 = vmatpush2.bf16.msra.mxu0 0
      %860 = vmatprep.subr.bf16.mxu0 0
      %861 = vmatpush2.bf16.msra.mxu0 0
      %862 = vmatprep.subr.bf16.mxu0 0
      %863 = vmatpush2.bf16.msra.mxu0 0
      %864 = vmatprep.subr.bf16.mxu0 0
      %865 = vmatpush2.bf16.msra.mxu0 0
      %866 = vmatprep.subr.bf16.mxu0 0
      %867 = vmatpush2.bf16.msra.mxu0 0
      %868 = vmatprep.subr.bf16.mxu0 0
      %869 = vmatpush2.bf16.msra.mxu0 0
      %870 = vmatprep.mubr.bf16.mxu0 0
      %871 = vmatmul.mubr.bf16.gmra.mxu0 %v795
      %v872 = vpop.f32.mrf.mxu0
      %v873 = vadd.f32 0.0, %v872
      %v874 = vpop.f32.mrf.mxu0
      %v875 = vpop.f32.mrf.mxu0
      %v876 = vpop.f32.mrf.mxu0
      %877 = vdwg.mxu0
      %v878 = vadd.f32 %v777, %v832
      %v879 = vadd.f32 %v778, %v834
      %v880 = vadd.f32 %v779, %v873
      %s881 = scalar_lea.vmem %s1, 7
      %v882 = vld [vmem:[%s881] sm:$0x1]
      %883 = vrot.lane.b32.xlu0 %v189, 91
      %v884 = vpop.permute.xlu0 %883
      %885 = vrot.lane.b32.xlu0 %v190, 91
      %v886 = vpop.permute.xlu0 %885
      %887 = vrot.lane.b32.xlu0 %v191, 91
      %v888 = vpop.permute.xlu0 %887
      %vm889 = vcmask 744448
      %v890 = vsel %vm889, %v884, %v886
      %v891 = vsel %vm889, %v886, %v888
      %v896 = vsel %vm204, %v882, 0
      %898 = vmatprep.subr.bf16.mxu0 0
      %899 = vmatpush1.bf16.msra.mxu0 0
      %900 = vmatprep.subr.bf16.mxu0 0
      %901 = vmatpush1.bf16.msra.mxu0 0
      %902 = vmatprep.subr.bf16.mxu0 0
      %903 = vmatpush1.bf16.msra.mxu0 0
      %904 = vmatprep.subr.bf16.mxu0 0
      %905 = vmatpush1.bf16.msra.mxu0 0
      %906 = vmatprep.subr.bf16.mxu0 0
      %907 = vmatpush1.bf16.msra.mxu0 0
      %908 = vmatprep.subr.bf16.mxu0 0
      %909 = vmatpush1.bf16.msra.mxu0 0
      %910 = vmatprep.subr.bf16.mxu0 0
      %911 = vmatpush1.bf16.msra.mxu0 0
      %912 = vmatprep.subr.bf16.mxu0 %v891
      %913 = vmatpush1.bf16.msra.mxu0 %v890
      %914 = vmatprep.subr.bf16.mxu0 0
      %915 = vmatpush2.bf16.msra.mxu0 0
      %916 = vmatprep.subr.bf16.mxu0 0
      %917 = vmatpush2.bf16.msra.mxu0 0
      %918 = vmatprep.subr.bf16.mxu0 0
      %919 = vmatpush2.bf16.msra.mxu0 0
      %920 = vmatprep.subr.bf16.mxu0 0
      %921 = vmatpush2.bf16.msra.mxu0 0
      %922 = vmatprep.subr.bf16.mxu0 0
      %923 = vmatpush2.bf16.msra.mxu0 0
      %924 = vmatprep.subr.bf16.mxu0 0
      %925 = vmatpush2.bf16.msra.mxu0 0
      %926 = vmatprep.subr.bf16.mxu0 0
      %927 = vmatpush2.bf16.msra.mxu0 0
      %928 = vmatprep.subr.bf16.mxu0 0
      %929 = vmatpush2.bf16.msra.mxu0 0
      %930 = vmatprep.mubr.bf16.mxu0 0
      %931 = vmatmul.mubr.bf16.gmra.mxu0 %v896
      %v932 = vpop.f32.mrf.mxu0
      %v933 = vadd.f32 0.0, %v932
      %v934 = vpop.f32.mrf.mxu0
      %v935 = vadd.f32 0.0, %v934
      %v936 = vpop.f32.mrf.mxu0
      %v937 = vpop.f32.mrf.mxu0
      %938 = vdwg.mxu0
      %939 = vmatprep.subr.bf16.mxu0 0
      %940 = vmatpush1.bf16.msra.mxu0 0
      %941 = vmatprep.subr.bf16.mxu0 0
      %942 = vmatpush1.bf16.msra.mxu0 0
      %943 = vmatprep.subr.bf16.mxu0 0
      %944 = vmatpush1.bf16.msra.mxu0 0
      %945 = vmatprep.subr.bf16.mxu0 0
      %946 = vmatpush1.bf16.msra.mxu0 0
      %947 = vmatprep.subr.bf16.mxu0 0
      %948 = vmatpush1.bf16.msra.mxu0 0
      %949 = vmatprep.subr.bf16.mxu0 0
      %950 = vmatpush1.bf16.msra.mxu0 0
      %951 = vmatprep.subr.bf16.mxu0 0
      %952 = vmatpush1.bf16.msra.mxu0 0
      %953 = vmatprep.subr.bf16.mxu0 0
      %954 = vmatpush1.bf16.msra.mxu0 %v888
      %955 = vmatprep.subr.bf16.mxu0 0
      %956 = vmatpush2.bf16.msra.mxu0 0
      %957 = vmatprep.subr.bf16.mxu0 0
      %958 = vmatpush2.bf16.msra.mxu0 0
      %959 = vmatprep.subr.bf16.mxu0 0
      %960 = vmatpush2.bf16.msra.mxu0 0
      %961 = vmatprep.subr.bf16.mxu0 0
      %962 = vmatpush2.bf16.msra.mxu0 0
      %963 = vmatprep.subr.bf16.mxu0 0
      %964 = vmatpush2.bf16.msra.mxu0 0
      %965 = vmatprep.subr.bf16.mxu0 0
      %966 = vmatpush2.bf16.msra.mxu0 0
      %967 = vmatprep.subr.bf16.mxu0 0
      %968 = vmatpush2.bf16.msra.mxu0 0
      %969 = vmatprep.subr.bf16.mxu0 0
      %970 = vmatpush2.bf16.msra.mxu0 0
      %971 = vmatprep.mubr.bf16.mxu0 0
      %972 = vmatmul.mubr.bf16.gmra.mxu0 %v896
      %v973 = vpop.f32.mrf.mxu0
      %v974 = vadd.f32 0.0, %v973
      %v975 = vpop.f32.mrf.mxu0
      %v976 = vpop.f32.mrf.mxu0
      %v977 = vpop.f32.mrf.mxu0
      %978 = vdwg.mxu0
      %v979 = vadd.f32 %v878, %v933
      %v980 = vadd.f32 %v879, %v935
      %v981 = vadd.f32 %v880, %v974
      %s982 = scalar_lea.vmem %s1, 8
      %v983 = vld [vmem:[%s982] sm:$0x1]
      %984 = vrot.lane.b32.xlu0 %v189, 90
      %v985 = vpop.permute.xlu0 %984
      %986 = vrot.lane.b32.xlu0 %v190, 90
      %v987 = vpop.permute.xlu0 %986
      %988 = vrot.lane.b32.xlu0 %v191, 90
      %v989 = vpop.permute.xlu0 %988
      %vm990 = vcmask 736256
      %v991 = vsel %vm990, %v985, %v987
      %v992 = vsel %vm990, %v987, %v989
      %v997 = vsel %vm204, %v983, 0
      %999 = vmatprep.subr.bf16.mxu0 0
      %1000 = vmatpush1.bf16.msra.mxu0 0
      %1001 = vmatprep.subr.bf16.mxu0 0
      %1002 = vmatpush1.bf16.msra.mxu0 0
      %1003 = vmatprep.subr.bf16.mxu0 0
      %1004 = vmatpush1.bf16.msra.mxu0 0
      %1005 = vmatprep.subr.bf16.mxu0 0
      %1006 = vmatpush1.bf16.msra.mxu0 0
      %1007 = vmatprep.subr.bf16.mxu0 0
      %1008 = vmatpush1.bf16.msra.mxu0 0
      %1009 = vmatprep.subr.bf16.mxu0 0
      %1010 = vmatpush1.bf16.msra.mxu0 0
      %1011 = vmatprep.subr.bf16.mxu0 0
      %1012 = vmatpush1.bf16.msra.mxu0 0
      %1013 = vmatprep.subr.bf16.mxu0 %v992
      %1014 = vmatpush1.bf16.msra.mxu0 %v991
      %1015 = vmatprep.subr.bf16.mxu0 0
      %1016 = vmatpush2.bf16.msra.mxu0 0
      %1017 = vmatprep.subr.bf16.mxu0 0
      %1018 = vmatpush2.bf16.msra.mxu0 0
      %1019 = vmatprep.subr.bf16.mxu0 0
      %1020 = vmatpush2.bf16.msra.mxu0 0
      %1021 = vmatprep.subr.bf16.mxu0 0
      %1022 = vmatpush2.bf16.msra.mxu0 0
      %1023 = vmatprep.subr.bf16.mxu0 0
      %1024 = vmatpush2.bf16.msra.mxu0 0
      %1025 = vmatprep.subr.bf16.mxu0 0
      %1026 = vmatpush2.bf16.msra.mxu0 0
      %1027 = vmatprep.subr.bf16.mxu0 0
      %1028 = vmatpush2.bf16.msra.mxu0 0
      %1029 = vmatprep.subr.bf16.mxu0 0
      %1030 = vmatpush2.bf16.msra.mxu0 0
      %1031 = vmatprep.mubr.bf16.mxu0 0
      %1032 = vmatmul.mubr.bf16.gmra.mxu0 %v997
      %v1033 = vpop.f32.mrf.mxu0
      %v1034 = vadd.f32 0.0, %v1033
      %v1035 = vpop.f32.mrf.mxu0
      %v1036 = vadd.f32 0.0, %v1035
      %v1037 = vpop.f32.mrf.mxu0
      %v1038 = vpop.f32.mrf.mxu0
      %1039 = vdwg.mxu0
      %1040 = vmatprep.subr.bf16.mxu0 0
      %1041 = vmatpush1.bf16.msra.mxu0 0
      %1042 = vmatprep.subr.bf16.mxu0 0
      %1043 = vmatpush1.bf16.msra.mxu0 0
      %1044 = vmatprep.subr.bf16.mxu0 0
      %1045 = vmatpush1.bf16.msra.mxu0 0
      %1046 = vmatprep.subr.bf16.mxu0 0
      %1047 = vmatpush1.bf16.msra.mxu0 0
      %1048 = vmatprep.subr.bf16.mxu0 0
      %1049 = vmatpush1.bf16.msra.mxu0 0
      %1050 = vmatprep.subr.bf16.mxu0 0
      %1051 = vmatpush1.bf16.msra.mxu0 0
      %1052 = vmatprep.subr.bf16.mxu0 0
      %1053 = vmatpush1.bf16.msra.mxu0 0
      %1054 = vmatprep.subr.bf16.mxu0 0
      %1055 = vmatpush1.bf16.msra.mxu0 %v989
      %1056 = vmatprep.subr.bf16.mxu0 0
      %1057 = vmatpush2.bf16.msra.mxu0 0
      %1058 = vmatprep.subr.bf16.mxu0 0
      %1059 = vmatpush2.bf16.msra.mxu0 0
      %1060 = vmatprep.subr.bf16.mxu0 0
      %1061 = vmatpush2.bf16.msra.mxu0 0
      %1062 = vmatprep.subr.bf16.mxu0 0
      %1063 = vmatpush2.bf16.msra.mxu0 0
      %1064 = vmatprep.subr.bf16.mxu0 0
      %1065 = vmatpush2.bf16.msra.mxu0 0
      %1066 = vmatprep.subr.bf16.mxu0 0
      %1067 = vmatpush2.bf16.msra.mxu0 0
      %1068 = vmatprep.subr.bf16.mxu0 0
      %1069 = vmatpush2.bf16.msra.mxu0 0
      %1070 = vmatprep.subr.bf16.mxu0 0
      %1071 = vmatpush2.bf16.msra.mxu0 0
      %1072 = vmatprep.mubr.bf16.mxu0 0
      %1073 = vmatmul.mubr.bf16.gmra.mxu0 %v997
      %v1074 = vpop.f32.mrf.mxu0
      %v1075 = vadd.f32 0.0, %v1074
      %v1076 = vpop.f32.mrf.mxu0
      %v1077 = vpop.f32.mrf.mxu0
      %v1078 = vpop.f32.mrf.mxu0
      %1079 = vdwg.mxu0
      %v1080 = vadd.f32 %v979, %v1034
      %v1081 = vadd.f32 %v980, %v1036
      %v1082 = vadd.f32 %v981, %v1075
      %v1083 = vld [vmem:[#allocation2] sm:$0x1]
      %1085 = vset.pattern.permute.xlu0 0
      %1086 = vperm.xlu0 %1085, %v1083
      %v1087 = vpop.permute.xlu0 %1086
      %v1089 = vlaneseq
      %v1090 = vshrl.u32 %v1089, 7
      %v1091 = vsub.s32 0, %v1090
      %v1092 = vrot.slane %v1087, %v1091
      %v1093 = vadd.f32 %v1080, %v1092
      %v1094 = vadd.f32 %v1081, %v1092
      %v1095 = vadd.f32 %v1082, %v1092
      %v1096 = vtanh.pop %v1093
      %v1097 = vtanh.pop %v1094
      %v1098 = vtanh.pop %v1095
      %v1102 = vcombine.low %v1096, %v1097
      %v1104 = vunpack.c.l.s4 1966171168
      %v1105 = vunpack.c.0.s8 %v1104
      %v1106 = vlaneseq
      %v1107 = vshrl.u32 %v1106, 7
      %v1108 = vsub.s32 %v1105, %v1107
      %v1109 = vrot.slane %v1102, %v1108
      %v1111 = vunpack.c.l.s4 1966171168
      %v1112 = vunpack.c.0.s8 %v1111
      %v1113 = vlaneseq
      %v1114 = vshrl.u32 %v1113, 7
      %v1115 = vsub.s32 %v1112, %v1114
      %v1116 = vrot.slane %v1098, %v1115
      %v1117 = vcombine.low %v1109, %v1116
      %v1119 = vunpack.c.l.s4 1966171168
      %v1120 = vunpack.c.0.s8 %v1119
      %v1121 = vlaneseq
      %v1122 = vshrl.u32 %v1121, 7
      %v1123 = vsub.s32 %v1120, %v1122
      %v1124 = vrot.slane %v1117, %v1123
      %v1126 = vlaneseq
      %vm1127 = vcmp.ge.s32.totalorder %v1126, 0
      %vm1128 = vcmp.lt.s32.totalorder %v1126, 288
      %vm1129 = vmand %vm1127, %vm1128
      %1130 = vst.msk [vmem:[%s170] sm:$0x7] %vm1129, %v1124
      %p1131 = scmp.lt.s32.totalorder %s16, 1
      %s1132 = scalar_select %p1131, %s16, 1
      %s1133 = smul.addr %s1132, 3
      %s1134 = scalar_lea.vmem %s3, %s1133
      // Predicated region
      $region33: #{generator_model_forward.17} parent=31 // pred_check
        %p1135 = pneg %p102
      $region34: #{generator_model_forward.17} parent=31 // pred_check_branch
        %1137 = sbr.rel (%p1135) target = $region36
      $region35: #{generator_model_forward.17} parent=31 // pred_region
        _
      $region36: #{generator_model_forward.17} parent=31 // pred_fallthru
        _
    $region32: #{generator_model_forward.17} parent=5 // pred_fallthru
      _
    %p1138 = scmp.le.s32.totalorder 2, %s11
    // Predicated region
    $region37: #{generator_model_forward.17} parent=5 // pred_check
      %p1139 = pneg %p1138
    $region38: #{generator_model_forward.17} parent=5 // pred_check_branch
      %1141 = sbr.rel (%p1139) target = $region40
    $region39: #{generator_model_forward.17} parent=5 // pred_region
      %s1142 = ssub.s32 %s11, 2
      // Predicated region
      $region41: #{generator_model_forward.17} parent=39 // pred_check
        %p1143 = pneg %p108
      $region42: #{generator_model_forward.17} parent=39 // pred_check_branch
        %1145 = sbr.rel (%p1143) target = $region44
      $region43: #{generator_model_forward.17} parent=39 // pred_region
        %p1146 = scmp.lt.s32.totalorder %s17, 1
        %s1147 = scalar_select %p1146, %s17, 1
        %s1148 = smul.addr %s1147, 3
        %s1149 = scalar_lea.vmem %s3, %s1148
      $region44: #{generator_model_forward.17} parent=39 // pred_fallthru
        _
    $region40: #{generator_model_forward.17} parent=5 // pred_fallthru
      _
  $region6: #{generator_model_forward.17} parent=0 // loop_footer
    %s15 = sadd.s32 1, %s11
  $region7: #{generator_model_forward.17} parent=0 // loop_footer_branch
    %10 = sbr.rel target = $region3
  $region8: #{generator_model_forward.17} parent=0 // loop_exit
    _

</llo_original>
